<compile_context>
chip_gen: v5e
topology: v5e:2x2
jax: 0.10.0
libtpu: 0.0.40
codegen_flags: <defaults>
</compile_context>

<pallas_src>
import functools

import jax
import jax.numpy as jnp
from jax.experimental import pallas as pl
from jax.experimental.pallas import tpu as pltpu

# ----------------------- small-shape config ---------------------------------
BATCH = 2
IN_C = 3
IN_HW = 32                 # stem stride 2 -> 16x16 feature map (matches AvgPool2d(16,1))
HO = WO = IN_HW // 2       # 16
NROWS = BATCH * HO * WO    # 512
STEM_C = 16                # real B4: 48
EXP_C = 32                 # MBConv expansion channels
SE_C = 8                   # SE squeeze channels
PROJ_C = 16                # MBConv output channels (== STEM_C -> residual)
FC_DIM = 64                # real B4: cf.model.fc_dim == 1792
NUM_CLASSES = 10           # cf.data.num_classes (no 'dg' extra class)
DROPOUT_RATE = 0.3 * 0.2   # cf.model.dropout_rate * 0.2 ; eval mode => identity
BN_EPS = 1e-3
K_STEM = 3 * 3 * IN_C      # 27
K_STEM_PAD = 32            # pad im2col K to a lane-friendlier size


# ----------------------------- fused Pallas kernel ---------------------------

def effnet_fused_kernel(
    patch_ref, stem_w_ref, stem_b_ref,
    exp_w_ref, exp_b_ref,
    dw_w_ref, dw_b_ref,
    se_w1_ref, se_b1_ref, se_w2_ref, se_b2_ref,
    proj_w_ref, proj_b_ref,
    head_w_ref, head_b_ref,
    fc_w_ref, fc_b_ref,
    out_ref,
    dw_pad_ref, flat_ref,
):
    f32 = jnp.float32
    bf16 = jnp.bfloat16

    # ---- stem: Conv3x3 s2 p1 (im2col matmul, BN scale pre-folded) + shift + SiLU
    y = jnp.dot(patch_ref[...], stem_w_ref[...], preferred_element_type=f32)
    y = y + stem_b_ref[...]
    y = y * jax.nn.sigmoid(y)                                   # [NROWS, STEM_C]

    # ---- MBConv expand 1x1 + BN + SiLU
    e = jnp.dot(y.astype(bf16), exp_w_ref[...], preferred_element_type=f32)
    e = e + exp_b_ref[...]
    e = e * jax.nn.sigmoid(e)                                   # [NROWS, EXP_C]

    # ---- depthwise 3x3 s1 p1: zero-padded VMEM map + 9 unrolled per-tap FMAs
    dw_pad_ref[...] = jnp.zeros_like(dw_pad_ref)
    for b in range(BATCH):
        for i in range(HO):
            r = b * HO * WO + i * WO
            dw_pad_ref[b, i + 1, 1:WO + 1, :] = e[r:r + WO, :]  # interior rows

    acc = jnp.zeros((BATCH, HO, WO, EXP_C), f32)
    for t in range(9):
        di, dj = t // 3, t % 3
        acc = acc + dw_pad_ref[:, di:di + HO, dj:dj + WO, :] * dw_w_ref[t:t + 1, :]
    d = acc + dw_b_ref[...]
    d = d * jax.nn.sigmoid(d)                                   # [B, HO, WO, EXP_C]

    # ---- Squeeze-and-Excitation (fully in VMEM / vregs)
    ssum = jnp.sum(d, axis=1)                                   # [B, WO, EXP_C]
    ssum = jnp.sum(ssum, axis=1)                                # [B, EXP_C]
    s = ssum * (1.0 / float(HO * WO))
    h1 = jnp.dot(s, se_w1_ref[...], preferred_element_type=f32) + se_b1_ref[...]
    h1 = h1 * jax.nn.sigmoid(h1)
    g = jnp.dot(h1, se_w2_ref[...], preferred_element_type=f32) + se_b2_ref[...]
    g = jax.nn.sigmoid(g)                                       # [B, EXP_C]

    # gate + flatten back to [NROWS, EXP_C] via row-strip stores (no reshape needed)
    for b in range(BATCH):
        gb = g[b:b + 1, :]
        for i in range(HO):
            r = b * HO * WO + i * WO
            flat_ref[r:r + WO, :] = d[b, i] * gb

    # ---- project 1x1 (linear BN, no activation) + fused residual with stem output
    dse = flat_ref[...]
    pr = jnp.dot(dse.astype(bf16), proj_w_ref[...], preferred_element_type=f32)
    pr = pr + proj_b_ref[...] + y                               # residual add in-kernel

    # ---- head 1x1 -> FC_DIM + BN + SiLU
    hf = jnp.dot(pr.astype(bf16), head_w_ref[...], preferred_element_type=f32)
    hf = hf + head_b_ref[...]
    hf = hf * jax.nn.sigmoid(hf)                                # [NROWS, FC_DIM]

    # ---- AvgPool2d(16, stride=1) + Flatten + Dropout(eval=>identity) + Linear
    for b in range(BATCH):
        r = b * HO * WO
        pooled = jnp.mean(hf[r:r + HO * WO, :], axis=0, keepdims=True)   # [1, FC_DIM]
        out_ref[b:b + 1, :] = (
            jnp.dot(pooled, fc_w_ref[...], preferred_element_type=f32) + fc_b_ref[...]
        )


# ----------------------------- plain-JAX glue ---------------------------------

def im2col(x, k, stride, pad):
    """x: [B,H,W,C] NHWC -> patches [B*Ho*Wo, k*k, C] (tap-major, channel-minor)."""
    b, h, w, c = x.shape
    xp = jnp.pad(x, ((0, 0), (pad, pad), (pad, pad), (0, 0)))
    ho = (h + 2 * pad - k) // stride + 1
    wo = (w + 2 * pad - k) // stride + 1
    cols = []
    for di in range(k):
        for dj in range(k):
            cols.append(xp[:, di:di + stride * (ho - 1) + 1:stride,
                           dj:dj + stride * (wo - 1) + 1:stride, :])
    p = jnp.stack(cols, axis=3)                      # [B,Ho,Wo,KK,C]
    return p.reshape(b * ho * wo, k * k, c), ho, wo


def conv_w_to_mat(w):
    """PyTorch conv weight [Cout,Cin,K,K] -> im2col matrix [K*K*Cin, Cout]."""
    return jnp.transpose(w, (2, 3, 1, 0)).reshape(-1, w.shape[0])


def dw_w_to_mat(w):
    """PyTorch depthwise weight [C,1,K,K] -> [K*K, C]."""
    c, _, k, _ = w.shape
    return jnp.transpose(w, (2, 3, 0, 1)).reshape(k * k, c)


def init_params(key):
    ks = jax.random.split(key, 16)

    def normal(k, shape, std=0.1):
        return std * jax.random.normal(k, shape, jnp.float32)

    def bn(k, c):
        k1, k2, k3, k4 = jax.random.split(k, 4)
        gamma = 1.0 + 0.05 * jax.random.normal(k1, (c,), jnp.float32)
        beta = 0.05 * jax.random.normal(k2, (c,), jnp.float32)
        mean = 0.05 * jax.random.normal(k3, (c,), jnp.float32)
        var = 1.0 + 0.1 * jnp.abs(jax.random.normal(k4, (c,), jnp.float32))
        scale = gamma / jnp.sqrt(var + BN_EPS)
        shift = beta - mean * scale
        return scale, shift

    p = {}
    # stem: Conv2d(3, STEM_C, 3, stride=2, pad=1, bias=False) + BN (scale folded) + SiLU
    w = conv_w_to_mat(normal(ks[0], (STEM_C, IN_C, 3, 3)))            # [27, STEM_C]
    sc, sh = bn(ks[1], STEM_C)
    w = jnp.pad(w * sc[None, :], ((0, K_STEM_PAD - K_STEM), (0, 0)))  # pad K 27->32
    p["stem_w"], p["stem_shift"] = w.astype(jnp.bfloat16), sh.reshape(1, -1)
    # MBConv expand 1x1
    w = conv_w_to_mat(normal(ks[2], (EXP_C, STEM_C, 1, 1)))
    sc, sh = bn(ks[3], EXP_C)
    p["exp_w"], p["exp_shift"] = (w * sc[None, :]).astype(jnp.bfloat16), sh.reshape(1, -1)
    # depthwise 3x3 (VPU path, keep f32)
    w = dw_w_to_mat(normal(ks[4], (EXP_C, 1, 3, 3)))                  # [9, EXP_C]
    sc, sh = bn(ks[5], EXP_C)
    p["dw_w"], p["dw_shift"] = w * sc[None, :], sh.reshape(1, -1)
    # SE
    p["se_w1"] = normal(ks[6], (EXP_C, SE_C))
    p["se_b1"] = normal(ks[7], (1, SE_C))
    p["se_w2"] = normal(ks[8], (SE_C, EXP_C))
    p["se_b2"] = normal(ks[9], (1, EXP_C))
    # project 1x1
    w = conv_w_to_mat(normal(ks[10], (PROJ_C, EXP_C, 1, 1)))
    sc, sh = bn(ks[11], PROJ_C)
    p["proj_w"], p["proj_shift"] = (w * sc[None, :]).astype(jnp.bfloat16), sh.reshape(1, -1)
    # head 1x1 -> FC_DIM
    w = conv_w_to_mat(normal(ks[12], (FC_DIM, PROJ_C, 1, 1)))
    sc, sh = bn(ks[13], FC_DIM)
    p["head_w"], p["head_shift"] = (w * sc[None, :]).astype(jnp.bfloat16), sh.reshape(1, -1)
    # classifier Linear(FC_DIM, NUM_CLASSES): torch weight [out,in] -> transpose
    p["fc_w"] = normal(ks[14], (NUM_CLASSES, FC_DIM)).T
    p["fc_b"] = normal(ks[15], (1, NUM_CLASSES))
    return p


def forward(params, x_nchw):
    x = jnp.transpose(x_nchw, (0, 2, 3, 1))                       # NCHW -> NHWC
    patches, _, _ = im2col(x, 3, 2, 1)                            # [NROWS, 9, IN_C]
    pmat = patches.reshape(patches.shape[0], -1)                  # [NROWS, 27]
    pmat = jnp.pad(pmat, ((0, 0), (0, K_STEM_PAD - K_STEM)))      # -> [NROWS, 32]
    pmat = pmat.astype(jnp.bfloat16)

    vmem = pl.BlockSpec(memory_space=pltpu.MemorySpace.VMEM)
    return pl.pallas_call(
        effnet_fused_kernel,
        out_shape=jax.ShapeDtypeStruct((BATCH, NUM_CLASSES), jnp.float32),
        in_specs=[vmem] * 17,
        out_specs=vmem,
        scratch_shapes=[
            pltpu.VMEM((BATCH, HO + 2, WO + 2, EXP_C), jnp.float32),  # padded dw map
            pltpu.VMEM((NROWS, EXP_C), jnp.float32),                  # SE-gated flat map
        ],
    )(pmat,
      params["stem_w"], params["stem_shift"],
      params["exp_w"], params["exp_shift"],
      params["dw_w"], params["dw_shift"],
      params["se_w1"], params["se_b1"], params["se_w2"], params["se_b2"],
      params["proj_w"], params["proj_shift"],
      params["head_w"], params["head_shift"],
      params["fc_w"], params["fc_b"])


if __name__ == "__main__":
    key = jax.random.PRNGKey(0)
    kx, kp = jax.random.split(key)
    x = jax.random.normal(kx, (BATCH, IN_C, IN_HW, IN_HW), jnp.float32)  # NCHW input
    params = init_params(kp)

    out = jax.jit(functools.partial(forward, params))(x)
    jax.block_until_ready(out)
    assert out.shape == (BATCH, NUM_CLASSES) and out.dtype == jnp.float32
    print("KERNEL_OK")
</pallas_src>

<mosaic_0001>
module attributes {stable_mosaic.version = 11 : i64} {
  func.func @effnet_fused_kernel(%arg0: memref<512x32xbf16, #tpu.memory_space<vmem>>, %arg1: memref<32x16xbf16, #tpu.memory_space<vmem>>, %arg2: memref<1x16xf32, #tpu.memory_space<vmem>>, %arg3: memref<16x32xbf16, #tpu.memory_space<vmem>>, %arg4: memref<1x32xf32, #tpu.memory_space<vmem>>, %arg5: memref<9x32xf32, #tpu.memory_space<vmem>>, %arg6: memref<1x32xf32, #tpu.memory_space<vmem>>, %arg7: memref<32x8xf32, #tpu.memory_space<vmem>>, %arg8: memref<1x8xf32, #tpu.memory_space<vmem>>, %arg9: memref<8x32xf32, #tpu.memory_space<vmem>>, %arg10: memref<1x32xf32, #tpu.memory_space<vmem>>, %arg11: memref<32x16xbf16, #tpu.memory_space<vmem>>, %arg12: memref<1x16xf32, #tpu.memory_space<vmem>>, %arg13: memref<16x64xbf16, #tpu.memory_space<vmem>>, %arg14: memref<1x64xf32, #tpu.memory_space<vmem>>, %arg15: memref<64x10xf32, #tpu.memory_space<vmem>>, %arg16: memref<1x10xf32, #tpu.memory_space<vmem>>, %arg17: memref<2x10xf32, #tpu.memory_space<vmem>>, %arg18: memref<2x18x18x32xf32, #tpu.memory_space<vmem>>, %arg19: memref<512x32xf32, #tpu.memory_space<vmem>>) attributes {dimension_semantics = [], scalar_prefetch = 0 : i64, scratch_operands = 2 : i64, tpu.core_type = #tpu.core_type<tc>} {
    %c0 = arith.constant 0 : index
    %c0_0 = arith.constant 0 : index
    %0 = vector.load %arg0[%c0, %c0_0] : memref<512x32xbf16, #tpu.memory_space<vmem>>, vector<512x32xbf16>
    %c0_1 = arith.constant 0 : index
    %c0_2 = arith.constant 0 : index
    %1 = vector.load %arg1[%c0_1, %c0_2] : memref<32x16xbf16, #tpu.memory_space<vmem>>, vector<32x16xbf16>
    %cst = arith.constant dense<0.000000e+00> : vector<512x16xf32>
    %2 = tpu.matmul %0, %1, %cst {dimension_numbers = #tpu.dot_dimension_numbers<[1], [0], [0], [1], [0, 0, 1, 1], [], []>} : vector<512x32xbf16>, vector<32x16xbf16>, vector<512x16xf32> -> vector<512x16xf32>
    %c0_3 = arith.constant 0 : index
    %c0_4 = arith.constant 0 : index
    %3 = vector.load %arg2[%c0_3, %c0_4] : memref<1x16xf32, #tpu.memory_space<vmem>>, vector<1x16xf32>
    %4 = vector.broadcast %3 : vector<1x16xf32> to vector<512x16xf32>
    %5 = arith.addf %2, %4 : vector<512x16xf32>
    %6 = arith.negf %5 : vector<512x16xf32>
    %7 = math.exp %6 : vector<512x16xf32>
    %cst_5 = arith.constant 1.000000e+00 : f32
    %8 = vector.broadcast %cst_5 : f32 to vector<512x16xf32>
    %9 = arith.addf %8, %7 : vector<512x16xf32>
    %10 = arith.divf %8, %9 : vector<512x16xf32>
    %11 = arith.mulf %5, %10 : vector<512x16xf32>
    %12 = arith.truncf %11 : vector<512x16xf32> to vector<512x16xbf16>
    %c0_6 = arith.constant 0 : index
    %c0_7 = arith.constant 0 : index
    %13 = vector.load %arg3[%c0_6, %c0_7] : memref<16x32xbf16, #tpu.memory_space<vmem>>, vector<16x32xbf16>
    %cst_8 = arith.constant dense<0.000000e+00> : vector<512x32xf32>
    %14 = tpu.matmul %12, %13, %cst_8 {dimension_numbers = #tpu.dot_dimension_numbers<[1], [0], [0], [1], [0, 0, 1, 1], [], []>} : vector<512x16xbf16>, vector<16x32xbf16>, vector<512x32xf32> -> vector<512x32xf32>
    %c0_9 = arith.constant 0 : index
    %c0_10 = arith.constant 0 : index
    %15 = vector.load %arg4[%c0_9, %c0_10] : memref<1x32xf32, #tpu.memory_space<vmem>>, vector<1x32xf32>
    %16 = vector.broadcast %15 : vector<1x32xf32> to vector<512x32xf32>
    %17 = arith.addf %14, %16 : vector<512x32xf32>
    %18 = arith.negf %17 : vector<512x32xf32>
    %19 = math.exp %18 : vector<512x32xf32>
    %cst_11 = arith.constant 1.000000e+00 : f32
    %20 = vector.broadcast %cst_11 : f32 to vector<512x32xf32>
    %21 = arith.addf %20, %19 : vector<512x32xf32>
    %22 = arith.divf %20, %21 : vector<512x32xf32>
    %23 = arith.mulf %17, %22 : vector<512x32xf32>
    %cst_12 = arith.constant 0.000000e+00 : f32
    %24 = vector.broadcast %cst_12 : f32 to vector<2x18x18x32xf32>
    %c0_13 = arith.constant 0 : index
    %c0_14 = arith.constant 0 : index
    %c0_15 = arith.constant 0 : index
    %c0_16 = arith.constant 0 : index
    %25 = vector.load %arg18[%c0_13, %c0_14, %c0_15, %c0_16] : memref<2x18x18x32xf32, #tpu.memory_space<vmem>>, vector<2x18x18x32xf32>
    tpu.vector_store %arg18[%c0_13, %c0_14, %c0_15, %c0_16], %24 {strides = array<i32>} : memref<2x18x18x32xf32, #tpu.memory_space<vmem>>, vector<2x18x18x32xf32>,
    %26 = vector.extract_strided_slice %23 {offsets = [0, 0], sizes = [16, 32], strides = [1, 1]} : vector<512x32xf32> to vector<16x32xf32>
    %c0_17 = arith.constant 0 : index
    %c1 = arith.constant 1 : index
    %c1_18 = arith.constant 1 : index
    %c0_19 = arith.constant 0 : index
    %27 = vector.load %arg18[%c0_17, %c1, %c1_18, %c0_19] : memref<2x18x18x32xf32, #tpu.memory_space<vmem>>, vector<1x1x16x32xf32>
    %28 = vector.shape_cast %27 : vector<1x1x16x32xf32> to vector<16x32xf32>
    %29 = vector.shape_cast %26 : vector<16x32xf32> to vector<1x1x16x32xf32>
    tpu.vector_store %arg18[%c0_17, %c1, %c1_18, %c0_19], %29 {strides = array<i32>} : memref<2x18x18x32xf32, #tpu.memory_space<vmem>>, vector<1x1x16x32xf32>,
    %30 = vector.extract_strided_slice %23 {offsets = [16, 0], sizes = [16, 32], strides = [1, 1]} : vector<512x32xf32> to vector<16x32xf32>
    %c0_20 = arith.constant 0 : index
    %c2 = arith.constant 2 : index
    %c1_21 = arith.constant 1 : index
    %c0_22 = arith.constant 0 : index
    %31 = vector.load %arg18[%c0_20, %c2, %c1_21, %c0_22] : memref<2x18x18x32xf32, #tpu.memory_space<vmem>>, vector<1x1x16x32xf32>
    %32 = vector.shape_cast %31 : vector<1x1x16x32xf32> to vector<16x32xf32>
    %33 = vector.shape_cast %30 : vector<16x32xf32> to vector<1x1x16x32xf32>
    tpu.vector_store %arg18[%c0_20, %c2, %c1_21, %c0_22], %33 {strides = array<i32>} : memref<2x18x18x32xf32, #tpu.memory_space<vmem>>, vector<1x1x16x32xf32>,
    %34 = vector.extract_strided_slice %23 {offsets = [32, 0], sizes = [16, 32], strides = [1, 1]} : vector<512x32xf32> to vector<16x32xf32>
    %c0_23 = arith.constant 0 : index
    %c3 = arith.constant 3 : index
    %c1_24 = arith.constant 1 : index
    %c0_25 = arith.constant 0 : index
    %35 = vector.load %arg18[%c0_23, %c3, %c1_24, %c0_25] : memref<2x18x18x32xf32, #tpu.memory_space<vmem>>, vector<1x1x16x32xf32>
    %36 = vector.shape_cast %35 : vector<1x1x16x32xf32> to vector<16x32xf32>
    %37 = vector.shape_cast %34 : vector<16x32xf32> to vector<1x1x16x32xf32>
    tpu.vector_store %arg18[%c0_23, %c3, %c1_24, %c0_25], %37 {strides = array<i32>} : memref<2x18x18x32xf32, #tpu.memory_space<vmem>>, vector<1x1x16x32xf32>,
    %38 = vector.extract_strided_slice %23 {offsets = [48, 0], sizes = [16, 32], strides = [1, 1]} : vector<512x32xf32> to vector<16x32xf32>
    %c0_26 = arith.constant 0 : index
    %c4 = arith.constant 4 : index
    %c1_27 = arith.constant 1 : index
    %c0_28 = arith.constant 0 : index
    %39 = vector.load %arg18[%c0_26, %c4, %c1_27, %c0_28] : memref<2x18x18x32xf32, #tpu.memory_space<vmem>>, vector<1x1x16x32xf32>
    %40 = vector.shape_cast %39 : vector<1x1x16x32xf32> to vector<16x32xf32>
    %41 = vector.shape_cast %38 : vector<16x32xf32> to vector<1x1x16x32xf32>
    tpu.vector_store %arg18[%c0_26, %c4, %c1_27, %c0_28], %41 {strides = array<i32>} : memref<2x18x18x32xf32, #tpu.memory_space<vmem>>, vector<1x1x16x32xf32>,
    %42 = vector.extract_strided_slice %23 {offsets = [64, 0], sizes = [16, 32], strides = [1, 1]} : vector<512x32xf32> to vector<16x32xf32>
    %c0_29 = arith.constant 0 : index
    %c5 = arith.constant 5 : index
    %c1_30 = arith.constant 1 : index
    %c0_31 = arith.constant 0 : index
    %43 = vector.load %arg18[%c0_29, %c5, %c1_30, %c0_31] : memref<2x18x18x32xf32, #tpu.memory_space<vmem>>, vector<1x1x16x32xf32>
    %44 = vector.shape_cast %43 : vector<1x1x16x32xf32> to vector<16x32xf32>
    %45 = vector.shape_cast %42 : vector<16x32xf32> to vector<1x1x16x32xf32>
    tpu.vector_store %arg18[%c0_29, %c5, %c1_30, %c0_31], %45 {strides = array<i32>} : memref<2x18x18x32xf32, #tpu.memory_space<vmem>>, vector<1x1x16x32xf32>,
    %46 = vector.extract_strided_slice %23 {offsets = [80, 0], sizes = [16, 32], strides = [1, 1]} : vector<512x32xf32> to vector<16x32xf32>
    %c0_32 = arith.constant 0 : index
    %c6 = arith.constant 6 : index
    %c1_33 = arith.constant 1 : index
    %c0_34 = arith.constant 0 : index
    %47 = vector.load %arg18[%c0_32, %c6, %c1_33, %c0_34] : memref<2x18x18x32xf32, #tpu.memory_space<vmem>>, vector<1x1x16x32xf32>
    %48 = vector.shape_cast %47 : vector<1x1x16x32xf32> to vector<16x32xf32>
    %49 = vector.shape_cast %46 : vector<16x32xf32> to vector<1x1x16x32xf32>
    tpu.vector_store %arg18[%c0_32, %c6, %c1_33, %c0_34], %49 {strides = array<i32>} : memref<2x18x18x32xf32, #tpu.memory_space<vmem>>, vector<1x1x16x32xf32>,
    %50 = vector.extract_strided_slice %23 {offsets = [96, 0], sizes = [16, 32], strides = [1, 1]} : vector<512x32xf32> to vector<16x32xf32>
    %c0_35 = arith.constant 0 : index
    %c7 = arith.constant 7 : index
    %c1_36 = arith.constant 1 : index
    %c0_37 = arith.constant 0 : index
    %51 = vector.load %arg18[%c0_35, %c7, %c1_36, %c0_37] : memref<2x18x18x32xf32, #tpu.memory_space<vmem>>, vector<1x1x16x32xf32>
    %52 = vector.shape_cast %51 : vector<1x1x16x32xf32> to vector<16x32xf32>
    %53 = vector.shape_cast %50 : vector<16x32xf32> to vector<1x1x16x32xf32>
    tpu.vector_store %arg18[%c0_35, %c7, %c1_36, %c0_37], %53 {strides = array<i32>} : memref<2x18x18x32xf32, #tpu.memory_space<vmem>>, vector<1x1x16x32xf32>,
    %54 = vector.extract_strided_slice %23 {offsets = [112, 0], sizes = [16, 32], strides = [1, 1]} : vector<512x32xf32> to vector<16x32xf32>
    %c0_38 = arith.constant 0 : index
    %c8 = arith.constant 8 : index
    %c1_39 = arith.constant 1 : index
    %c0_40 = arith.constant 0 : index
    %55 = vector.load %arg18[%c0_38, %c8, %c1_39, %c0_40] : memref<2x18x18x32xf32, #tpu.memory_space<vmem>>, vector<1x1x16x32xf32>
    %56 = vector.shape_cast %55 : vector<1x1x16x32xf32> to vector<16x32xf32>
    %57 = vector.shape_cast %54 : vector<16x32xf32> to vector<1x1x16x32xf32>
    tpu.vector_store %arg18[%c0_38, %c8, %c1_39, %c0_40], %57 {strides = array<i32>} : memref<2x18x18x32xf32, #tpu.memory_space<vmem>>, vector<1x1x16x32xf32>,
    %58 = vector.extract_strided_slice %23 {offsets = [128, 0], sizes = [16, 32], strides = [1, 1]} : vector<512x32xf32> to vector<16x32xf32>
    %c0_41 = arith.constant 0 : index
    %c9 = arith.constant 9 : index
    %c1_42 = arith.constant 1 : index
    %c0_43 = arith.constant 0 : index
    %59 = vector.load %arg18[%c0_41, %c9, %c1_42, %c0_43] : memref<2x18x18x32xf32, #tpu.memory_space<vmem>>, vector<1x1x16x32xf32>
    %60 = vector.shape_cast %59 : vector<1x1x16x32xf32> to vector<16x32xf32>
    %61 = vector.shape_cast %58 : vector<16x32xf32> to vector<1x1x16x32xf32>
    tpu.vector_store %arg18[%c0_41, %c9, %c1_42, %c0_43], %61 {strides = array<i32>} : memref<2x18x18x32xf32, #tpu.memory_space<vmem>>, vector<1x1x16x32xf32>,
    %62 = vector.extract_strided_slice %23 {offsets = [144, 0], sizes = [16, 32], strides = [1, 1]} : vector<512x32xf32> to vector<16x32xf32>
    %c0_44 = arith.constant 0 : index
    %c10 = arith.constant 10 : index
    %c1_45 = arith.constant 1 : index
    %c0_46 = arith.constant 0 : index
    %63 = vector.load %arg18[%c0_44, %c10, %c1_45, %c0_46] : memref<2x18x18x32xf32, #tpu.memory_space<vmem>>, vector<1x1x16x32xf32>
    %64 = vector.shape_cast %63 : vector<1x1x16x32xf32> to vector<16x32xf32>
    %65 = vector.shape_cast %62 : vector<16x32xf32> to vector<1x1x16x32xf32>
    tpu.vector_store %arg18[%c0_44, %c10, %c1_45, %c0_46], %65 {strides = array<i32>} : memref<2x18x18x32xf32, #tpu.memory_space<vmem>>, vector<1x1x16x32xf32>,
    %66 = vector.extract_strided_slice %23 {offsets = [160, 0], sizes = [16, 32], strides = [1, 1]} : vector<512x32xf32> to vector<16x32xf32>
    %c0_47 = arith.constant 0 : index
    %c11 = arith.constant 11 : index
    %c1_48 = arith.constant 1 : index
    %c0_49 = arith.constant 0 : index
    %67 = vector.load %arg18[%c0_47, %c11, %c1_48, %c0_49] : memref<2x18x18x32xf32, #tpu.memory_space<vmem>>, vector<1x1x16x32xf32>
    %68 = vector.shape_cast %67 : vector<1x1x16x32xf32> to vector<16x32xf32>
    %69 = vector.shape_cast %66 : vector<16x32xf32> to vector<1x1x16x32xf32>
    tpu.vector_store %arg18[%c0_47, %c11, %c1_48, %c0_49], %69 {strides = array<i32>} : memref<2x18x18x32xf32, #tpu.memory_space<vmem>>, vector<1x1x16x32xf32>,
    %70 = vector.extract_strided_slice %23 {offsets = [176, 0], sizes = [16, 32], strides = [1, 1]} : vector<512x32xf32> to vector<16x32xf32>
    %c0_50 = arith.constant 0 : index
    %c12 = arith.constant 12 : index
    %c1_51 = arith.constant 1 : index
    %c0_52 = arith.constant 0 : index
    %71 = vector.load %arg18[%c0_50, %c12, %c1_51, %c0_52] : memref<2x18x18x32xf32, #tpu.memory_space<vmem>>, vector<1x1x16x32xf32>
    %72 = vector.shape_cast %71 : vector<1x1x16x32xf32> to vector<16x32xf32>
    %73 = vector.shape_cast %70 : vector<16x32xf32> to vector<1x1x16x32xf32>
    tpu.vector_store %arg18[%c0_50, %c12, %c1_51, %c0_52], %73 {strides = array<i32>} : memref<2x18x18x32xf32, #tpu.memory_space<vmem>>, vector<1x1x16x32xf32>,
    %74 = vector.extract_strided_slice %23 {offsets = [192, 0], sizes = [16, 32], strides = [1, 1]} : vector<512x32xf32> to vector<16x32xf32>
    %c0_53 = arith.constant 0 : index
    %c13 = arith.constant 13 : index
    %c1_54 = arith.constant 1 : index
    %c0_55 = arith.constant 0 : index
    %75 = vector.load %arg18[%c0_53, %c13, %c1_54, %c0_55] : memref<2x18x18x32xf32, #tpu.memory_space<vmem>>, vector<1x1x16x32xf32>
    %76 = vector.shape_cast %75 : vector<1x1x16x32xf32> to vector<16x32xf32>
    %77 = vector.shape_cast %74 : vector<16x32xf32> to vector<1x1x16x32xf32>
    tpu.vector_store %arg18[%c0_53, %c13, %c1_54, %c0_55], %77 {strides = array<i32>} : memref<2x18x18x32xf32, #tpu.memory_space<vmem>>, vector<1x1x16x32xf32>,
    %78 = vector.extract_strided_slice %23 {offsets = [208, 0], sizes = [16, 32], strides = [1, 1]} : vector<512x32xf32> to vector<16x32xf32>
    %c0_56 = arith.constant 0 : index
    %c14 = arith.constant 14 : index
    %c1_57 = arith.constant 1 : index
    %c0_58 = arith.constant 0 : index
    %79 = vector.load %arg18[%c0_56, %c14, %c1_57, %c0_58] : memref<2x18x18x32xf32, #tpu.memory_space<vmem>>, vector<1x1x16x32xf32>
    %80 = vector.shape_cast %79 : vector<1x1x16x32xf32> to vector<16x32xf32>
    %81 = vector.shape_cast %78 : vector<16x32xf32> to vector<1x1x16x32xf32>
    tpu.vector_store %arg18[%c0_56, %c14, %c1_57, %c0_58], %81 {strides = array<i32>} : memref<2x18x18x32xf32, #tpu.memory_space<vmem>>, vector<1x1x16x32xf32>,
    %82 = vector.extract_strided_slice %23 {offsets = [224, 0], sizes = [16, 32], strides = [1, 1]} : vector<512x32xf32> to vector<16x32xf32>
    %c0_59 = arith.constant 0 : index
    %c15 = arith.constant 15 : index
    %c1_60 = arith.constant 1 : index
    %c0_61 = arith.constant 0 : index
    %83 = vector.load %arg18[%c0_59, %c15, %c1_60, %c0_61] : memref<2x18x18x32xf32, #tpu.memory_space<vmem>>, vector<1x1x16x32xf32>
    %84 = vector.shape_cast %83 : vector<1x1x16x32xf32> to vector<16x32xf32>
    %85 = vector.shape_cast %82 : vector<16x32xf32> to vector<1x1x16x32xf32>
    tpu.vector_store %arg18[%c0_59, %c15, %c1_60, %c0_61], %85 {strides = array<i32>} : memref<2x18x18x32xf32, #tpu.memory_space<vmem>>, vector<1x1x16x32xf32>,
    %86 = vector.extract_strided_slice %23 {offsets = [240, 0], sizes = [16, 32], strides = [1, 1]} : vector<512x32xf32> to vector<16x32xf32>
    %c0_62 = arith.constant 0 : index
    %c16 = arith.constant 16 : index
    %c1_63 = arith.constant 1 : index
    %c0_64 = arith.constant 0 : index
    %87 = vector.load %arg18[%c0_62, %c16, %c1_63, %c0_64] : memref<2x18x18x32xf32, #tpu.memory_space<vmem>>, vector<1x1x16x32xf32>
    %88 = vector.shape_cast %87 : vector<1x1x16x32xf32> to vector<16x32xf32>
    %89 = vector.shape_cast %86 : vector<16x32xf32> to vector<1x1x16x32xf32>
    tpu.vector_store %arg18[%c0_62, %c16, %c1_63, %c0_64], %89 {strides = array<i32>} : memref<2x18x18x32xf32, #tpu.memory_space<vmem>>, vector<1x1x16x32xf32>,
    %90 = vector.extract_strided_slice %23 {offsets = [256, 0], sizes = [16, 32], strides = [1, 1]} : vector<512x32xf32> to vector<16x32xf32>
    %c1_65 = arith.constant 1 : index
    %c1_66 = arith.constant 1 : index
    %c1_67 = arith.constant 1 : index
    %c0_68 = arith.constant 0 : index
    %91 = vector.load %arg18[%c1_65, %c1_66, %c1_67, %c0_68] : memref<2x18x18x32xf32, #tpu.memory_space<vmem>>, vector<1x1x16x32xf32>
    %92 = vector.shape_cast %91 : vector<1x1x16x32xf32> to vector<16x32xf32>
    %93 = vector.shape_cast %90 : vector<16x32xf32> to vector<1x1x16x32xf32>
    tpu.vector_store %arg18[%c1_65, %c1_66, %c1_67, %c0_68], %93 {strides = array<i32>} : memref<2x18x18x32xf32, #tpu.memory_space<vmem>>, vector<1x1x16x32xf32>,
    %94 = vector.extract_strided_slice %23 {offsets = [272, 0], sizes = [16, 32], strides = [1, 1]} : vector<512x32xf32> to vector<16x32xf32>
    %c1_69 = arith.constant 1 : index
    %c2_70 = arith.constant 2 : index
    %c1_71 = arith.constant 1 : index
    %c0_72 = arith.constant 0 : index
    %95 = vector.load %arg18[%c1_69, %c2_70, %c1_71, %c0_72] : memref<2x18x18x32xf32, #tpu.memory_space<vmem>>, vector<1x1x16x32xf32>
    %96 = vector.shape_cast %95 : vector<1x1x16x32xf32> to vector<16x32xf32>
    %97 = vector.shape_cast %94 : vector<16x32xf32> to vector<1x1x16x32xf32>
    tpu.vector_store %arg18[%c1_69, %c2_70, %c1_71, %c0_72], %97 {strides = array<i32>} : memref<2x18x18x32xf32, #tpu.memory_space<vmem>>, vector<1x1x16x32xf32>,
    %98 = vector.extract_strided_slice %23 {offsets = [288, 0], sizes = [16, 32], strides = [1, 1]} : vector<512x32xf32> to vector<16x32xf32>
    %c1_73 = arith.constant 1 : index
    %c3_74 = arith.constant 3 : index
    %c1_75 = arith.constant 1 : index
    %c0_76 = arith.constant 0 : index
    %99 = vector.load %arg18[%c1_73, %c3_74, %c1_75, %c0_76] : memref<2x18x18x32xf32, #tpu.memory_space<vmem>>, vector<1x1x16x32xf32>
    %100 = vector.shape_cast %99 : vector<1x1x16x32xf32> to vector<16x32xf32>
    %101 = vector.shape_cast %98 : vector<16x32xf32> to vector<1x1x16x32xf32>
    tpu.vector_store %arg18[%c1_73, %c3_74, %c1_75, %c0_76], %101 {strides = array<i32>} : memref<2x18x18x32xf32, #tpu.memory_space<vmem>>, vector<1x1x16x32xf32>,
    %102 = vector.extract_strided_slice %23 {offsets = [304, 0], sizes = [16, 32], strides = [1, 1]} : vector<512x32xf32> to vector<16x32xf32>
    %c1_77 = arith.constant 1 : index
    %c4_78 = arith.constant 4 : index
    %c1_79 = arith.constant 1 : index
    %c0_80 = arith.constant 0 : index
    %103 = vector.load %arg18[%c1_77, %c4_78, %c1_79, %c0_80] : memref<2x18x18x32xf32, #tpu.memory_space<vmem>>, vector<1x1x16x32xf32>
    %104 = vector.shape_cast %103 : vector<1x1x16x32xf32> to vector<16x32xf32>
    %105 = vector.shape_cast %102 : vector<16x32xf32> to vector<1x1x16x32xf32>
    tpu.vector_store %arg18[%c1_77, %c4_78, %c1_79, %c0_80], %105 {strides = array<i32>} : memref<2x18x18x32xf32, #tpu.memory_space<vmem>>, vector<1x1x16x32xf32>,
    %106 = vector.extract_strided_slice %23 {offsets = [320, 0], sizes = [16, 32], strides = [1, 1]} : vector<512x32xf32> to vector<16x32xf32>
    %c1_81 = arith.constant 1 : index
    %c5_82 = arith.constant 5 : index
    %c1_83 = arith.constant 1 : index
    %c0_84 = arith.constant 0 : index
    %107 = vector.load %arg18[%c1_81, %c5_82, %c1_83, %c0_84] : memref<2x18x18x32xf32, #tpu.memory_space<vmem>>, vector<1x1x16x32xf32>
    %108 = vector.shape_cast %107 : vector<1x1x16x32xf32> to vector<16x32xf32>
    %109 = vector.shape_cast %106 : vector<16x32xf32> to vector<1x1x16x32xf32>
    tpu.vector_store %arg18[%c1_81, %c5_82, %c1_83, %c0_84], %109 {strides = array<i32>} : memref<2x18x18x32xf32, #tpu.memory_space<vmem>>, vector<1x1x16x32xf32>,
    %110 = vector.extract_strided_slice %23 {offsets = [336, 0], sizes = [16, 32], strides = [1, 1]} : vector<512x32xf32> to vector<16x32xf32>
    %c1_85 = arith.constant 1 : index
    %c6_86 = arith.constant 6 : index
    %c1_87 = arith.constant 1 : index
    %c0_88 = arith.constant 0 : index
    %111 = vector.load %arg18[%c1_85, %c6_86, %c1_87, %c0_88] : memref<2x18x18x32xf32, #tpu.memory_space<vmem>>, vector<1x1x16x32xf32>
    %112 = vector.shape_cast %111 : vector<1x1x16x32xf32> to vector<16x32xf32>
    %113 = vector.shape_cast %110 : vector<16x32xf32> to vector<1x1x16x32xf32>
    tpu.vector_store %arg18[%c1_85, %c6_86, %c1_87, %c0_88], %113 {strides = array<i32>} : memref<2x18x18x32xf32, #tpu.memory_space<vmem>>, vector<1x1x16x32xf32>,
    %114 = vector.extract_strided_slice %23 {offsets = [352, 0], sizes = [16, 32], strides = [1, 1]} : vector<512x32xf32> to vector<16x32xf32>
    %c1_89 = arith.constant 1 : index
    %c7_90 = arith.constant 7 : index
    %c1_91 = arith.constant 1 : index
    %c0_92 = arith.constant 0 : index
    %115 = vector.load %arg18[%c1_89, %c7_90, %c1_91, %c0_92] : memref<2x18x18x32xf32, #tpu.memory_space<vmem>>, vector<1x1x16x32xf32>
    %116 = vector.shape_cast %115 : vector<1x1x16x32xf32> to vector<16x32xf32>
    %117 = vector.shape_cast %114 : vector<16x32xf32> to vector<1x1x16x32xf32>
    tpu.vector_store %arg18[%c1_89, %c7_90, %c1_91, %c0_92], %117 {strides = array<i32>} : memref<2x18x18x32xf32, #tpu.memory_space<vmem>>, vector<1x1x16x32xf32>,
    %118 = vector.extract_strided_slice %23 {offsets = [368, 0], sizes = [16, 32], strides = [1, 1]} : vector<512x32xf32> to vector<16x32xf32>
    %c1_93 = arith.constant 1 : index
    %c8_94 = arith.constant 8 : index
    %c1_95 = arith.constant 1 : index
    %c0_96 = arith.constant 0 : index
    %119 = vector.load %arg18[%c1_93, %c8_94, %c1_95, %c0_96] : memref<2x18x18x32xf32, #tpu.memory_space<vmem>>, vector<1x1x16x32xf32>
    %120 = vector.shape_cast %119 : vector<1x1x16x32xf32> to vector<16x32xf32>
    %121 = vector.shape_cast %118 : vector<16x32xf32> to vector<1x1x16x32xf32>
    tpu.vector_store %arg18[%c1_93, %c8_94, %c1_95, %c0_96], %121 {strides = array<i32>} : memref<2x18x18x32xf32, #tpu.memory_space<vmem>>, vector<1x1x16x32xf32>,
    %122 = vector.extract_strided_slice %23 {offsets = [384, 0], sizes = [16, 32], strides = [1, 1]} : vector<512x32xf32> to vector<16x32xf32>
    %c1_97 = arith.constant 1 : index
    %c9_98 = arith.constant 9 : index
    %c1_99 = arith.constant 1 : index
    %c0_100 = arith.constant 0 : index
    %123 = vector.load %arg18[%c1_97, %c9_98, %c1_99, %c0_100] : memref<2x18x18x32xf32, #tpu.memory_space<vmem>>, vector<1x1x16x32xf32>
    %124 = vector.shape_cast %123 : vector<1x1x16x32xf32> to vector<16x32xf32>
    %125 = vector.shape_cast %122 : vector<16x32xf32> to vector<1x1x16x32xf32>
    tpu.vector_store %arg18[%c1_97, %c9_98, %c1_99, %c0_100], %125 {strides = array<i32>} : memref<2x18x18x32xf32, #tpu.memory_space<vmem>>, vector<1x1x16x32xf32>,
    %126 = vector.extract_strided_slice %23 {offsets = [400, 0], sizes = [16, 32], strides = [1, 1]} : vector<512x32xf32> to vector<16x32xf32>
    %c1_101 = arith.constant 1 : index
    %c10_102 = arith.constant 10 : index
    %c1_103 = arith.constant 1 : index
    %c0_104 = arith.constant 0 : index
    %127 = vector.load %arg18[%c1_101, %c10_102, %c1_103, %c0_104] : memref<2x18x18x32xf32, #tpu.memory_space<vmem>>, vector<1x1x16x32xf32>
    %128 = vector.shape_cast %127 : vector<1x1x16x32xf32> to vector<16x32xf32>
    %129 = vector.shape_cast %126 : vector<16x32xf32> to vector<1x1x16x32xf32>
    tpu.vector_store %arg18[%c1_101, %c10_102, %c1_103, %c0_104], %129 {strides = array<i32>} : memref<2x18x18x32xf32, #tpu.memory_space<vmem>>, vector<1x1x16x32xf32>,
    %130 = vector.extract_strided_slice %23 {offsets = [416, 0], sizes = [16, 32], strides = [1, 1]} : vector<512x32xf32> to vector<16x32xf32>
    %c1_105 = arith.constant 1 : index
    %c11_106 = arith.constant 11 : index
    %c1_107 = arith.constant 1 : index
    %c0_108 = arith.constant 0 : index
    %131 = vector.load %arg18[%c1_105, %c11_106, %c1_107, %c0_108] : memref<2x18x18x32xf32, #tpu.memory_space<vmem>>, vector<1x1x16x32xf32>
    %132 = vector.shape_cast %131 : vector<1x1x16x32xf32> to vector<16x32xf32>
    %133 = vector.shape_cast %130 : vector<16x32xf32> to vector<1x1x16x32xf32>
    tpu.vector_store %arg18[%c1_105, %c11_106, %c1_107, %c0_108], %133 {strides = array<i32>} : memref<2x18x18x32xf32, #tpu.memory_space<vmem>>, vector<1x1x16x32xf32>,
    %134 = vector.extract_strided_slice %23 {offsets = [432, 0], sizes = [16, 32], strides = [1, 1]} : vector<512x32xf32> to vector<16x32xf32>
    %c1_109 = arith.constant 1 : index
    %c12_110 = arith.constant 12 : index
    %c1_111 = arith.constant 1 : index
    %c0_112 = arith.constant 0 : index
    %135 = vector.load %arg18[%c1_109, %c12_110, %c1_111, %c0_112] : memref<2x18x18x32xf32, #tpu.memory_space<vmem>>, vector<1x1x16x32xf32>
    %136 = vector.shape_cast %135 : vector<1x1x16x32xf32> to vector<16x32xf32>
    %137 = vector.shape_cast %134 : vector<16x32xf32> to vector<1x1x16x32xf32>
    tpu.vector_store %arg18[%c1_109, %c12_110, %c1_111, %c0_112], %137 {strides = array<i32>} : memref<2x18x18x32xf32, #tpu.memory_space<vmem>>, vector<1x1x16x32xf32>,
    %138 = vector.extract_strided_slice %23 {offsets = [448, 0], sizes = [16, 32], strides = [1, 1]} : vector<512x32xf32> to vector<16x32xf32>
    %c1_113 = arith.constant 1 : index
    %c13_114 = arith.constant 13 : index
    %c1_115 = arith.constant 1 : index
    %c0_116 = arith.constant 0 : index
    %139 = vector.load %arg18[%c1_113, %c13_114, %c1_115, %c0_116] : memref<2x18x18x32xf32, #tpu.memory_space<vmem>>, vector<1x1x16x32xf32>
    %140 = vector.shape_cast %139 : vector<1x1x16x32xf32> to vector<16x32xf32>
    %141 = vector.shape_cast %138 : vector<16x32xf32> to vector<1x1x16x32xf32>
    tpu.vector_store %arg18[%c1_113, %c13_114, %c1_115, %c0_116], %141 {strides = array<i32>} : memref<2x18x18x32xf32, #tpu.memory_space<vmem>>, vector<1x1x16x32xf32>,
    %142 = vector.extract_strided_slice %23 {offsets = [464, 0], sizes = [16, 32], strides = [1, 1]} : vector<512x32xf32> to vector<16x32xf32>
    %c1_117 = arith.constant 1 : index
    %c14_118 = arith.constant 14 : index
    %c1_119 = arith.constant 1 : index
    %c0_120 = arith.constant 0 : index
    %143 = vector.load %arg18[%c1_117, %c14_118, %c1_119, %c0_120] : memref<2x18x18x32xf32, #tpu.memory_space<vmem>>, vector<1x1x16x32xf32>
    %144 = vector.shape_cast %143 : vector<1x1x16x32xf32> to vector<16x32xf32>
    %145 = vector.shape_cast %142 : vector<16x32xf32> to vector<1x1x16x32xf32>
    tpu.vector_store %arg18[%c1_117, %c14_118, %c1_119, %c0_120], %145 {strides = array<i32>} : memref<2x18x18x32xf32, #tpu.memory_space<vmem>>, vector<1x1x16x32xf32>,
    %146 = vector.extract_strided_slice %23 {offsets = [480, 0], sizes = [16, 32], strides = [1, 1]} : vector<512x32xf32> to vector<16x32xf32>
    %c1_121 = arith.constant 1 : index
    %c15_122 = arith.constant 15 : index
    %c1_123 = arith.constant 1 : index
    %c0_124 = arith.constant 0 : index
    %147 = vector.load %arg18[%c1_121, %c15_122, %c1_123, %c0_124] : memref<2x18x18x32xf32, #tpu.memory_space<vmem>>, vector<1x1x16x32xf32>
    %148 = vector.shape_cast %147 : vector<1x1x16x32xf32> to vector<16x32xf32>
    %149 = vector.shape_cast %146 : vector<16x32xf32> to vector<1x1x16x32xf32>
    tpu.vector_store %arg18[%c1_121, %c15_122, %c1_123, %c0_124], %149 {strides = array<i32>} : memref<2x18x18x32xf32, #tpu.memory_space<vmem>>, vector<1x1x16x32xf32>,
    %150 = vector.extract_strided_slice %23 {offsets = [496, 0], sizes = [16, 32], strides = [1, 1]} : vector<512x32xf32> to vector<16x32xf32>
    %c1_125 = arith.constant 1 : index
    %c16_126 = arith.constant 16 : index
    %c1_127 = arith.constant 1 : index
    %c0_128 = arith.constant 0 : index
    %151 = vector.load %arg18[%c1_125, %c16_126, %c1_127, %c0_128] : memref<2x18x18x32xf32, #tpu.memory_space<vmem>>, vector<1x1x16x32xf32>
    %152 = vector.shape_cast %151 : vector<1x1x16x32xf32> to vector<16x32xf32>
    %153 = vector.shape_cast %150 : vector<16x32xf32> to vector<1x1x16x32xf32>
    tpu.vector_store %arg18[%c1_125, %c16_126, %c1_127, %c0_128], %153 {strides = array<i32>} : memref<2x18x18x32xf32, #tpu.memory_space<vmem>>, vector<1x1x16x32xf32>,
    %cst_129 = arith.constant 0.000000e+00 : f32
    %154 = vector.broadcast %cst_129 : f32 to vector<2x16x16x32xf32>
    %c0_130 = arith.constant 0 : index
    %c0_131 = arith.constant 0 : index
    %c0_132 = arith.constant 0 : index
    %c0_133 = arith.constant 0 : index
    %155 = vector.load %arg18[%c0_130, %c0_131, %c0_132, %c0_133] : memref<2x18x18x32xf32, #tpu.memory_space<vmem>>, vector<2x16x16x32xf32>
    %c0_134 = arith.constant 0 : index
    %c0_135 = arith.constant 0 : index
    %156 = vector.load %arg5[%c0_134, %c0_135] : memref<9x32xf32, #tpu.memory_space<vmem>>, vector<1x32xf32>
    %157 = vector.shape_cast %156 : vector<1x32xf32> to vector<1x1x1x32xf32>
    %158 = vector.broadcast %157 : vector<1x1x1x32xf32> to vector<2x16x16x32xf32>
    %159 = arith.mulf %155, %158 : vector<2x16x16x32xf32>
    %160 = arith.addf %154, %159 : vector<2x16x16x32xf32>
    %c0_136 = arith.constant 0 : index
    %c0_137 = arith.constant 0 : index
    %c1_138 = arith.constant 1 : index
    %c0_139 = arith.constant 0 : index
    %161 = vector.load %arg18[%c0_136, %c0_137, %c1_138, %c0_139] : memref<2x18x18x32xf32, #tpu.memory_space<vmem>>, vector<2x16x16x32xf32>
    %c1_140 = arith.constant 1 : index
    %c0_141 = arith.constant 0 : index
    %162 = vector.load %arg5[%c1_140, %c0_141] : memref<9x32xf32, #tpu.memory_space<vmem>>, vector<1x32xf32>
    %163 = vector.shape_cast %162 : vector<1x32xf32> to vector<1x1x1x32xf32>
    %164 = vector.broadcast %163 : vector<1x1x1x32xf32> to vector<2x16x16x32xf32>
    %165 = arith.mulf %161, %164 : vector<2x16x16x32xf32>
    %166 = arith.addf %160, %165 : vector<2x16x16x32xf32>
    %c0_142 = arith.constant 0 : index
    %c0_143 = arith.constant 0 : index
    %c2_144 = arith.constant 2 : index
    %c0_145 = arith.constant 0 : index
    %167 = vector.load %arg18[%c0_142, %c0_143, %c2_144, %c0_145] : memref<2x18x18x32xf32, #tpu.memory_space<vmem>>, vector<2x16x16x32xf32>
    %c2_146 = arith.constant 2 : index
    %c0_147 = arith.constant 0 : index
    %168 = vector.load %arg5[%c2_146, %c0_147] : memref<9x32xf32, #tpu.memory_space<vmem>>, vector<1x32xf32>
    %169 = vector.shape_cast %168 : vector<1x32xf32> to vector<1x1x1x32xf32>
    %170 = vector.broadcast %169 : vector<1x1x1x32xf32> to vector<2x16x16x32xf32>
    %171 = arith.mulf %167, %170 : vector<2x16x16x32xf32>
    %172 = arith.addf %166, %171 : vector<2x16x16x32xf32>
    %c0_148 = arith.constant 0 : index
    %c1_149 = arith.constant 1 : index
    %c0_150 = arith.constant 0 : index
    %c0_151 = arith.constant 0 : index
    %173 = vector.load %arg18[%c0_148, %c1_149, %c0_150, %c0_151] : memref<2x18x18x32xf32, #tpu.memory_space<vmem>>, vector<2x16x16x32xf32>
    %c3_152 = arith.constant 3 : index
    %c0_153 = arith.constant 0 : index
    %174 = vector.load %arg5[%c3_152, %c0_153] : memref<9x32xf32, #tpu.memory_space<vmem>>, vector<1x32xf32>
    %175 = vector.shape_cast %174 : vector<1x32xf32> to vector<1x1x1x32xf32>
    %176 = vector.broadcast %175 : vector<1x1x1x32xf32> to vector<2x16x16x32xf32>
    %177 = arith.mulf %173, %176 : vector<2x16x16x32xf32>
    %178 = arith.addf %172, %177 : vector<2x16x16x32xf32>
    %c0_154 = arith.constant 0 : index
    %c1_155 = arith.constant 1 : index
    %c1_156 = arith.constant 1 : index
    %c0_157 = arith.constant 0 : index
    %179 = vector.load %arg18[%c0_154, %c1_155, %c1_156, %c0_157] : memref<2x18x18x32xf32, #tpu.memory_space<vmem>>, vector<2x16x16x32xf32>
    %c4_158 = arith.constant 4 : index
    %c0_159 = arith.constant 0 : index
    %180 = vector.load %arg5[%c4_158, %c0_159] : memref<9x32xf32, #tpu.memory_space<vmem>>, vector<1x32xf32>
    %181 = vector.shape_cast %180 : vector<1x32xf32> to vector<1x1x1x32xf32>
    %182 = vector.broadcast %181 : vector<1x1x1x32xf32> to vector<2x16x16x32xf32>
    %183 = arith.mulf %179, %182 : vector<2x16x16x32xf32>
    %184 = arith.addf %178, %183 : vector<2x16x16x32xf32>
    %c0_160 = arith.constant 0 : index
    %c1_161 = arith.constant 1 : index
    %c2_162 = arith.constant 2 : index
    %c0_163 = arith.constant 0 : index
    %185 = vector.load %arg18[%c0_160, %c1_161, %c2_162, %c0_163] : memref<2x18x18x32xf32, #tpu.memory_space<vmem>>, vector<2x16x16x32xf32>
    %c5_164 = arith.constant 5 : index
    %c0_165 = arith.constant 0 : index
    %186 = vector.load %arg5[%c5_164, %c0_165] : memref<9x32xf32, #tpu.memory_space<vmem>>, vector<1x32xf32>
    %187 = vector.shape_cast %186 : vector<1x32xf32> to vector<1x1x1x32xf32>
    %188 = vector.broadcast %187 : vector<1x1x1x32xf32> to vector<2x16x16x32xf32>
    %189 = arith.mulf %185, %188 : vector<2x16x16x32xf32>
    %190 = arith.addf %184, %189 : vector<2x16x16x32xf32>
    %c0_166 = arith.constant 0 : index
    %c2_167 = arith.constant 2 : index
    %c0_168 = arith.constant 0 : index
    %c0_169 = arith.constant 0 : index
    %191 = vector.load %arg18[%c0_166, %c2_167, %c0_168, %c0_169] : memref<2x18x18x32xf32, #tpu.memory_space<vmem>>, vector<2x16x16x32xf32>
    %c6_170 = arith.constant 6 : index
    %c0_171 = arith.constant 0 : index
    %192 = vector.load %arg5[%c6_170, %c0_171] : memref<9x32xf32, #tpu.memory_space<vmem>>, vector<1x32xf32>
    %193 = vector.shape_cast %192 : vector<1x32xf32> to vector<1x1x1x32xf32>
    %194 = vector.broadcast %193 : vector<1x1x1x32xf32> to vector<2x16x16x32xf32>
    %195 = arith.mulf %191, %194 : vector<2x16x16x32xf32>
    %196 = arith.addf %190, %195 : vector<2x16x16x32xf32>
    %c0_172 = arith.constant 0 : index
    %c2_173 = arith.constant 2 : index
    %c1_174 = arith.constant 1 : index
    %c0_175 = arith.constant 0 : index
    %197 = vector.load %arg18[%c0_172, %c2_173, %c1_174, %c0_175] : memref<2x18x18x32xf32, #tpu.memory_space<vmem>>, vector<2x16x16x32xf32>
    %c7_176 = arith.constant 7 : index
    %c0_177 = arith.constant 0 : index
    %198 = vector.load %arg5[%c7_176, %c0_177] : memref<9x32xf32, #tpu.memory_space<vmem>>, vector<1x32xf32>
    %199 = vector.shape_cast %198 : vector<1x32xf32> to vector<1x1x1x32xf32>
    %200 = vector.broadcast %199 : vector<1x1x1x32xf32> to vector<2x16x16x32xf32>
    %201 = arith.mulf %197, %200 : vector<2x16x16x32xf32>
    %202 = arith.addf %196, %201 : vector<2x16x16x32xf32>
    %c0_178 = arith.constant 0 : index
    %c2_179 = arith.constant 2 : index
    %c2_180 = arith.constant 2 : index
    %c0_181 = arith.constant 0 : index
    %203 = vector.load %arg18[%c0_178, %c2_179, %c2_180, %c0_181] : memref<2x18x18x32xf32, #tpu.memory_space<vmem>>, vector<2x16x16x32xf32>
    %c8_182 = arith.constant 8 : index
    %c0_183 = arith.constant 0 : index
    %204 = vector.load %arg5[%c8_182, %c0_183] : memref<9x32xf32, #tpu.memory_space<vmem>>, vector<1x32xf32>
    %205 = vector.shape_cast %204 : vector<1x32xf32> to vector<1x1x1x32xf32>
    %206 = vector.broadcast %205 : vector<1x1x1x32xf32> to vector<2x16x16x32xf32>
    %207 = arith.mulf %203, %206 : vector<2x16x16x32xf32>
    %208 = arith.addf %202, %207 : vector<2x16x16x32xf32>
    %c0_184 = arith.constant 0 : index
    %c0_185 = arith.constant 0 : index
    %209 = vector.load %arg6[%c0_184, %c0_185] : memref<1x32xf32, #tpu.memory_space<vmem>>, vector<1x32xf32>
    %210 = vector.shape_cast %209 : vector<1x32xf32> to vector<1x1x1x32xf32>
    %211 = vector.broadcast %210 : vector<1x1x1x32xf32> to vector<2x16x16x32xf32>
    %212 = arith.addf %208, %211 : vector<2x16x16x32xf32>
    %213 = arith.negf %212 : vector<2x16x16x32xf32>
    %214 = math.exp %213 : vector<2x16x16x32xf32>
    %cst_186 = arith.constant 1.000000e+00 : f32
    %215 = vector.broadcast %cst_186 : f32 to vector<2x16x16x32xf32>
    %216 = arith.addf %215, %214 : vector<2x16x16x32xf32>
    %217 = arith.divf %215, %216 : vector<2x16x16x32xf32>
    %218 = arith.mulf %212, %217 : vector<2x16x16x32xf32>
    %cst_187 = arith.constant dense<0.000000e+00> : vector<2x16x32xf32>
    %219 = vector.multi_reduction <add>, %218, %cst_187 [1] : vector<2x16x16x32xf32> to vector<2x16x32xf32>
    %cst_188 = arith.constant dense<0.000000e+00> : vector<2x32xf32>
    %220 = vector.multi_reduction <add>, %219, %cst_188 [1] : vector<2x16x32xf32> to vector<2x32xf32>
    %cst_189 = arith.constant 3.906250e-03 : f32
    %221 = vector.broadcast %cst_189 : f32 to vector<2x32xf32>
    %222 = arith.mulf %220, %221 : vector<2x32xf32>
    %c0_190 = arith.constant 0 : index
    %c0_191 = arith.constant 0 : index
    %223 = vector.load %arg7[%c0_190, %c0_191] : memref<32x8xf32, #tpu.memory_space<vmem>>, vector<32x8xf32>
    %cst_192 = arith.constant dense<0.000000e+00> : vector<2x8xf32>
    %224 = tpu.matmul %222, %223, %cst_192 {dimension_numbers = #tpu.dot_dimension_numbers<[1], [0], [0], [1], [0, 0, 1, 1], [], []>} : vector<2x32xf32>, vector<32x8xf32>, vector<2x8xf32> -> vector<2x8xf32>
    %c0_193 = arith.constant 0 : index
    %c0_194 = arith.constant 0 : index
    %225 = vector.load %arg8[%c0_193, %c0_194] : memref<1x8xf32, #tpu.memory_space<vmem>>, vector<1x8xf32>
    %226 = vector.broadcast %225 : vector<1x8xf32> to vector<2x8xf32>
    %227 = arith.addf %224, %226 : vector<2x8xf32>
    %228 = arith.negf %227 : vector<2x8xf32>
    %229 = math.exp %228 : vector<2x8xf32>
    %cst_195 = arith.constant 1.000000e+00 : f32
    %230 = vector.broadcast %cst_195 : f32 to vector<2x8xf32>
    %231 = arith.addf %230, %229 : vector<2x8xf32>
    %232 = arith.divf %230, %231 : vector<2x8xf32>
    %233 = arith.mulf %227, %232 : vector<2x8xf32>
    %c0_196 = arith.constant 0 : index
    %c0_197 = arith.constant 0 : index
    %234 = vector.load %arg9[%c0_196, %c0_197] : memref<8x32xf32, #tpu.memory_space<vmem>>, vector<8x32xf32>
    %cst_198 = arith.constant dense<0.000000e+00> : vector<2x32xf32>
    %235 = tpu.matmul %233, %234, %cst_198 {dimension_numbers = #tpu.dot_dimension_numbers<[1], [0], [0], [1], [0, 0, 1, 1], [], []>} : vector<2x8xf32>, vector<8x32xf32>, vector<2x32xf32> -> vector<2x32xf32>
    %c0_199 = arith.constant 0 : index
    %c0_200 = arith.constant 0 : index
    %236 = vector.load %arg10[%c0_199, %c0_200] : memref<1x32xf32, #tpu.memory_space<vmem>>, vector<1x32xf32>
    %237 = vector.broadcast %236 : vector<1x32xf32> to vector<2x32xf32>
    %238 = arith.addf %235, %237 : vector<2x32xf32>
    %239 = arith.negf %238 : vector<2x32xf32>
    %240 = math.exp %239 : vector<2x32xf32>
    %cst_201 = arith.constant 1.000000e+00 : f32
    %241 = vector.broadcast %cst_201 : f32 to vector<2x32xf32>
    %242 = arith.addf %241, %240 : vector<2x32xf32>
    %243 = arith.divf %241, %242 : vector<2x32xf32>
    %244 = vector.extract_strided_slice %243 {offsets = [0, 0], sizes = [1, 32], strides = [1, 1]} : vector<2x32xf32> to vector<1x32xf32>
    %245 = vector.extract_strided_slice %218 {offsets = [0, 0, 0, 0], sizes = [1, 1, 16, 32], strides = [1, 1, 1, 1]} : vector<2x16x16x32xf32> to vector<1x1x16x32xf32>
    %246 = vector.shape_cast %245 : vector<1x1x16x32xf32> to vector<16x32xf32>
    %247 = vector.broadcast %244 : vector<1x32xf32> to vector<16x32xf32>
    %248 = arith.mulf %246, %247 : vector<16x32xf32>
    %c0_202 = arith.constant 0 : index
    %c0_203 = arith.constant 0 : index
    %249 = vector.load %arg19[%c0_202, %c0_203] : memref<512x32xf32, #tpu.memory_space<vmem>>, vector<16x32xf32>
    tpu.vector_store %arg19[%c0_202, %c0_203], %248 {strides = array<i32>} : memref<512x32xf32, #tpu.memory_space<vmem>>, vector<16x32xf32>,
    %250 = vector.extract_strided_slice %218 {offsets = [0, 1, 0, 0], sizes = [1, 1, 16, 32], strides = [1, 1, 1, 1]} : vector<2x16x16x32xf32> to vector<1x1x16x32xf32>
    %251 = vector.shape_cast %250 : vector<1x1x16x32xf32> to vector<16x32xf32>
    %252 = vector.broadcast %244 : vector<1x32xf32> to vector<16x32xf32>
    %253 = arith.mulf %251, %252 : vector<16x32xf32>
    %c16_204 = arith.constant 16 : index
    %c0_205 = arith.constant 0 : index
    %254 = vector.load %arg19[%c16_204, %c0_205] : memref<512x32xf32, #tpu.memory_space<vmem>>, vector<16x32xf32>
    tpu.vector_store %arg19[%c16_204, %c0_205], %253 {strides = array<i32>} : memref<512x32xf32, #tpu.memory_space<vmem>>, vector<16x32xf32>,
    %255 = vector.extract_strided_slice %218 {offsets = [0, 2, 0, 0], sizes = [1, 1, 16, 32], strides = [1, 1, 1, 1]} : vector<2x16x16x32xf32> to vector<1x1x16x32xf32>
    %256 = vector.shape_cast %255 : vector<1x1x16x32xf32> to vector<16x32xf32>
    %257 = vector.broadcast %244 : vector<1x32xf32> to vector<16x32xf32>
    %258 = arith.mulf %256, %257 : vector<16x32xf32>
    %c32 = arith.constant 32 : index
    %c0_206 = arith.constant 0 : index
    %259 = vector.load %arg19[%c32, %c0_206] : memref<512x32xf32, #tpu.memory_space<vmem>>, vector<16x32xf32>
    tpu.vector_store %arg19[%c32, %c0_206], %258 {strides = array<i32>} : memref<512x32xf32, #tpu.memory_space<vmem>>, vector<16x32xf32>,
    %260 = vector.extract_strided_slice %218 {offsets = [0, 3, 0, 0], sizes = [1, 1, 16, 32], strides = [1, 1, 1, 1]} : vector<2x16x16x32xf32> to vector<1x1x16x32xf32>
    %261 = vector.shape_cast %260 : vector<1x1x16x32xf32> to vector<16x32xf32>
    %262 = vector.broadcast %244 : vector<1x32xf32> to vector<16x32xf32>
    %263 = arith.mulf %261, %262 : vector<16x32xf32>
    %c48 = arith.constant 48 : index
    %c0_207 = arith.constant 0 : index
    %264 = vector.load %arg19[%c48, %c0_207] : memref<512x32xf32, #tpu.memory_space<vmem>>, vector<16x32xf32>
    tpu.vector_store %arg19[%c48, %c0_207], %263 {strides = array<i32>} : memref<512x32xf32, #tpu.memory_space<vmem>>, vector<16x32xf32>,
    %265 = vector.extract_strided_slice %218 {offsets = [0, 4, 0, 0], sizes = [1, 1, 16, 32], strides = [1, 1, 1, 1]} : vector<2x16x16x32xf32> to vector<1x1x16x32xf32>
    %266 = vector.shape_cast %265 : vector<1x1x16x32xf32> to vector<16x32xf32>
    %267 = vector.broadcast %244 : vector<1x32xf32> to vector<16x32xf32>
    %268 = arith.mulf %266, %267 : vector<16x32xf32>
    %c64 = arith.constant 64 : index
    %c0_208 = arith.constant 0 : index
    %269 = vector.load %arg19[%c64, %c0_208] : memref<512x32xf32, #tpu.memory_space<vmem>>, vector<16x32xf32>
    tpu.vector_store %arg19[%c64, %c0_208], %268 {strides = array<i32>} : memref<512x32xf32, #tpu.memory_space<vmem>>, vector<16x32xf32>,
    %270 = vector.extract_strided_slice %218 {offsets = [0, 5, 0, 0], sizes = [1, 1, 16, 32], strides = [1, 1, 1, 1]} : vector<2x16x16x32xf32> to vector<1x1x16x32xf32>
    %271 = vector.shape_cast %270 : vector<1x1x16x32xf32> to vector<16x32xf32>
    %272 = vector.broadcast %244 : vector<1x32xf32> to vector<16x32xf32>
    %273 = arith.mulf %271, %272 : vector<16x32xf32>
    %c80 = arith.constant 80 : index
    %c0_209 = arith.constant 0 : index
    %274 = vector.load %arg19[%c80, %c0_209] : memref<512x32xf32, #tpu.memory_space<vmem>>, vector<16x32xf32>
    tpu.vector_store %arg19[%c80, %c0_209], %273 {strides = array<i32>} : memref<512x32xf32, #tpu.memory_space<vmem>>, vector<16x32xf32>,
    %275 = vector.extract_strided_slice %218 {offsets = [0, 6, 0, 0], sizes = [1, 1, 16, 32], strides = [1, 1, 1, 1]} : vector<2x16x16x32xf32> to vector<1x1x16x32xf32>
    %276 = vector.shape_cast %275 : vector<1x1x16x32xf32> to vector<16x32xf32>
    %277 = vector.broadcast %244 : vector<1x32xf32> to vector<16x32xf32>
    %278 = arith.mulf %276, %277 : vector<16x32xf32>
    %c96 = arith.constant 96 : index
    %c0_210 = arith.constant 0 : index
    %279 = vector.load %arg19[%c96, %c0_210] : memref<512x32xf32, #tpu.memory_space<vmem>>, vector<16x32xf32>
    tpu.vector_store %arg19[%c96, %c0_210], %278 {strides = array<i32>} : memref<512x32xf32, #tpu.memory_space<vmem>>, vector<16x32xf32>,
    %280 = vector.extract_strided_slice %218 {offsets = [0, 7, 0, 0], sizes = [1, 1, 16, 32], strides = [1, 1, 1, 1]} : vector<2x16x16x32xf32> to vector<1x1x16x32xf32>
    %281 = vector.shape_cast %280 : vector<1x1x16x32xf32> to vector<16x32xf32>
    %282 = vector.broadcast %244 : vector<1x32xf32> to vector<16x32xf32>
    %283 = arith.mulf %281, %282 : vector<16x32xf32>
    %c112 = arith.constant 112 : index
    %c0_211 = arith.constant 0 : index
    %284 = vector.load %arg19[%c112, %c0_211] : memref<512x32xf32, #tpu.memory_space<vmem>>, vector<16x32xf32>
    tpu.vector_store %arg19[%c112, %c0_211], %283 {strides = array<i32>} : memref<512x32xf32, #tpu.memory_space<vmem>>, vector<16x32xf32>,
    %285 = vector.extract_strided_slice %218 {offsets = [0, 8, 0, 0], sizes = [1, 1, 16, 32], strides = [1, 1, 1, 1]} : vector<2x16x16x32xf32> to vector<1x1x16x32xf32>
    %286 = vector.shape_cast %285 : vector<1x1x16x32xf32> to vector<16x32xf32>
    %287 = vector.broadcast %244 : vector<1x32xf32> to vector<16x32xf32>
    %288 = arith.mulf %286, %287 : vector<16x32xf32>
    %c128 = arith.constant 128 : index
    %c0_212 = arith.constant 0 : index
    %289 = vector.load %arg19[%c128, %c0_212] : memref<512x32xf32, #tpu.memory_space<vmem>>, vector<16x32xf32>
    tpu.vector_store %arg19[%c128, %c0_212], %288 {strides = array<i32>} : memref<512x32xf32, #tpu.memory_space<vmem>>, vector<16x32xf32>,
    %290 = vector.extract_strided_slice %218 {offsets = [0, 9, 0, 0], sizes = [1, 1, 16, 32], strides = [1, 1, 1, 1]} : vector<2x16x16x32xf32> to vector<1x1x16x32xf32>
    %291 = vector.shape_cast %290 : vector<1x1x16x32xf32> to vector<16x32xf32>
    %292 = vector.broadcast %244 : vector<1x32xf32> to vector<16x32xf32>
    %293 = arith.mulf %291, %292 : vector<16x32xf32>
    %c144 = arith.constant 144 : index
    %c0_213 = arith.constant 0 : index
    %294 = vector.load %arg19[%c144, %c0_213] : memref<512x32xf32, #tpu.memory_space<vmem>>, vector<16x32xf32>
    tpu.vector_store %arg19[%c144, %c0_213], %293 {strides = array<i32>} : memref<512x32xf32, #tpu.memory_space<vmem>>, vector<16x32xf32>,
    %295 = vector.extract_strided_slice %218 {offsets = [0, 10, 0, 0], sizes = [1, 1, 16, 32], strides = [1, 1, 1, 1]} : vector<2x16x16x32xf32> to vector<1x1x16x32xf32>
    %296 = vector.shape_cast %295 : vector<1x1x16x32xf32> to vector<16x32xf32>
    %297 = vector.broadcast %244 : vector<1x32xf32> to vector<16x32xf32>
    %298 = arith.mulf %296, %297 : vector<16x32xf32>
    %c160 = arith.constant 160 : index
    %c0_214 = arith.constant 0 : index
    %299 = vector.load %arg19[%c160, %c0_214] : memref<512x32xf32, #tpu.memory_space<vmem>>, vector<16x32xf32>
    tpu.vector_store %arg19[%c160, %c0_214], %298 {strides = array<i32>} : memref<512x32xf32, #tpu.memory_space<vmem>>, vector<16x32xf32>,
    %300 = vector.extract_strided_slice %218 {offsets = [0, 11, 0, 0], sizes = [1, 1, 16, 32], strides = [1, 1, 1, 1]} : vector<2x16x16x32xf32> to vector<1x1x16x32xf32>
    %301 = vector.shape_cast %300 : vector<1x1x16x32xf32> to vector<16x32xf32>
    %302 = vector.broadcast %244 : vector<1x32xf32> to vector<16x32xf32>
    %303 = arith.mulf %301, %302 : vector<16x32xf32>
    %c176 = arith.constant 176 : index
    %c0_215 = arith.constant 0 : index
    %304 = vector.load %arg19[%c176, %c0_215] : memref<512x32xf32, #tpu.memory_space<vmem>>, vector<16x32xf32>
    tpu.vector_store %arg19[%c176, %c0_215], %303 {strides = array<i32>} : memref<512x32xf32, #tpu.memory_space<vmem>>, vector<16x32xf32>,
    %305 = vector.extract_strided_slice %218 {offsets = [0, 12, 0, 0], sizes = [1, 1, 16, 32], strides = [1, 1, 1, 1]} : vector<2x16x16x32xf32> to vector<1x1x16x32xf32>
    %306 = vector.shape_cast %305 : vector<1x1x16x32xf32> to vector<16x32xf32>
    %307 = vector.broadcast %244 : vector<1x32xf32> to vector<16x32xf32>
    %308 = arith.mulf %306, %307 : vector<16x32xf32>
    %c192 = arith.constant 192 : index
    %c0_216 = arith.constant 0 : index
    %309 = vector.load %arg19[%c192, %c0_216] : memref<512x32xf32, #tpu.memory_space<vmem>>, vector<16x32xf32>
    tpu.vector_store %arg19[%c192, %c0_216], %308 {strides = array<i32>} : memref<512x32xf32, #tpu.memory_space<vmem>>, vector<16x32xf32>,
    %310 = vector.extract_strided_slice %218 {offsets = [0, 13, 0, 0], sizes = [1, 1, 16, 32], strides = [1, 1, 1, 1]} : vector<2x16x16x32xf32> to vector<1x1x16x32xf32>
    %311 = vector.shape_cast %310 : vector<1x1x16x32xf32> to vector<16x32xf32>
    %312 = vector.broadcast %244 : vector<1x32xf32> to vector<16x32xf32>
    %313 = arith.mulf %311, %312 : vector<16x32xf32>
    %c208 = arith.constant 208 : index
    %c0_217 = arith.constant 0 : index
    %314 = vector.load %arg19[%c208, %c0_217] : memref<512x32xf32, #tpu.memory_space<vmem>>, vector<16x32xf32>
    tpu.vector_store %arg19[%c208, %c0_217], %313 {strides = array<i32>} : memref<512x32xf32, #tpu.memory_space<vmem>>, vector<16x32xf32>,
    %315 = vector.extract_strided_slice %218 {offsets = [0, 14, 0, 0], sizes = [1, 1, 16, 32], strides = [1, 1, 1, 1]} : vector<2x16x16x32xf32> to vector<1x1x16x32xf32>
    %316 = vector.shape_cast %315 : vector<1x1x16x32xf32> to vector<16x32xf32>
    %317 = vector.broadcast %244 : vector<1x32xf32> to vector<16x32xf32>
    %318 = arith.mulf %316, %317 : vector<16x32xf32>
    %c224 = arith.constant 224 : index
    %c0_218 = arith.constant 0 : index
    %319 = vector.load %arg19[%c224, %c0_218] : memref<512x32xf32, #tpu.memory_space<vmem>>, vector<16x32xf32>
    tpu.vector_store %arg19[%c224, %c0_218], %318 {strides = array<i32>} : memref<512x32xf32, #tpu.memory_space<vmem>>, vector<16x32xf32>,
    %320 = vector.extract_strided_slice %218 {offsets = [0, 15, 0, 0], sizes = [1, 1, 16, 32], strides = [1, 1, 1, 1]} : vector<2x16x16x32xf32> to vector<1x1x16x32xf32>
    %321 = vector.shape_cast %320 : vector<1x1x16x32xf32> to vector<16x32xf32>
    %322 = vector.broadcast %244 : vector<1x32xf32> to vector<16x32xf32>
    %323 = arith.mulf %321, %322 : vector<16x32xf32>
    %c240 = arith.constant 240 : index
    %c0_219 = arith.constant 0 : index
    %324 = vector.load %arg19[%c240, %c0_219] : memref<512x32xf32, #tpu.memory_space<vmem>>, vector<16x32xf32>
    tpu.vector_store %arg19[%c240, %c0_219], %323 {strides = array<i32>} : memref<512x32xf32, #tpu.memory_space<vmem>>, vector<16x32xf32>,
    %325 = vector.extract_strided_slice %243 {offsets = [1, 0], sizes = [1, 32], strides = [1, 1]} : vector<2x32xf32> to vector<1x32xf32>
    %326 = vector.extract_strided_slice %218 {offsets = [1, 0, 0, 0], sizes = [1, 1, 16, 32], strides = [1, 1, 1, 1]} : vector<2x16x16x32xf32> to vector<1x1x16x32xf32>
    %327 = vector.shape_cast %326 : vector<1x1x16x32xf32> to vector<16x32xf32>
    %328 = vector.broadcast %325 : vector<1x32xf32> to vector<16x32xf32>
    %329 = arith.mulf %327, %328 : vector<16x32xf32>
    %c256 = arith.constant 256 : index
    %c0_220 = arith.constant 0 : index
    %330 = vector.load %arg19[%c256, %c0_220] : memref<512x32xf32, #tpu.memory_space<vmem>>, vector<16x32xf32>
    tpu.vector_store %arg19[%c256, %c0_220], %329 {strides = array<i32>} : memref<512x32xf32, #tpu.memory_space<vmem>>, vector<16x32xf32>,
    %331 = vector.extract_strided_slice %218 {offsets = [1, 1, 0, 0], sizes = [1, 1, 16, 32], strides = [1, 1, 1, 1]} : vector<2x16x16x32xf32> to vector<1x1x16x32xf32>
    %332 = vector.shape_cast %331 : vector<1x1x16x32xf32> to vector<16x32xf32>
    %333 = vector.broadcast %325 : vector<1x32xf32> to vector<16x32xf32>
    %334 = arith.mulf %332, %333 : vector<16x32xf32>
    %c272 = arith.constant 272 : index
    %c0_221 = arith.constant 0 : index
    %335 = vector.load %arg19[%c272, %c0_221] : memref<512x32xf32, #tpu.memory_space<vmem>>, vector<16x32xf32>
    tpu.vector_store %arg19[%c272, %c0_221], %334 {strides = array<i32>} : memref<512x32xf32, #tpu.memory_space<vmem>>, vector<16x32xf32>,
    %336 = vector.extract_strided_slice %218 {offsets = [1, 2, 0, 0], sizes = [1, 1, 16, 32], strides = [1, 1, 1, 1]} : vector<2x16x16x32xf32> to vector<1x1x16x32xf32>
    %337 = vector.shape_cast %336 : vector<1x1x16x32xf32> to vector<16x32xf32>
    %338 = vector.broadcast %325 : vector<1x32xf32> to vector<16x32xf32>
    %339 = arith.mulf %337, %338 : vector<16x32xf32>
    %c288 = arith.constant 288 : index
    %c0_222 = arith.constant 0 : index
    %340 = vector.load %arg19[%c288, %c0_222] : memref<512x32xf32, #tpu.memory_space<vmem>>, vector<16x32xf32>
    tpu.vector_store %arg19[%c288, %c0_222], %339 {strides = array<i32>} : memref<512x32xf32, #tpu.memory_space<vmem>>, vector<16x32xf32>,
    %341 = vector.extract_strided_slice %218 {offsets = [1, 3, 0, 0], sizes = [1, 1, 16, 32], strides = [1, 1, 1, 1]} : vector<2x16x16x32xf32> to vector<1x1x16x32xf32>
    %342 = vector.shape_cast %341 : vector<1x1x16x32xf32> to vector<16x32xf32>
    %343 = vector.broadcast %325 : vector<1x32xf32> to vector<16x32xf32>
    %344 = arith.mulf %342, %343 : vector<16x32xf32>
    %c304 = arith.constant 304 : index
    %c0_223 = arith.constant 0 : index
    %345 = vector.load %arg19[%c304, %c0_223] : memref<512x32xf32, #tpu.memory_space<vmem>>, vector<16x32xf32>
    tpu.vector_store %arg19[%c304, %c0_223], %344 {strides = array<i32>} : memref<512x32xf32, #tpu.memory_space<vmem>>, vector<16x32xf32>,
    %346 = vector.extract_strided_slice %218 {offsets = [1, 4, 0, 0], sizes = [1, 1, 16, 32], strides = [1, 1, 1, 1]} : vector<2x16x16x32xf32> to vector<1x1x16x32xf32>
    %347 = vector.shape_cast %346 : vector<1x1x16x32xf32> to vector<16x32xf32>
    %348 = vector.broadcast %325 : vector<1x32xf32> to vector<16x32xf32>
    %349 = arith.mulf %347, %348 : vector<16x32xf32>
    %c320 = arith.constant 320 : index
    %c0_224 = arith.constant 0 : index
    %350 = vector.load %arg19[%c320, %c0_224] : memref<512x32xf32, #tpu.memory_space<vmem>>, vector<16x32xf32>
    tpu.vector_store %arg19[%c320, %c0_224], %349 {strides = array<i32>} : memref<512x32xf32, #tpu.memory_space<vmem>>, vector<16x32xf32>,
    %351 = vector.extract_strided_slice %218 {offsets = [1, 5, 0, 0], sizes = [1, 1, 16, 32], strides = [1, 1, 1, 1]} : vector<2x16x16x32xf32> to vector<1x1x16x32xf32>
    %352 = vector.shape_cast %351 : vector<1x1x16x32xf32> to vector<16x32xf32>
    %353 = vector.broadcast %325 : vector<1x32xf32> to vector<16x32xf32>
    %354 = arith.mulf %352, %353 : vector<16x32xf32>
    %c336 = arith.constant 336 : index
    %c0_225 = arith.constant 0 : index
    %355 = vector.load %arg19[%c336, %c0_225] : memref<512x32xf32, #tpu.memory_space<vmem>>, vector<16x32xf32>
    tpu.vector_store %arg19[%c336, %c0_225], %354 {strides = array<i32>} : memref<512x32xf32, #tpu.memory_space<vmem>>, vector<16x32xf32>,
    %356 = vector.extract_strided_slice %218 {offsets = [1, 6, 0, 0], sizes = [1, 1, 16, 32], strides = [1, 1, 1, 1]} : vector<2x16x16x32xf32> to vector<1x1x16x32xf32>
    %357 = vector.shape_cast %356 : vector<1x1x16x32xf32> to vector<16x32xf32>
    %358 = vector.broadcast %325 : vector<1x32xf32> to vector<16x32xf32>
    %359 = arith.mulf %357, %358 : vector<16x32xf32>
    %c352 = arith.constant 352 : index
    %c0_226 = arith.constant 0 : index
    %360 = vector.load %arg19[%c352, %c0_226] : memref<512x32xf32, #tpu.memory_space<vmem>>, vector<16x32xf32>
    tpu.vector_store %arg19[%c352, %c0_226], %359 {strides = array<i32>} : memref<512x32xf32, #tpu.memory_space<vmem>>, vector<16x32xf32>,
    %361 = vector.extract_strided_slice %218 {offsets = [1, 7, 0, 0], sizes = [1, 1, 16, 32], strides = [1, 1, 1, 1]} : vector<2x16x16x32xf32> to vector<1x1x16x32xf32>
    %362 = vector.shape_cast %361 : vector<1x1x16x32xf32> to vector<16x32xf32>
    %363 = vector.broadcast %325 : vector<1x32xf32> to vector<16x32xf32>
    %364 = arith.mulf %362, %363 : vector<16x32xf32>
    %c368 = arith.constant 368 : index
    %c0_227 = arith.constant 0 : index
    %365 = vector.load %arg19[%c368, %c0_227] : memref<512x32xf32, #tpu.memory_space<vmem>>, vector<16x32xf32>
    tpu.vector_store %arg19[%c368, %c0_227], %364 {strides = array<i32>} : memref<512x32xf32, #tpu.memory_space<vmem>>, vector<16x32xf32>,
    %366 = vector.extract_strided_slice %218 {offsets = [1, 8, 0, 0], sizes = [1, 1, 16, 32], strides = [1, 1, 1, 1]} : vector<2x16x16x32xf32> to vector<1x1x16x32xf32>
    %367 = vector.shape_cast %366 : vector<1x1x16x32xf32> to vector<16x32xf32>
    %368 = vector.broadcast %325 : vector<1x32xf32> to vector<16x32xf32>
    %369 = arith.mulf %367, %368 : vector<16x32xf32>
    %c384 = arith.constant 384 : index
    %c0_228 = arith.constant 0 : index
    %370 = vector.load %arg19[%c384, %c0_228] : memref<512x32xf32, #tpu.memory_space<vmem>>, vector<16x32xf32>
    tpu.vector_store %arg19[%c384, %c0_228], %369 {strides = array<i32>} : memref<512x32xf32, #tpu.memory_space<vmem>>, vector<16x32xf32>,
    %371 = vector.extract_strided_slice %218 {offsets = [1, 9, 0, 0], sizes = [1, 1, 16, 32], strides = [1, 1, 1, 1]} : vector<2x16x16x32xf32> to vector<1x1x16x32xf32>
    %372 = vector.shape_cast %371 : vector<1x1x16x32xf32> to vector<16x32xf32>
    %373 = vector.broadcast %325 : vector<1x32xf32> to vector<16x32xf32>
    %374 = arith.mulf %372, %373 : vector<16x32xf32>
    %c400 = arith.constant 400 : index
    %c0_229 = arith.constant 0 : index
    %375 = vector.load %arg19[%c400, %c0_229] : memref<512x32xf32, #tpu.memory_space<vmem>>, vector<16x32xf32>
    tpu.vector_store %arg19[%c400, %c0_229], %374 {strides = array<i32>} : memref<512x32xf32, #tpu.memory_space<vmem>>, vector<16x32xf32>,
    %376 = vector.extract_strided_slice %218 {offsets = [1, 10, 0, 0], sizes = [1, 1, 16, 32], strides = [1, 1, 1, 1]} : vector<2x16x16x32xf32> to vector<1x1x16x32xf32>
    %377 = vector.shape_cast %376 : vector<1x1x16x32xf32> to vector<16x32xf32>
    %378 = vector.broadcast %325 : vector<1x32xf32> to vector<16x32xf32>
    %379 = arith.mulf %377, %378 : vector<16x32xf32>
    %c416 = arith.constant 416 : index
    %c0_230 = arith.constant 0 : index
    %380 = vector.load %arg19[%c416, %c0_230] : memref<512x32xf32, #tpu.memory_space<vmem>>, vector<16x32xf32>
    tpu.vector_store %arg19[%c416, %c0_230], %379 {strides = array<i32>} : memref<512x32xf32, #tpu.memory_space<vmem>>, vector<16x32xf32>,
    %381 = vector.extract_strided_slice %218 {offsets = [1, 11, 0, 0], sizes = [1, 1, 16, 32], strides = [1, 1, 1, 1]} : vector<2x16x16x32xf32> to vector<1x1x16x32xf32>
    %382 = vector.shape_cast %381 : vector<1x1x16x32xf32> to vector<16x32xf32>
    %383 = vector.broadcast %325 : vector<1x32xf32> to vector<16x32xf32>
    %384 = arith.mulf %382, %383 : vector<16x32xf32>
    %c432 = arith.constant 432 : index
    %c0_231 = arith.constant 0 : index
    %385 = vector.load %arg19[%c432, %c0_231] : memref<512x32xf32, #tpu.memory_space<vmem>>, vector<16x32xf32>
    tpu.vector_store %arg19[%c432, %c0_231], %384 {strides = array<i32>} : memref<512x32xf32, #tpu.memory_space<vmem>>, vector<16x32xf32>,
    %386 = vector.extract_strided_slice %218 {offsets = [1, 12, 0, 0], sizes = [1, 1, 16, 32], strides = [1, 1, 1, 1]} : vector<2x16x16x32xf32> to vector<1x1x16x32xf32>
    %387 = vector.shape_cast %386 : vector<1x1x16x32xf32> to vector<16x32xf32>
    %388 = vector.broadcast %325 : vector<1x32xf32> to vector<16x32xf32>
    %389 = arith.mulf %387, %388 : vector<16x32xf32>
    %c448 = arith.constant 448 : index
    %c0_232 = arith.constant 0 : index
    %390 = vector.load %arg19[%c448, %c0_232] : memref<512x32xf32, #tpu.memory_space<vmem>>, vector<16x32xf32>
    tpu.vector_store %arg19[%c448, %c0_232], %389 {strides = array<i32>} : memref<512x32xf32, #tpu.memory_space<vmem>>, vector<16x32xf32>,
    %391 = vector.extract_strided_slice %218 {offsets = [1, 13, 0, 0], sizes = [1, 1, 16, 32], strides = [1, 1, 1, 1]} : vector<2x16x16x32xf32> to vector<1x1x16x32xf32>
    %392 = vector.shape_cast %391 : vector<1x1x16x32xf32> to vector<16x32xf32>
    %393 = vector.broadcast %325 : vector<1x32xf32> to vector<16x32xf32>
    %394 = arith.mulf %392, %393 : vector<16x32xf32>
    %c464 = arith.constant 464 : index
    %c0_233 = arith.constant 0 : index
    %395 = vector.load %arg19[%c464, %c0_233] : memref<512x32xf32, #tpu.memory_space<vmem>>, vector<16x32xf32>
    tpu.vector_store %arg19[%c464, %c0_233], %394 {strides = array<i32>} : memref<512x32xf32, #tpu.memory_space<vmem>>, vector<16x32xf32>,
    %396 = vector.extract_strided_slice %218 {offsets = [1, 14, 0, 0], sizes = [1, 1, 16, 32], strides = [1, 1, 1, 1]} : vector<2x16x16x32xf32> to vector<1x1x16x32xf32>
    %397 = vector.shape_cast %396 : vector<1x1x16x32xf32> to vector<16x32xf32>
    %398 = vector.broadcast %325 : vector<1x32xf32> to vector<16x32xf32>
    %399 = arith.mulf %397, %398 : vector<16x32xf32>
    %c480 = arith.constant 480 : index
    %c0_234 = arith.constant 0 : index
    %400 = vector.load %arg19[%c480, %c0_234] : memref<512x32xf32, #tpu.memory_space<vmem>>, vector<16x32xf32>
    tpu.vector_store %arg19[%c480, %c0_234], %399 {strides = array<i32>} : memref<512x32xf32, #tpu.memory_space<vmem>>, vector<16x32xf32>,
    %401 = vector.extract_strided_slice %218 {offsets = [1, 15, 0, 0], sizes = [1, 1, 16, 32], strides = [1, 1, 1, 1]} : vector<2x16x16x32xf32> to vector<1x1x16x32xf32>
    %402 = vector.shape_cast %401 : vector<1x1x16x32xf32> to vector<16x32xf32>
    %403 = vector.broadcast %325 : vector<1x32xf32> to vector<16x32xf32>
    %404 = arith.mulf %402, %403 : vector<16x32xf32>
    %c496 = arith.constant 496 : index
    %c0_235 = arith.constant 0 : index
    %405 = vector.load %arg19[%c496, %c0_235] : memref<512x32xf32, #tpu.memory_space<vmem>>, vector<16x32xf32>
    tpu.vector_store %arg19[%c496, %c0_235], %404 {strides = array<i32>} : memref<512x32xf32, #tpu.memory_space<vmem>>, vector<16x32xf32>,
    %c0_236 = arith.constant 0 : index
    %c0_237 = arith.constant 0 : index
    %406 = vector.load %arg19[%c0_236, %c0_237] : memref<512x32xf32, #tpu.memory_space<vmem>>, vector<512x32xf32>
    %407 = arith.truncf %406 : vector<512x32xf32> to vector<512x32xbf16>
    %c0_238 = arith.constant 0 : index
    %c0_239 = arith.constant 0 : index
    %408 = vector.load %arg11[%c0_238, %c0_239] : memref<32x16xbf16, #tpu.memory_space<vmem>>, vector<32x16xbf16>
    %cst_240 = arith.constant dense<0.000000e+00> : vector<512x16xf32>
    %409 = tpu.matmul %407, %408, %cst_240 {dimension_numbers = #tpu.dot_dimension_numbers<[1], [0], [0], [1], [0, 0, 1, 1], [], []>} : vector<512x32xbf16>, vector<32x16xbf16>, vector<512x16xf32> -> vector<512x16xf32>
    %c0_241 = arith.constant 0 : index
    %c0_242 = arith.constant 0 : index
    %410 = vector.load %arg12[%c0_241, %c0_242] : memref<1x16xf32, #tpu.memory_space<vmem>>, vector<1x16xf32>
    %411 = vector.broadcast %410 : vector<1x16xf32> to vector<512x16xf32>
    %412 = arith.addf %409, %411 : vector<512x16xf32>
    %413 = arith.addf %412, %11 : vector<512x16xf32>
    %414 = arith.truncf %413 : vector<512x16xf32> to vector<512x16xbf16>
    %c0_243 = arith.constant 0 : index
    %c0_244 = arith.constant 0 : index
    %415 = vector.load %arg13[%c0_243, %c0_244] : memref<16x64xbf16, #tpu.memory_space<vmem>>, vector<16x64xbf16>
    %cst_245 = arith.constant dense<0.000000e+00> : vector<512x64xf32>
    %416 = tpu.matmul %414, %415, %cst_245 {dimension_numbers = #tpu.dot_dimension_numbers<[1], [0], [0], [1], [0, 0, 1, 1], [], []>} : vector<512x16xbf16>, vector<16x64xbf16>, vector<512x64xf32> -> vector<512x64xf32>
    %c0_246 = arith.constant 0 : index
    %c0_247 = arith.constant 0 : index
    %417 = vector.load %arg14[%c0_246, %c0_247] : memref<1x64xf32, #tpu.memory_space<vmem>>, vector<1x64xf32>
    %418 = vector.broadcast %417 : vector<1x64xf32> to vector<512x64xf32>
    %419 = arith.addf %416, %418 : vector<512x64xf32>
    %420 = arith.negf %419 : vector<512x64xf32>
    %421 = math.exp %420 : vector<512x64xf32>
    %cst_248 = arith.constant 1.000000e+00 : f32
    %422 = vector.broadcast %cst_248 : f32 to vector<512x64xf32>
    %423 = arith.addf %422, %421 : vector<512x64xf32>
    %424 = arith.divf %422, %423 : vector<512x64xf32>
    %425 = arith.mulf %419, %424 : vector<512x64xf32>
    %426 = vector.extract_strided_slice %425 {offsets = [0, 0], sizes = [256, 64], strides = [1, 1]} : vector<512x64xf32> to vector<256x64xf32>
    %cst_249 = arith.constant dense<0.000000e+00> : vector<64xf32>
    %427 = vector.multi_reduction <add>, %426, %cst_249 [0] : vector<256x64xf32> to vector<64xf32>
    %428 = vector.shape_cast %427 : vector<64xf32> to vector<1x64xf32>
    %cst_250 = arith.constant 2.560000e+02 : f32
    %429 = vector.broadcast %cst_250 : f32 to vector<1x64xf32>
    %430 = arith.divf %428, %429 : vector<1x64xf32>
    %c0_251 = arith.constant 0 : index
    %c0_252 = arith.constant 0 : index
    %431 = vector.load %arg15[%c0_251, %c0_252] : memref<64x10xf32, #tpu.memory_space<vmem>>, vector<64x10xf32>
    %cst_253 = arith.constant dense<0.000000e+00> : vector<1x10xf32>
    %432 = tpu.matmul %430, %431, %cst_253 {dimension_numbers = #tpu.dot_dimension_numbers<[1], [0], [0], [1], [0, 0, 1, 1], [], []>} : vector<1x64xf32>, vector<64x10xf32>, vector<1x10xf32> -> vector<1x10xf32>
    %c0_254 = arith.constant 0 : index
    %c0_255 = arith.constant 0 : index
    %433 = vector.load %arg16[%c0_254, %c0_255] : memref<1x10xf32, #tpu.memory_space<vmem>>, vector<1x10xf32>
    %434 = arith.addf %432, %433 : vector<1x10xf32>
    %c0_256 = arith.constant 0 : index
    %c0_257 = arith.constant 0 : index
    %435 = vector.load %arg17[%c0_256, %c0_257] : memref<2x10xf32, #tpu.memory_space<vmem>>, vector<1x10xf32>
    tpu.vector_store %arg17[%c0_256, %c0_257], %434 {strides = array<i32>} : memref<2x10xf32, #tpu.memory_space<vmem>>, vector<1x10xf32>,
    %436 = vector.extract_strided_slice %425 {offsets = [256, 0], sizes = [256, 64], strides = [1, 1]} : vector<512x64xf32> to vector<256x64xf32>
    %cst_258 = arith.constant dense<0.000000e+00> : vector<64xf32>
    %437 = vector.multi_reduction <add>, %436, %cst_258 [0] : vector<256x64xf32> to vector<64xf32>
    %438 = vector.shape_cast %437 : vector<64xf32> to vector<1x64xf32>
    %cst_259 = arith.constant 2.560000e+02 : f32
    %439 = vector.broadcast %cst_259 : f32 to vector<1x64xf32>
    %440 = arith.divf %438, %439 : vector<1x64xf32>
    %c0_260 = arith.constant 0 : index
    %c0_261 = arith.constant 0 : index
    %441 = vector.load %arg15[%c0_260, %c0_261] : memref<64x10xf32, #tpu.memory_space<vmem>>, vector<64x10xf32>
    %cst_262 = arith.constant dense<0.000000e+00> : vector<1x10xf32>
    %442 = tpu.matmul %440, %441, %cst_262 {dimension_numbers = #tpu.dot_dimension_numbers<[1], [0], [0], [1], [0, 0, 1, 1], [], []>} : vector<1x64xf32>, vector<64x10xf32>, vector<1x10xf32> -> vector<1x10xf32>
    %c0_263 = arith.constant 0 : index
    %c0_264 = arith.constant 0 : index
    %443 = vector.load %arg16[%c0_263, %c0_264] : memref<1x10xf32, #tpu.memory_space<vmem>>, vector<1x10xf32>
    %444 = arith.addf %442, %443 : vector<1x10xf32>
    %c1_265 = arith.constant 1 : index
    %c0_266 = arith.constant 0 : index
    %445 = vector.load %arg17[%c1_265, %c0_266] : memref<2x10xf32, #tpu.memory_space<vmem>>, vector<1x10xf32>
    tpu.vector_store %arg17[%c1_265, %c0_266], %444 {strides = array<i32>} : memref<2x10xf32, #tpu.memory_space<vmem>>, vector<1x10xf32>,
    return
  }
}

</mosaic_0001>

<llo_original>
// kernel: forward.1
$region0: #{forward.1}
  #allocation0 [shape = 'u32[]', space=smem, size = 0x4, offset = 0x4, fixed_abs, tag = 'smem constant byte address 0x4 - core index']
  #allocation1 [shape = 'u32[72,128]{1,0:T(1,128)}', space=vmem, size = 0x9000, scoped, tag = 'internal scratch']
  #allocation2 [shape = 'f32[2,18,18,32]{3,2,1,0:T(8,128)}', space=vmem, size = 0x6c000, scoped, tag = 'scratch operand']
  #allocation3 [shape = 'f32[512,32]{1,0:T(8,128)}', space=vmem, size = 0x40000, scoped, tag = 'scratch operand']
  %s0 = inlined_call_operand.vmem [shape: bf16[512,32], index: 0, kind: input, shape index: {}]
  %s1 = inlined_call_operand.vmem [shape: bf16[32,16], index: 1, kind: input, shape index: {}]
  %s2 = inlined_call_operand.vmem [shape: f32[1,16], index: 2, kind: input, shape index: {}]
  %s3 = inlined_call_operand.vmem [shape: bf16[16,32], index: 3, kind: input, shape index: {}]
  %s4 = inlined_call_operand.vmem [shape: f32[1,32], index: 4, kind: input, shape index: {}]
  %s5 = inlined_call_operand.vmem [shape: f32[9,32], index: 5, kind: input, shape index: {}]
  %s6 = inlined_call_operand.vmem [shape: f32[1,32], index: 6, kind: input, shape index: {}]
  %s7 = inlined_call_operand.vmem [shape: f32[32,8], index: 7, kind: input, shape index: {}]
  %s8 = inlined_call_operand.vmem [shape: f32[1,8], index: 8, kind: input, shape index: {}]
  %s9 = inlined_call_operand.vmem [shape: f32[8,32], index: 9, kind: input, shape index: {}]
  %s10 = inlined_call_operand.vmem [shape: f32[1,32], index: 10, kind: input, shape index: {}]
  %s11 = inlined_call_operand.vmem [shape: bf16[32,16], index: 11, kind: input, shape index: {}]
  %s12 = inlined_call_operand.vmem [shape: f32[1,16], index: 12, kind: input, shape index: {}]
  %s13 = inlined_call_operand.vmem [shape: bf16[16,64], index: 13, kind: input, shape index: {}]
  %s14 = inlined_call_operand.vmem [shape: f32[1,64], index: 14, kind: input, shape index: {}]
  %s15 = inlined_call_operand.vmem [shape: f32[64,10], index: 15, kind: input, shape index: {}]
  %s16 = inlined_call_operand.vmem [shape: f32[1,10], index: 16, kind: input, shape index: {}]
  %s17 = inlined_call_operand.hbm [shape: f32[2,10], index: 17, kind: output, shape index: {}]
  %s18 = sld [smem:[#allocation0]]
  $region78: #{forward.1} parent=0
    _
  %s20 = ssub.s32 1, %s18
  %s21 = scalar_select 0, %s20, %s18
  $region1: #{forward.1} parent=0
    #allocation4 [shape = 'u8[1024]{0}', space=vmem, size = 0x400, scoped, tag = 'output window, operand 0, single buffered']
    #allocation5 [shape = 's32[1]{0}', space=sflag, size = 0x4, scoped, tag = 'scoped memory for forward.1']
    %22 = vsyncpa [#allocation5], 0
    // Predicated region
    $region2: #{forward.1} parent=1 // pred_check
      _
    $region3: #{forward.1} parent=1 // pred_check_branch
      %24 = sbr.rel (0) target = $region5
    $region4: #{forward.1} parent=1 // pred_region
      _
    $region5: #{forward.1} parent=1 // pred_fallthru
      _
    // Predicated region
    $region6: #{forward.1} parent=1 // pred_check
      _
    $region7: #{forward.1} parent=1 // pred_check_branch
      %26 = sbr.rel (0) target = $region9
    $region8: #{forward.1} parent=1 // pred_region
      _
    $region9: #{forward.1} parent=1 // pred_fallthru
      _
    // Predicated region
    $region10: #{forward.1} parent=1 // pred_check
      _
    $region11: #{forward.1} parent=1 // pred_check_branch
      %28 = sbr.rel (0) target = $region13
    $region12: #{forward.1} parent=1 // pred_region
      _
    $region13: #{forward.1} parent=1 // pred_fallthru
      _
    // Predicated region
    $region14: #{forward.1} parent=1 // pred_check
      _
    $region15: #{forward.1} parent=1 // pred_check_branch
      %30 = sbr.rel (0) target = $region17
    $region16: #{forward.1} parent=1 // pred_region
      _
    $region17: #{forward.1} parent=1 // pred_fallthru
      _
    // Predicated region
    $region18: #{forward.1} parent=1 // pred_check
      _
    $region19: #{forward.1} parent=1 // pred_check_branch
      %32 = sbr.rel (0) target = $region21
    $region20: #{forward.1} parent=1 // pred_region
      _
    $region21: #{forward.1} parent=1 // pred_fallthru
      _
    // Predicated region
    $region22: #{forward.1} parent=1 // pred_check
      _
    $region23: #{forward.1} parent=1 // pred_check_branch
      %34 = sbr.rel (0) target = $region25
    $region24: #{forward.1} parent=1 // pred_region
      _
    $region25: #{forward.1} parent=1 // pred_fallthru
      _
    // Predicated region
    $region26: #{forward.1} parent=1 // pred_check
      _
    $region27: #{forward.1} parent=1 // pred_check_branch
      %36 = sbr.rel (0) target = $region29
    $region28: #{forward.1} parent=1 // pred_region
      _
    $region29: #{forward.1} parent=1 // pred_fallthru
      _
    // Predicated region
    $region30: #{forward.1} parent=1 // pred_check
      _
    $region31: #{forward.1} parent=1 // pred_check_branch
      %38 = sbr.rel (0) target = $region33
    $region32: #{forward.1} parent=1 // pred_region
      _
    $region33: #{forward.1} parent=1 // pred_fallthru
      _
    // Predicated region
    $region34: #{forward.1} parent=1 // pred_check
      _
    $region35: #{forward.1} parent=1 // pred_check_branch
      %40 = sbr.rel (0) target = $region37
    $region36: #{forward.1} parent=1 // pred_region
      _
    $region37: #{forward.1} parent=1 // pred_fallthru
      _
    // Predicated region
    $region38: #{forward.1} parent=1 // pred_check
      _
    $region39: #{forward.1} parent=1 // pred_check_branch
      %42 = sbr.rel (0) target = $region41
    $region40: #{forward.1} parent=1 // pred_region
      _
    $region41: #{forward.1} parent=1 // pred_fallthru
      _
    // Predicated region
    $region42: #{forward.1} parent=1 // pred_check
      _
    $region43: #{forward.1} parent=1 // pred_check_branch
      %44 = sbr.rel (0) target = $region45
    $region44: #{forward.1} parent=1 // pred_region
      _
    $region45: #{forward.1} parent=1 // pred_fallthru
      _
    // Predicated region
    $region46: #{forward.1} parent=1 // pred_check
      _
    $region47: #{forward.1} parent=1 // pred_check_branch
      %46 = sbr.rel (0) target = $region49
    $region48: #{forward.1} parent=1 // pred_region
      _
    $region49: #{forward.1} parent=1 // pred_fallthru
      _
    // Predicated region
    $region50: #{forward.1} parent=1 // pred_check
      _
    $region51: #{forward.1} parent=1 // pred_check_branch
      %48 = sbr.rel (0) target = $region53
    $region52: #{forward.1} parent=1 // pred_region
      _
    $region53: #{forward.1} parent=1 // pred_fallthru
      _
    // Predicated region
    $region54: #{forward.1} parent=1 // pred_check
      _
    $region55: #{forward.1} parent=1 // pred_check_branch
      %50 = sbr.rel (0) target = $region57
    $region56: #{forward.1} parent=1 // pred_region
      _
    $region57: #{forward.1} parent=1 // pred_fallthru
      _
    // Predicated region
    $region58: #{forward.1} parent=1 // pred_check
      _
    $region59: #{forward.1} parent=1 // pred_check_branch
      %52 = sbr.rel (0) target = $region61
    $region60: #{forward.1} parent=1 // pred_region
      _
    $region61: #{forward.1} parent=1 // pred_fallthru
      _
    // Predicated region
    $region62: #{forward.1} parent=1 // pred_check
      _
    $region63: #{forward.1} parent=1 // pred_check_branch
      %54 = sbr.rel (0) target = $region65
    $region64: #{forward.1} parent=1 // pred_region
      _
    $region65: #{forward.1} parent=1 // pred_fallthru
      _
    // Predicated region
    $region66: #{forward.1} parent=1 // pred_check
      _
    $region67: #{forward.1} parent=1 // pred_check_branch
      %56 = sbr.rel (0) target = $region69
    $region68: #{forward.1} parent=1 // pred_region
      _
    $region69: #{forward.1} parent=1 // pred_fallthru
      _
    %v58 = vld [vmem:[%s0] sm:$0xf]
    %v59 = vld [vmem:[%s0 + $0x4] sm:$0xf]
    %v60 = vld [vmem:[%s0 + $0x8] sm:$0xf]
    %v61 = vld [vmem:[%s0 + $0xc] sm:$0xf]
    %v62 = vld [vmem:[%s0 + $0x10] sm:$0xf]
    %v63 = vld [vmem:[%s0 + $0x14] sm:$0xf]
    %v64 = vld [vmem:[%s0 + $0x18] sm:$0xf]
    %v65 = vld [vmem:[%s0 + $0x1c] sm:$0xf]
    %v66 = vld [vmem:[%s0 + $0x20] sm:$0xf]
    %v67 = vld [vmem:[%s0 + $0x24] sm:$0xf]
    %v68 = vld [vmem:[%s0 + $0x28] sm:$0xf]
    %v69 = vld [vmem:[%s0 + $0x2c] sm:$0xf]
    %v70 = vld [vmem:[%s0 + $0x30] sm:$0xf]
    %v71 = vld [vmem:[%s0 + $0x34] sm:$0xf]
    %v72 = vld [vmem:[%s0 + $0x38] sm:$0xf]
    %v73 = vld [vmem:[%s0 + $0x3c] sm:$0xf]
    %v74 = vld [vmem:[%s0 + $0x40] sm:$0xf]
    %v75 = vld [vmem:[%s0 + $0x44] sm:$0xf]
    %v76 = vld [vmem:[%s0 + $0x48] sm:$0xf]
    %v77 = vld [vmem:[%s0 + $0x4c] sm:$0xf]
    %v78 = vld [vmem:[%s0 + $0x50] sm:$0xf]
    %v79 = vld [vmem:[%s0 + $0x54] sm:$0xf]
    %v80 = vld [vmem:[%s0 + $0x58] sm:$0xf]
    %v81 = vld [vmem:[%s0 + $0x5c] sm:$0xf]
    %v82 = vld [vmem:[%s0 + $0x60] sm:$0xf]
    %v83 = vld [vmem:[%s0 + $0x64] sm:$0xf]
    %v84 = vld [vmem:[%s0 + $0x68] sm:$0xf]
    %v85 = vld [vmem:[%s0 + $0x6c] sm:$0xf]
    %v86 = vld [vmem:[%s0 + $0x70] sm:$0xf]
    %v87 = vld [vmem:[%s0 + $0x74] sm:$0xf]
    %v88 = vld [vmem:[%s0 + $0x78] sm:$0xf]
    %v89 = vld [vmem:[%s0 + $0x7c] sm:$0xf]
    %v90 = vld [vmem:[%s0 + $0x80] sm:$0xf]
    %v91 = vld [vmem:[%s0 + $0x84] sm:$0xf]
    %v92 = vld [vmem:[%s0 + $0x88] sm:$0xf]
    %v93 = vld [vmem:[%s0 + $0x8c] sm:$0xf]
    %v94 = vld [vmem:[%s0 + $0x90] sm:$0xf]
    %v95 = vld [vmem:[%s0 + $0x94] sm:$0xf]
    %v96 = vld [vmem:[%s0 + $0x98] sm:$0xf]
    %v97 = vld [vmem:[%s0 + $0x9c] sm:$0xf]
    %v98 = vld [vmem:[%s0 + $0xa0] sm:$0xf]
    %v99 = vld [vmem:[%s0 + $0xa4] sm:$0xf]
    %v100 = vld [vmem:[%s0 + $0xa8] sm:$0xf]
    %v101 = vld [vmem:[%s0 + $0xac] sm:$0xf]
    %v102 = vld [vmem:[%s0 + $0xb0] sm:$0xf]
    %v103 = vld [vmem:[%s0 + $0xb4] sm:$0xf]
    %v104 = vld [vmem:[%s0 + $0xb8] sm:$0xf]
    %v105 = vld [vmem:[%s0 + $0xbc] sm:$0xf]
    %v106 = vld [vmem:[%s0 + $0xc0] sm:$0xf]
    %v107 = vld [vmem:[%s0 + $0xc4] sm:$0xf]
    %v108 = vld [vmem:[%s0 + $0xc8] sm:$0xf]
    %v109 = vld [vmem:[%s0 + $0xcc] sm:$0xf]
    %v110 = vld [vmem:[%s0 + $0xd0] sm:$0xf]
    %v111 = vld [vmem:[%s0 + $0xd4] sm:$0xf]
    %v112 = vld [vmem:[%s0 + $0xd8] sm:$0xf]
    %v113 = vld [vmem:[%s0 + $0xdc] sm:$0xf]
    %v114 = vld [vmem:[%s0 + $0xe0] sm:$0xf]
    %v115 = vld [vmem:[%s0 + $0xe4] sm:$0xf]
    %v116 = vld [vmem:[%s0 + $0xe8] sm:$0xf]
    %v117 = vld [vmem:[%s0 + $0xec] sm:$0xf]
    %v118 = vld [vmem:[%s0 + $0xf0] sm:$0xf]
    %v119 = vld [vmem:[%s0 + $0xf4] sm:$0xf]
    %v120 = vld [vmem:[%s0 + $0xf8] sm:$0xf]
    %v121 = vld [vmem:[%s0 + $0xfc] sm:$0xf]
    %v122 = vld [vmem:[%s1] sm:$0xf]
    %v123 = vld [vmem:[%s1 + $0x4] sm:$0xf]
    %v124 = vld [vmem:[%s1 + $0x8] sm:$0xf]
    %v125 = vld [vmem:[%s1 + $0xc] sm:$0xf]
    %v126 = vld [vmem:[%s2] sm:$0x1]
    %v128 = vperm.slane %v126, 0
    %v194 = vunpack.c.l.b16 %v58
    %v195 = vunpack.c.l.b16 %v59
    %v196 = vunpack.c.l.b16 %v60
    %v197 = vunpack.c.l.b16 %v61
    %v198 = vunpack.c.l.b16 %v62
    %v199 = vunpack.c.l.b16 %v63
    %v200 = vunpack.c.l.b16 %v64
    %v201 = vunpack.c.l.b16 %v65
    %v202 = vunpack.c.l.b16 %v66
    %v203 = vunpack.c.l.b16 %v67
    %v204 = vunpack.c.l.b16 %v68
    %v205 = vunpack.c.l.b16 %v69
    %v206 = vunpack.c.l.b16 %v70
    %v207 = vunpack.c.l.b16 %v71
    %v208 = vunpack.c.l.b16 %v72
    %v209 = vunpack.c.l.b16 %v73
    %v210 = vunpack.c.l.b16 %v74
    %v211 = vunpack.c.l.b16 %v75
    %v212 = vunpack.c.l.b16 %v76
    %v213 = vunpack.c.l.b16 %v77
    %v214 = vunpack.c.l.b16 %v78
    %v215 = vunpack.c.l.b16 %v79
    %v216 = vunpack.c.l.b16 %v80
    %v217 = vunpack.c.l.b16 %v81
    %v218 = vunpack.c.l.b16 %v82
    %v219 = vunpack.c.l.b16 %v83
    %v220 = vunpack.c.l.b16 %v84
    %v221 = vunpack.c.l.b16 %v85
    %v222 = vunpack.c.l.b16 %v86
    %v223 = vunpack.c.l.b16 %v87
    %v224 = vunpack.c.l.b16 %v88
    %v225 = vunpack.c.l.b16 %v89
    %v226 = vunpack.c.l.b16 %v90
    %v227 = vunpack.c.l.b16 %v91
    %v228 = vunpack.c.l.b16 %v92
    %v229 = vunpack.c.l.b16 %v93
    %v230 = vunpack.c.l.b16 %v94
    %v231 = vunpack.c.l.b16 %v95
    %v232 = vunpack.c.l.b16 %v96
    %v233 = vunpack.c.l.b16 %v97
    %v234 = vunpack.c.l.b16 %v98
    %v235 = vunpack.c.l.b16 %v99
    %v236 = vunpack.c.l.b16 %v100
    %v237 = vunpack.c.l.b16 %v101
    %v238 = vunpack.c.l.b16 %v102
    %v239 = vunpack.c.l.b16 %v103
    %v240 = vunpack.c.l.b16 %v104
    %v241 = vunpack.c.l.b16 %v105
    %v242 = vunpack.c.l.b16 %v106
    %v243 = vunpack.c.l.b16 %v107
    %v244 = vunpack.c.l.b16 %v108
    %v245 = vunpack.c.l.b16 %v109
    %v246 = vunpack.c.l.b16 %v110
    %v247 = vunpack.c.l.b16 %v111
    %v248 = vunpack.c.l.b16 %v112
    %v249 = vunpack.c.l.b16 %v113
    %v250 = vunpack.c.l.b16 %v114
    %v251 = vunpack.c.l.b16 %v115
    %v252 = vunpack.c.l.b16 %v116
    %v253 = vunpack.c.l.b16 %v117
    %v254 = vunpack.c.l.b16 %v118
    %v255 = vunpack.c.l.b16 %v119
    %v256 = vunpack.c.l.b16 %v120
    %v257 = vunpack.c.l.b16 %v121
    %v258 = vpack.c.b16 %v195, %v194
    %v259 = vpack.c.b16 %v197, %v196
    %v260 = vpack.c.b16 %v199, %v198
    %v261 = vpack.c.b16 %v201, %v200
    %v262 = vpack.c.b16 %v203, %v202
    %v263 = vpack.c.b16 %v205, %v204
    %v264 = vpack.c.b16 %v207, %v206
    %v265 = vpack.c.b16 %v209, %v208
    %v266 = vpack.c.b16 %v211, %v210
    %v267 = vpack.c.b16 %v213, %v212
    %v268 = vpack.c.b16 %v215, %v214
    %v269 = vpack.c.b16 %v217, %v216
    %v270 = vpack.c.b16 %v219, %v218
    %v271 = vpack.c.b16 %v221, %v220
    %v272 = vpack.c.b16 %v223, %v222
    %v273 = vpack.c.b16 %v225, %v224
    %v274 = vpack.c.b16 %v227, %v226
    %v275 = vpack.c.b16 %v229, %v228
    %v276 = vpack.c.b16 %v231, %v230
    %v277 = vpack.c.b16 %v233, %v232
    %v278 = vpack.c.b16 %v235, %v234
    %v279 = vpack.c.b16 %v237, %v236
    %v280 = vpack.c.b16 %v239, %v238
    %v281 = vpack.c.b16 %v241, %v240
    %v282 = vpack.c.b16 %v243, %v242
    %v283 = vpack.c.b16 %v245, %v244
    %v284 = vpack.c.b16 %v247, %v246
    %v285 = vpack.c.b16 %v249, %v248
    %v286 = vpack.c.b16 %v251, %v250
    %v287 = vpack.c.b16 %v253, %v252
    %v288 = vpack.c.b16 %v255, %v254
    %v289 = vpack.c.b16 %v257, %v256
    %v294 = vunpack.c.l.b16 %v122
    %v295 = vunpack.c.l.b16 %v123
    %v296 = vunpack.c.l.b16 %v124
    %v297 = vunpack.c.l.b16 %v125
    %v298 = vpack.c.b16 %v295, %v294
    %v299 = vpack.c.b16 %v297, %v296
    %vm302 = vcmask 261120
    %v304 = vsel %vm302, %v258, 0
    %v307 = vsel %vm302, %v259, 0
    %v310 = vsel %vm302, %v260, 0
    %v313 = vsel %vm302, %v261, 0
    %v316 = vsel %vm302, %v262, 0
    %v319 = vsel %vm302, %v263, 0
    %v322 = vsel %vm302, %v264, 0
    %v325 = vsel %vm302, %v265, 0
    %v328 = vsel %vm302, %v266, 0
    %v331 = vsel %vm302, %v267, 0
    %v334 = vsel %vm302, %v268, 0
    %v337 = vsel %vm302, %v269, 0
    %v340 = vsel %vm302, %v270, 0
    %v343 = vsel %vm302, %v271, 0
    %v346 = vsel %vm302, %v272, 0
    %v349 = vsel %vm302, %v273, 0
    %v352 = vsel %vm302, %v274, 0
    %v355 = vsel %vm302, %v275, 0
    %v358 = vsel %vm302, %v276, 0
    %v361 = vsel %vm302, %v277, 0
    %v364 = vsel %vm302, %v278, 0
    %v367 = vsel %vm302, %v279, 0
    %v370 = vsel %vm302, %v280, 0
    %v373 = vsel %vm302, %v281, 0
    %v376 = vsel %vm302, %v282, 0
    %v379 = vsel %vm302, %v283, 0
    %v382 = vsel %vm302, %v284, 0
    %v385 = vsel %vm302, %v285, 0
    %v388 = vsel %vm302, %v286, 0
    %v391 = vsel %vm302, %v287, 0
    %v394 = vsel %vm302, %v288, 0
    %v397 = vsel %vm302, %v289, 0
    %399 = vmatpush.bf16.msra.mxu0 0
    %400 = vmatpush.bf16.msra.mxu0 0
    %401 = vmatpush.bf16.msra.mxu0 0
    %402 = vmatpush.bf16.msra.mxu0 0
    %403 = vmatpush.bf16.msra.mxu0 0
    %404 = vmatpush.bf16.msra.mxu0 0
    %405 = vmatpush.bf16.msra.mxu0 %v299
    %406 = vmatpush.bf16.msra.mxu0 %v298
    %407 = vmatmul.bf16.gmra.mxu0 %v304
    %v408 = vpop.f32.mrf.mxu0
    %v409 = vadd.f32 %v128, %v408
    %v410 = vpop.f32.mrf.mxu0
    %v411 = vadd.f32 %v128, %v410
    %412 = vmatmul.bf16.gmra.mxu0 %v307
    %v413 = vpop.f32.mrf.mxu0
    %v414 = vadd.f32 %v128, %v413
    %v415 = vpop.f32.mrf.mxu0
    %v416 = vadd.f32 %v128, %v415
    %417 = vmatmul.bf16.gmra.mxu0 %v310
    %v418 = vpop.f32.mrf.mxu0
    %v419 = vadd.f32 %v128, %v418
    %v420 = vpop.f32.mrf.mxu0
    %v421 = vadd.f32 %v128, %v420
    %422 = vmatmul.bf16.gmra.mxu0 %v313
    %v423 = vpop.f32.mrf.mxu0
    %v424 = vadd.f32 %v128, %v423
    %v425 = vpop.f32.mrf.mxu0
    %v426 = vadd.f32 %v128, %v425
    %427 = vmatmul.bf16.gmra.mxu0 %v316
    %v428 = vpop.f32.mrf.mxu0
    %v429 = vadd.f32 %v128, %v428
    %v430 = vpop.f32.mrf.mxu0
    %v431 = vadd.f32 %v128, %v430
    %432 = vmatmul.bf16.gmra.mxu0 %v319
    %v433 = vpop.f32.mrf.mxu0
    %v434 = vadd.f32 %v128, %v433
    %v435 = vpop.f32.mrf.mxu0
    %v436 = vadd.f32 %v128, %v435
    %437 = vmatmul.bf16.gmra.mxu0 %v322
    %v438 = vpop.f32.mrf.mxu0
    %v439 = vadd.f32 %v128, %v438
    %v440 = vpop.f32.mrf.mxu0
    %v441 = vadd.f32 %v128, %v440
    %442 = vmatmul.bf16.gmra.mxu0 %v325
    %v443 = vpop.f32.mrf.mxu0
    %v444 = vadd.f32 %v128, %v443
    %v445 = vpop.f32.mrf.mxu0
    %v446 = vadd.f32 %v128, %v445
    %447 = vmatmul.bf16.gmra.mxu0 %v328
    %v448 = vpop.f32.mrf.mxu0
    %v449 = vadd.f32 %v128, %v448
    %v450 = vpop.f32.mrf.mxu0
    %v451 = vadd.f32 %v128, %v450
    %452 = vmatmul.bf16.gmra.mxu0 %v331
    %v453 = vpop.f32.mrf.mxu0
    %v454 = vadd.f32 %v128, %v453
    %v455 = vpop.f32.mrf.mxu0
    %v456 = vadd.f32 %v128, %v455
    %457 = vmatmul.bf16.gmra.mxu0 %v334
    %v458 = vpop.f32.mrf.mxu0
    %v459 = vadd.f32 %v128, %v458
    %v460 = vpop.f32.mrf.mxu0
    %v461 = vadd.f32 %v128, %v460
    %462 = vmatmul.bf16.gmra.mxu0 %v337
    %v463 = vpop.f32.mrf.mxu0
    %v464 = vadd.f32 %v128, %v463
    %v465 = vpop.f32.mrf.mxu0
    %v466 = vadd.f32 %v128, %v465
    %467 = vmatmul.bf16.gmra.mxu0 %v340
    %v468 = vpop.f32.mrf.mxu0
    %v469 = vadd.f32 %v128, %v468
    %v470 = vpop.f32.mrf.mxu0
    %v471 = vadd.f32 %v128, %v470
    %472 = vmatmul.bf16.gmra.mxu0 %v343
    %v473 = vpop.f32.mrf.mxu0
    %v474 = vadd.f32 %v128, %v473
    %v475 = vpop.f32.mrf.mxu0
    %v476 = vadd.f32 %v128, %v475
    %477 = vmatmul.bf16.gmra.mxu0 %v346
    %v478 = vpop.f32.mrf.mxu0
    %v479 = vadd.f32 %v128, %v478
    %v480 = vpop.f32.mrf.mxu0
    %v481 = vadd.f32 %v128, %v480
    %482 = vmatmul.bf16.gmra.mxu0 %v349
    %v483 = vpop.f32.mrf.mxu0
    %v484 = vadd.f32 %v128, %v483
    %v485 = vpop.f32.mrf.mxu0
    %v486 = vadd.f32 %v128, %v485
    %487 = vmatmul.bf16.gmra.mxu0 %v352
    %v488 = vpop.f32.mrf.mxu0
    %v489 = vadd.f32 %v128, %v488
    %v490 = vpop.f32.mrf.mxu0
    %v491 = vadd.f32 %v128, %v490
    %492 = vmatmul.bf16.gmra.mxu0 %v355
    %v493 = vpop.f32.mrf.mxu0
    %v494 = vadd.f32 %v128, %v493
    %v495 = vpop.f32.mrf.mxu0
    %v496 = vadd.f32 %v128, %v495
    %497 = vmatmul.bf16.gmra.mxu0 %v358
    %v498 = vpop.f32.mrf.mxu0
    %v499 = vadd.f32 %v128, %v498
    %v500 = vpop.f32.mrf.mxu0
    %v501 = vadd.f32 %v128, %v500
    %502 = vmatmul.bf16.gmra.mxu0 %v361
    %v503 = vpop.f32.mrf.mxu0
    %v504 = vadd.f32 %v128, %v503
    %v505 = vpop.f32.mrf.mxu0
    %v506 = vadd.f32 %v128, %v505
    %507 = vmatmul.bf16.gmra.mxu0 %v364
    %v508 = vpop.f32.mrf.mxu0
    %v509 = vadd.f32 %v128, %v508
    %v510 = vpop.f32.mrf.mxu0
    %v511 = vadd.f32 %v128, %v510
    %512 = vmatmul.bf16.gmra.mxu0 %v367
    %v513 = vpop.f32.mrf.mxu0
    %v514 = vadd.f32 %v128, %v513
    %v515 = vpop.f32.mrf.mxu0
    %v516 = vadd.f32 %v128, %v515
    %517 = vmatmul.bf16.gmra.mxu0 %v370
    %v518 = vpop.f32.mrf.mxu0
    %v519 = vadd.f32 %v128, %v518
    %v520 = vpop.f32.mrf.mxu0
    %v521 = vadd.f32 %v128, %v520
    %522 = vmatmul.bf16.gmra.mxu0 %v373
    %v523 = vpop.f32.mrf.mxu0
    %v524 = vadd.f32 %v128, %v523
    %v525 = vpop.f32.mrf.mxu0
    %v526 = vadd.f32 %v128, %v525
    %527 = vmatmul.bf16.gmra.mxu0 %v376
    %v528 = vpop.f32.mrf.mxu0
    %v529 = vadd.f32 %v128, %v528
    %v530 = vpop.f32.mrf.mxu0
    %v531 = vadd.f32 %v128, %v530
    %532 = vmatmul.bf16.gmra.mxu0 %v379
    %v533 = vpop.f32.mrf.mxu0
    %v534 = vadd.f32 %v128, %v533
    %v535 = vpop.f32.mrf.mxu0
    %v536 = vadd.f32 %v128, %v535
    %537 = vmatmul.bf16.gmra.mxu0 %v382
    %v538 = vpop.f32.mrf.mxu0
    %v539 = vadd.f32 %v128, %v538
    %v540 = vpop.f32.mrf.mxu0
    %v541 = vadd.f32 %v128, %v540
    %542 = vmatmul.bf16.gmra.mxu0 %v385
    %v543 = vpop.f32.mrf.mxu0
    %v544 = vadd.f32 %v128, %v543
    %v545 = vpop.f32.mrf.mxu0
    %v546 = vadd.f32 %v128, %v545
    %547 = vmatmul.bf16.gmra.mxu0 %v388
    %v548 = vpop.f32.mrf.mxu0
    %v549 = vadd.f32 %v128, %v548
    %v550 = vpop.f32.mrf.mxu0
    %v551 = vadd.f32 %v128, %v550
    %552 = vmatmul.bf16.gmra.mxu0 %v391
    %v553 = vpop.f32.mrf.mxu0
    %v554 = vadd.f32 %v128, %v553
    %v555 = vpop.f32.mrf.mxu0
    %v556 = vadd.f32 %v128, %v555
    %557 = vmatmul.bf16.gmra.mxu0 %v394
    %v558 = vpop.f32.mrf.mxu0
    %v559 = vadd.f32 %v128, %v558
    %v560 = vpop.f32.mrf.mxu0
    %v561 = vadd.f32 %v128, %v560
    %562 = vmatmul.bf16.gmra.mxu0 %v397
    %v563 = vpop.f32.mrf.mxu0
    %v564 = vadd.f32 %v128, %v563
    %v565 = vpop.f32.mrf.mxu0
    %v566 = vadd.f32 %v128, %v565
    %567 = vdwg.mxu0
    %v568 = vxor.u32 %v409, 2147483648
    %v569 = vxor.u32 %v411, 2147483648
    %v570 = vxor.u32 %v414, 2147483648
    %v571 = vxor.u32 %v416, 2147483648
    %v572 = vxor.u32 %v419, 2147483648
    %v573 = vxor.u32 %v421, 2147483648
    %v574 = vxor.u32 %v424, 2147483648
    %v575 = vxor.u32 %v426, 2147483648
    %v576 = vxor.u32 %v429, 2147483648
    %v577 = vxor.u32 %v431, 2147483648
    %v578 = vxor.u32 %v434, 2147483648
    %v579 = vxor.u32 %v436, 2147483648
    %v580 = vxor.u32 %v439, 2147483648
    %v581 = vxor.u32 %v441, 2147483648
    %v582 = vxor.u32 %v444, 2147483648
    %v583 = vxor.u32 %v446, 2147483648
    %v584 = vxor.u32 %v449, 2147483648
    %v585 = vxor.u32 %v451, 2147483648
    %v586 = vxor.u32 %v454, 2147483648
    %v587 = vxor.u32 %v456, 2147483648
    %v588 = vxor.u32 %v459, 2147483648
    %v589 = vxor.u32 %v461, 2147483648
    %v590 = vxor.u32 %v464, 2147483648
    %v591 = vxor.u32 %v466, 2147483648
    %v592 = vxor.u32 %v469, 2147483648
    %v593 = vxor.u32 %v471, 2147483648
    %v594 = vxor.u32 %v474, 2147483648
    %v595 = vxor.u32 %v476, 2147483648
    %v596 = vxor.u32 %v479, 2147483648
    %v597 = vxor.u32 %v481, 2147483648
    %v598 = vxor.u32 %v484, 2147483648
    %v599 = vxor.u32 %v486, 2147483648
    %v600 = vxor.u32 %v489, 2147483648
    %v601 = vxor.u32 %v491, 2147483648
    %v602 = vxor.u32 %v494, 2147483648
    %v603 = vxor.u32 %v496, 2147483648
    %v604 = vxor.u32 %v499, 2147483648
    %v605 = vxor.u32 %v501, 2147483648
    %v606 = vxor.u32 %v504, 2147483648
    %v607 = vxor.u32 %v506, 2147483648
    %v608 = vxor.u32 %v509, 2147483648
    %v609 = vxor.u32 %v511, 2147483648
    %v610 = vxor.u32 %v514, 2147483648
    %v611 = vxor.u32 %v516, 2147483648
    %v612 = vxor.u32 %v519, 2147483648
    %v613 = vxor.u32 %v521, 2147483648
    %v614 = vxor.u32 %v524, 2147483648
    %v615 = vxor.u32 %v526, 2147483648
    %v616 = vxor.u32 %v529, 2147483648
    %v617 = vxor.u32 %v531, 2147483648
    %v618 = vxor.u32 %v534, 2147483648
    %v619 = vxor.u32 %v536, 2147483648
    %v620 = vxor.u32 %v539, 2147483648
    %v621 = vxor.u32 %v541, 2147483648
    %v622 = vxor.u32 %v544, 2147483648
    %v623 = vxor.u32 %v546, 2147483648
    %v624 = vxor.u32 %v549, 2147483648
    %v625 = vxor.u32 %v551, 2147483648
    %v626 = vxor.u32 %v554, 2147483648
    %v627 = vxor.u32 %v556, 2147483648
    %v628 = vxor.u32 %v559, 2147483648
    %v629 = vxor.u32 %v561, 2147483648
    %v630 = vxor.u32 %v564, 2147483648
    %v631 = vxor.u32 %v566, 2147483648
    %v632 = vmul.f32 %v568, 1.442695
    %v633 = vpow.pop %v632
    %v634 = vmul.f32 %v569, 1.442695
    %v635 = vpow.pop %v634
    %v636 = vmul.f32 %v570, 1.442695
    %v637 = vpow.pop %v636
    %v638 = vmul.f32 %v571, 1.442695
    %v639 = vpow.pop %v638
    %v640 = vmul.f32 %v572, 1.442695
    %v641 = vpow.pop %v640
    %v642 = vmul.f32 %v573, 1.442695
    %v643 = vpow.pop %v642
    %v644 = vmul.f32 %v574, 1.442695
    %v645 = vpow.pop %v644
    %v646 = vmul.f32 %v575, 1.442695
    %v647 = vpow.pop %v646
    %v648 = vmul.f32 %v576, 1.442695
    %v649 = vpow.pop %v648
    %v650 = vmul.f32 %v577, 1.442695
    %v651 = vpow.pop %v650
    %v652 = vmul.f32 %v578, 1.442695
    %v653 = vpow.pop %v652
    %v654 = vmul.f32 %v579, 1.442695
    %v655 = vpow.pop %v654
    %v656 = vmul.f32 %v580, 1.442695
    %v657 = vpow.pop %v656
    %v658 = vmul.f32 %v581, 1.442695
    %v659 = vpow.pop %v658
    %v660 = vmul.f32 %v582, 1.442695
    %v661 = vpow.pop %v660
    %v662 = vmul.f32 %v583, 1.442695
    %v663 = vpow.pop %v662
    %v664 = vmul.f32 %v584, 1.442695
    %v665 = vpow.pop %v664
    %v666 = vmul.f32 %v585, 1.442695
    %v667 = vpow.pop %v666
    %v668 = vmul.f32 %v586, 1.442695
    %v669 = vpow.pop %v668
    %v670 = vmul.f32 %v587, 1.442695
    %v671 = vpow.pop %v670
    %v672 = vmul.f32 %v588, 1.442695
    %v673 = vpow.pop %v672
    %v674 = vmul.f32 %v589, 1.442695
    %v675 = vpow.pop %v674
    %v676 = vmul.f32 %v590, 1.442695
    %v677 = vpow.pop %v676
    %v678 = vmul.f32 %v591, 1.442695
    %v679 = vpow.pop %v678
    %v680 = vmul.f32 %v592, 1.442695
    %v681 = vpow.pop %v680
    %v682 = vmul.f32 %v593, 1.442695
    %v683 = vpow.pop %v682
    %v684 = vmul.f32 %v594, 1.442695
    %v685 = vpow.pop %v684
    %v686 = vmul.f32 %v595, 1.442695
    %v687 = vpow.pop %v686
    %v688 = vmul.f32 %v596, 1.442695
    %v689 = vpow.pop %v688
    %v690 = vmul.f32 %v597, 1.442695
    %v691 = vpow.pop %v690
    %v692 = vmul.f32 %v598, 1.442695
    %v693 = vpow.pop %v692
    %v694 = vmul.f32 %v599, 1.442695
    %v695 = vpow.pop %v694
    %v696 = vmul.f32 %v600, 1.442695
    %v697 = vpow.pop %v696
    %v698 = vmul.f32 %v601, 1.442695
    %v699 = vpow.pop %v698
    %v700 = vmul.f32 %v602, 1.442695
    %v701 = vpow.pop %v700
    %v702 = vmul.f32 %v603, 1.442695
    %v703 = vpow.pop %v702
    %v704 = vmul.f32 %v604, 1.442695
    %v705 = vpow.pop %v704
    %v706 = vmul.f32 %v605, 1.442695
    %v707 = vpow.pop %v706
    %v708 = vmul.f32 %v606, 1.442695
    %v709 = vpow.pop %v708
    %v710 = vmul.f32 %v607, 1.442695
    %v711 = vpow.pop %v710
    %v712 = vmul.f32 %v608, 1.442695
    %v713 = vpow.pop %v712
    %v714 = vmul.f32 %v609, 1.442695
    %v715 = vpow.pop %v714
    %v716 = vmul.f32 %v610, 1.442695
    %v717 = vpow.pop %v716
    %v718 = vmul.f32 %v611, 1.442695
    %v719 = vpow.pop %v718
    %v720 = vmul.f32 %v612, 1.442695
    %v721 = vpow.pop %v720
    %v722 = vmul.f32 %v613, 1.442695
    %v723 = vpow.pop %v722
    %v724 = vmul.f32 %v614, 1.442695
    %v725 = vpow.pop %v724
    %v726 = vmul.f32 %v615, 1.442695
    %v727 = vpow.pop %v726
    %v728 = vmul.f32 %v616, 1.442695
    %v729 = vpow.pop %v728
    %v730 = vmul.f32 %v617, 1.442695
    %v731 = vpow.pop %v730
    %v732 = vmul.f32 %v618, 1.442695
    %v733 = vpow.pop %v732
    %v734 = vmul.f32 %v619, 1.442695
    %v735 = vpow.pop %v734
    %v736 = vmul.f32 %v620, 1.442695
    %v737 = vpow.pop %v736
    %v738 = vmul.f32 %v621, 1.442695
    %v739 = vpow.pop %v738
    %v740 = vmul.f32 %v622, 1.442695
    %v741 = vpow.pop %v740
    %v742 = vmul.f32 %v623, 1.442695
    %v743 = vpow.pop %v742
    %v744 = vmul.f32 %v624, 1.442695
    %v745 = vpow.pop %v744
    %v746 = vmul.f32 %v625, 1.442695
    %v747 = vpow.pop %v746
    %v748 = vmul.f32 %v626, 1.442695
    %v749 = vpow.pop %v748
    %v750 = vmul.f32 %v627, 1.442695
    %v751 = vpow.pop %v750
    %v752 = vmul.f32 %v628, 1.442695
    %v753 = vpow.pop %v752
    %v754 = vmul.f32 %v629, 1.442695
    %v755 = vpow.pop %v754
    %v756 = vmul.f32 %v630, 1.442695
    %v757 = vpow.pop %v756
    %v758 = vmul.f32 %v631, 1.442695
    %v759 = vpow.pop %v758
    %v760 = vadd.f32 %v633, 1.0
    %v761 = vadd.f32 %v635, 1.0
    %v762 = vadd.f32 %v637, 1.0
    %v763 = vadd.f32 %v639, 1.0
    %v764 = vadd.f32 %v641, 1.0
    %v765 = vadd.f32 %v643, 1.0
    %v766 = vadd.f32 %v645, 1.0
    %v767 = vadd.f32 %v647, 1.0
    %v768 = vadd.f32 %v649, 1.0
    %v769 = vadd.f32 %v651, 1.0
    %v770 = vadd.f32 %v653, 1.0
    %v771 = vadd.f32 %v655, 1.0
    %v772 = vadd.f32 %v657, 1.0
    %v773 = vadd.f32 %v659, 1.0
    %v774 = vadd.f32 %v661, 1.0
    %v775 = vadd.f32 %v663, 1.0
    %v776 = vadd.f32 %v665, 1.0
    %v777 = vadd.f32 %v667, 1.0
    %v778 = vadd.f32 %v669, 1.0
    %v779 = vadd.f32 %v671, 1.0
    %v780 = vadd.f32 %v673, 1.0
    %v781 = vadd.f32 %v675, 1.0
    %v782 = vadd.f32 %v677, 1.0
    %v783 = vadd.f32 %v679, 1.0
    %v784 = vadd.f32 %v681, 1.0
    %v785 = vadd.f32 %v683, 1.0
    %v786 = vadd.f32 %v685, 1.0
    %v787 = vadd.f32 %v687, 1.0
    %v788 = vadd.f32 %v689, 1.0
    %v789 = vadd.f32 %v691, 1.0
    %v790 = vadd.f32 %v693, 1.0
    %v791 = vadd.f32 %v695, 1.0
    %v792 = vadd.f32 %v697, 1.0
    %v793 = vadd.f32 %v699, 1.0
    %v794 = vadd.f32 %v701, 1.0
    %v795 = vadd.f32 %v703, 1.0
    %v796 = vadd.f32 %v705, 1.0
    %v797 = vadd.f32 %v707, 1.0
    %v798 = vadd.f32 %v709, 1.0
    %v799 = vadd.f32 %v711, 1.0
    %v800 = vadd.f32 %v713, 1.0
    %v801 = vadd.f32 %v715, 1.0
    %v802 = vadd.f32 %v717, 1.0
    %v803 = vadd.f32 %v719, 1.0
    %v804 = vadd.f32 %v721, 1.0
    %v805 = vadd.f32 %v723, 1.0
    %v806 = vadd.f32 %v725, 1.0
    %v807 = vadd.f32 %v727, 1.0
    %v808 = vadd.f32 %v729, 1.0
    %v809 = vadd.f32 %v731, 1.0
    %v810 = vadd.f32 %v733, 1.0
    %v811 = vadd.f32 %v735, 1.0
    %v812 = vadd.f32 %v737, 1.0
    %v813 = vadd.f32 %v739, 1.0
    %v814 = vadd.f32 %v741, 1.0
    %v815 = vadd.f32 %v743, 1.0
    %v816 = vadd.f32 %v745, 1.0
    %v817 = vadd.f32 %v747, 1.0
    %v818 = vadd.f32 %v749, 1.0
    %v819 = vadd.f32 %v751, 1.0
    %v820 = vadd.f32 %v753, 1.0
    %v821 = vadd.f32 %v755, 1.0
    %v822 = vadd.f32 %v757, 1.0
    %v823 = vadd.f32 %v759, 1.0
    %v824 = vrcp.pop %v760
    %v825 = vmul.f32 %v760, %v824
    %v826 = vsub.f32 1.0, %v825
    %v827 = vmul.f32 %v824, %v826
    %v828 = vadd.f32 %v824, %v827
    %vm829 = vweird.f32 %v760
    %vm830 = vweird.f32 %v824
    %vm831 = vmor %vm829, %vm830
    %v832 = vsel %vm831, %v824, %v828
    %v833 = vand.u32 2147483647, %v760
    %vm834 = vcmp.eq.f32.partialorder %v833, 8.507059e+37
    %v835 = vand.u32 %v760, 2147483648
    %v836 = vor.u32 1.1754944e-38, %v835
    %v837 = vsel %vm834, %v836, %v832
    %v838 = vmul.f32 1.0, %v837
    %v839 = vrcp.pop %v761
    %v840 = vmul.f32 %v761, %v839
    %v841 = vsub.f32 1.0, %v840
    %v842 = vmul.f32 %v839, %v841
    %v843 = vadd.f32 %v839, %v842
    %vm844 = vweird.f32 %v761
    %vm845 = vweird.f32 %v839
    %vm846 = vmor %vm844, %vm845
    %v847 = vsel %vm846, %v839, %v843
    %v848 = vand.u32 2147483647, %v761
    %vm849 = vcmp.eq.f32.partialorder %v848, 8.507059e+37
    %v850 = vand.u32 %v761, 2147483648
    %v851 = vor.u32 1.1754944e-38, %v850
    %v852 = vsel %vm849, %v851, %v847
    %v853 = vmul.f32 1.0, %v852
    %v854 = vrcp.pop %v762
    %v855 = vmul.f32 %v762, %v854
    %v856 = vsub.f32 1.0, %v855
    %v857 = vmul.f32 %v854, %v856
    %v858 = vadd.f32 %v854, %v857
    %vm859 = vweird.f32 %v762
    %vm860 = vweird.f32 %v854
    %vm861 = vmor %vm859, %vm860
    %v862 = vsel %vm861, %v854, %v858
    %v863 = vand.u32 2147483647, %v762
    %vm864 = vcmp.eq.f32.partialorder %v863, 8.507059e+37
    %v865 = vand.u32 %v762, 2147483648
    %v866 = vor.u32 1.1754944e-38, %v865
    %v867 = vsel %vm864, %v866, %v862
    %v868 = vmul.f32 1.0, %v867
    %v869 = vrcp.pop %v763
    %v870 = vmul.f32 %v763, %v869
    %v871 = vsub.f32 1.0, %v870
    %v872 = vmul.f32 %v869, %v871
    %v873 = vadd.f32 %v869, %v872
    %vm874 = vweird.f32 %v763
    %vm875 = vweird.f32 %v869
    %vm876 = vmor %vm874, %vm875
    %v877 = vsel %vm876, %v869, %v873
    %v878 = vand.u32 2147483647, %v763
    %vm879 = vcmp.eq.f32.partialorder %v878, 8.507059e+37
    %v880 = vand.u32 %v763, 2147483648
    %v881 = vor.u32 1.1754944e-38, %v880
    %v882 = vsel %vm879, %v881, %v877
    %v883 = vmul.f32 1.0, %v882
    %v884 = vrcp.pop %v764
    %v885 = vmul.f32 %v764, %v884
    %v886 = vsub.f32 1.0, %v885
    %v887 = vmul.f32 %v884, %v886
    %v888 = vadd.f32 %v884, %v887
    %vm889 = vweird.f32 %v764
    %vm890 = vweird.f32 %v884
    %vm891 = vmor %vm889, %vm890
    %v892 = vsel %vm891, %v884, %v888
    %v893 = vand.u32 2147483647, %v764
    %vm894 = vcmp.eq.f32.partialorder %v893, 8.507059e+37
    %v895 = vand.u32 %v764, 2147483648
    %v896 = vor.u32 1.1754944e-38, %v895
    %v897 = vsel %vm894, %v896, %v892
    %v898 = vmul.f32 1.0, %v897
    %v899 = vrcp.pop %v765
    %v900 = vmul.f32 %v765, %v899
    %v901 = vsub.f32 1.0, %v900
    %v902 = vmul.f32 %v899, %v901
    %v903 = vadd.f32 %v899, %v902
    %vm904 = vweird.f32 %v765
    %vm905 = vweird.f32 %v899
    %vm906 = vmor %vm904, %vm905
    %v907 = vsel %vm906, %v899, %v903
    %v908 = vand.u32 2147483647, %v765
    %vm909 = vcmp.eq.f32.partialorder %v908, 8.507059e+37
    %v910 = vand.u32 %v765, 2147483648
    %v911 = vor.u32 1.1754944e-38, %v910
    %v912 = vsel %vm909, %v911, %v907
    %v913 = vmul.f32 1.0, %v912
    %v914 = vrcp.pop %v766
    %v915 = vmul.f32 %v766, %v914
    %v916 = vsub.f32 1.0, %v915
    %v917 = vmul.f32 %v914, %v916
    %v918 = vadd.f32 %v914, %v917
    %vm919 = vweird.f32 %v766
    %vm920 = vweird.f32 %v914
    %vm921 = vmor %vm919, %vm920
    %v922 = vsel %vm921, %v914, %v918
    %v923 = vand.u32 2147483647, %v766
    %vm924 = vcmp.eq.f32.partialorder %v923, 8.507059e+37
    %v925 = vand.u32 %v766, 2147483648
    %v926 = vor.u32 1.1754944e-38, %v925
    %v927 = vsel %vm924, %v926, %v922
    %v928 = vmul.f32 1.0, %v927
    %v929 = vrcp.pop %v767
    %v930 = vmul.f32 %v767, %v929
    %v931 = vsub.f32 1.0, %v930
    %v932 = vmul.f32 %v929, %v931
    %v933 = vadd.f32 %v929, %v932
    %vm934 = vweird.f32 %v767
    %vm935 = vweird.f32 %v929
    %vm936 = vmor %vm934, %vm935
    %v937 = vsel %vm936, %v929, %v933
    %v938 = vand.u32 2147483647, %v767
    %vm939 = vcmp.eq.f32.partialorder %v938, 8.507059e+37
    %v940 = vand.u32 %v767, 2147483648
    %v941 = vor.u32 1.1754944e-38, %v940
    %v942 = vsel %vm939, %v941, %v937
    %v943 = vmul.f32 1.0, %v942
    %v944 = vrcp.pop %v768
    %v945 = vmul.f32 %v768, %v944
    %v946 = vsub.f32 1.0, %v945
    %v947 = vmul.f32 %v944, %v946
    %v948 = vadd.f32 %v944, %v947
    %vm949 = vweird.f32 %v768
    %vm950 = vweird.f32 %v944
    %vm951 = vmor %vm949, %vm950
    %v952 = vsel %vm951, %v944, %v948
    %v953 = vand.u32 2147483647, %v768
    %vm954 = vcmp.eq.f32.partialorder %v953, 8.507059e+37
    %v955 = vand.u32 %v768, 2147483648
    %v956 = vor.u32 1.1754944e-38, %v955
    %v957 = vsel %vm954, %v956, %v952
    %v958 = vmul.f32 1.0, %v957
    %v959 = vrcp.pop %v769
    %v960 = vmul.f32 %v769, %v959
    %v961 = vsub.f32 1.0, %v960
    %v962 = vmul.f32 %v959, %v961
    %v963 = vadd.f32 %v959, %v962
    %vm964 = vweird.f32 %v769
    %vm965 = vweird.f32 %v959
    %vm966 = vmor %vm964, %vm965
    %v967 = vsel %vm966, %v959, %v963
    %v968 = vand.u32 2147483647, %v769
    %vm969 = vcmp.eq.f32.partialorder %v968, 8.507059e+37
    %v970 = vand.u32 %v769, 2147483648
    %v971 = vor.u32 1.1754944e-38, %v970
    %v972 = vsel %vm969, %v971, %v967
    %v973 = vmul.f32 1.0, %v972
    %v974 = vrcp.pop %v770
    %v975 = vmul.f32 %v770, %v974
    %v976 = vsub.f32 1.0, %v975
    %v977 = vmul.f32 %v974, %v976
    %v978 = vadd.f32 %v974, %v977
    %vm979 = vweird.f32 %v770
    %vm980 = vweird.f32 %v974
    %vm981 = vmor %vm979, %vm980
    %v982 = vsel %vm981, %v974, %v978
    %v983 = vand.u32 2147483647, %v770
    %vm984 = vcmp.eq.f32.partialorder %v983, 8.507059e+37
    %v985 = vand.u32 %v770, 2147483648
    %v986 = vor.u32 1.1754944e-38, %v985
    %v987 = vsel %vm984, %v986, %v982
    %v988 = vmul.f32 1.0, %v987
    %v989 = vrcp.pop %v771
    %v990 = vmul.f32 %v771, %v989
    %v991 = vsub.f32 1.0, %v990
    %v992 = vmul.f32 %v989, %v991
    %v993 = vadd.f32 %v989, %v992
    %vm994 = vweird.f32 %v771
    %vm995 = vweird.f32 %v989
    %vm996 = vmor %vm994, %vm995
    %v997 = vsel %vm996, %v989, %v993
    %v998 = vand.u32 2147483647, %v771
    %vm999 = vcmp.eq.f32.partialorder %v998, 8.507059e+37
    %v1000 = vand.u32 %v771, 2147483648
    %v1001 = vor.u32 1.1754944e-38, %v1000
    %v1002 = vsel %vm999, %v1001, %v997
    %v1003 = vmul.f32 1.0, %v1002
    %v1004 = vrcp.pop %v772
    %v1005 = vmul.f32 %v772, %v1004
    %v1006 = vsub.f32 1.0, %v1005
    %v1007 = vmul.f32 %v1004, %v1006
    %v1008 = vadd.f32 %v1004, %v1007
    %vm1009 = vweird.f32 %v772
    %vm1010 = vweird.f32 %v1004
    %vm1011 = vmor %vm1009, %vm1010
    %v1012 = vsel %vm1011, %v1004, %v1008
    %v1013 = vand.u32 2147483647, %v772
    %vm1014 = vcmp.eq.f32.partialorder %v1013, 8.507059e+37
    %v1015 = vand.u32 %v772, 2147483648
    %v1016 = vor.u32 1.1754944e-38, %v1015
    %v1017 = vsel %vm1014, %v1016, %v1012
    %v1018 = vmul.f32 1.0, %v1017
    %v1019 = vrcp.pop %v773
    %v1020 = vmul.f32 %v773, %v1019
    %v1021 = vsub.f32 1.0, %v1020
    %v1022 = vmul.f32 %v1019, %v1021
    %v1023 = vadd.f32 %v1019, %v1022
    %vm1024 = vweird.f32 %v773
    %vm1025 = vweird.f32 %v1019
    %vm1026 = vmor %vm1024, %vm1025
    %v1027 = vsel %vm1026, %v1019, %v1023
    %v1028 = vand.u32 2147483647, %v773
    %vm1029 = vcmp.eq.f32.partialorder %v1028, 8.507059e+37
    %v1030 = vand.u32 %v773, 2147483648
    %v1031 = vor.u32 1.1754944e-38, %v1030
    %v1032 = vsel %vm1029, %v1031, %v1027
    %v1033 = vmul.f32 1.0, %v1032
    %v1034 = vrcp.pop %v774
    %v1035 = vmul.f32 %v774, %v1034
    %v1036 = vsub.f32 1.0, %v1035
    %v1037 = vmul.f32 %v1034, %v1036
    %v1038 = vadd.f32 %v1034, %v1037
    %vm1039 = vweird.f32 %v774
    %vm1040 = vweird.f32 %v1034
    %vm1041 = vmor %vm1039, %vm1040
    %v1042 = vsel %vm1041, %v1034, %v1038
    %v1043 = vand.u32 2147483647, %v774
    %vm1044 = vcmp.eq.f32.partialorder %v1043, 8.507059e+37
    %v1045 = vand.u32 %v774, 2147483648
    %v1046 = vor.u32 1.1754944e-38, %v1045
    %v1047 = vsel %vm1044, %v1046, %v1042
    %v1048 = vmul.f32 1.0, %v1047
    %v1049 = vrcp.pop %v775
    %v1050 = vmul.f32 %v775, %v1049
    %v1051 = vsub.f32 1.0, %v1050
    %v1052 = vmul.f32 %v1049, %v1051
    %v1053 = vadd.f32 %v1049, %v1052
    %vm1054 = vweird.f32 %v775
    %vm1055 = vweird.f32 %v1049
    %vm1056 = vmor %vm1054, %vm1055
    %v1057 = vsel %vm1056, %v1049, %v1053
    %v1058 = vand.u32 2147483647, %v775
    %vm1059 = vcmp.eq.f32.partialorder %v1058, 8.507059e+37
    %v1060 = vand.u32 %v775, 2147483648
    %v1061 = vor.u32 1.1754944e-38, %v1060
    %v1062 = vsel %vm1059, %v1061, %v1057
    %v1063 = vmul.f32 1.0, %v1062
    %v1064 = vrcp.pop %v776
    %v1065 = vmul.f32 %v776, %v1064
    %v1066 = vsub.f32 1.0, %v1065
    %v1067 = vmul.f32 %v1064, %v1066
    %v1068 = vadd.f32 %v1064, %v1067
    %vm1069 = vweird.f32 %v776
    %vm1070 = vweird.f32 %v1064
    %vm1071 = vmor %vm1069, %vm1070
    %v1072 = vsel %vm1071, %v1064, %v1068
    %v1073 = vand.u32 2147483647, %v776
    %vm1074 = vcmp.eq.f32.partialorder %v1073, 8.507059e+37
    %v1075 = vand.u32 %v776, 2147483648
    %v1076 = vor.u32 1.1754944e-38, %v1075
    %v1077 = vsel %vm1074, %v1076, %v1072
    %v1078 = vmul.f32 1.0, %v1077
    %v1079 = vrcp.pop %v777
    %v1080 = vmul.f32 %v777, %v1079
    %v1081 = vsub.f32 1.0, %v1080
    %v1082 = vmul.f32 %v1079, %v1081
    %v1083 = vadd.f32 %v1079, %v1082
    %vm1084 = vweird.f32 %v777
    %vm1085 = vweird.f32 %v1079
    %vm1086 = vmor %vm1084, %vm1085
    %v1087 = vsel %vm1086, %v1079, %v1083
    %v1088 = vand.u32 2147483647, %v777
    %vm1089 = vcmp.eq.f32.partialorder %v1088, 8.507059e+37
    %v1090 = vand.u32 %v777, 2147483648
    %v1091 = vor.u32 1.1754944e-38, %v1090
    %v1092 = vsel %vm1089, %v1091, %v1087
    %v1093 = vmul.f32 1.0, %v1092
    %v1094 = vrcp.pop %v778
    %v1095 = vmul.f32 %v778, %v1094
    %v1096 = vsub.f32 1.0, %v1095
    %v1097 = vmul.f32 %v1094, %v1096
    %v1098 = vadd.f32 %v1094, %v1097
    %vm1099 = vweird.f32 %v778
    %vm1100 = vweird.f32 %v1094
    %vm1101 = vmor %vm1099, %vm1100
    %v1102 = vsel %vm1101, %v1094, %v1098
    %v1103 = vand.u32 2147483647, %v778
    %vm1104 = vcmp.eq.f32.partialorder %v1103, 8.507059e+37
    %v1105 = vand.u32 %v778, 2147483648
    %v1106 = vor.u32 1.1754944e-38, %v1105
    %v1107 = vsel %vm1104, %v1106, %v1102
    %v1108 = vmul.f32 1.0, %v1107
    %v1109 = vrcp.pop %v779
    %v1110 = vmul.f32 %v779, %v1109
    %v1111 = vsub.f32 1.0, %v1110
    %v1112 = vmul.f32 %v1109, %v1111
    %v1113 = vadd.f32 %v1109, %v1112
    %vm1114 = vweird.f32 %v779
    %vm1115 = vweird.f32 %v1109
    %vm1116 = vmor %vm1114, %vm1115
    %v1117 = vsel %vm1116, %v1109, %v1113
    %v1118 = vand.u32 2147483647, %v779
    %vm1119 = vcmp.eq.f32.partialorder %v1118, 8.507059e+37
    %v1120 = vand.u32 %v779, 2147483648
    %v1121 = vor.u32 1.1754944e-38, %v1120
    %v1122 = vsel %vm1119, %v1121, %v1117
    %v1123 = vmul.f32 1.0, %v1122
    %v1124 = vrcp.pop %v780
    %v1125 = vmul.f32 %v780, %v1124
    %v1126 = vsub.f32 1.0, %v1125
    %v1127 = vmul.f32 %v1124, %v1126
    %v1128 = vadd.f32 %v1124, %v1127
    %vm1129 = vweird.f32 %v780
    %vm1130 = vweird.f32 %v1124
    %vm1131 = vmor %vm1129, %vm1130
    %v1132 = vsel %vm1131, %v1124, %v1128
    %v1133 = vand.u32 2147483647, %v780
    %vm1134 = vcmp.eq.f32.partialorder %v1133, 8.507059e+37
    %v1135 = vand.u32 %v780, 2147483648
    %v1136 = vor.u32 1.1754944e-38, %v1135
    %v1137 = vsel %vm1134, %v1136, %v1132
    %v1138 = vmul.f32 1.0, %v1137
    %v1139 = vrcp.pop %v781
    %v1140 = vmul.f32 %v781, %v1139
    %v1141 = vsub.f32 1.0, %v1140
    %v1142 = vmul.f32 %v1139, %v1141
    %v1143 = vadd.f32 %v1139, %v1142
    %vm1144 = vweird.f32 %v781
    %vm1145 = vweird.f32 %v1139
    %vm1146 = vmor %vm1144, %vm1145
    %v1147 = vsel %vm1146, %v1139, %v1143
    %v1148 = vand.u32 2147483647, %v781
    %vm1149 = vcmp.eq.f32.partialorder %v1148, 8.507059e+37
    %v1150 = vand.u32 %v781, 2147483648
    %v1151 = vor.u32 1.1754944e-38, %v1150
    %v1152 = vsel %vm1149, %v1151, %v1147
    %v1153 = vmul.f32 1.0, %v1152
    %v1154 = vrcp.pop %v782
    %v1155 = vmul.f32 %v782, %v1154
    %v1156 = vsub.f32 1.0, %v1155
    %v1157 = vmul.f32 %v1154, %v1156
    %v1158 = vadd.f32 %v1154, %v1157
    %vm1159 = vweird.f32 %v782
    %vm1160 = vweird.f32 %v1154
    %vm1161 = vmor %vm1159, %vm1160
    %v1162 = vsel %vm1161, %v1154, %v1158
    %v1163 = vand.u32 2147483647, %v782
    %vm1164 = vcmp.eq.f32.partialorder %v1163, 8.507059e+37
    %v1165 = vand.u32 %v782, 2147483648
    %v1166 = vor.u32 1.1754944e-38, %v1165
    %v1167 = vsel %vm1164, %v1166, %v1162
    %v1168 = vmul.f32 1.0, %v1167
    %v1169 = vrcp.pop %v783
    %v1170 = vmul.f32 %v783, %v1169
    %v1171 = vsub.f32 1.0, %v1170
    %v1172 = vmul.f32 %v1169, %v1171
    %v1173 = vadd.f32 %v1169, %v1172
    %vm1174 = vweird.f32 %v783
    %vm1175 = vweird.f32 %v1169
    %vm1176 = vmor %vm1174, %vm1175
    %v1177 = vsel %vm1176, %v1169, %v1173
    %v1178 = vand.u32 2147483647, %v783
    %vm1179 = vcmp.eq.f32.partialorder %v1178, 8.507059e+37
    %v1180 = vand.u32 %v783, 2147483648
    %v1181 = vor.u32 1.1754944e-38, %v1180
    %v1182 = vsel %vm1179, %v1181, %v1177
    %v1183 = vmul.f32 1.0, %v1182
    %v1184 = vrcp.pop %v784
    %v1185 = vmul.f32 %v784, %v1184
    %v1186 = vsub.f32 1.0, %v1185
    %v1187 = vmul.f32 %v1184, %v1186
    %v1188 = vadd.f32 %v1184, %v1187
    %vm1189 = vweird.f32 %v784
    %vm1190 = vweird.f32 %v1184
    %vm1191 = vmor %vm1189, %vm1190
    %v1192 = vsel %vm1191, %v1184, %v1188
    %v1193 = vand.u32 2147483647, %v784
    %vm1194 = vcmp.eq.f32.partialorder %v1193, 8.507059e+37
    %v1195 = vand.u32 %v784, 2147483648
    %v1196 = vor.u32 1.1754944e-38, %v1195
    %v1197 = vsel %vm1194, %v1196, %v1192
    %v1198 = vmul.f32 1.0, %v1197
    %v1199 = vrcp.pop %v785
    %v1200 = vmul.f32 %v785, %v1199
    %v1201 = vsub.f32 1.0, %v1200
    %v1202 = vmul.f32 %v1199, %v1201
    %v1203 = vadd.f32 %v1199, %v1202
    %vm1204 = vweird.f32 %v785
    %vm1205 = vweird.f32 %v1199
    %vm1206 = vmor %vm1204, %vm1205
    %v1207 = vsel %vm1206, %v1199, %v1203
    %v1208 = vand.u32 2147483647, %v785
    %vm1209 = vcmp.eq.f32.partialorder %v1208, 8.507059e+37
    %v1210 = vand.u32 %v785, 2147483648
    %v1211 = vor.u32 1.1754944e-38, %v1210
    %v1212 = vsel %vm1209, %v1211, %v1207
    %v1213 = vmul.f32 1.0, %v1212
    %v1214 = vrcp.pop %v786
    %v1215 = vmul.f32 %v786, %v1214
    %v1216 = vsub.f32 1.0, %v1215
    %v1217 = vmul.f32 %v1214, %v1216
    %v1218 = vadd.f32 %v1214, %v1217
    %vm1219 = vweird.f32 %v786
    %vm1220 = vweird.f32 %v1214
    %vm1221 = vmor %vm1219, %vm1220
    %v1222 = vsel %vm1221, %v1214, %v1218
    %v1223 = vand.u32 2147483647, %v786
    %vm1224 = vcmp.eq.f32.partialorder %v1223, 8.507059e+37
    %v1225 = vand.u32 %v786, 2147483648
    %v1226 = vor.u32 1.1754944e-38, %v1225
    %v1227 = vsel %vm1224, %v1226, %v1222
    %v1228 = vmul.f32 1.0, %v1227
    %v1229 = vrcp.pop %v787
    %v1230 = vmul.f32 %v787, %v1229
    %v1231 = vsub.f32 1.0, %v1230
    %v1232 = vmul.f32 %v1229, %v1231
    %v1233 = vadd.f32 %v1229, %v1232
    %vm1234 = vweird.f32 %v787
    %vm1235 = vweird.f32 %v1229
    %vm1236 = vmor %vm1234, %vm1235
    %v1237 = vsel %vm1236, %v1229, %v1233
    %v1238 = vand.u32 2147483647, %v787
    %vm1239 = vcmp.eq.f32.partialorder %v1238, 8.507059e+37
    %v1240 = vand.u32 %v787, 2147483648
    %v1241 = vor.u32 1.1754944e-38, %v1240
    %v1242 = vsel %vm1239, %v1241, %v1237
    %v1243 = vmul.f32 1.0, %v1242
    %v1244 = vrcp.pop %v788
    %v1245 = vmul.f32 %v788, %v1244
    %v1246 = vsub.f32 1.0, %v1245
    %v1247 = vmul.f32 %v1244, %v1246
    %v1248 = vadd.f32 %v1244, %v1247
    %vm1249 = vweird.f32 %v788
    %vm1250 = vweird.f32 %v1244
    %vm1251 = vmor %vm1249, %vm1250
    %v1252 = vsel %vm1251, %v1244, %v1248
    %v1253 = vand.u32 2147483647, %v788
    %vm1254 = vcmp.eq.f32.partialorder %v1253, 8.507059e+37
    %v1255 = vand.u32 %v788, 2147483648
    %v1256 = vor.u32 1.1754944e-38, %v1255
    %v1257 = vsel %vm1254, %v1256, %v1252
    %v1258 = vmul.f32 1.0, %v1257
    %v1259 = vrcp.pop %v789
    %v1260 = vmul.f32 %v789, %v1259
    %v1261 = vsub.f32 1.0, %v1260
    %v1262 = vmul.f32 %v1259, %v1261
    %v1263 = vadd.f32 %v1259, %v1262
    %vm1264 = vweird.f32 %v789
    %vm1265 = vweird.f32 %v1259
    %vm1266 = vmor %vm1264, %vm1265
    %v1267 = vsel %vm1266, %v1259, %v1263
    %v1268 = vand.u32 2147483647, %v789
    %vm1269 = vcmp.eq.f32.partialorder %v1268, 8.507059e+37
    %v1270 = vand.u32 %v789, 2147483648
    %v1271 = vor.u32 1.1754944e-38, %v1270
    %v1272 = vsel %vm1269, %v1271, %v1267
    %v1273 = vmul.f32 1.0, %v1272
    %v1274 = vrcp.pop %v790
    %v1275 = vmul.f32 %v790, %v1274
    %v1276 = vsub.f32 1.0, %v1275
    %v1277 = vmul.f32 %v1274, %v1276
    %v1278 = vadd.f32 %v1274, %v1277
    %vm1279 = vweird.f32 %v790
    %vm1280 = vweird.f32 %v1274
    %vm1281 = vmor %vm1279, %vm1280
    %v1282 = vsel %vm1281, %v1274, %v1278
    %v1283 = vand.u32 2147483647, %v790
    %vm1284 = vcmp.eq.f32.partialorder %v1283, 8.507059e+37
    %v1285 = vand.u32 %v790, 2147483648
    %v1286 = vor.u32 1.1754944e-38, %v1285
    %v1287 = vsel %vm1284, %v1286, %v1282
    %v1288 = vmul.f32 1.0, %v1287
    %v1289 = vrcp.pop %v791
    %v1290 = vmul.f32 %v791, %v1289
    %v1291 = vsub.f32 1.0, %v1290
    %v1292 = vmul.f32 %v1289, %v1291
    %v1293 = vadd.f32 %v1289, %v1292
    %vm1294 = vweird.f32 %v791
    %vm1295 = vweird.f32 %v1289
    %vm1296 = vmor %vm1294, %vm1295
    %v1297 = vsel %vm1296, %v1289, %v1293
    %v1298 = vand.u32 2147483647, %v791
    %vm1299 = vcmp.eq.f32.partialorder %v1298, 8.507059e+37
    %v1300 = vand.u32 %v791, 2147483648
    %v1301 = vor.u32 1.1754944e-38, %v1300
    %v1302 = vsel %vm1299, %v1301, %v1297
    %v1303 = vmul.f32 1.0, %v1302
    %v1304 = vrcp.pop %v792
    %v1305 = vmul.f32 %v792, %v1304
    %v1306 = vsub.f32 1.0, %v1305
    %v1307 = vmul.f32 %v1304, %v1306
    %v1308 = vadd.f32 %v1304, %v1307
    %vm1309 = vweird.f32 %v792
    %vm1310 = vweird.f32 %v1304
    %vm1311 = vmor %vm1309, %vm1310
    %v1312 = vsel %vm1311, %v1304, %v1308
    %v1313 = vand.u32 2147483647, %v792
    %vm1314 = vcmp.eq.f32.partialorder %v1313, 8.507059e+37
    %v1315 = vand.u32 %v792, 2147483648
    %v1316 = vor.u32 1.1754944e-38, %v1315
    %v1317 = vsel %vm1314, %v1316, %v1312
    %v1318 = vmul.f32 1.0, %v1317
    %v1319 = vrcp.pop %v793
    %v1320 = vmul.f32 %v793, %v1319
    %v1321 = vsub.f32 1.0, %v1320
    %v1322 = vmul.f32 %v1319, %v1321
    %v1323 = vadd.f32 %v1319, %v1322
    %vm1324 = vweird.f32 %v793
    %vm1325 = vweird.f32 %v1319
    %vm1326 = vmor %vm1324, %vm1325
    %v1327 = vsel %vm1326, %v1319, %v1323
    %v1328 = vand.u32 2147483647, %v793
    %vm1329 = vcmp.eq.f32.partialorder %v1328, 8.507059e+37
    %v1330 = vand.u32 %v793, 2147483648
    %v1331 = vor.u32 1.1754944e-38, %v1330
    %v1332 = vsel %vm1329, %v1331, %v1327
    %v1333 = vmul.f32 1.0, %v1332
    %v1334 = vrcp.pop %v794
    %v1335 = vmul.f32 %v794, %v1334
    %v1336 = vsub.f32 1.0, %v1335
    %v1337 = vmul.f32 %v1334, %v1336
    %v1338 = vadd.f32 %v1334, %v1337
    %vm1339 = vweird.f32 %v794
    %vm1340 = vweird.f32 %v1334
    %vm1341 = vmor %vm1339, %vm1340
    %v1342 = vsel %vm1341, %v1334, %v1338
    %v1343 = vand.u32 2147483647, %v794
    %vm1344 = vcmp.eq.f32.partialorder %v1343, 8.507059e+37
    %v1345 = vand.u32 %v794, 2147483648
    %v1346 = vor.u32 1.1754944e-38, %v1345
    %v1347 = vsel %vm1344, %v1346, %v1342
    %v1348 = vmul.f32 1.0, %v1347
    %v1349 = vrcp.pop %v795
    %v1350 = vmul.f32 %v795, %v1349
    %v1351 = vsub.f32 1.0, %v1350
    %v1352 = vmul.f32 %v1349, %v1351
    %v1353 = vadd.f32 %v1349, %v1352
    %vm1354 = vweird.f32 %v795
    %vm1355 = vweird.f32 %v1349
    %vm1356 = vmor %vm1354, %vm1355
    %v1357 = vsel %vm1356, %v1349, %v1353
    %v1358 = vand.u32 2147483647, %v795
    %vm1359 = vcmp.eq.f32.partialorder %v1358, 8.507059e+37
    %v1360 = vand.u32 %v795, 2147483648
    %v1361 = vor.u32 1.1754944e-38, %v1360
    %v1362 = vsel %vm1359, %v1361, %v1357
    %v1363 = vmul.f32 1.0, %v1362
    %v1364 = vrcp.pop %v796
    %v1365 = vmul.f32 %v796, %v1364
    %v1366 = vsub.f32 1.0, %v1365
    %v1367 = vmul.f32 %v1364, %v1366
    %v1368 = vadd.f32 %v1364, %v1367
    %vm1369 = vweird.f32 %v796
    %vm1370 = vweird.f32 %v1364
    %vm1371 = vmor %vm1369, %vm1370
    %v1372 = vsel %vm1371, %v1364, %v1368
    %v1373 = vand.u32 2147483647, %v796
    %vm1374 = vcmp.eq.f32.partialorder %v1373, 8.507059e+37
    %v1375 = vand.u32 %v796, 2147483648
    %v1376 = vor.u32 1.1754944e-38, %v1375
    %v1377 = vsel %vm1374, %v1376, %v1372
    %v1378 = vmul.f32 1.0, %v1377
    %v1379 = vrcp.pop %v797
    %v1380 = vmul.f32 %v797, %v1379
    %v1381 = vsub.f32 1.0, %v1380
    %v1382 = vmul.f32 %v1379, %v1381
    %v1383 = vadd.f32 %v1379, %v1382
    %vm1384 = vweird.f32 %v797
    %vm1385 = vweird.f32 %v1379
    %vm1386 = vmor %vm1384, %vm1385
    %v1387 = vsel %vm1386, %v1379, %v1383
    %v1388 = vand.u32 2147483647, %v797
    %vm1389 = vcmp.eq.f32.partialorder %v1388, 8.507059e+37
    %v1390 = vand.u32 %v797, 2147483648
    %v1391 = vor.u32 1.1754944e-38, %v1390
    %v1392 = vsel %vm1389, %v1391, %v1387
    %v1393 = vmul.f32 1.0, %v1392
    %v1394 = vrcp.pop %v798
    %v1395 = vmul.f32 %v798, %v1394
    %v1396 = vsub.f32 1.0, %v1395
    %v1397 = vmul.f32 %v1394, %v1396
    %v1398 = vadd.f32 %v1394, %v1397
    %vm1399 = vweird.f32 %v798
    %vm1400 = vweird.f32 %v1394
    %vm1401 = vmor %vm1399, %vm1400
    %v1402 = vsel %vm1401, %v1394, %v1398
    %v1403 = vand.u32 2147483647, %v798
    %vm1404 = vcmp.eq.f32.partialorder %v1403, 8.507059e+37
    %v1405 = vand.u32 %v798, 2147483648
    %v1406 = vor.u32 1.1754944e-38, %v1405
    %v1407 = vsel %vm1404, %v1406, %v1402
    %v1408 = vmul.f32 1.0, %v1407
    %v1409 = vrcp.pop %v799
    %v1410 = vmul.f32 %v799, %v1409
    %v1411 = vsub.f32 1.0, %v1410
    %v1412 = vmul.f32 %v1409, %v1411
    %v1413 = vadd.f32 %v1409, %v1412
    %vm1414 = vweird.f32 %v799
    %vm1415 = vweird.f32 %v1409
    %vm1416 = vmor %vm1414, %vm1415
    %v1417 = vsel %vm1416, %v1409, %v1413
    %v1418 = vand.u32 2147483647, %v799
    %vm1419 = vcmp.eq.f32.partialorder %v1418, 8.507059e+37
    %v1420 = vand.u32 %v799, 2147483648
    %v1421 = vor.u32 1.1754944e-38, %v1420
    %v1422 = vsel %vm1419, %v1421, %v1417
    %v1423 = vmul.f32 1.0, %v1422
    %v1424 = vrcp.pop %v800
    %v1425 = vmul.f32 %v800, %v1424
    %v1426 = vsub.f32 1.0, %v1425
    %v1427 = vmul.f32 %v1424, %v1426
    %v1428 = vadd.f32 %v1424, %v1427
    %vm1429 = vweird.f32 %v800
    %vm1430 = vweird.f32 %v1424
    %vm1431 = vmor %vm1429, %vm1430
    %v1432 = vsel %vm1431, %v1424, %v1428
    %v1433 = vand.u32 2147483647, %v800
    %vm1434 = vcmp.eq.f32.partialorder %v1433, 8.507059e+37
    %v1435 = vand.u32 %v800, 2147483648
    %v1436 = vor.u32 1.1754944e-38, %v1435
    %v1437 = vsel %vm1434, %v1436, %v1432
    %v1438 = vmul.f32 1.0, %v1437
    %v1439 = vrcp.pop %v801
    %v1440 = vmul.f32 %v801, %v1439
    %v1441 = vsub.f32 1.0, %v1440
    %v1442 = vmul.f32 %v1439, %v1441
    %v1443 = vadd.f32 %v1439, %v1442
    %vm1444 = vweird.f32 %v801
    %vm1445 = vweird.f32 %v1439
    %vm1446 = vmor %vm1444, %vm1445
    %v1447 = vsel %vm1446, %v1439, %v1443
    %v1448 = vand.u32 2147483647, %v801
    %vm1449 = vcmp.eq.f32.partialorder %v1448, 8.507059e+37
    %v1450 = vand.u32 %v801, 2147483648
    %v1451 = vor.u32 1.1754944e-38, %v1450
    %v1452 = vsel %vm1449, %v1451, %v1447
    %v1453 = vmul.f32 1.0, %v1452
    %v1454 = vrcp.pop %v802
    %v1455 = vmul.f32 %v802, %v1454
    %v1456 = vsub.f32 1.0, %v1455
    %v1457 = vmul.f32 %v1454, %v1456
    %v1458 = vadd.f32 %v1454, %v1457
    %vm1459 = vweird.f32 %v802
    %vm1460 = vweird.f32 %v1454
    %vm1461 = vmor %vm1459, %vm1460
    %v1462 = vsel %vm1461, %v1454, %v1458
    %v1463 = vand.u32 2147483647, %v802
    %vm1464 = vcmp.eq.f32.partialorder %v1463, 8.507059e+37
    %v1465 = vand.u32 %v802, 2147483648
    %v1466 = vor.u32 1.1754944e-38, %v1465
    %v1467 = vsel %vm1464, %v1466, %v1462
    %v1468 = vmul.f32 1.0, %v1467
    %v1469 = vrcp.pop %v803
    %v1470 = vmul.f32 %v803, %v1469
    %v1471 = vsub.f32 1.0, %v1470
    %v1472 = vmul.f32 %v1469, %v1471
    %v1473 = vadd.f32 %v1469, %v1472
    %vm1474 = vweird.f32 %v803
    %vm1475 = vweird.f32 %v1469
    %vm1476 = vmor %vm1474, %vm1475
    %v1477 = vsel %vm1476, %v1469, %v1473
    %v1478 = vand.u32 2147483647, %v803
    %vm1479 = vcmp.eq.f32.partialorder %v1478, 8.507059e+37
    %v1480 = vand.u32 %v803, 2147483648
    %v1481 = vor.u32 1.1754944e-38, %v1480
    %v1482 = vsel %vm1479, %v1481, %v1477
    %v1483 = vmul.f32 1.0, %v1482
    %v1484 = vrcp.pop %v804
    %v1485 = vmul.f32 %v804, %v1484
    %v1486 = vsub.f32 1.0, %v1485
    %v1487 = vmul.f32 %v1484, %v1486
    %v1488 = vadd.f32 %v1484, %v1487
    %vm1489 = vweird.f32 %v804
    %vm1490 = vweird.f32 %v1484
    %vm1491 = vmor %vm1489, %vm1490
    %v1492 = vsel %vm1491, %v1484, %v1488
    %v1493 = vand.u32 2147483647, %v804
    %vm1494 = vcmp.eq.f32.partialorder %v1493, 8.507059e+37
    %v1495 = vand.u32 %v804, 2147483648
    %v1496 = vor.u32 1.1754944e-38, %v1495
    %v1497 = vsel %vm1494, %v1496, %v1492
    %v1498 = vmul.f32 1.0, %v1497
    %v1499 = vrcp.pop %v805
    %v1500 = vmul.f32 %v805, %v1499
    %v1501 = vsub.f32 1.0, %v1500
    %v1502 = vmul.f32 %v1499, %v1501
    %v1503 = vadd.f32 %v1499, %v1502
    %vm1504 = vweird.f32 %v805
    %vm1505 = vweird.f32 %v1499
    %vm1506 = vmor %vm1504, %vm1505
    %v1507 = vsel %vm1506, %v1499, %v1503
    %v1508 = vand.u32 2147483647, %v805
    %vm1509 = vcmp.eq.f32.partialorder %v1508, 8.507059e+37
    %v1510 = vand.u32 %v805, 2147483648
    %v1511 = vor.u32 1.1754944e-38, %v1510
    %v1512 = vsel %vm1509, %v1511, %v1507
    %v1513 = vmul.f32 1.0, %v1512
    %v1514 = vrcp.pop %v806
    %v1515 = vmul.f32 %v806, %v1514
    %v1516 = vsub.f32 1.0, %v1515
    %v1517 = vmul.f32 %v1514, %v1516
    %v1518 = vadd.f32 %v1514, %v1517
    %vm1519 = vweird.f32 %v806
    %vm1520 = vweird.f32 %v1514
    %vm1521 = vmor %vm1519, %vm1520
    %v1522 = vsel %vm1521, %v1514, %v1518
    %v1523 = vand.u32 2147483647, %v806
    %vm1524 = vcmp.eq.f32.partialorder %v1523, 8.507059e+37
    %v1525 = vand.u32 %v806, 2147483648
    %v1526 = vor.u32 1.1754944e-38, %v1525
    %v1527 = vsel %vm1524, %v1526, %v1522
    %v1528 = vmul.f32 1.0, %v1527
    %v1529 = vrcp.pop %v807
    %v1530 = vmul.f32 %v807, %v1529
    %v1531 = vsub.f32 1.0, %v1530
    %v1532 = vmul.f32 %v1529, %v1531
    %v1533 = vadd.f32 %v1529, %v1532
    %vm1534 = vweird.f32 %v807
    %vm1535 = vweird.f32 %v1529
    %vm1536 = vmor %vm1534, %vm1535
    %v1537 = vsel %vm1536, %v1529, %v1533
    %v1538 = vand.u32 2147483647, %v807
    %vm1539 = vcmp.eq.f32.partialorder %v1538, 8.507059e+37
    %v1540 = vand.u32 %v807, 2147483648
    %v1541 = vor.u32 1.1754944e-38, %v1540
    %v1542 = vsel %vm1539, %v1541, %v1537
    %v1543 = vmul.f32 1.0, %v1542
    %v1544 = vrcp.pop %v808
    %v1545 = vmul.f32 %v808, %v1544
    %v1546 = vsub.f32 1.0, %v1545
    %v1547 = vmul.f32 %v1544, %v1546
    %v1548 = vadd.f32 %v1544, %v1547
    %vm1549 = vweird.f32 %v808
    %vm1550 = vweird.f32 %v1544
    %vm1551 = vmor %vm1549, %vm1550
    %v1552 = vsel %vm1551, %v1544, %v1548
    %v1553 = vand.u32 2147483647, %v808
    %vm1554 = vcmp.eq.f32.partialorder %v1553, 8.507059e+37
    %v1555 = vand.u32 %v808, 2147483648
    %v1556 = vor.u32 1.1754944e-38, %v1555
    %v1557 = vsel %vm1554, %v1556, %v1552
    %v1558 = vmul.f32 1.0, %v1557
    %v1559 = vrcp.pop %v809
    %v1560 = vmul.f32 %v809, %v1559
    %v1561 = vsub.f32 1.0, %v1560
    %v1562 = vmul.f32 %v1559, %v1561
    %v1563 = vadd.f32 %v1559, %v1562
    %vm1564 = vweird.f32 %v809
    %vm1565 = vweird.f32 %v1559
    %vm1566 = vmor %vm1564, %vm1565
    %v1567 = vsel %vm1566, %v1559, %v1563
    %v1568 = vand.u32 2147483647, %v809
    %vm1569 = vcmp.eq.f32.partialorder %v1568, 8.507059e+37
    %v1570 = vand.u32 %v809, 2147483648
    %v1571 = vor.u32 1.1754944e-38, %v1570
    %v1572 = vsel %vm1569, %v1571, %v1567
    %v1573 = vmul.f32 1.0, %v1572
    %v1574 = vrcp.pop %v810
    %v1575 = vmul.f32 %v810, %v1574
    %v1576 = vsub.f32 1.0, %v1575
    %v1577 = vmul.f32 %v1574, %v1576
    %v1578 = vadd.f32 %v1574, %v1577
    %vm1579 = vweird.f32 %v810
    %vm1580 = vweird.f32 %v1574
    %vm1581 = vmor %vm1579, %vm1580
    %v1582 = vsel %vm1581, %v1574, %v1578
    %v1583 = vand.u32 2147483647, %v810
    %vm1584 = vcmp.eq.f32.partialorder %v1583, 8.507059e+37
    %v1585 = vand.u32 %v810, 2147483648
    %v1586 = vor.u32 1.1754944e-38, %v1585
    %v1587 = vsel %vm1584, %v1586, %v1582
    %v1588 = vmul.f32 1.0, %v1587
    %v1589 = vrcp.pop %v811
    %v1590 = vmul.f32 %v811, %v1589
    %v1591 = vsub.f32 1.0, %v1590
    %v1592 = vmul.f32 %v1589, %v1591
    %v1593 = vadd.f32 %v1589, %v1592
    %vm1594 = vweird.f32 %v811
    %vm1595 = vweird.f32 %v1589
    %vm1596 = vmor %vm1594, %vm1595
    %v1597 = vsel %vm1596, %v1589, %v1593
    %v1598 = vand.u32 2147483647, %v811
    %vm1599 = vcmp.eq.f32.partialorder %v1598, 8.507059e+37
    %v1600 = vand.u32 %v811, 2147483648
    %v1601 = vor.u32 1.1754944e-38, %v1600
    %v1602 = vsel %vm1599, %v1601, %v1597
    %v1603 = vmul.f32 1.0, %v1602
    %v1604 = vrcp.pop %v812
    %v1605 = vmul.f32 %v812, %v1604
    %v1606 = vsub.f32 1.0, %v1605
    %v1607 = vmul.f32 %v1604, %v1606
    %v1608 = vadd.f32 %v1604, %v1607
    %vm1609 = vweird.f32 %v812
    %vm1610 = vweird.f32 %v1604
    %vm1611 = vmor %vm1609, %vm1610
    %v1612 = vsel %vm1611, %v1604, %v1608
    %v1613 = vand.u32 2147483647, %v812
    %vm1614 = vcmp.eq.f32.partialorder %v1613, 8.507059e+37
    %v1615 = vand.u32 %v812, 2147483648
    %v1616 = vor.u32 1.1754944e-38, %v1615
    %v1617 = vsel %vm1614, %v1616, %v1612
    %v1618 = vmul.f32 1.0, %v1617
    %v1619 = vrcp.pop %v813
    %v1620 = vmul.f32 %v813, %v1619
    %v1621 = vsub.f32 1.0, %v1620
    %v1622 = vmul.f32 %v1619, %v1621
    %v1623 = vadd.f32 %v1619, %v1622
    %vm1624 = vweird.f32 %v813
    %vm1625 = vweird.f32 %v1619
    %vm1626 = vmor %vm1624, %vm1625
    %v1627 = vsel %vm1626, %v1619, %v1623
    %v1628 = vand.u32 2147483647, %v813
    %vm1629 = vcmp.eq.f32.partialorder %v1628, 8.507059e+37
    %v1630 = vand.u32 %v813, 2147483648
    %v1631 = vor.u32 1.1754944e-38, %v1630
    %v1632 = vsel %vm1629, %v1631, %v1627
    %v1633 = vmul.f32 1.0, %v1632
    %v1634 = vrcp.pop %v814
    %v1635 = vmul.f32 %v814, %v1634
    %v1636 = vsub.f32 1.0, %v1635
    %v1637 = vmul.f32 %v1634, %v1636
    %v1638 = vadd.f32 %v1634, %v1637
    %vm1639 = vweird.f32 %v814
    %vm1640 = vweird.f32 %v1634
    %vm1641 = vmor %vm1639, %vm1640
    %v1642 = vsel %vm1641, %v1634, %v1638
    %v1643 = vand.u32 2147483647, %v814
    %vm1644 = vcmp.eq.f32.partialorder %v1643, 8.507059e+37
    %v1645 = vand.u32 %v814, 2147483648
    %v1646 = vor.u32 1.1754944e-38, %v1645
    %v1647 = vsel %vm1644, %v1646, %v1642
    %v1648 = vmul.f32 1.0, %v1647
    %v1649 = vrcp.pop %v815
    %v1650 = vmul.f32 %v815, %v1649
    %v1651 = vsub.f32 1.0, %v1650
    %v1652 = vmul.f32 %v1649, %v1651
    %v1653 = vadd.f32 %v1649, %v1652
    %vm1654 = vweird.f32 %v815
    %vm1655 = vweird.f32 %v1649
    %vm1656 = vmor %vm1654, %vm1655
    %v1657 = vsel %vm1656, %v1649, %v1653
    %v1658 = vand.u32 2147483647, %v815
    %vm1659 = vcmp.eq.f32.partialorder %v1658, 8.507059e+37
    %v1660 = vand.u32 %v815, 2147483648
    %v1661 = vor.u32 1.1754944e-38, %v1660
    %v1662 = vsel %vm1659, %v1661, %v1657
    %v1663 = vmul.f32 1.0, %v1662
    %v1664 = vrcp.pop %v816
    %v1665 = vmul.f32 %v816, %v1664
    %v1666 = vsub.f32 1.0, %v1665
    %v1667 = vmul.f32 %v1664, %v1666
    %v1668 = vadd.f32 %v1664, %v1667
    %vm1669 = vweird.f32 %v816
    %vm1670 = vweird.f32 %v1664
    %vm1671 = vmor %vm1669, %vm1670
    %v1672 = vsel %vm1671, %v1664, %v1668
    %v1673 = vand.u32 2147483647, %v816
    %vm1674 = vcmp.eq.f32.partialorder %v1673, 8.507059e+37
    %v1675 = vand.u32 %v816, 2147483648
    %v1676 = vor.u32 1.1754944e-38, %v1675
    %v1677 = vsel %vm1674, %v1676, %v1672
    %v1678 = vmul.f32 1.0, %v1677
    %v1679 = vrcp.pop %v817
    %v1680 = vmul.f32 %v817, %v1679
    %v1681 = vsub.f32 1.0, %v1680
    %v1682 = vmul.f32 %v1679, %v1681
    %v1683 = vadd.f32 %v1679, %v1682
    %vm1684 = vweird.f32 %v817
    %vm1685 = vweird.f32 %v1679
    %vm1686 = vmor %vm1684, %vm1685
    %v1687 = vsel %vm1686, %v1679, %v1683
    %v1688 = vand.u32 2147483647, %v817
    %vm1689 = vcmp.eq.f32.partialorder %v1688, 8.507059e+37
    %v1690 = vand.u32 %v817, 2147483648
    %v1691 = vor.u32 1.1754944e-38, %v1690
    %v1692 = vsel %vm1689, %v1691, %v1687
    %v1693 = vmul.f32 1.0, %v1692
    %v1694 = vrcp.pop %v818
    %v1695 = vmul.f32 %v818, %v1694
    %v1696 = vsub.f32 1.0, %v1695
    %v1697 = vmul.f32 %v1694, %v1696
    %v1698 = vadd.f32 %v1694, %v1697
    %vm1699 = vweird.f32 %v818
    %vm1700 = vweird.f32 %v1694
    %vm1701 = vmor %vm1699, %vm1700
    %v1702 = vsel %vm1701, %v1694, %v1698
    %v1703 = vand.u32 2147483647, %v818
    %vm1704 = vcmp.eq.f32.partialorder %v1703, 8.507059e+37
    %v1705 = vand.u32 %v818, 2147483648
    %v1706 = vor.u32 1.1754944e-38, %v1705
    %v1707 = vsel %vm1704, %v1706, %v1702
    %v1708 = vmul.f32 1.0, %v1707
    %v1709 = vrcp.pop %v819
    %v1710 = vmul.f32 %v819, %v1709
    %v1711 = vsub.f32 1.0, %v1710
    %v1712 = vmul.f32 %v1709, %v1711
    %v1713 = vadd.f32 %v1709, %v1712
    %vm1714 = vweird.f32 %v819
    %vm1715 = vweird.f32 %v1709
    %vm1716 = vmor %vm1714, %vm1715
    %v1717 = vsel %vm1716, %v1709, %v1713
    %v1718 = vand.u32 2147483647, %v819
    %vm1719 = vcmp.eq.f32.partialorder %v1718, 8.507059e+37
    %v1720 = vand.u32 %v819, 2147483648
    %v1721 = vor.u32 1.1754944e-38, %v1720
    %v1722 = vsel %vm1719, %v1721, %v1717
    %v1723 = vmul.f32 1.0, %v1722
    %v1724 = vrcp.pop %v820
    %v1725 = vmul.f32 %v820, %v1724
    %v1726 = vsub.f32 1.0, %v1725
    %v1727 = vmul.f32 %v1724, %v1726
    %v1728 = vadd.f32 %v1724, %v1727
    %vm1729 = vweird.f32 %v820
    %vm1730 = vweird.f32 %v1724
    %vm1731 = vmor %vm1729, %vm1730
    %v1732 = vsel %vm1731, %v1724, %v1728
    %v1733 = vand.u32 2147483647, %v820
    %vm1734 = vcmp.eq.f32.partialorder %v1733, 8.507059e+37
    %v1735 = vand.u32 %v820, 2147483648
    %v1736 = vor.u32 1.1754944e-38, %v1735
    %v1737 = vsel %vm1734, %v1736, %v1732
    %v1738 = vmul.f32 1.0, %v1737
    %v1739 = vrcp.pop %v821
    %v1740 = vmul.f32 %v821, %v1739
    %v1741 = vsub.f32 1.0, %v1740
    %v1742 = vmul.f32 %v1739, %v1741
    %v1743 = vadd.f32 %v1739, %v1742
    %vm1744 = vweird.f32 %v821
    %vm1745 = vweird.f32 %v1739
    %vm1746 = vmor %vm1744, %vm1745
    %v1747 = vsel %vm1746, %v1739, %v1743
    %v1748 = vand.u32 2147483647, %v821
    %vm1749 = vcmp.eq.f32.partialorder %v1748, 8.507059e+37
    %v1750 = vand.u32 %v821, 2147483648
    %v1751 = vor.u32 1.1754944e-38, %v1750
    %v1752 = vsel %vm1749, %v1751, %v1747
    %v1753 = vmul.f32 1.0, %v1752
    %v1754 = vrcp.pop %v822
    %v1755 = vmul.f32 %v822, %v1754
    %v1756 = vsub.f32 1.0, %v1755
    %v1757 = vmul.f32 %v1754, %v1756
    %v1758 = vadd.f32 %v1754, %v1757
    %vm1759 = vweird.f32 %v822
    %vm1760 = vweird.f32 %v1754
    %vm1761 = vmor %vm1759, %vm1760
    %v1762 = vsel %vm1761, %v1754, %v1758
    %v1763 = vand.u32 2147483647, %v822
    %vm1764 = vcmp.eq.f32.partialorder %v1763, 8.507059e+37
    %v1765 = vand.u32 %v822, 2147483648
    %v1766 = vor.u32 1.1754944e-38, %v1765
    %v1767 = vsel %vm1764, %v1766, %v1762
    %v1768 = vmul.f32 1.0, %v1767
    %v1769 = vrcp.pop %v823
    %v1770 = vmul.f32 %v823, %v1769
    %v1771 = vsub.f32 1.0, %v1770
    %v1772 = vmul.f32 %v1769, %v1771
    %v1773 = vadd.f32 %v1769, %v1772
    %vm1774 = vweird.f32 %v823
    %vm1775 = vweird.f32 %v1769
    %vm1776 = vmor %vm1774, %vm1775
    %v1777 = vsel %vm1776, %v1769, %v1773
    %v1778 = vand.u32 2147483647, %v823
    %vm1779 = vcmp.eq.f32.partialorder %v1778, 8.507059e+37
    %v1780 = vand.u32 %v823, 2147483648
    %v1781 = vor.u32 1.1754944e-38, %v1780
    %v1782 = vsel %vm1779, %v1781, %v1777
    %v1783 = vmul.f32 1.0, %v1782
    %v1784 = vmul.f32 %v409, %v838
    %v1785 = vmul.f32 %v411, %v853
    %v1786 = vmul.f32 %v414, %v868
    %v1787 = vmul.f32 %v416, %v883
    %v1788 = vmul.f32 %v419, %v898
    %v1789 = vmul.f32 %v421, %v913
    %v1790 = vmul.f32 %v424, %v928
    %v1791 = vmul.f32 %v426, %v943
    %v1792 = vmul.f32 %v429, %v958
    %v1793 = vmul.f32 %v431, %v973
    %v1794 = vmul.f32 %v434, %v988
    %v1795 = vmul.f32 %v436, %v1003
    %v1796 = vmul.f32 %v439, %v1018
    %v1797 = vmul.f32 %v441, %v1033
    %v1798 = vmul.f32 %v444, %v1048
    %v1799 = vmul.f32 %v446, %v1063
    %v1800 = vmul.f32 %v449, %v1078
    %v1801 = vmul.f32 %v451, %v1093
    %v1802 = vmul.f32 %v454, %v1108
    %v1803 = vmul.f32 %v456, %v1123
    %v1804 = vmul.f32 %v459, %v1138
    %v1805 = vmul.f32 %v461, %v1153
    %v1806 = vmul.f32 %v464, %v1168
    %v1807 = vmul.f32 %v466, %v1183
    %v1808 = vmul.f32 %v469, %v1198
    %v1809 = vmul.f32 %v471, %v1213
    %v1810 = vmul.f32 %v474, %v1228
    %v1811 = vmul.f32 %v476, %v1243
    %v1812 = vmul.f32 %v479, %v1258
    %v1813 = vmul.f32 %v481, %v1273
    %v1814 = vmul.f32 %v484, %v1288
    %v1815 = vmul.f32 %v486, %v1303
    %v1816 = vmul.f32 %v489, %v1318
    %v1817 = vmul.f32 %v491, %v1333
    %v1818 = vmul.f32 %v494, %v1348
    %v1819 = vmul.f32 %v496, %v1363
    %v1820 = vmul.f32 %v499, %v1378
    %v1821 = vmul.f32 %v501, %v1393
    %v1822 = vmul.f32 %v504, %v1408
    %v1823 = vmul.f32 %v506, %v1423
    %v1824 = vmul.f32 %v509, %v1438
    %v1825 = vmul.f32 %v511, %v1453
    %v1826 = vmul.f32 %v514, %v1468
    %v1827 = vmul.f32 %v516, %v1483
    %v1828 = vmul.f32 %v519, %v1498
    %v1829 = vmul.f32 %v521, %v1513
    %v1830 = vmul.f32 %v524, %v1528
    %v1831 = vmul.f32 %v526, %v1543
    %v1832 = vmul.f32 %v529, %v1558
    %v1833 = vmul.f32 %v531, %v1573
    %v1834 = vmul.f32 %v534, %v1588
    %v1835 = vmul.f32 %v536, %v1603
    %v1836 = vmul.f32 %v539, %v1618
    %v1837 = vmul.f32 %v541, %v1633
    %v1838 = vmul.f32 %v544, %v1648
    %v1839 = vmul.f32 %v546, %v1663
    %v1840 = vmul.f32 %v549, %v1678
    %v1841 = vmul.f32 %v551, %v1693
    %v1842 = vmul.f32 %v554, %v1708
    %v1843 = vmul.f32 %v556, %v1723
    %v1844 = vmul.f32 %v559, %v1738
    %v1845 = vmul.f32 %v561, %v1753
    %v1846 = vmul.f32 %v564, %v1768
    %v1847 = vmul.f32 %v566, %v1783
    %v1848 = vpack.c.bf16 %v1785, %v1784
    %v1849 = vpack.c.bf16 %v1787, %v1786
    %v1850 = vpack.c.bf16 %v1789, %v1788
    %v1851 = vpack.c.bf16 %v1791, %v1790
    %v1852 = vpack.c.bf16 %v1793, %v1792
    %v1853 = vpack.c.bf16 %v1795, %v1794
    %v1854 = vpack.c.bf16 %v1797, %v1796
    %v1855 = vpack.c.bf16 %v1799, %v1798
    %v1856 = vpack.c.bf16 %v1801, %v1800
    %v1857 = vpack.c.bf16 %v1803, %v1802
    %v1858 = vpack.c.bf16 %v1805, %v1804
    %v1859 = vpack.c.bf16 %v1807, %v1806
    %v1860 = vpack.c.bf16 %v1809, %v1808
    %v1861 = vpack.c.bf16 %v1811, %v1810
    %v1862 = vpack.c.bf16 %v1813, %v1812
    %v1863 = vpack.c.bf16 %v1815, %v1814
    %v1864 = vpack.c.bf16 %v1817, %v1816
    %v1865 = vpack.c.bf16 %v1819, %v1818
    %v1866 = vpack.c.bf16 %v1821, %v1820
    %v1867 = vpack.c.bf16 %v1823, %v1822
    %v1868 = vpack.c.bf16 %v1825, %v1824
    %v1869 = vpack.c.bf16 %v1827, %v1826
    %v1870 = vpack.c.bf16 %v1829, %v1828
    %v1871 = vpack.c.bf16 %v1831, %v1830
    %v1872 = vpack.c.bf16 %v1833, %v1832
    %v1873 = vpack.c.bf16 %v1835, %v1834
    %v1874 = vpack.c.bf16 %v1837, %v1836
    %v1875 = vpack.c.bf16 %v1839, %v1838
    %v1876 = vpack.c.bf16 %v1841, %v1840
    %v1877 = vpack.c.bf16 %v1843, %v1842
    %v1878 = vpack.c.bf16 %v1845, %v1844
    %v1879 = vpack.c.bf16 %v1847, %v1846
    %v1880 = vld [vmem:[%s3] sm:$0xf]
    %v1881 = vld [vmem:[%s3 + $0x4] sm:$0xf]
    %v1882 = vld [vmem:[%s4] sm:$0x1]
    %v1884 = vperm.slane %v1882, 0
    %v1888 = vunpack.c.l.b16 %v1880
    %v1889 = vunpack.c.l.b16 %v1881
    %v1890 = vpack.c.b16 %v1889, %v1888
    %vm1892 = vcmask 130048
    %v1894 = vsel %vm1892, %v1848, 0
    %v1897 = vsel %vm1892, %v1849, 0
    %v1900 = vsel %vm1892, %v1850, 0
    %v1903 = vsel %vm1892, %v1851, 0
    %v1906 = vsel %vm1892, %v1852, 0
    %v1909 = vsel %vm1892, %v1853, 0
    %v1912 = vsel %vm1892, %v1854, 0
    %v1915 = vsel %vm1892, %v1855, 0
    %v1918 = vsel %vm1892, %v1856, 0
    %v1921 = vsel %vm1892, %v1857, 0
    %v1924 = vsel %vm1892, %v1858, 0
    %v1927 = vsel %vm1892, %v1859, 0
    %v1930 = vsel %vm1892, %v1860, 0
    %v1933 = vsel %vm1892, %v1861, 0
    %v1936 = vsel %vm1892, %v1862, 0
    %v1939 = vsel %vm1892, %v1863, 0
    %v1942 = vsel %vm1892, %v1864, 0
    %v1945 = vsel %vm1892, %v1865, 0
    %v1948 = vsel %vm1892, %v1866, 0
    %v1951 = vsel %vm1892, %v1867, 0
    %v1954 = vsel %vm1892, %v1868, 0
    %v1957 = vsel %vm1892, %v1869, 0
    %v1960 = vsel %vm1892, %v1870, 0
    %v1963 = vsel %vm1892, %v1871, 0
    %v1966 = vsel %vm1892, %v1872, 0
    %v1969 = vsel %vm1892, %v1873, 0
    %v1972 = vsel %vm1892, %v1874, 0
    %v1975 = vsel %vm1892, %v1875, 0
    %v1978 = vsel %vm1892, %v1876, 0
    %v1981 = vsel %vm1892, %v1877, 0
    %v1984 = vsel %vm1892, %v1878, 0
    %v1987 = vsel %vm1892, %v1879, 0
    %1989 = vmatpush.bf16.msra.mxu0 0
    %1990 = vmatpush.bf16.msra.mxu0 0
    %1991 = vmatpush.bf16.msra.mxu0 0
    %1992 = vmatpush.bf16.msra.mxu0 0
    %1993 = vmatpush.bf16.msra.mxu0 0
    %1994 = vmatpush.bf16.msra.mxu0 0
    %1995 = vmatpush.bf16.msra.mxu0 0
    %1996 = vmatpush.bf16.msra.mxu0 %v1890
    %1997 = vmatmul.bf16.gmra.mxu0 %v1894
    %v1998 = vpop.f32.mrf.mxu0
    %v1999 = vadd.f32 %v1884, %v1998
    %v2000 = vpop.f32.mrf.mxu0
    %v2001 = vadd.f32 %v1884, %v2000
    %2002 = vmatmul.bf16.gmra.mxu0 %v1897
    %v2003 = vpop.f32.mrf.mxu0
    %v2004 = vadd.f32 %v1884, %v2003
    %v2005 = vpop.f32.mrf.mxu0
    %v2006 = vadd.f32 %v1884, %v2005
    %2007 = vmatmul.bf16.gmra.mxu0 %v1900
    %v2008 = vpop.f32.mrf.mxu0
    %v2009 = vadd.f32 %v1884, %v2008
    %v2010 = vpop.f32.mrf.mxu0
    %v2011 = vadd.f32 %v1884, %v2010
    %2012 = vmatmul.bf16.gmra.mxu0 %v1903
    %v2013 = vpop.f32.mrf.mxu0
    %v2014 = vadd.f32 %v1884, %v2013
    %v2015 = vpop.f32.mrf.mxu0
    %v2016 = vadd.f32 %v1884, %v2015
    %2017 = vmatmul.bf16.gmra.mxu0 %v1906
    %v2018 = vpop.f32.mrf.mxu0
    %v2019 = vadd.f32 %v1884, %v2018
    %v2020 = vpop.f32.mrf.mxu0
    %v2021 = vadd.f32 %v1884, %v2020
    %2022 = vmatmul.bf16.gmra.mxu0 %v1909
    %v2023 = vpop.f32.mrf.mxu0
    %v2024 = vadd.f32 %v1884, %v2023
    %v2025 = vpop.f32.mrf.mxu0
    %v2026 = vadd.f32 %v1884, %v2025
    %2027 = vmatmul.bf16.gmra.mxu0 %v1912
    %v2028 = vpop.f32.mrf.mxu0
    %v2029 = vadd.f32 %v1884, %v2028
    %v2030 = vpop.f32.mrf.mxu0
    %v2031 = vadd.f32 %v1884, %v2030
    %2032 = vmatmul.bf16.gmra.mxu0 %v1915
    %v2033 = vpop.f32.mrf.mxu0
    %v2034 = vadd.f32 %v1884, %v2033
    %v2035 = vpop.f32.mrf.mxu0
    %v2036 = vadd.f32 %v1884, %v2035
    %2037 = vmatmul.bf16.gmra.mxu0 %v1918
    %v2038 = vpop.f32.mrf.mxu0
    %v2039 = vadd.f32 %v1884, %v2038
    %v2040 = vpop.f32.mrf.mxu0
    %v2041 = vadd.f32 %v1884, %v2040
    %2042 = vmatmul.bf16.gmra.mxu0 %v1921
    %v2043 = vpop.f32.mrf.mxu0
    %v2044 = vadd.f32 %v1884, %v2043
    %v2045 = vpop.f32.mrf.mxu0
    %v2046 = vadd.f32 %v1884, %v2045
    %2047 = vmatmul.bf16.gmra.mxu0 %v1924
    %v2048 = vpop.f32.mrf.mxu0
    %v2049 = vadd.f32 %v1884, %v2048
    %v2050 = vpop.f32.mrf.mxu0
    %v2051 = vadd.f32 %v1884, %v2050
    %2052 = vmatmul.bf16.gmra.mxu0 %v1927
    %v2053 = vpop.f32.mrf.mxu0
    %v2054 = vadd.f32 %v1884, %v2053
    %v2055 = vpop.f32.mrf.mxu0
    %v2056 = vadd.f32 %v1884, %v2055
    %2057 = vmatmul.bf16.gmra.mxu0 %v1930
    %v2058 = vpop.f32.mrf.mxu0
    %v2059 = vadd.f32 %v1884, %v2058
    %v2060 = vpop.f32.mrf.mxu0
    %v2061 = vadd.f32 %v1884, %v2060
    %2062 = vmatmul.bf16.gmra.mxu0 %v1933
    %v2063 = vpop.f32.mrf.mxu0
    %v2064 = vadd.f32 %v1884, %v2063
    %v2065 = vpop.f32.mrf.mxu0
    %v2066 = vadd.f32 %v1884, %v2065
    %2067 = vmatmul.bf16.gmra.mxu0 %v1936
    %v2068 = vpop.f32.mrf.mxu0
    %v2069 = vadd.f32 %v1884, %v2068
    %v2070 = vpop.f32.mrf.mxu0
    %v2071 = vadd.f32 %v1884, %v2070
    %2072 = vmatmul.bf16.gmra.mxu0 %v1939
    %v2073 = vpop.f32.mrf.mxu0
    %v2074 = vadd.f32 %v1884, %v2073
    %v2075 = vpop.f32.mrf.mxu0
    %v2076 = vadd.f32 %v1884, %v2075
    %2077 = vmatmul.bf16.gmra.mxu0 %v1942
    %v2078 = vpop.f32.mrf.mxu0
    %v2079 = vadd.f32 %v1884, %v2078
    %v2080 = vpop.f32.mrf.mxu0
    %v2081 = vadd.f32 %v1884, %v2080
    %2082 = vmatmul.bf16.gmra.mxu0 %v1945
    %v2083 = vpop.f32.mrf.mxu0
    %v2084 = vadd.f32 %v1884, %v2083
    %v2085 = vpop.f32.mrf.mxu0
    %v2086 = vadd.f32 %v1884, %v2085
    %2087 = vmatmul.bf16.gmra.mxu0 %v1948
    %v2088 = vpop.f32.mrf.mxu0
    %v2089 = vadd.f32 %v1884, %v2088
    %v2090 = vpop.f32.mrf.mxu0
    %v2091 = vadd.f32 %v1884, %v2090
    %2092 = vmatmul.bf16.gmra.mxu0 %v1951
    %v2093 = vpop.f32.mrf.mxu0
    %v2094 = vadd.f32 %v1884, %v2093
    %v2095 = vpop.f32.mrf.mxu0
    %v2096 = vadd.f32 %v1884, %v2095
    %2097 = vmatmul.bf16.gmra.mxu0 %v1954
    %v2098 = vpop.f32.mrf.mxu0
    %v2099 = vadd.f32 %v1884, %v2098
    %v2100 = vpop.f32.mrf.mxu0
    %v2101 = vadd.f32 %v1884, %v2100
    %2102 = vmatmul.bf16.gmra.mxu0 %v1957
    %v2103 = vpop.f32.mrf.mxu0
    %v2104 = vadd.f32 %v1884, %v2103
    %v2105 = vpop.f32.mrf.mxu0
    %v2106 = vadd.f32 %v1884, %v2105
    %2107 = vmatmul.bf16.gmra.mxu0 %v1960
    %v2108 = vpop.f32.mrf.mxu0
    %v2109 = vadd.f32 %v1884, %v2108
    %v2110 = vpop.f32.mrf.mxu0
    %v2111 = vadd.f32 %v1884, %v2110
    %2112 = vmatmul.bf16.gmra.mxu0 %v1963
    %v2113 = vpop.f32.mrf.mxu0
    %v2114 = vadd.f32 %v1884, %v2113
    %v2115 = vpop.f32.mrf.mxu0
    %v2116 = vadd.f32 %v1884, %v2115
    %2117 = vmatmul.bf16.gmra.mxu0 %v1966
    %v2118 = vpop.f32.mrf.mxu0
    %v2119 = vadd.f32 %v1884, %v2118
    %v2120 = vpop.f32.mrf.mxu0
    %v2121 = vadd.f32 %v1884, %v2120
    %2122 = vmatmul.bf16.gmra.mxu0 %v1969
    %v2123 = vpop.f32.mrf.mxu0
    %v2124 = vadd.f32 %v1884, %v2123
    %v2125 = vpop.f32.mrf.mxu0
    %v2126 = vadd.f32 %v1884, %v2125
    %2127 = vmatmul.bf16.gmra.mxu0 %v1972
    %v2128 = vpop.f32.mrf.mxu0
    %v2129 = vadd.f32 %v1884, %v2128
    %v2130 = vpop.f32.mrf.mxu0
    %v2131 = vadd.f32 %v1884, %v2130
    %2132 = vmatmul.bf16.gmra.mxu0 %v1975
    %v2133 = vpop.f32.mrf.mxu0
    %v2134 = vadd.f32 %v1884, %v2133
    %v2135 = vpop.f32.mrf.mxu0
    %v2136 = vadd.f32 %v1884, %v2135
    %2137 = vmatmul.bf16.gmra.mxu0 %v1978
    %v2138 = vpop.f32.mrf.mxu0
    %v2139 = vadd.f32 %v1884, %v2138
    %v2140 = vpop.f32.mrf.mxu0
    %v2141 = vadd.f32 %v1884, %v2140
    %2142 = vmatmul.bf16.gmra.mxu0 %v1981
    %v2143 = vpop.f32.mrf.mxu0
    %v2144 = vadd.f32 %v1884, %v2143
    %v2145 = vpop.f32.mrf.mxu0
    %v2146 = vadd.f32 %v1884, %v2145
    %2147 = vmatmul.bf16.gmra.mxu0 %v1984
    %v2148 = vpop.f32.mrf.mxu0
    %v2149 = vadd.f32 %v1884, %v2148
    %v2150 = vpop.f32.mrf.mxu0
    %v2151 = vadd.f32 %v1884, %v2150
    %2152 = vmatmul.bf16.gmra.mxu0 %v1987
    %v2153 = vpop.f32.mrf.mxu0
    %v2154 = vadd.f32 %v1884, %v2153
    %v2155 = vpop.f32.mrf.mxu0
    %v2156 = vadd.f32 %v1884, %v2155
    %2157 = vdwg.mxu0
    %v2158 = vxor.u32 %v1999, 2147483648
    %v2159 = vxor.u32 %v2001, 2147483648
    %v2160 = vxor.u32 %v2004, 2147483648
    %v2161 = vxor.u32 %v2006, 2147483648
    %v2162 = vxor.u32 %v2009, 2147483648
    %v2163 = vxor.u32 %v2011, 2147483648
    %v2164 = vxor.u32 %v2014, 2147483648
    %v2165 = vxor.u32 %v2016, 2147483648
    %v2166 = vxor.u32 %v2019, 2147483648
    %v2167 = vxor.u32 %v2021, 2147483648
    %v2168 = vxor.u32 %v2024, 2147483648
    %v2169 = vxor.u32 %v2026, 2147483648
    %v2170 = vxor.u32 %v2029, 2147483648
    %v2171 = vxor.u32 %v2031, 2147483648
    %v2172 = vxor.u32 %v2034, 2147483648
    %v2173 = vxor.u32 %v2036, 2147483648
    %v2174 = vxor.u32 %v2039, 2147483648
    %v2175 = vxor.u32 %v2041, 2147483648
    %v2176 = vxor.u32 %v2044, 2147483648
    %v2177 = vxor.u32 %v2046, 2147483648
    %v2178 = vxor.u32 %v2049, 2147483648
    %v2179 = vxor.u32 %v2051, 2147483648
    %v2180 = vxor.u32 %v2054, 2147483648
    %v2181 = vxor.u32 %v2056, 2147483648
    %v2182 = vxor.u32 %v2059, 2147483648
    %v2183 = vxor.u32 %v2061, 2147483648
    %v2184 = vxor.u32 %v2064, 2147483648
    %v2185 = vxor.u32 %v2066, 2147483648
    %v2186 = vxor.u32 %v2069, 2147483648
    %v2187 = vxor.u32 %v2071, 2147483648
    %v2188 = vxor.u32 %v2074, 2147483648
    %v2189 = vxor.u32 %v2076, 2147483648
    %v2190 = vxor.u32 %v2079, 2147483648
    %v2191 = vxor.u32 %v2081, 2147483648
    %v2192 = vxor.u32 %v2084, 2147483648
    %v2193 = vxor.u32 %v2086, 2147483648
    %v2194 = vxor.u32 %v2089, 2147483648
    %v2195 = vxor.u32 %v2091, 2147483648
    %v2196 = vxor.u32 %v2094, 2147483648
    %v2197 = vxor.u32 %v2096, 2147483648
    %v2198 = vxor.u32 %v2099, 2147483648
    %v2199 = vxor.u32 %v2101, 2147483648
    %v2200 = vxor.u32 %v2104, 2147483648
    %v2201 = vxor.u32 %v2106, 2147483648
    %v2202 = vxor.u32 %v2109, 2147483648
    %v2203 = vxor.u32 %v2111, 2147483648
    %v2204 = vxor.u32 %v2114, 2147483648
    %v2205 = vxor.u32 %v2116, 2147483648
    %v2206 = vxor.u32 %v2119, 2147483648
    %v2207 = vxor.u32 %v2121, 2147483648
    %v2208 = vxor.u32 %v2124, 2147483648
    %v2209 = vxor.u32 %v2126, 2147483648
    %v2210 = vxor.u32 %v2129, 2147483648
    %v2211 = vxor.u32 %v2131, 2147483648
    %v2212 = vxor.u32 %v2134, 2147483648
    %v2213 = vxor.u32 %v2136, 2147483648
    %v2214 = vxor.u32 %v2139, 2147483648
    %v2215 = vxor.u32 %v2141, 2147483648
    %v2216 = vxor.u32 %v2144, 2147483648
    %v2217 = vxor.u32 %v2146, 2147483648
    %v2218 = vxor.u32 %v2149, 2147483648
    %v2219 = vxor.u32 %v2151, 2147483648
    %v2220 = vxor.u32 %v2154, 2147483648
    %v2221 = vxor.u32 %v2156, 2147483648
    %v2222 = vmul.f32 %v2158, 1.442695
    %v2223 = vpow.pop %v2222
    %v2224 = vmul.f32 %v2159, 1.442695
    %v2225 = vpow.pop %v2224
    %v2226 = vmul.f32 %v2160, 1.442695
    %v2227 = vpow.pop %v2226
    %v2228 = vmul.f32 %v2161, 1.442695
    %v2229 = vpow.pop %v2228
    %v2230 = vmul.f32 %v2162, 1.442695
    %v2231 = vpow.pop %v2230
    %v2232 = vmul.f32 %v2163, 1.442695
    %v2233 = vpow.pop %v2232
    %v2234 = vmul.f32 %v2164, 1.442695
    %v2235 = vpow.pop %v2234
    %v2236 = vmul.f32 %v2165, 1.442695
    %v2237 = vpow.pop %v2236
    %v2238 = vmul.f32 %v2166, 1.442695
    %v2239 = vpow.pop %v2238
    %v2240 = vmul.f32 %v2167, 1.442695
    %v2241 = vpow.pop %v2240
    %v2242 = vmul.f32 %v2168, 1.442695
    %v2243 = vpow.pop %v2242
    %v2244 = vmul.f32 %v2169, 1.442695
    %v2245 = vpow.pop %v2244
    %v2246 = vmul.f32 %v2170, 1.442695
    %v2247 = vpow.pop %v2246
    %v2248 = vmul.f32 %v2171, 1.442695
    %v2249 = vpow.pop %v2248
    %v2250 = vmul.f32 %v2172, 1.442695
    %v2251 = vpow.pop %v2250
    %v2252 = vmul.f32 %v2173, 1.442695
    %v2253 = vpow.pop %v2252
    %v2254 = vmul.f32 %v2174, 1.442695
    %v2255 = vpow.pop %v2254
    %v2256 = vmul.f32 %v2175, 1.442695
    %v2257 = vpow.pop %v2256
    %v2258 = vmul.f32 %v2176, 1.442695
    %v2259 = vpow.pop %v2258
    %v2260 = vmul.f32 %v2177, 1.442695
    %v2261 = vpow.pop %v2260
    %v2262 = vmul.f32 %v2178, 1.442695
    %v2263 = vpow.pop %v2262
    %v2264 = vmul.f32 %v2179, 1.442695
    %v2265 = vpow.pop %v2264
    %v2266 = vmul.f32 %v2180, 1.442695
    %v2267 = vpow.pop %v2266
    %v2268 = vmul.f32 %v2181, 1.442695
    %v2269 = vpow.pop %v2268
    %v2270 = vmul.f32 %v2182, 1.442695
    %v2271 = vpow.pop %v2270
    %v2272 = vmul.f32 %v2183, 1.442695
    %v2273 = vpow.pop %v2272
    %v2274 = vmul.f32 %v2184, 1.442695
    %v2275 = vpow.pop %v2274
    %v2276 = vmul.f32 %v2185, 1.442695
    %v2277 = vpow.pop %v2276
    %v2278 = vmul.f32 %v2186, 1.442695
    %v2279 = vpow.pop %v2278
    %v2280 = vmul.f32 %v2187, 1.442695
    %v2281 = vpow.pop %v2280
    %v2282 = vmul.f32 %v2188, 1.442695
    %v2283 = vpow.pop %v2282
    %v2284 = vmul.f32 %v2189, 1.442695
    %v2285 = vpow.pop %v2284
    %v2286 = vmul.f32 %v2190, 1.442695
    %v2287 = vpow.pop %v2286
    %v2288 = vmul.f32 %v2191, 1.442695
    %v2289 = vpow.pop %v2288
    %v2290 = vmul.f32 %v2192, 1.442695
    %v2291 = vpow.pop %v2290
    %v2292 = vmul.f32 %v2193, 1.442695
    %v2293 = vpow.pop %v2292
    %v2294 = vmul.f32 %v2194, 1.442695
    %v2295 = vpow.pop %v2294
    %v2296 = vmul.f32 %v2195, 1.442695
    %v2297 = vpow.pop %v2296
    %v2298 = vmul.f32 %v2196, 1.442695
    %v2299 = vpow.pop %v2298
    %v2300 = vmul.f32 %v2197, 1.442695
    %v2301 = vpow.pop %v2300
    %v2302 = vmul.f32 %v2198, 1.442695
    %v2303 = vpow.pop %v2302
    %v2304 = vmul.f32 %v2199, 1.442695
    %v2305 = vpow.pop %v2304
    %v2306 = vmul.f32 %v2200, 1.442695
    %v2307 = vpow.pop %v2306
    %v2308 = vmul.f32 %v2201, 1.442695
    %v2309 = vpow.pop %v2308
    %v2310 = vmul.f32 %v2202, 1.442695
    %v2311 = vpow.pop %v2310
    %v2312 = vmul.f32 %v2203, 1.442695
    %v2313 = vpow.pop %v2312
    %v2314 = vmul.f32 %v2204, 1.442695
    %v2315 = vpow.pop %v2314
    %v2316 = vmul.f32 %v2205, 1.442695
    %v2317 = vpow.pop %v2316
    %v2318 = vmul.f32 %v2206, 1.442695
    %v2319 = vpow.pop %v2318
    %v2320 = vmul.f32 %v2207, 1.442695
    %v2321 = vpow.pop %v2320
    %v2322 = vmul.f32 %v2208, 1.442695
    %v2323 = vpow.pop %v2322
    %v2324 = vmul.f32 %v2209, 1.442695
    %v2325 = vpow.pop %v2324
    %v2326 = vmul.f32 %v2210, 1.442695
    %v2327 = vpow.pop %v2326
    %v2328 = vmul.f32 %v2211, 1.442695
    %v2329 = vpow.pop %v2328
    %v2330 = vmul.f32 %v2212, 1.442695
    %v2331 = vpow.pop %v2330
    %v2332 = vmul.f32 %v2213, 1.442695
    %v2333 = vpow.pop %v2332
    %v2334 = vmul.f32 %v2214, 1.442695
    %v2335 = vpow.pop %v2334
    %v2336 = vmul.f32 %v2215, 1.442695
    %v2337 = vpow.pop %v2336
    %v2338 = vmul.f32 %v2216, 1.442695
    %v2339 = vpow.pop %v2338
    %v2340 = vmul.f32 %v2217, 1.442695
    %v2341 = vpow.pop %v2340
    %v2342 = vmul.f32 %v2218, 1.442695
    %v2343 = vpow.pop %v2342
    %v2344 = vmul.f32 %v2219, 1.442695
    %v2345 = vpow.pop %v2344
    %v2346 = vmul.f32 %v2220, 1.442695
    %v2347 = vpow.pop %v2346
    %v2348 = vmul.f32 %v2221, 1.442695
    %v2349 = vpow.pop %v2348
    %v2350 = vadd.f32 %v2223, 1.0
    %v2351 = vadd.f32 %v2225, 1.0
    %v2352 = vadd.f32 %v2227, 1.0
    %v2353 = vadd.f32 %v2229, 1.0
    %v2354 = vadd.f32 %v2231, 1.0
    %v2355 = vadd.f32 %v2233, 1.0
    %v2356 = vadd.f32 %v2235, 1.0
    %v2357 = vadd.f32 %v2237, 1.0
    %v2358 = vadd.f32 %v2239, 1.0
    %v2359 = vadd.f32 %v2241, 1.0
    %v2360 = vadd.f32 %v2243, 1.0
    %v2361 = vadd.f32 %v2245, 1.0
    %v2362 = vadd.f32 %v2247, 1.0
    %v2363 = vadd.f32 %v2249, 1.0
    %v2364 = vadd.f32 %v2251, 1.0
    %v2365 = vadd.f32 %v2253, 1.0
    %v2366 = vadd.f32 %v2255, 1.0
    %v2367 = vadd.f32 %v2257, 1.0
    %v2368 = vadd.f32 %v2259, 1.0
    %v2369 = vadd.f32 %v2261, 1.0
    %v2370 = vadd.f32 %v2263, 1.0
    %v2371 = vadd.f32 %v2265, 1.0
    %v2372 = vadd.f32 %v2267, 1.0
    %v2373 = vadd.f32 %v2269, 1.0
    %v2374 = vadd.f32 %v2271, 1.0
    %v2375 = vadd.f32 %v2273, 1.0
    %v2376 = vadd.f32 %v2275, 1.0
    %v2377 = vadd.f32 %v2277, 1.0
    %v2378 = vadd.f32 %v2279, 1.0
    %v2379 = vadd.f32 %v2281, 1.0
    %v2380 = vadd.f32 %v2283, 1.0
    %v2381 = vadd.f32 %v2285, 1.0
    %v2382 = vadd.f32 %v2287, 1.0
    %v2383 = vadd.f32 %v2289, 1.0
    %v2384 = vadd.f32 %v2291, 1.0
    %v2385 = vadd.f32 %v2293, 1.0
    %v2386 = vadd.f32 %v2295, 1.0
    %v2387 = vadd.f32 %v2297, 1.0
    %v2388 = vadd.f32 %v2299, 1.0
    %v2389 = vadd.f32 %v2301, 1.0
    %v2390 = vadd.f32 %v2303, 1.0
    %v2391 = vadd.f32 %v2305, 1.0
    %v2392 = vadd.f32 %v2307, 1.0
    %v2393 = vadd.f32 %v2309, 1.0
    %v2394 = vadd.f32 %v2311, 1.0
    %v2395 = vadd.f32 %v2313, 1.0
    %v2396 = vadd.f32 %v2315, 1.0
    %v2397 = vadd.f32 %v2317, 1.0
    %v2398 = vadd.f32 %v2319, 1.0
    %v2399 = vadd.f32 %v2321, 1.0
    %v2400 = vadd.f32 %v2323, 1.0
    %v2401 = vadd.f32 %v2325, 1.0
    %v2402 = vadd.f32 %v2327, 1.0
    %v2403 = vadd.f32 %v2329, 1.0
    %v2404 = vadd.f32 %v2331, 1.0
    %v2405 = vadd.f32 %v2333, 1.0
    %v2406 = vadd.f32 %v2335, 1.0
    %v2407 = vadd.f32 %v2337, 1.0
    %v2408 = vadd.f32 %v2339, 1.0
    %v2409 = vadd.f32 %v2341, 1.0
    %v2410 = vadd.f32 %v2343, 1.0
    %v2411 = vadd.f32 %v2345, 1.0
    %v2412 = vadd.f32 %v2347, 1.0
    %v2413 = vadd.f32 %v2349, 1.0
    %v2414 = vrcp.pop %v2350
    %v2415 = vmul.f32 %v2350, %v2414
    %v2416 = vsub.f32 1.0, %v2415
    %v2417 = vmul.f32 %v2414, %v2416
    %v2418 = vadd.f32 %v2414, %v2417
    %vm2419 = vweird.f32 %v2350
    %vm2420 = vweird.f32 %v2414
    %vm2421 = vmor %vm2419, %vm2420
    %v2422 = vsel %vm2421, %v2414, %v2418
    %v2423 = vand.u32 2147483647, %v2350
    %vm2424 = vcmp.eq.f32.partialorder %v2423, 8.507059e+37
    %v2425 = vand.u32 %v2350, 2147483648
    %v2426 = vor.u32 1.1754944e-38, %v2425
    %v2427 = vsel %vm2424, %v2426, %v2422
    %v2428 = vmul.f32 1.0, %v2427
    %v2429 = vrcp.pop %v2351
    %v2430 = vmul.f32 %v2351, %v2429
    %v2431 = vsub.f32 1.0, %v2430
    %v2432 = vmul.f32 %v2429, %v2431
    %v2433 = vadd.f32 %v2429, %v2432
    %vm2434 = vweird.f32 %v2351
    %vm2435 = vweird.f32 %v2429
    %vm2436 = vmor %vm2434, %vm2435
    %v2437 = vsel %vm2436, %v2429, %v2433
    %v2438 = vand.u32 2147483647, %v2351
    %vm2439 = vcmp.eq.f32.partialorder %v2438, 8.507059e+37
    %v2440 = vand.u32 %v2351, 2147483648
    %v2441 = vor.u32 1.1754944e-38, %v2440
    %v2442 = vsel %vm2439, %v2441, %v2437
    %v2443 = vmul.f32 1.0, %v2442
    %v2444 = vrcp.pop %v2352
    %v2445 = vmul.f32 %v2352, %v2444
    %v2446 = vsub.f32 1.0, %v2445
    %v2447 = vmul.f32 %v2444, %v2446
    %v2448 = vadd.f32 %v2444, %v2447
    %vm2449 = vweird.f32 %v2352
    %vm2450 = vweird.f32 %v2444
    %vm2451 = vmor %vm2449, %vm2450
    %v2452 = vsel %vm2451, %v2444, %v2448
    %v2453 = vand.u32 2147483647, %v2352
    %vm2454 = vcmp.eq.f32.partialorder %v2453, 8.507059e+37
    %v2455 = vand.u32 %v2352, 2147483648
    %v2456 = vor.u32 1.1754944e-38, %v2455
    %v2457 = vsel %vm2454, %v2456, %v2452
    %v2458 = vmul.f32 1.0, %v2457
    %v2459 = vrcp.pop %v2353
    %v2460 = vmul.f32 %v2353, %v2459
    %v2461 = vsub.f32 1.0, %v2460
    %v2462 = vmul.f32 %v2459, %v2461
    %v2463 = vadd.f32 %v2459, %v2462
    %vm2464 = vweird.f32 %v2353
    %vm2465 = vweird.f32 %v2459
    %vm2466 = vmor %vm2464, %vm2465
    %v2467 = vsel %vm2466, %v2459, %v2463
    %v2468 = vand.u32 2147483647, %v2353
    %vm2469 = vcmp.eq.f32.partialorder %v2468, 8.507059e+37
    %v2470 = vand.u32 %v2353, 2147483648
    %v2471 = vor.u32 1.1754944e-38, %v2470
    %v2472 = vsel %vm2469, %v2471, %v2467
    %v2473 = vmul.f32 1.0, %v2472
    %v2474 = vrcp.pop %v2354
    %v2475 = vmul.f32 %v2354, %v2474
    %v2476 = vsub.f32 1.0, %v2475
    %v2477 = vmul.f32 %v2474, %v2476
    %v2478 = vadd.f32 %v2474, %v2477
    %vm2479 = vweird.f32 %v2354
    %vm2480 = vweird.f32 %v2474
    %vm2481 = vmor %vm2479, %vm2480
    %v2482 = vsel %vm2481, %v2474, %v2478
    %v2483 = vand.u32 2147483647, %v2354
    %vm2484 = vcmp.eq.f32.partialorder %v2483, 8.507059e+37
    %v2485 = vand.u32 %v2354, 2147483648
    %v2486 = vor.u32 1.1754944e-38, %v2485
    %v2487 = vsel %vm2484, %v2486, %v2482
    %v2488 = vmul.f32 1.0, %v2487
    %v2489 = vrcp.pop %v2355
    %v2490 = vmul.f32 %v2355, %v2489
    %v2491 = vsub.f32 1.0, %v2490
    %v2492 = vmul.f32 %v2489, %v2491
    %v2493 = vadd.f32 %v2489, %v2492
    %vm2494 = vweird.f32 %v2355
    %vm2495 = vweird.f32 %v2489
    %vm2496 = vmor %vm2494, %vm2495
    %v2497 = vsel %vm2496, %v2489, %v2493
    %v2498 = vand.u32 2147483647, %v2355
    %vm2499 = vcmp.eq.f32.partialorder %v2498, 8.507059e+37
    %v2500 = vand.u32 %v2355, 2147483648
    %v2501 = vor.u32 1.1754944e-38, %v2500
    %v2502 = vsel %vm2499, %v2501, %v2497
    %v2503 = vmul.f32 1.0, %v2502
    %v2504 = vrcp.pop %v2356
    %v2505 = vmul.f32 %v2356, %v2504
    %v2506 = vsub.f32 1.0, %v2505
    %v2507 = vmul.f32 %v2504, %v2506
    %v2508 = vadd.f32 %v2504, %v2507
    %vm2509 = vweird.f32 %v2356
    %vm2510 = vweird.f32 %v2504
    %vm2511 = vmor %vm2509, %vm2510
    %v2512 = vsel %vm2511, %v2504, %v2508
    %v2513 = vand.u32 2147483647, %v2356
    %vm2514 = vcmp.eq.f32.partialorder %v2513, 8.507059e+37
    %v2515 = vand.u32 %v2356, 2147483648
    %v2516 = vor.u32 1.1754944e-38, %v2515
    %v2517 = vsel %vm2514, %v2516, %v2512
    %v2518 = vmul.f32 1.0, %v2517
    %v2519 = vrcp.pop %v2357
    %v2520 = vmul.f32 %v2357, %v2519
    %v2521 = vsub.f32 1.0, %v2520
    %v2522 = vmul.f32 %v2519, %v2521
    %v2523 = vadd.f32 %v2519, %v2522
    %vm2524 = vweird.f32 %v2357
    %vm2525 = vweird.f32 %v2519
    %vm2526 = vmor %vm2524, %vm2525
    %v2527 = vsel %vm2526, %v2519, %v2523
    %v2528 = vand.u32 2147483647, %v2357
    %vm2529 = vcmp.eq.f32.partialorder %v2528, 8.507059e+37
    %v2530 = vand.u32 %v2357, 2147483648
    %v2531 = vor.u32 1.1754944e-38, %v2530
    %v2532 = vsel %vm2529, %v2531, %v2527
    %v2533 = vmul.f32 1.0, %v2532
    %v2534 = vrcp.pop %v2358
    %v2535 = vmul.f32 %v2358, %v2534
    %v2536 = vsub.f32 1.0, %v2535
    %v2537 = vmul.f32 %v2534, %v2536
    %v2538 = vadd.f32 %v2534, %v2537
    %vm2539 = vweird.f32 %v2358
    %vm2540 = vweird.f32 %v2534
    %vm2541 = vmor %vm2539, %vm2540
    %v2542 = vsel %vm2541, %v2534, %v2538
    %v2543 = vand.u32 2147483647, %v2358
    %vm2544 = vcmp.eq.f32.partialorder %v2543, 8.507059e+37
    %v2545 = vand.u32 %v2358, 2147483648
    %v2546 = vor.u32 1.1754944e-38, %v2545
    %v2547 = vsel %vm2544, %v2546, %v2542
    %v2548 = vmul.f32 1.0, %v2547
    %v2549 = vrcp.pop %v2359
    %v2550 = vmul.f32 %v2359, %v2549
    %v2551 = vsub.f32 1.0, %v2550
    %v2552 = vmul.f32 %v2549, %v2551
    %v2553 = vadd.f32 %v2549, %v2552
    %vm2554 = vweird.f32 %v2359
    %vm2555 = vweird.f32 %v2549
    %vm2556 = vmor %vm2554, %vm2555
    %v2557 = vsel %vm2556, %v2549, %v2553
    %v2558 = vand.u32 2147483647, %v2359
    %vm2559 = vcmp.eq.f32.partialorder %v2558, 8.507059e+37
    %v2560 = vand.u32 %v2359, 2147483648
    %v2561 = vor.u32 1.1754944e-38, %v2560
    %v2562 = vsel %vm2559, %v2561, %v2557
    %v2563 = vmul.f32 1.0, %v2562
    %v2564 = vrcp.pop %v2360
    %v2565 = vmul.f32 %v2360, %v2564
    %v2566 = vsub.f32 1.0, %v2565
    %v2567 = vmul.f32 %v2564, %v2566
    %v2568 = vadd.f32 %v2564, %v2567
    %vm2569 = vweird.f32 %v2360
    %vm2570 = vweird.f32 %v2564
    %vm2571 = vmor %vm2569, %vm2570
    %v2572 = vsel %vm2571, %v2564, %v2568
    %v2573 = vand.u32 2147483647, %v2360
    %vm2574 = vcmp.eq.f32.partialorder %v2573, 8.507059e+37
    %v2575 = vand.u32 %v2360, 2147483648
    %v2576 = vor.u32 1.1754944e-38, %v2575
    %v2577 = vsel %vm2574, %v2576, %v2572
    %v2578 = vmul.f32 1.0, %v2577
    %v2579 = vrcp.pop %v2361
    %v2580 = vmul.f32 %v2361, %v2579
    %v2581 = vsub.f32 1.0, %v2580
    %v2582 = vmul.f32 %v2579, %v2581
    %v2583 = vadd.f32 %v2579, %v2582
    %vm2584 = vweird.f32 %v2361
    %vm2585 = vweird.f32 %v2579
    %vm2586 = vmor %vm2584, %vm2585
    %v2587 = vsel %vm2586, %v2579, %v2583
    %v2588 = vand.u32 2147483647, %v2361
    %vm2589 = vcmp.eq.f32.partialorder %v2588, 8.507059e+37
    %v2590 = vand.u32 %v2361, 2147483648
    %v2591 = vor.u32 1.1754944e-38, %v2590
    %v2592 = vsel %vm2589, %v2591, %v2587
    %v2593 = vmul.f32 1.0, %v2592
    %v2594 = vrcp.pop %v2362
    %v2595 = vmul.f32 %v2362, %v2594
    %v2596 = vsub.f32 1.0, %v2595
    %v2597 = vmul.f32 %v2594, %v2596
    %v2598 = vadd.f32 %v2594, %v2597
    %vm2599 = vweird.f32 %v2362
    %vm2600 = vweird.f32 %v2594
    %vm2601 = vmor %vm2599, %vm2600
    %v2602 = vsel %vm2601, %v2594, %v2598
    %v2603 = vand.u32 2147483647, %v2362
    %vm2604 = vcmp.eq.f32.partialorder %v2603, 8.507059e+37
    %v2605 = vand.u32 %v2362, 2147483648
    %v2606 = vor.u32 1.1754944e-38, %v2605
    %v2607 = vsel %vm2604, %v2606, %v2602
    %v2608 = vmul.f32 1.0, %v2607
    %v2609 = vrcp.pop %v2363
    %v2610 = vmul.f32 %v2363, %v2609
    %v2611 = vsub.f32 1.0, %v2610
    %v2612 = vmul.f32 %v2609, %v2611
    %v2613 = vadd.f32 %v2609, %v2612
    %vm2614 = vweird.f32 %v2363
    %vm2615 = vweird.f32 %v2609
    %vm2616 = vmor %vm2614, %vm2615
    %v2617 = vsel %vm2616, %v2609, %v2613
    %v2618 = vand.u32 2147483647, %v2363
    %vm2619 = vcmp.eq.f32.partialorder %v2618, 8.507059e+37
    %v2620 = vand.u32 %v2363, 2147483648
    %v2621 = vor.u32 1.1754944e-38, %v2620
    %v2622 = vsel %vm2619, %v2621, %v2617
    %v2623 = vmul.f32 1.0, %v2622
    %v2624 = vrcp.pop %v2364
    %v2625 = vmul.f32 %v2364, %v2624
    %v2626 = vsub.f32 1.0, %v2625
    %v2627 = vmul.f32 %v2624, %v2626
    %v2628 = vadd.f32 %v2624, %v2627
    %vm2629 = vweird.f32 %v2364
    %vm2630 = vweird.f32 %v2624
    %vm2631 = vmor %vm2629, %vm2630
    %v2632 = vsel %vm2631, %v2624, %v2628
    %v2633 = vand.u32 2147483647, %v2364
    %vm2634 = vcmp.eq.f32.partialorder %v2633, 8.507059e+37
    %v2635 = vand.u32 %v2364, 2147483648
    %v2636 = vor.u32 1.1754944e-38, %v2635
    %v2637 = vsel %vm2634, %v2636, %v2632
    %v2638 = vmul.f32 1.0, %v2637
    %v2639 = vrcp.pop %v2365
    %v2640 = vmul.f32 %v2365, %v2639
    %v2641 = vsub.f32 1.0, %v2640
    %v2642 = vmul.f32 %v2639, %v2641
    %v2643 = vadd.f32 %v2639, %v2642
    %vm2644 = vweird.f32 %v2365
    %vm2645 = vweird.f32 %v2639
    %vm2646 = vmor %vm2644, %vm2645
    %v2647 = vsel %vm2646, %v2639, %v2643
    %v2648 = vand.u32 2147483647, %v2365
    %vm2649 = vcmp.eq.f32.partialorder %v2648, 8.507059e+37
    %v2650 = vand.u32 %v2365, 2147483648
    %v2651 = vor.u32 1.1754944e-38, %v2650
    %v2652 = vsel %vm2649, %v2651, %v2647
    %v2653 = vmul.f32 1.0, %v2652
    %v2654 = vrcp.pop %v2366
    %v2655 = vmul.f32 %v2366, %v2654
    %v2656 = vsub.f32 1.0, %v2655
    %v2657 = vmul.f32 %v2654, %v2656
    %v2658 = vadd.f32 %v2654, %v2657
    %vm2659 = vweird.f32 %v2366
    %vm2660 = vweird.f32 %v2654
    %vm2661 = vmor %vm2659, %vm2660
    %v2662 = vsel %vm2661, %v2654, %v2658
    %v2663 = vand.u32 2147483647, %v2366
    %vm2664 = vcmp.eq.f32.partialorder %v2663, 8.507059e+37
    %v2665 = vand.u32 %v2366, 2147483648
    %v2666 = vor.u32 1.1754944e-38, %v2665
    %v2667 = vsel %vm2664, %v2666, %v2662
    %v2668 = vmul.f32 1.0, %v2667
    %v2669 = vrcp.pop %v2367
    %v2670 = vmul.f32 %v2367, %v2669
    %v2671 = vsub.f32 1.0, %v2670
    %v2672 = vmul.f32 %v2669, %v2671
    %v2673 = vadd.f32 %v2669, %v2672
    %vm2674 = vweird.f32 %v2367
    %vm2675 = vweird.f32 %v2669
    %vm2676 = vmor %vm2674, %vm2675
    %v2677 = vsel %vm2676, %v2669, %v2673
    %v2678 = vand.u32 2147483647, %v2367
    %vm2679 = vcmp.eq.f32.partialorder %v2678, 8.507059e+37
    %v2680 = vand.u32 %v2367, 2147483648
    %v2681 = vor.u32 1.1754944e-38, %v2680
    %v2682 = vsel %vm2679, %v2681, %v2677
    %v2683 = vmul.f32 1.0, %v2682
    %v2684 = vrcp.pop %v2368
    %v2685 = vmul.f32 %v2368, %v2684
    %v2686 = vsub.f32 1.0, %v2685
    %v2687 = vmul.f32 %v2684, %v2686
    %v2688 = vadd.f32 %v2684, %v2687
    %vm2689 = vweird.f32 %v2368
    %vm2690 = vweird.f32 %v2684
    %vm2691 = vmor %vm2689, %vm2690
    %v2692 = vsel %vm2691, %v2684, %v2688
    %v2693 = vand.u32 2147483647, %v2368
    %vm2694 = vcmp.eq.f32.partialorder %v2693, 8.507059e+37
    %v2695 = vand.u32 %v2368, 2147483648
    %v2696 = vor.u32 1.1754944e-38, %v2695
    %v2697 = vsel %vm2694, %v2696, %v2692
    %v2698 = vmul.f32 1.0, %v2697
    %v2699 = vrcp.pop %v2369
    %v2700 = vmul.f32 %v2369, %v2699
    %v2701 = vsub.f32 1.0, %v2700
    %v2702 = vmul.f32 %v2699, %v2701
    %v2703 = vadd.f32 %v2699, %v2702
    %vm2704 = vweird.f32 %v2369
    %vm2705 = vweird.f32 %v2699
    %vm2706 = vmor %vm2704, %vm2705
    %v2707 = vsel %vm2706, %v2699, %v2703
    %v2708 = vand.u32 2147483647, %v2369
    %vm2709 = vcmp.eq.f32.partialorder %v2708, 8.507059e+37
    %v2710 = vand.u32 %v2369, 2147483648
    %v2711 = vor.u32 1.1754944e-38, %v2710
    %v2712 = vsel %vm2709, %v2711, %v2707
    %v2713 = vmul.f32 1.0, %v2712
    %v2714 = vrcp.pop %v2370
    %v2715 = vmul.f32 %v2370, %v2714
    %v2716 = vsub.f32 1.0, %v2715
    %v2717 = vmul.f32 %v2714, %v2716
    %v2718 = vadd.f32 %v2714, %v2717
    %vm2719 = vweird.f32 %v2370
    %vm2720 = vweird.f32 %v2714
    %vm2721 = vmor %vm2719, %vm2720
    %v2722 = vsel %vm2721, %v2714, %v2718
    %v2723 = vand.u32 2147483647, %v2370
    %vm2724 = vcmp.eq.f32.partialorder %v2723, 8.507059e+37
    %v2725 = vand.u32 %v2370, 2147483648
    %v2726 = vor.u32 1.1754944e-38, %v2725
    %v2727 = vsel %vm2724, %v2726, %v2722
    %v2728 = vmul.f32 1.0, %v2727
    %v2729 = vrcp.pop %v2371
    %v2730 = vmul.f32 %v2371, %v2729
    %v2731 = vsub.f32 1.0, %v2730
    %v2732 = vmul.f32 %v2729, %v2731
    %v2733 = vadd.f32 %v2729, %v2732
    %vm2734 = vweird.f32 %v2371
    %vm2735 = vweird.f32 %v2729
    %vm2736 = vmor %vm2734, %vm2735
    %v2737 = vsel %vm2736, %v2729, %v2733
    %v2738 = vand.u32 2147483647, %v2371
    %vm2739 = vcmp.eq.f32.partialorder %v2738, 8.507059e+37
    %v2740 = vand.u32 %v2371, 2147483648
    %v2741 = vor.u32 1.1754944e-38, %v2740
    %v2742 = vsel %vm2739, %v2741, %v2737
    %v2743 = vmul.f32 1.0, %v2742
    %v2744 = vrcp.pop %v2372
    %v2745 = vmul.f32 %v2372, %v2744
    %v2746 = vsub.f32 1.0, %v2745
    %v2747 = vmul.f32 %v2744, %v2746
    %v2748 = vadd.f32 %v2744, %v2747
    %vm2749 = vweird.f32 %v2372
    %vm2750 = vweird.f32 %v2744
    %vm2751 = vmor %vm2749, %vm2750
    %v2752 = vsel %vm2751, %v2744, %v2748
    %v2753 = vand.u32 2147483647, %v2372
    %vm2754 = vcmp.eq.f32.partialorder %v2753, 8.507059e+37
    %v2755 = vand.u32 %v2372, 2147483648
    %v2756 = vor.u32 1.1754944e-38, %v2755
    %v2757 = vsel %vm2754, %v2756, %v2752
    %v2758 = vmul.f32 1.0, %v2757
    %v2759 = vrcp.pop %v2373
    %v2760 = vmul.f32 %v2373, %v2759
    %v2761 = vsub.f32 1.0, %v2760
    %v2762 = vmul.f32 %v2759, %v2761
    %v2763 = vadd.f32 %v2759, %v2762
    %vm2764 = vweird.f32 %v2373
    %vm2765 = vweird.f32 %v2759
    %vm2766 = vmor %vm2764, %vm2765
    %v2767 = vsel %vm2766, %v2759, %v2763
    %v2768 = vand.u32 2147483647, %v2373
    %vm2769 = vcmp.eq.f32.partialorder %v2768, 8.507059e+37
    %v2770 = vand.u32 %v2373, 2147483648
    %v2771 = vor.u32 1.1754944e-38, %v2770
    %v2772 = vsel %vm2769, %v2771, %v2767
    %v2773 = vmul.f32 1.0, %v2772
    %v2774 = vrcp.pop %v2374
    %v2775 = vmul.f32 %v2374, %v2774
    %v2776 = vsub.f32 1.0, %v2775
    %v2777 = vmul.f32 %v2774, %v2776
    %v2778 = vadd.f32 %v2774, %v2777
    %vm2779 = vweird.f32 %v2374
    %vm2780 = vweird.f32 %v2774
    %vm2781 = vmor %vm2779, %vm2780
    %v2782 = vsel %vm2781, %v2774, %v2778
    %v2783 = vand.u32 2147483647, %v2374
    %vm2784 = vcmp.eq.f32.partialorder %v2783, 8.507059e+37
    %v2785 = vand.u32 %v2374, 2147483648
    %v2786 = vor.u32 1.1754944e-38, %v2785
    %v2787 = vsel %vm2784, %v2786, %v2782
    %v2788 = vmul.f32 1.0, %v2787
    %v2789 = vrcp.pop %v2375
    %v2790 = vmul.f32 %v2375, %v2789
    %v2791 = vsub.f32 1.0, %v2790
    %v2792 = vmul.f32 %v2789, %v2791
    %v2793 = vadd.f32 %v2789, %v2792
    %vm2794 = vweird.f32 %v2375
    %vm2795 = vweird.f32 %v2789
    %vm2796 = vmor %vm2794, %vm2795
    %v2797 = vsel %vm2796, %v2789, %v2793
    %v2798 = vand.u32 2147483647, %v2375
    %vm2799 = vcmp.eq.f32.partialorder %v2798, 8.507059e+37
    %v2800 = vand.u32 %v2375, 2147483648
    %v2801 = vor.u32 1.1754944e-38, %v2800
    %v2802 = vsel %vm2799, %v2801, %v2797
    %v2803 = vmul.f32 1.0, %v2802
    %v2804 = vrcp.pop %v2376
    %v2805 = vmul.f32 %v2376, %v2804
    %v2806 = vsub.f32 1.0, %v2805
    %v2807 = vmul.f32 %v2804, %v2806
    %v2808 = vadd.f32 %v2804, %v2807
    %vm2809 = vweird.f32 %v2376
    %vm2810 = vweird.f32 %v2804
    %vm2811 = vmor %vm2809, %vm2810
    %v2812 = vsel %vm2811, %v2804, %v2808
    %v2813 = vand.u32 2147483647, %v2376
    %vm2814 = vcmp.eq.f32.partialorder %v2813, 8.507059e+37
    %v2815 = vand.u32 %v2376, 2147483648
    %v2816 = vor.u32 1.1754944e-38, %v2815
    %v2817 = vsel %vm2814, %v2816, %v2812
    %v2818 = vmul.f32 1.0, %v2817
    %v2819 = vrcp.pop %v2377
    %v2820 = vmul.f32 %v2377, %v2819
    %v2821 = vsub.f32 1.0, %v2820
    %v2822 = vmul.f32 %v2819, %v2821
    %v2823 = vadd.f32 %v2819, %v2822
    %vm2824 = vweird.f32 %v2377
    %vm2825 = vweird.f32 %v2819
    %vm2826 = vmor %vm2824, %vm2825
    %v2827 = vsel %vm2826, %v2819, %v2823
    %v2828 = vand.u32 2147483647, %v2377
    %vm2829 = vcmp.eq.f32.partialorder %v2828, 8.507059e+37
    %v2830 = vand.u32 %v2377, 2147483648
    %v2831 = vor.u32 1.1754944e-38, %v2830
    %v2832 = vsel %vm2829, %v2831, %v2827
    %v2833 = vmul.f32 1.0, %v2832
    %v2834 = vrcp.pop %v2378
    %v2835 = vmul.f32 %v2378, %v2834
    %v2836 = vsub.f32 1.0, %v2835
    %v2837 = vmul.f32 %v2834, %v2836
    %v2838 = vadd.f32 %v2834, %v2837
    %vm2839 = vweird.f32 %v2378
    %vm2840 = vweird.f32 %v2834
    %vm2841 = vmor %vm2839, %vm2840
    %v2842 = vsel %vm2841, %v2834, %v2838
    %v2843 = vand.u32 2147483647, %v2378
    %vm2844 = vcmp.eq.f32.partialorder %v2843, 8.507059e+37
    %v2845 = vand.u32 %v2378, 2147483648
    %v2846 = vor.u32 1.1754944e-38, %v2845
    %v2847 = vsel %vm2844, %v2846, %v2842
    %v2848 = vmul.f32 1.0, %v2847
    %v2849 = vrcp.pop %v2379
    %v2850 = vmul.f32 %v2379, %v2849
    %v2851 = vsub.f32 1.0, %v2850
    %v2852 = vmul.f32 %v2849, %v2851
    %v2853 = vadd.f32 %v2849, %v2852
    %vm2854 = vweird.f32 %v2379
    %vm2855 = vweird.f32 %v2849
    %vm2856 = vmor %vm2854, %vm2855
    %v2857 = vsel %vm2856, %v2849, %v2853
    %v2858 = vand.u32 2147483647, %v2379
    %vm2859 = vcmp.eq.f32.partialorder %v2858, 8.507059e+37
    %v2860 = vand.u32 %v2379, 2147483648
    %v2861 = vor.u32 1.1754944e-38, %v2860
    %v2862 = vsel %vm2859, %v2861, %v2857
    %v2863 = vmul.f32 1.0, %v2862
    %v2864 = vrcp.pop %v2380
    %v2865 = vmul.f32 %v2380, %v2864
    %v2866 = vsub.f32 1.0, %v2865
    %v2867 = vmul.f32 %v2864, %v2866
    %v2868 = vadd.f32 %v2864, %v2867
    %vm2869 = vweird.f32 %v2380
    %vm2870 = vweird.f32 %v2864
    %vm2871 = vmor %vm2869, %vm2870
    %v2872 = vsel %vm2871, %v2864, %v2868
    %v2873 = vand.u32 2147483647, %v2380
    %vm2874 = vcmp.eq.f32.partialorder %v2873, 8.507059e+37
    %v2875 = vand.u32 %v2380, 2147483648
    %v2876 = vor.u32 1.1754944e-38, %v2875
    %v2877 = vsel %vm2874, %v2876, %v2872
    %v2878 = vmul.f32 1.0, %v2877
    %v2879 = vrcp.pop %v2381
    %v2880 = vmul.f32 %v2381, %v2879
    %v2881 = vsub.f32 1.0, %v2880
    %v2882 = vmul.f32 %v2879, %v2881
    %v2883 = vadd.f32 %v2879, %v2882
    %vm2884 = vweird.f32 %v2381
    %vm2885 = vweird.f32 %v2879
    %vm2886 = vmor %vm2884, %vm2885
    %v2887 = vsel %vm2886, %v2879, %v2883
    %v2888 = vand.u32 2147483647, %v2381
    %vm2889 = vcmp.eq.f32.partialorder %v2888, 8.507059e+37
    %v2890 = vand.u32 %v2381, 2147483648
    %v2891 = vor.u32 1.1754944e-38, %v2890
    %v2892 = vsel %vm2889, %v2891, %v2887
    %v2893 = vmul.f32 1.0, %v2892
    %v2894 = vrcp.pop %v2382
    %v2895 = vmul.f32 %v2382, %v2894
    %v2896 = vsub.f32 1.0, %v2895
    %v2897 = vmul.f32 %v2894, %v2896
    %v2898 = vadd.f32 %v2894, %v2897
    %vm2899 = vweird.f32 %v2382
    %vm2900 = vweird.f32 %v2894
    %vm2901 = vmor %vm2899, %vm2900
    %v2902 = vsel %vm2901, %v2894, %v2898
    %v2903 = vand.u32 2147483647, %v2382
    %vm2904 = vcmp.eq.f32.partialorder %v2903, 8.507059e+37
    %v2905 = vand.u32 %v2382, 2147483648
    %v2906 = vor.u32 1.1754944e-38, %v2905
    %v2907 = vsel %vm2904, %v2906, %v2902
    %v2908 = vmul.f32 1.0, %v2907
    %v2909 = vrcp.pop %v2383
    %v2910 = vmul.f32 %v2383, %v2909
    %v2911 = vsub.f32 1.0, %v2910
    %v2912 = vmul.f32 %v2909, %v2911
    %v2913 = vadd.f32 %v2909, %v2912
    %vm2914 = vweird.f32 %v2383
    %vm2915 = vweird.f32 %v2909
    %vm2916 = vmor %vm2914, %vm2915
    %v2917 = vsel %vm2916, %v2909, %v2913
    %v2918 = vand.u32 2147483647, %v2383
    %vm2919 = vcmp.eq.f32.partialorder %v2918, 8.507059e+37
    %v2920 = vand.u32 %v2383, 2147483648
    %v2921 = vor.u32 1.1754944e-38, %v2920
    %v2922 = vsel %vm2919, %v2921, %v2917
    %v2923 = vmul.f32 1.0, %v2922
    %v2924 = vrcp.pop %v2384
    %v2925 = vmul.f32 %v2384, %v2924
    %v2926 = vsub.f32 1.0, %v2925
    %v2927 = vmul.f32 %v2924, %v2926
    %v2928 = vadd.f32 %v2924, %v2927
    %vm2929 = vweird.f32 %v2384
    %vm2930 = vweird.f32 %v2924
    %vm2931 = vmor %vm2929, %vm2930
    %v2932 = vsel %vm2931, %v2924, %v2928
    %v2933 = vand.u32 2147483647, %v2384
    %vm2934 = vcmp.eq.f32.partialorder %v2933, 8.507059e+37
    %v2935 = vand.u32 %v2384, 2147483648
    %v2936 = vor.u32 1.1754944e-38, %v2935
    %v2937 = vsel %vm2934, %v2936, %v2932
    %v2938 = vmul.f32 1.0, %v2937
    %v2939 = vrcp.pop %v2385
    %v2940 = vmul.f32 %v2385, %v2939
    %v2941 = vsub.f32 1.0, %v2940
    %v2942 = vmul.f32 %v2939, %v2941
    %v2943 = vadd.f32 %v2939, %v2942
    %vm2944 = vweird.f32 %v2385
    %vm2945 = vweird.f32 %v2939
    %vm2946 = vmor %vm2944, %vm2945
    %v2947 = vsel %vm2946, %v2939, %v2943
    %v2948 = vand.u32 2147483647, %v2385
    %vm2949 = vcmp.eq.f32.partialorder %v2948, 8.507059e+37
    %v2950 = vand.u32 %v2385, 2147483648
    %v2951 = vor.u32 1.1754944e-38, %v2950
    %v2952 = vsel %vm2949, %v2951, %v2947
    %v2953 = vmul.f32 1.0, %v2952
    %v2954 = vrcp.pop %v2386
    %v2955 = vmul.f32 %v2386, %v2954
    %v2956 = vsub.f32 1.0, %v2955
    %v2957 = vmul.f32 %v2954, %v2956
    %v2958 = vadd.f32 %v2954, %v2957
    %vm2959 = vweird.f32 %v2386
    %vm2960 = vweird.f32 %v2954
    %vm2961 = vmor %vm2959, %vm2960
    %v2962 = vsel %vm2961, %v2954, %v2958
    %v2963 = vand.u32 2147483647, %v2386
    %vm2964 = vcmp.eq.f32.partialorder %v2963, 8.507059e+37
    %v2965 = vand.u32 %v2386, 2147483648
    %v2966 = vor.u32 1.1754944e-38, %v2965
    %v2967 = vsel %vm2964, %v2966, %v2962
    %v2968 = vmul.f32 1.0, %v2967
    %v2969 = vrcp.pop %v2387
    %v2970 = vmul.f32 %v2387, %v2969
    %v2971 = vsub.f32 1.0, %v2970
    %v2972 = vmul.f32 %v2969, %v2971
    %v2973 = vadd.f32 %v2969, %v2972
    %vm2974 = vweird.f32 %v2387
    %vm2975 = vweird.f32 %v2969
    %vm2976 = vmor %vm2974, %vm2975
    %v2977 = vsel %vm2976, %v2969, %v2973
    %v2978 = vand.u32 2147483647, %v2387
    %vm2979 = vcmp.eq.f32.partialorder %v2978, 8.507059e+37
    %v2980 = vand.u32 %v2387, 2147483648
    %v2981 = vor.u32 1.1754944e-38, %v2980
    %v2982 = vsel %vm2979, %v2981, %v2977
    %v2983 = vmul.f32 1.0, %v2982
    %v2984 = vrcp.pop %v2388
    %v2985 = vmul.f32 %v2388, %v2984
    %v2986 = vsub.f32 1.0, %v2985
    %v2987 = vmul.f32 %v2984, %v2986
    %v2988 = vadd.f32 %v2984, %v2987
    %vm2989 = vweird.f32 %v2388
    %vm2990 = vweird.f32 %v2984
    %vm2991 = vmor %vm2989, %vm2990
    %v2992 = vsel %vm2991, %v2984, %v2988
    %v2993 = vand.u32 2147483647, %v2388
    %vm2994 = vcmp.eq.f32.partialorder %v2993, 8.507059e+37
    %v2995 = vand.u32 %v2388, 2147483648
    %v2996 = vor.u32 1.1754944e-38, %v2995
    %v2997 = vsel %vm2994, %v2996, %v2992
    %v2998 = vmul.f32 1.0, %v2997
    %v2999 = vrcp.pop %v2389
    %v3000 = vmul.f32 %v2389, %v2999
    %v3001 = vsub.f32 1.0, %v3000
    %v3002 = vmul.f32 %v2999, %v3001
    %v3003 = vadd.f32 %v2999, %v3002
    %vm3004 = vweird.f32 %v2389
    %vm3005 = vweird.f32 %v2999
    %vm3006 = vmor %vm3004, %vm3005
    %v3007 = vsel %vm3006, %v2999, %v3003
    %v3008 = vand.u32 2147483647, %v2389
    %vm3009 = vcmp.eq.f32.partialorder %v3008, 8.507059e+37
    %v3010 = vand.u32 %v2389, 2147483648
    %v3011 = vor.u32 1.1754944e-38, %v3010
    %v3012 = vsel %vm3009, %v3011, %v3007
    %v3013 = vmul.f32 1.0, %v3012
    %v3014 = vrcp.pop %v2390
    %v3015 = vmul.f32 %v2390, %v3014
    %v3016 = vsub.f32 1.0, %v3015
    %v3017 = vmul.f32 %v3014, %v3016
    %v3018 = vadd.f32 %v3014, %v3017
    %vm3019 = vweird.f32 %v2390
    %vm3020 = vweird.f32 %v3014
    %vm3021 = vmor %vm3019, %vm3020
    %v3022 = vsel %vm3021, %v3014, %v3018
    %v3023 = vand.u32 2147483647, %v2390
    %vm3024 = vcmp.eq.f32.partialorder %v3023, 8.507059e+37
    %v3025 = vand.u32 %v2390, 2147483648
    %v3026 = vor.u32 1.1754944e-38, %v3025
    %v3027 = vsel %vm3024, %v3026, %v3022
    %v3028 = vmul.f32 1.0, %v3027
    %v3029 = vrcp.pop %v2391
    %v3030 = vmul.f32 %v2391, %v3029
    %v3031 = vsub.f32 1.0, %v3030
    %v3032 = vmul.f32 %v3029, %v3031
    %v3033 = vadd.f32 %v3029, %v3032
    %vm3034 = vweird.f32 %v2391
    %vm3035 = vweird.f32 %v3029
    %vm3036 = vmor %vm3034, %vm3035
    %v3037 = vsel %vm3036, %v3029, %v3033
    %v3038 = vand.u32 2147483647, %v2391
    %vm3039 = vcmp.eq.f32.partialorder %v3038, 8.507059e+37
    %v3040 = vand.u32 %v2391, 2147483648
    %v3041 = vor.u32 1.1754944e-38, %v3040
    %v3042 = vsel %vm3039, %v3041, %v3037
    %v3043 = vmul.f32 1.0, %v3042
    %v3044 = vrcp.pop %v2392
    %v3045 = vmul.f32 %v2392, %v3044
    %v3046 = vsub.f32 1.0, %v3045
    %v3047 = vmul.f32 %v3044, %v3046
    %v3048 = vadd.f32 %v3044, %v3047
    %vm3049 = vweird.f32 %v2392
    %vm3050 = vweird.f32 %v3044
    %vm3051 = vmor %vm3049, %vm3050
    %v3052 = vsel %vm3051, %v3044, %v3048
    %v3053 = vand.u32 2147483647, %v2392
    %vm3054 = vcmp.eq.f32.partialorder %v3053, 8.507059e+37
    %v3055 = vand.u32 %v2392, 2147483648
    %v3056 = vor.u32 1.1754944e-38, %v3055
    %v3057 = vsel %vm3054, %v3056, %v3052
    %v3058 = vmul.f32 1.0, %v3057
    %v3059 = vrcp.pop %v2393
    %v3060 = vmul.f32 %v2393, %v3059
    %v3061 = vsub.f32 1.0, %v3060
    %v3062 = vmul.f32 %v3059, %v3061
    %v3063 = vadd.f32 %v3059, %v3062
    %vm3064 = vweird.f32 %v2393
    %vm3065 = vweird.f32 %v3059
    %vm3066 = vmor %vm3064, %vm3065
    %v3067 = vsel %vm3066, %v3059, %v3063
    %v3068 = vand.u32 2147483647, %v2393
    %vm3069 = vcmp.eq.f32.partialorder %v3068, 8.507059e+37
    %v3070 = vand.u32 %v2393, 2147483648
    %v3071 = vor.u32 1.1754944e-38, %v3070
    %v3072 = vsel %vm3069, %v3071, %v3067
    %v3073 = vmul.f32 1.0, %v3072
    %v3074 = vrcp.pop %v2394
    %v3075 = vmul.f32 %v2394, %v3074
    %v3076 = vsub.f32 1.0, %v3075
    %v3077 = vmul.f32 %v3074, %v3076
    %v3078 = vadd.f32 %v3074, %v3077
    %vm3079 = vweird.f32 %v2394
    %vm3080 = vweird.f32 %v3074
    %vm3081 = vmor %vm3079, %vm3080
    %v3082 = vsel %vm3081, %v3074, %v3078
    %v3083 = vand.u32 2147483647, %v2394
    %vm3084 = vcmp.eq.f32.partialorder %v3083, 8.507059e+37
    %v3085 = vand.u32 %v2394, 2147483648
    %v3086 = vor.u32 1.1754944e-38, %v3085
    %v3087 = vsel %vm3084, %v3086, %v3082
    %v3088 = vmul.f32 1.0, %v3087
    %v3089 = vrcp.pop %v2395
    %v3090 = vmul.f32 %v2395, %v3089
    %v3091 = vsub.f32 1.0, %v3090
    %v3092 = vmul.f32 %v3089, %v3091
    %v3093 = vadd.f32 %v3089, %v3092
    %vm3094 = vweird.f32 %v2395
    %vm3095 = vweird.f32 %v3089
    %vm3096 = vmor %vm3094, %vm3095
    %v3097 = vsel %vm3096, %v3089, %v3093
    %v3098 = vand.u32 2147483647, %v2395
    %vm3099 = vcmp.eq.f32.partialorder %v3098, 8.507059e+37
    %v3100 = vand.u32 %v2395, 2147483648
    %v3101 = vor.u32 1.1754944e-38, %v3100
    %v3102 = vsel %vm3099, %v3101, %v3097
    %v3103 = vmul.f32 1.0, %v3102
    %v3104 = vrcp.pop %v2396
    %v3105 = vmul.f32 %v2396, %v3104
    %v3106 = vsub.f32 1.0, %v3105
    %v3107 = vmul.f32 %v3104, %v3106
    %v3108 = vadd.f32 %v3104, %v3107
    %vm3109 = vweird.f32 %v2396
    %vm3110 = vweird.f32 %v3104
    %vm3111 = vmor %vm3109, %vm3110
    %v3112 = vsel %vm3111, %v3104, %v3108
    %v3113 = vand.u32 2147483647, %v2396
    %vm3114 = vcmp.eq.f32.partialorder %v3113, 8.507059e+37
    %v3115 = vand.u32 %v2396, 2147483648
    %v3116 = vor.u32 1.1754944e-38, %v3115
    %v3117 = vsel %vm3114, %v3116, %v3112
    %v3118 = vmul.f32 1.0, %v3117
    %v3119 = vrcp.pop %v2397
    %v3120 = vmul.f32 %v2397, %v3119
    %v3121 = vsub.f32 1.0, %v3120
    %v3122 = vmul.f32 %v3119, %v3121
    %v3123 = vadd.f32 %v3119, %v3122
    %vm3124 = vweird.f32 %v2397
    %vm3125 = vweird.f32 %v3119
    %vm3126 = vmor %vm3124, %vm3125
    %v3127 = vsel %vm3126, %v3119, %v3123
    %v3128 = vand.u32 2147483647, %v2397
    %vm3129 = vcmp.eq.f32.partialorder %v3128, 8.507059e+37
    %v3130 = vand.u32 %v2397, 2147483648
    %v3131 = vor.u32 1.1754944e-38, %v3130
    %v3132 = vsel %vm3129, %v3131, %v3127
    %v3133 = vmul.f32 1.0, %v3132
    %v3134 = vrcp.pop %v2398
    %v3135 = vmul.f32 %v2398, %v3134
    %v3136 = vsub.f32 1.0, %v3135
    %v3137 = vmul.f32 %v3134, %v3136
    %v3138 = vadd.f32 %v3134, %v3137
    %vm3139 = vweird.f32 %v2398
    %vm3140 = vweird.f32 %v3134
    %vm3141 = vmor %vm3139, %vm3140
    %v3142 = vsel %vm3141, %v3134, %v3138
    %v3143 = vand.u32 2147483647, %v2398
    %vm3144 = vcmp.eq.f32.partialorder %v3143, 8.507059e+37
    %v3145 = vand.u32 %v2398, 2147483648
    %v3146 = vor.u32 1.1754944e-38, %v3145
    %v3147 = vsel %vm3144, %v3146, %v3142
    %v3148 = vmul.f32 1.0, %v3147
    %v3149 = vrcp.pop %v2399
    %v3150 = vmul.f32 %v2399, %v3149
    %v3151 = vsub.f32 1.0, %v3150
    %v3152 = vmul.f32 %v3149, %v3151
    %v3153 = vadd.f32 %v3149, %v3152
    %vm3154 = vweird.f32 %v2399
    %vm3155 = vweird.f32 %v3149
    %vm3156 = vmor %vm3154, %vm3155
    %v3157 = vsel %vm3156, %v3149, %v3153
    %v3158 = vand.u32 2147483647, %v2399
    %vm3159 = vcmp.eq.f32.partialorder %v3158, 8.507059e+37
    %v3160 = vand.u32 %v2399, 2147483648
    %v3161 = vor.u32 1.1754944e-38, %v3160
    %v3162 = vsel %vm3159, %v3161, %v3157
    %v3163 = vmul.f32 1.0, %v3162
    %v3164 = vrcp.pop %v2400
    %v3165 = vmul.f32 %v2400, %v3164
    %v3166 = vsub.f32 1.0, %v3165
    %v3167 = vmul.f32 %v3164, %v3166
    %v3168 = vadd.f32 %v3164, %v3167
    %vm3169 = vweird.f32 %v2400
    %vm3170 = vweird.f32 %v3164
    %vm3171 = vmor %vm3169, %vm3170
    %v3172 = vsel %vm3171, %v3164, %v3168
    %v3173 = vand.u32 2147483647, %v2400
    %vm3174 = vcmp.eq.f32.partialorder %v3173, 8.507059e+37
    %v3175 = vand.u32 %v2400, 2147483648
    %v3176 = vor.u32 1.1754944e-38, %v3175
    %v3177 = vsel %vm3174, %v3176, %v3172
    %v3178 = vmul.f32 1.0, %v3177
    %v3179 = vrcp.pop %v2401
    %v3180 = vmul.f32 %v2401, %v3179
    %v3181 = vsub.f32 1.0, %v3180
    %v3182 = vmul.f32 %v3179, %v3181
    %v3183 = vadd.f32 %v3179, %v3182
    %vm3184 = vweird.f32 %v2401
    %vm3185 = vweird.f32 %v3179
    %vm3186 = vmor %vm3184, %vm3185
    %v3187 = vsel %vm3186, %v3179, %v3183
    %v3188 = vand.u32 2147483647, %v2401
    %vm3189 = vcmp.eq.f32.partialorder %v3188, 8.507059e+37
    %v3190 = vand.u32 %v2401, 2147483648
    %v3191 = vor.u32 1.1754944e-38, %v3190
    %v3192 = vsel %vm3189, %v3191, %v3187
    %v3193 = vmul.f32 1.0, %v3192
    %v3194 = vrcp.pop %v2402
    %v3195 = vmul.f32 %v2402, %v3194
    %v3196 = vsub.f32 1.0, %v3195
    %v3197 = vmul.f32 %v3194, %v3196
    %v3198 = vadd.f32 %v3194, %v3197
    %vm3199 = vweird.f32 %v2402
    %vm3200 = vweird.f32 %v3194
    %vm3201 = vmor %vm3199, %vm3200
    %v3202 = vsel %vm3201, %v3194, %v3198
    %v3203 = vand.u32 2147483647, %v2402
    %vm3204 = vcmp.eq.f32.partialorder %v3203, 8.507059e+37
    %v3205 = vand.u32 %v2402, 2147483648
    %v3206 = vor.u32 1.1754944e-38, %v3205
    %v3207 = vsel %vm3204, %v3206, %v3202
    %v3208 = vmul.f32 1.0, %v3207
    %v3209 = vrcp.pop %v2403
    %v3210 = vmul.f32 %v2403, %v3209
    %v3211 = vsub.f32 1.0, %v3210
    %v3212 = vmul.f32 %v3209, %v3211
    %v3213 = vadd.f32 %v3209, %v3212
    %vm3214 = vweird.f32 %v2403
    %vm3215 = vweird.f32 %v3209
    %vm3216 = vmor %vm3214, %vm3215
    %v3217 = vsel %vm3216, %v3209, %v3213
    %v3218 = vand.u32 2147483647, %v2403
    %vm3219 = vcmp.eq.f32.partialorder %v3218, 8.507059e+37
    %v3220 = vand.u32 %v2403, 2147483648
    %v3221 = vor.u32 1.1754944e-38, %v3220
    %v3222 = vsel %vm3219, %v3221, %v3217
    %v3223 = vmul.f32 1.0, %v3222
    %v3224 = vrcp.pop %v2404
    %v3225 = vmul.f32 %v2404, %v3224
    %v3226 = vsub.f32 1.0, %v3225
    %v3227 = vmul.f32 %v3224, %v3226
    %v3228 = vadd.f32 %v3224, %v3227
    %vm3229 = vweird.f32 %v2404
    %vm3230 = vweird.f32 %v3224
    %vm3231 = vmor %vm3229, %vm3230
    %v3232 = vsel %vm3231, %v3224, %v3228
    %v3233 = vand.u32 2147483647, %v2404
    %vm3234 = vcmp.eq.f32.partialorder %v3233, 8.507059e+37
    %v3235 = vand.u32 %v2404, 2147483648
    %v3236 = vor.u32 1.1754944e-38, %v3235
    %v3237 = vsel %vm3234, %v3236, %v3232
    %v3238 = vmul.f32 1.0, %v3237
    %v3239 = vrcp.pop %v2405
    %v3240 = vmul.f32 %v2405, %v3239
    %v3241 = vsub.f32 1.0, %v3240
    %v3242 = vmul.f32 %v3239, %v3241
    %v3243 = vadd.f32 %v3239, %v3242
    %vm3244 = vweird.f32 %v2405
    %vm3245 = vweird.f32 %v3239
    %vm3246 = vmor %vm3244, %vm3245
    %v3247 = vsel %vm3246, %v3239, %v3243
    %v3248 = vand.u32 2147483647, %v2405
    %vm3249 = vcmp.eq.f32.partialorder %v3248, 8.507059e+37
    %v3250 = vand.u32 %v2405, 2147483648
    %v3251 = vor.u32 1.1754944e-38, %v3250
    %v3252 = vsel %vm3249, %v3251, %v3247
    %v3253 = vmul.f32 1.0, %v3252
    %v3254 = vrcp.pop %v2406
    %v3255 = vmul.f32 %v2406, %v3254
    %v3256 = vsub.f32 1.0, %v3255
    %v3257 = vmul.f32 %v3254, %v3256
    %v3258 = vadd.f32 %v3254, %v3257
    %vm3259 = vweird.f32 %v2406
    %vm3260 = vweird.f32 %v3254
    %vm3261 = vmor %vm3259, %vm3260
    %v3262 = vsel %vm3261, %v3254, %v3258
    %v3263 = vand.u32 2147483647, %v2406
    %vm3264 = vcmp.eq.f32.partialorder %v3263, 8.507059e+37
    %v3265 = vand.u32 %v2406, 2147483648
    %v3266 = vor.u32 1.1754944e-38, %v3265
    %v3267 = vsel %vm3264, %v3266, %v3262
    %v3268 = vmul.f32 1.0, %v3267
    %v3269 = vrcp.pop %v2407
    %v3270 = vmul.f32 %v2407, %v3269
    %v3271 = vsub.f32 1.0, %v3270
    %v3272 = vmul.f32 %v3269, %v3271
    %v3273 = vadd.f32 %v3269, %v3272
    %vm3274 = vweird.f32 %v2407
    %vm3275 = vweird.f32 %v3269
    %vm3276 = vmor %vm3274, %vm3275
    %v3277 = vsel %vm3276, %v3269, %v3273
    %v3278 = vand.u32 2147483647, %v2407
    %vm3279 = vcmp.eq.f32.partialorder %v3278, 8.507059e+37
    %v3280 = vand.u32 %v2407, 2147483648
    %v3281 = vor.u32 1.1754944e-38, %v3280
    %v3282 = vsel %vm3279, %v3281, %v3277
    %v3283 = vmul.f32 1.0, %v3282
    %v3284 = vrcp.pop %v2408
    %v3285 = vmul.f32 %v2408, %v3284
    %v3286 = vsub.f32 1.0, %v3285
    %v3287 = vmul.f32 %v3284, %v3286
    %v3288 = vadd.f32 %v3284, %v3287
    %vm3289 = vweird.f32 %v2408
    %vm3290 = vweird.f32 %v3284
    %vm3291 = vmor %vm3289, %vm3290
    %v3292 = vsel %vm3291, %v3284, %v3288
    %v3293 = vand.u32 2147483647, %v2408
    %vm3294 = vcmp.eq.f32.partialorder %v3293, 8.507059e+37
    %v3295 = vand.u32 %v2408, 2147483648
    %v3296 = vor.u32 1.1754944e-38, %v3295
    %v3297 = vsel %vm3294, %v3296, %v3292
    %v3298 = vmul.f32 1.0, %v3297
    %v3299 = vrcp.pop %v2409
    %v3300 = vmul.f32 %v2409, %v3299
    %v3301 = vsub.f32 1.0, %v3300
    %v3302 = vmul.f32 %v3299, %v3301
    %v3303 = vadd.f32 %v3299, %v3302
    %vm3304 = vweird.f32 %v2409
    %vm3305 = vweird.f32 %v3299
    %vm3306 = vmor %vm3304, %vm3305
    %v3307 = vsel %vm3306, %v3299, %v3303
    %v3308 = vand.u32 2147483647, %v2409
    %vm3309 = vcmp.eq.f32.partialorder %v3308, 8.507059e+37
    %v3310 = vand.u32 %v2409, 2147483648
    %v3311 = vor.u32 1.1754944e-38, %v3310
    %v3312 = vsel %vm3309, %v3311, %v3307
    %v3313 = vmul.f32 1.0, %v3312
    %v3314 = vrcp.pop %v2410
    %v3315 = vmul.f32 %v2410, %v3314
    %v3316 = vsub.f32 1.0, %v3315
    %v3317 = vmul.f32 %v3314, %v3316
    %v3318 = vadd.f32 %v3314, %v3317
    %vm3319 = vweird.f32 %v2410
    %vm3320 = vweird.f32 %v3314
    %vm3321 = vmor %vm3319, %vm3320
    %v3322 = vsel %vm3321, %v3314, %v3318
    %v3323 = vand.u32 2147483647, %v2410
    %vm3324 = vcmp.eq.f32.partialorder %v3323, 8.507059e+37
    %v3325 = vand.u32 %v2410, 2147483648
    %v3326 = vor.u32 1.1754944e-38, %v3325
    %v3327 = vsel %vm3324, %v3326, %v3322
    %v3328 = vmul.f32 1.0, %v3327
    %v3329 = vrcp.pop %v2411
    %v3330 = vmul.f32 %v2411, %v3329
    %v3331 = vsub.f32 1.0, %v3330
    %v3332 = vmul.f32 %v3329, %v3331
    %v3333 = vadd.f32 %v3329, %v3332
    %vm3334 = vweird.f32 %v2411
    %vm3335 = vweird.f32 %v3329
    %vm3336 = vmor %vm3334, %vm3335
    %v3337 = vsel %vm3336, %v3329, %v3333
    %v3338 = vand.u32 2147483647, %v2411
    %vm3339 = vcmp.eq.f32.partialorder %v3338, 8.507059e+37
    %v3340 = vand.u32 %v2411, 2147483648
    %v3341 = vor.u32 1.1754944e-38, %v3340
    %v3342 = vsel %vm3339, %v3341, %v3337
    %v3343 = vmul.f32 1.0, %v3342
    %v3344 = vrcp.pop %v2412
    %v3345 = vmul.f32 %v2412, %v3344
    %v3346 = vsub.f32 1.0, %v3345
    %v3347 = vmul.f32 %v3344, %v3346
    %v3348 = vadd.f32 %v3344, %v3347
    %vm3349 = vweird.f32 %v2412
    %vm3350 = vweird.f32 %v3344
    %vm3351 = vmor %vm3349, %vm3350
    %v3352 = vsel %vm3351, %v3344, %v3348
    %v3353 = vand.u32 2147483647, %v2412
    %vm3354 = vcmp.eq.f32.partialorder %v3353, 8.507059e+37
    %v3355 = vand.u32 %v2412, 2147483648
    %v3356 = vor.u32 1.1754944e-38, %v3355
    %v3357 = vsel %vm3354, %v3356, %v3352
    %v3358 = vmul.f32 1.0, %v3357
    %v3359 = vrcp.pop %v2413
    %v3360 = vmul.f32 %v2413, %v3359
    %v3361 = vsub.f32 1.0, %v3360
    %v3362 = vmul.f32 %v3359, %v3361
    %v3363 = vadd.f32 %v3359, %v3362
    %vm3364 = vweird.f32 %v2413
    %vm3365 = vweird.f32 %v3359
    %vm3366 = vmor %vm3364, %vm3365
    %v3367 = vsel %vm3366, %v3359, %v3363
    %v3368 = vand.u32 2147483647, %v2413
    %vm3369 = vcmp.eq.f32.partialorder %v3368, 8.507059e+37
    %v3370 = vand.u32 %v2413, 2147483648
    %v3371 = vor.u32 1.1754944e-38, %v3370
    %v3372 = vsel %vm3369, %v3371, %v3367
    %v3373 = vmul.f32 1.0, %v3372
    %v3374 = vmul.f32 %v1999, %v2428
    %v3375 = vmul.f32 %v2001, %v2443
    %v3376 = vmul.f32 %v2004, %v2458
    %v3377 = vmul.f32 %v2006, %v2473
    %v3378 = vmul.f32 %v2009, %v2488
    %v3379 = vmul.f32 %v2011, %v2503
    %v3380 = vmul.f32 %v2014, %v2518
    %v3381 = vmul.f32 %v2016, %v2533
    %v3382 = vmul.f32 %v2019, %v2548
    %v3383 = vmul.f32 %v2021, %v2563
    %v3384 = vmul.f32 %v2024, %v2578
    %v3385 = vmul.f32 %v2026, %v2593
    %v3386 = vmul.f32 %v2029, %v2608
    %v3387 = vmul.f32 %v2031, %v2623
    %v3388 = vmul.f32 %v2034, %v2638
    %v3389 = vmul.f32 %v2036, %v2653
    %v3390 = vmul.f32 %v2039, %v2668
    %v3391 = vmul.f32 %v2041, %v2683
    %v3392 = vmul.f32 %v2044, %v2698
    %v3393 = vmul.f32 %v2046, %v2713
    %v3394 = vmul.f32 %v2049, %v2728
    %v3395 = vmul.f32 %v2051, %v2743
    %v3396 = vmul.f32 %v2054, %v2758
    %v3397 = vmul.f32 %v2056, %v2773
    %v3398 = vmul.f32 %v2059, %v2788
    %v3399 = vmul.f32 %v2061, %v2803
    %v3400 = vmul.f32 %v2064, %v2818
    %v3401 = vmul.f32 %v2066, %v2833
    %v3402 = vmul.f32 %v2069, %v2848
    %v3403 = vmul.f32 %v2071, %v2863
    %v3404 = vmul.f32 %v2074, %v2878
    %v3405 = vmul.f32 %v2076, %v2893
    %v3406 = vmul.f32 %v2079, %v2908
    %v3407 = vmul.f32 %v2081, %v2923
    %v3408 = vmul.f32 %v2084, %v2938
    %v3409 = vmul.f32 %v2086, %v2953
    %v3410 = vmul.f32 %v2089, %v2968
    %v3411 = vmul.f32 %v2091, %v2983
    %v3412 = vmul.f32 %v2094, %v2998
    %v3413 = vmul.f32 %v2096, %v3013
    %v3414 = vmul.f32 %v2099, %v3028
    %v3415 = vmul.f32 %v2101, %v3043
    %v3416 = vmul.f32 %v2104, %v3058
    %v3417 = vmul.f32 %v2106, %v3073
    %v3418 = vmul.f32 %v2109, %v3088
    %v3419 = vmul.f32 %v2111, %v3103
    %v3420 = vmul.f32 %v2114, %v3118
    %v3421 = vmul.f32 %v2116, %v3133
    %v3422 = vmul.f32 %v2119, %v3148
    %v3423 = vmul.f32 %v2121, %v3163
    %v3424 = vmul.f32 %v2124, %v3178
    %v3425 = vmul.f32 %v2126, %v3193
    %v3426 = vmul.f32 %v2129, %v3208
    %v3427 = vmul.f32 %v2131, %v3223
    %v3428 = vmul.f32 %v2134, %v3238
    %v3429 = vmul.f32 %v2136, %v3253
    %v3430 = vmul.f32 %v2139, %v3268
    %v3431 = vmul.f32 %v2141, %v3283
    %v3432 = vmul.f32 %v2144, %v3298
    %v3433 = vmul.f32 %v2146, %v3313
    %v3434 = vmul.f32 %v2149, %v3328
    %v3435 = vmul.f32 %v2151, %v3343
    %v3436 = vmul.f32 %v2154, %v3358
    %v3437 = vmul.f32 %v2156, %v3373
    %3438 = vst.msk [vmem:[#allocation2] sm:$0xff] %vm302, 0.0
    %3439 = vst.msk [vmem:[#allocation2 + $0x8] sm:$0xff] %vm302, 0.0
    %vm3440 = vcmask 254976
    %3441 = vst.msk [vmem:[#allocation2 + $0x10] sm:$0x3] %vm3440, 0.0
    %3442 = vst.msk [vmem:[#allocation2 + $0x18] sm:$0xff] %vm302, 0.0
    %3443 = vst.msk [vmem:[#allocation2 + $0x20] sm:$0xff] %vm302, 0.0
    %3444 = vst.msk [vmem:[#allocation2 + $0x28] sm:$0x3] %vm3440, 0.0
    %3445 = vst.msk [vmem:[#allocation2 + $0x30] sm:$0xff] %vm302, 0.0
    %3446 = vst.msk [vmem:[#allocation2 + $0x38] sm:$0xff] %vm302, 0.0
    %3447 = vst.msk [vmem:[#allocation2 + $0x40] sm:$0x3] %vm3440, 0.0
    %3448 = vst.msk [vmem:[#allocation2 + $0x48] sm:$0xff] %vm302, 0.0
    %3449 = vst.msk [vmem:[#allocation2 + $0x50] sm:$0xff] %vm302, 0.0
    %3450 = vst.msk [vmem:[#allocation2 + $0x58] sm:$0x3] %vm3440, 0.0
    %3451 = vst.msk [vmem:[#allocation2 + $0x60] sm:$0xff] %vm302, 0.0
    %3452 = vst.msk [vmem:[#allocation2 + $0x68] sm:$0xff] %vm302, 0.0
    %3453 = vst.msk [vmem:[#allocation2 + $0x70] sm:$0x3] %vm3440, 0.0
    %3454 = vst.msk [vmem:[#allocation2 + $0x78] sm:$0xff] %vm302, 0.0
    %3455 = vst.msk [vmem:[#allocation2 + $0x80] sm:$0xff] %vm302, 0.0
    %3456 = vst.msk [vmem:[#allocation2 + $0x88] sm:$0x3] %vm3440, 0.0
    %3457 = vst.msk [vmem:[#allocation2 + $0x90] sm:$0xff] %vm302, 0.0
    %3458 = vst.msk [vmem:[#allocation2 + $0x98] sm:$0xff] %vm302, 0.0
    %3459 = vst.msk [vmem:[#allocation2 + $0xa0] sm:$0x3] %vm3440, 0.0
    %3460 = vst.msk [vmem:[#allocation2 + $0xa8] sm:$0xff] %vm302, 0.0
    %3461 = vst.msk [vmem:[#allocation2 + $0xb0] sm:$0xff] %vm302, 0.0
    %3462 = vst.msk [vmem:[#allocation2 + $0xb8] sm:$0x3] %vm3440, 0.0
    %3463 = vst.msk [vmem:[#allocation2 + $0xc0] sm:$0xff] %vm302, 0.0
    %3464 = vst.msk [vmem:[#allocation2 + $0xc8] sm:$0xff] %vm302, 0.0
    %3465 = vst.msk [vmem:[#allocation2 + $0xd0] sm:$0x3] %vm3440, 0.0
    %3466 = vst.msk [vmem:[#allocation2 + $0xd8] sm:$0xff] %vm302, 0.0
    %3467 = vst.msk [vmem:[#allocation2 + $0xe0] sm:$0xff] %vm302, 0.0
    %3468 = vst.msk [vmem:[#allocation2 + $0xe8] sm:$0x3] %vm3440, 0.0
    %3469 = vst.msk [vmem:[#allocation2 + $0xf0] sm:$0xff] %vm302, 0.0
    %3470 = vst.msk [vmem:[#allocation2 + $0xf8] sm:$0xff] %vm302, 0.0
    %3471 = vst.msk [vmem:[#allocation2 + $0x100] sm:$0x3] %vm3440, 0.0
    %3472 = vst.msk [vmem:[#allocation2 + $0x108] sm:$0xff] %vm302, 0.0
    %3473 = vst.msk [vmem:[#allocation2 + $0x110] sm:$0xff] %vm302, 0.0
    %3474 = vst.msk [vmem:[#allocation2 + $0x118] sm:$0x3] %vm3440, 0.0
    %3475 = vst.msk [vmem:[#allocation2 + $0x120] sm:$0xff] %vm302, 0.0
    %3476 = vst.msk [vmem:[#allocation2 + $0x128] sm:$0xff] %vm302, 0.0
    %3477 = vst.msk [vmem:[#allocation2 + $0x130] sm:$0x3] %vm3440, 0.0
    %3478 = vst.msk [vmem:[#allocation2 + $0x138] sm:$0xff] %vm302, 0.0
    %3479 = vst.msk [vmem:[#allocation2 + $0x140] sm:$0xff] %vm302, 0.0
    %3480 = vst.msk [vmem:[#allocation2 + $0x148] sm:$0x3] %vm3440, 0.0
    %3481 = vst.msk [vmem:[#allocation2 + $0x150] sm:$0xff] %vm302, 0.0
    %3482 = vst.msk [vmem:[#allocation2 + $0x158] sm:$0xff] %vm302, 0.0
    %3483 = vst.msk [vmem:[#allocation2 + $0x160] sm:$0x3] %vm3440, 0.0
    %3484 = vst.msk [vmem:[#allocation2 + $0x168] sm:$0xff] %vm302, 0.0
    %3485 = vst.msk [vmem:[#allocation2 + $0x170] sm:$0xff] %vm302, 0.0
    %3486 = vst.msk [vmem:[#allocation2 + $0x178] sm:$0x3] %vm3440, 0.0
    %3487 = vst.msk [vmem:[#allocation2 + $0x180] sm:$0xff] %vm302, 0.0
    %3488 = vst.msk [vmem:[#allocation2 + $0x188] sm:$0xff] %vm302, 0.0
    %3489 = vst.msk [vmem:[#allocation2 + $0x190] sm:$0x3] %vm3440, 0.0
    %3490 = vst.msk [vmem:[#allocation2 + $0x198] sm:$0xff] %vm302, 0.0
    %3491 = vst.msk [vmem:[#allocation2 + $0x1a0] sm:$0xff] %vm302, 0.0
    %3492 = vst.msk [vmem:[#allocation2 + $0x1a8] sm:$0x3] %vm3440, 0.0
    %3493 = vst.msk [vmem:[#allocation2 + $0x1b0] sm:$0xff] %vm302, 0.0
    %3494 = vst.msk [vmem:[#allocation2 + $0x1b8] sm:$0xff] %vm302, 0.0
    %3495 = vst.msk [vmem:[#allocation2 + $0x1c0] sm:$0x3] %vm3440, 0.0
    %3496 = vst.msk [vmem:[#allocation2 + $0x1c8] sm:$0xff] %vm302, 0.0
    %3497 = vst.msk [vmem:[#allocation2 + $0x1d0] sm:$0xff] %vm302, 0.0
    %3498 = vst.msk [vmem:[#allocation2 + $0x1d8] sm:$0x3] %vm3440, 0.0
    %3499 = vst.msk [vmem:[#allocation2 + $0x1e0] sm:$0xff] %vm302, 0.0
    %3500 = vst.msk [vmem:[#allocation2 + $0x1e8] sm:$0xff] %vm302, 0.0
    %3501 = vst.msk [vmem:[#allocation2 + $0x1f0] sm:$0x3] %vm3440, 0.0
    %3502 = vst.msk [vmem:[#allocation2 + $0x1f8] sm:$0xff] %vm302, 0.0
    %3503 = vst.msk [vmem:[#allocation2 + $0x200] sm:$0xff] %vm302, 0.0
    %3504 = vst.msk [vmem:[#allocation2 + $0x208] sm:$0x3] %vm3440, 0.0
    %3505 = vst.msk [vmem:[#allocation2 + $0x210] sm:$0xff] %vm302, 0.0
    %3506 = vst.msk [vmem:[#allocation2 + $0x218] sm:$0xff] %vm302, 0.0
    %3507 = vst.msk [vmem:[#allocation2 + $0x220] sm:$0x3] %vm3440, 0.0
    %3508 = vst.msk [vmem:[#allocation2 + $0x228] sm:$0xff] %vm302, 0.0
    %3509 = vst.msk [vmem:[#allocation2 + $0x230] sm:$0xff] %vm302, 0.0
    %3510 = vst.msk [vmem:[#allocation2 + $0x238] sm:$0x3] %vm3440, 0.0
    %3511 = vst.msk [vmem:[#allocation2 + $0x240] sm:$0xff] %vm302, 0.0
    %3512 = vst.msk [vmem:[#allocation2 + $0x248] sm:$0xff] %vm302, 0.0
    %3513 = vst.msk [vmem:[#allocation2 + $0x250] sm:$0x3] %vm3440, 0.0
    %3514 = vst.msk [vmem:[#allocation2 + $0x258] sm:$0xff] %vm302, 0.0
    %3515 = vst.msk [vmem:[#allocation2 + $0x260] sm:$0xff] %vm302, 0.0
    %3516 = vst.msk [vmem:[#allocation2 + $0x268] sm:$0x3] %vm3440, 0.0
    %3517 = vst.msk [vmem:[#allocation2 + $0x270] sm:$0xff] %vm302, 0.0
    %3518 = vst.msk [vmem:[#allocation2 + $0x278] sm:$0xff] %vm302, 0.0
    %3519 = vst.msk [vmem:[#allocation2 + $0x280] sm:$0x3] %vm3440, 0.0
    %3520 = vst.msk [vmem:[#allocation2 + $0x288] sm:$0xff] %vm302, 0.0
    %3521 = vst.msk [vmem:[#allocation2 + $0x290] sm:$0xff] %vm302, 0.0
    %3522 = vst.msk [vmem:[#allocation2 + $0x298] sm:$0x3] %vm3440, 0.0
    %3523 = vst.msk [vmem:[#allocation2 + $0x2a0] sm:$0xff] %vm302, 0.0
    %3524 = vst.msk [vmem:[#allocation2 + $0x2a8] sm:$0xff] %vm302, 0.0
    %3525 = vst.msk [vmem:[#allocation2 + $0x2b0] sm:$0x3] %vm3440, 0.0
    %3526 = vst.msk [vmem:[#allocation2 + $0x2b8] sm:$0xff] %vm302, 0.0
    %3527 = vst.msk [vmem:[#allocation2 + $0x2c0] sm:$0xff] %vm302, 0.0
    %3528 = vst.msk [vmem:[#allocation2 + $0x2c8] sm:$0x3] %vm3440, 0.0
    %3529 = vst.msk [vmem:[#allocation2 + $0x2d0] sm:$0xff] %vm302, 0.0
    %3530 = vst.msk [vmem:[#allocation2 + $0x2d8] sm:$0xff] %vm302, 0.0
    %3531 = vst.msk [vmem:[#allocation2 + $0x2e0] sm:$0x3] %vm3440, 0.0
    %3532 = vst.msk [vmem:[#allocation2 + $0x2e8] sm:$0xff] %vm302, 0.0
    %3533 = vst.msk [vmem:[#allocation2 + $0x2f0] sm:$0xff] %vm302, 0.0
    %3534 = vst.msk [vmem:[#allocation2 + $0x2f8] sm:$0x3] %vm3440, 0.0
    %3535 = vst.msk [vmem:[#allocation2 + $0x300] sm:$0xff] %vm302, 0.0
    %3536 = vst.msk [vmem:[#allocation2 + $0x308] sm:$0xff] %vm302, 0.0
    %3537 = vst.msk [vmem:[#allocation2 + $0x310] sm:$0x3] %vm3440, 0.0
    %3538 = vst.msk [vmem:[#allocation2 + $0x318] sm:$0xff] %vm302, 0.0
    %3539 = vst.msk [vmem:[#allocation2 + $0x320] sm:$0xff] %vm302, 0.0
    %3540 = vst.msk [vmem:[#allocation2 + $0x328] sm:$0x3] %vm3440, 0.0
    %3541 = vst.msk [vmem:[#allocation2 + $0x330] sm:$0xff] %vm302, 0.0
    %3542 = vst.msk [vmem:[#allocation2 + $0x338] sm:$0xff] %vm302, 0.0
    %3543 = vst.msk [vmem:[#allocation2 + $0x340] sm:$0x3] %vm3440, 0.0
    %3544 = vst.msk [vmem:[#allocation2 + $0x348] sm:$0xff] %vm302, 0.0
    %3545 = vst.msk [vmem:[#allocation2 + $0x350] sm:$0xff] %vm302, 0.0
    %3546 = vst.msk [vmem:[#allocation2 + $0x358] sm:$0x3] %vm3440, 0.0
    %s3547 = scalar_lea.vmem [#allocation2], 24
    %3548 = vst.msk [vmem:[%s3547 + $0x1] sm:$0xff] %vm302, %v3374
    %3549 = vst.msk [vmem:[%s3547 + $0x9] sm:$0xff] %vm302, %v3375
    %s3550 = scalar_lea.vmem [#allocation2], 48
    %3551 = vst.msk [vmem:[%s3550 + $0x1] sm:$0xff] %vm302, %v3376
    %3552 = vst.msk [vmem:[%s3550 + $0x9] sm:$0xff] %vm302, %v3377
    %s3553 = scalar_lea.vmem [#allocation2], 72
    %3554 = vst.msk [vmem:[%s3553 + $0x1] sm:$0xff] %vm302, %v3378
    %3555 = vst.msk [vmem:[%s3553 + $0x9] sm:$0xff] %vm302, %v3379
    %s3556 = scalar_lea.vmem [#allocation2], 96
    %3557 = vst.msk [vmem:[%s3556 + $0x1] sm:$0xff] %vm302, %v3380
    %3558 = vst.msk [vmem:[%s3556 + $0x9] sm:$0xff] %vm302, %v3381
    %s3559 = scalar_lea.vmem [#allocation2], 120
    %3560 = vst.msk [vmem:[%s3559 + $0x1] sm:$0xff] %vm302, %v3382
    %3561 = vst.msk [vmem:[%s3559 + $0x9] sm:$0xff] %vm302, %v3383
    %s3562 = scalar_lea.vmem [#allocation2], 144
    %3563 = vst.msk [vmem:[%s3562 + $0x1] sm:$0xff] %vm302, %v3384
    %3564 = vst.msk [vmem:[%s3562 + $0x9] sm:$0xff] %vm302, %v3385
    %s3565 = scalar_lea.vmem [#allocation2], 168
    %3566 = vst.msk [vmem:[%s3565 + $0x1] sm:$0xff] %vm302, %v3386
    %3567 = vst.msk [vmem:[%s3565 + $0x9] sm:$0xff] %vm302, %v3387
    %s3568 = scalar_lea.vmem [#allocation2], 192
    %3569 = vst.msk [vmem:[%s3568 + $0x1] sm:$0xff] %vm302, %v3388
    %3570 = vst.msk [vmem:[%s3568 + $0x9] sm:$0xff] %vm302, %v3389
    %s3571 = scalar_lea.vmem [#allocation2], 216
    %3572 = vst.msk [vmem:[%s3571 + $0x1] sm:$0xff] %vm302, %v3390
    %3573 = vst.msk [vmem:[%s3571 + $0x9] sm:$0xff] %vm302, %v3391
    %s3574 = scalar_lea.vmem [#allocation2], 240
    %3575 = vst.msk [vmem:[%s3574 + $0x1] sm:$0xff] %vm302, %v3392
    %3576 = vst.msk [vmem:[%s3574 + $0x9] sm:$0xff] %vm302, %v3393
    %s3577 = scalar_lea.vmem [#allocation2], 264
    %3578 = vst.msk [vmem:[%s3577 + $0x1] sm:$0xff] %vm302, %v3394
    %3579 = vst.msk [vmem:[%s3577 + $0x9] sm:$0xff] %vm302, %v3395
    %s3580 = scalar_lea.vmem [#allocation2], 288
    %3581 = vst.msk [vmem:[%s3580 + $0x1] sm:$0xff] %vm302, %v3396
    %3582 = vst.msk [vmem:[%s3580 + $0x9] sm:$0xff] %vm302, %v3397
    %s3583 = scalar_lea.vmem [#allocation2], 312
    %3584 = vst.msk [vmem:[%s3583 + $0x1] sm:$0xff] %vm302, %v3398
    %3585 = vst.msk [vmem:[%s3583 + $0x9] sm:$0xff] %vm302, %v3399
    %s3586 = scalar_lea.vmem [#allocation2], 336
    %3587 = vst.msk [vmem:[%s3586 + $0x1] sm:$0xff] %vm302, %v3400
    %3588 = vst.msk [vmem:[%s3586 + $0x9] sm:$0xff] %vm302, %v3401
    %s3589 = scalar_lea.vmem [#allocation2], 360
    %3590 = vst.msk [vmem:[%s3589 + $0x1] sm:$0xff] %vm302, %v3402
    %3591 = vst.msk [vmem:[%s3589 + $0x9] sm:$0xff] %vm302, %v3403
    %s3592 = scalar_lea.vmem [#allocation2], 384
    %3593 = vst.msk [vmem:[%s3592 + $0x1] sm:$0xff] %vm302, %v3404
    %3594 = vst.msk [vmem:[%s3592 + $0x9] sm:$0xff] %vm302, %v3405
    %s3595 = scalar_lea.vmem [#allocation2], 456
    %3596 = vst.msk [vmem:[%s3595 + $0x1] sm:$0xff] %vm302, %v3406
    %3597 = vst.msk [vmem:[%s3595 + $0x9] sm:$0xff] %vm302, %v3407
    %s3598 = scalar_lea.vmem [#allocation2], 480
    %3599 = vst.msk [vmem:[%s3598 + $0x1] sm:$0xff] %vm302, %v3408
    %3600 = vst.msk [vmem:[%s3598 + $0x9] sm:$0xff] %vm302, %v3409
    %s3601 = scalar_lea.vmem [#allocation2], 504
    %3602 = vst.msk [vmem:[%s3601 + $0x1] sm:$0xff] %vm302, %v3410
    %3603 = vst.msk [vmem:[%s3601 + $0x9] sm:$0xff] %vm302, %v3411
    %s3604 = scalar_lea.vmem [#allocation2], 528
    %3605 = vst.msk [vmem:[%s3604 + $0x1] sm:$0xff] %vm302, %v3412
    %3606 = vst.msk [vmem:[%s3604 + $0x9] sm:$0xff] %vm302, %v3413
    %s3607 = scalar_lea.vmem [#allocation2], 552
    %3608 = vst.msk [vmem:[%s3607 + $0x1] sm:$0xff] %vm302, %v3414
    %3609 = vst.msk [vmem:[%s3607 + $0x9] sm:$0xff] %vm302, %v3415
    %s3610 = scalar_lea.vmem [#allocation2], 576
    %3611 = vst.msk [vmem:[%s3610 + $0x1] sm:$0xff] %vm302, %v3416
    %3612 = vst.msk [vmem:[%s3610 + $0x9] sm:$0xff] %vm302, %v3417
    %s3613 = scalar_lea.vmem [#allocation2], 600
    %3614 = vst.msk [vmem:[%s3613 + $0x1] sm:$0xff] %vm302, %v3418
    %3615 = vst.msk [vmem:[%s3613 + $0x9] sm:$0xff] %vm302, %v3419
    %s3616 = scalar_lea.vmem [#allocation2], 624
    %3617 = vst.msk [vmem:[%s3616 + $0x1] sm:$0xff] %vm302, %v3420
    %3618 = vst.msk [vmem:[%s3616 + $0x9] sm:$0xff] %vm302, %v3421
    %s3619 = scalar_lea.vmem [#allocation2], 648
    %3620 = vst.msk [vmem:[%s3619 + $0x1] sm:$0xff] %vm302, %v3422
    %3621 = vst.msk [vmem:[%s3619 + $0x9] sm:$0xff] %vm302, %v3423
    %s3622 = scalar_lea.vmem [#allocation2], 672
    %3623 = vst.msk [vmem:[%s3622 + $0x1] sm:$0xff] %vm302, %v3424
    %3624 = vst.msk [vmem:[%s3622 + $0x9] sm:$0xff] %vm302, %v3425
    %s3625 = scalar_lea.vmem [#allocation2], 696
    %3626 = vst.msk [vmem:[%s3625 + $0x1] sm:$0xff] %vm302, %v3426
    %3627 = vst.msk [vmem:[%s3625 + $0x9] sm:$0xff] %vm302, %v3427
    %s3628 = scalar_lea.vmem [#allocation2], 720
    %3629 = vst.msk [vmem:[%s3628 + $0x1] sm:$0xff] %vm302, %v3428
    %3630 = vst.msk [vmem:[%s3628 + $0x9] sm:$0xff] %vm302, %v3429
    %s3631 = scalar_lea.vmem [#allocation2], 744
    %3632 = vst.msk [vmem:[%s3631 + $0x1] sm:$0xff] %vm302, %v3430
    %3633 = vst.msk [vmem:[%s3631 + $0x9] sm:$0xff] %vm302, %v3431
    %s3634 = scalar_lea.vmem [#allocation2], 768
    %3635 = vst.msk [vmem:[%s3634 + $0x1] sm:$0xff] %vm302, %v3432
    %3636 = vst.msk [vmem:[%s3634 + $0x9] sm:$0xff] %vm302, %v3433
    %s3637 = scalar_lea.vmem [#allocation2], 792
    %3638 = vst.msk [vmem:[%s3637 + $0x1] sm:$0xff] %vm302, %v3434
    %3639 = vst.msk [vmem:[%s3637 + $0x9] sm:$0xff] %vm302, %v3435
    %s3640 = scalar_lea.vmem [#allocation2], 816
    %3641 = vst.msk [vmem:[%s3640 + $0x1] sm:$0xff] %vm302, %v3436
    %3642 = vst.msk [vmem:[%s3640 + $0x9] sm:$0xff] %vm302, %v3437
    %v3643 = vld [vmem:[#allocation2] sm:$0xff]
    %v3644 = vld [vmem:[#allocation2 + $0x8] sm:$0xff]
    %v3645 = vld [vmem:[#allocation2 + $0x18] sm:$0xff]
    %v3646 = vld [vmem:[#allocation2 + $0x20] sm:$0xff]
    %v3647 = vld [vmem:[#allocation2 + $0x30] sm:$0xff]
    %v3648 = vld [vmem:[#allocation2 + $0x38] sm:$0xff]
    %v3649 = vld [vmem:[#allocation2 + $0x48] sm:$0xff]
    %v3650 = vld [vmem:[#allocation2 + $0x50] sm:$0xff]
    %v3651 = vld [vmem:[#allocation2 + $0x60] sm:$0xff]
    %v3652 = vld [vmem:[#allocation2 + $0x68] sm:$0xff]
    %v3653 = vld [vmem:[#allocation2 + $0x78] sm:$0xff]
    %v3654 = vld [vmem:[#allocation2 + $0x80] sm:$0xff]
    %v3655 = vld [vmem:[#allocation2 + $0x90] sm:$0xff]
    %v3656 = vld [vmem:[#allocation2 + $0x98] sm:$0xff]
    %v3657 = vld [vmem:[#allocation2 + $0xa8] sm:$0xff]
    %v3658 = vld [vmem:[#allocation2 + $0xb0] sm:$0xff]
    %v3659 = vld [vmem:[#allocation2 + $0xc0] sm:$0xff]
    %v3660 = vld [vmem:[#allocation2 + $0xc8] sm:$0xff]
    %v3661 = vld [vmem:[#allocation2 + $0xd8] sm:$0xff]
    %v3662 = vld [vmem:[#allocation2 + $0xe0] sm:$0xff]
    %v3663 = vld [vmem:[#allocation2 + $0xf0] sm:$0xff]
    %v3664 = vld [vmem:[#allocation2 + $0xf8] sm:$0xff]
    %v3665 = vld [vmem:[#allocation2 + $0x108] sm:$0xff]
    %v3666 = vld [vmem:[#allocation2 + $0x110] sm:$0xff]
    %v3667 = vld [vmem:[#allocation2 + $0x120] sm:$0xff]
    %v3668 = vld [vmem:[#allocation2 + $0x128] sm:$0xff]
    %v3669 = vld [vmem:[#allocation2 + $0x138] sm:$0xff]
    %v3670 = vld [vmem:[#allocation2 + $0x140] sm:$0xff]
    %v3671 = vld [vmem:[#allocation2 + $0x150] sm:$0xff]
    %v3672 = vld [vmem:[#allocation2 + $0x158] sm:$0xff]
    %v3673 = vld [vmem:[#allocation2 + $0x168] sm:$0xff]
    %v3674 = vld [vmem:[#allocation2 + $0x170] sm:$0xff]
    %v3675 = vld [vmem:[#allocation2 + $0x1b0] sm:$0xff]
    %v3676 = vld [vmem:[#allocation2 + $0x1b8] sm:$0xff]
    %v3677 = vld [vmem:[#allocation2 + $0x1c8] sm:$0xff]
    %v3678 = vld [vmem:[#allocation2 + $0x1d0] sm:$0xff]
    %v3679 = vld [vmem:[#allocation2 + $0x1e0] sm:$0xff]
    %v3680 = vld [vmem:[#allocation2 + $0x1e8] sm:$0xff]
    %v3681 = vld [vmem:[#allocation2 + $0x1f8] sm:$0xff]
    %v3682 = vld [vmem:[#allocation2 + $0x200] sm:$0xff]
    %v3683 = vld [vmem:[#allocation2 + $0x210] sm:$0xff]
    %v3684 = vld [vmem:[#allocation2 + $0x218] sm:$0xff]
    %v3685 = vld [vmem:[#allocation2 + $0x228] sm:$0xff]
    %v3686 = vld [vmem:[#allocation2 + $0x230] sm:$0xff]
    %v3687 = vld [vmem:[#allocation2 + $0x240] sm:$0xff]
    %v3688 = vld [vmem:[#allocation2 + $0x248] sm:$0xff]
    %v3689 = vld [vmem:[#allocation2 + $0x258] sm:$0xff]
    %v3690 = vld [vmem:[#allocation2 + $0x260] sm:$0xff]
    %v3691 = vld [vmem:[#allocation2 + $0x270] sm:$0xff]
    %v3692 = vld [vmem:[#allocation2 + $0x278] sm:$0xff]
    %v3693 = vld [vmem:[#allocation2 + $0x288] sm:$0xff]
    %v3694 = vld [vmem:[#allocation2 + $0x290] sm:$0xff]
    %v3695 = vld [vmem:[#allocation2 + $0x2a0] sm:$0xff]
    %v3696 = vld [vmem:[#allocation2 + $0x2a8] sm:$0xff]
    %v3697 = vld [vmem:[#allocation2 + $0x2b8] sm:$0xff]
    %v3698 = vld [vmem:[#allocation2 + $0x2c0] sm:$0xff]
    %v3699 = vld [vmem:[#allocation2 + $0x2d0] sm:$0xff]
    %v3700 = vld [vmem:[#allocation2 + $0x2d8] sm:$0xff]
    %v3701 = vld [vmem:[#allocation2 + $0x2e8] sm:$0xff]
    %v3702 = vld [vmem:[#allocation2 + $0x2f0] sm:$0xff]
    %v3703 = vld [vmem:[#allocation2 + $0x300] sm:$0xff]
    %v3704 = vld [vmem:[#allocation2 + $0x308] sm:$0xff]
    %v3705 = vld [vmem:[#allocation2 + $0x318] sm:$0xff]
    %v3706 = vld [vmem:[#allocation2 + $0x320] sm:$0xff]
    %v3707 = vld [vmem:[%s5] sm:$0x1]
    %v3708 = vperm.slane %v3707, 0
    %v3709 = vmul.f32 %v3643, %v3708
    %v3710 = vmul.f32 %v3644, %v3708
    %v3711 = vmul.f32 %v3645, %v3708
    %v3712 = vmul.f32 %v3646, %v3708
    %v3713 = vmul.f32 %v3647, %v3708
    %v3714 = vmul.f32 %v3648, %v3708
    %v3715 = vmul.f32 %v3649, %v3708
    %v3716 = vmul.f32 %v3650, %v3708
    %v3717 = vmul.f32 %v3651, %v3708
    %v3718 = vmul.f32 %v3652, %v3708
    %v3719 = vmul.f32 %v3653, %v3708
    %v3720 = vmul.f32 %v3654, %v3708
    %v3721 = vmul.f32 %v3655, %v3708
    %v3722 = vmul.f32 %v3656, %v3708
    %v3723 = vmul.f32 %v3657, %v3708
    %v3724 = vmul.f32 %v3658, %v3708
    %v3725 = vmul.f32 %v3659, %v3708
    %v3726 = vmul.f32 %v3660, %v3708
    %v3727 = vmul.f32 %v3661, %v3708
    %v3728 = vmul.f32 %v3662, %v3708
    %v3729 = vmul.f32 %v3663, %v3708
    %v3730 = vmul.f32 %v3664, %v3708
    %v3731 = vmul.f32 %v3665, %v3708
    %v3732 = vmul.f32 %v3666, %v3708
    %v3733 = vmul.f32 %v3667, %v3708
    %v3734 = vmul.f32 %v3668, %v3708
    %v3735 = vmul.f32 %v3669, %v3708
    %v3736 = vmul.f32 %v3670, %v3708
    %v3737 = vmul.f32 %v3671, %v3708
    %v3738 = vmul.f32 %v3672, %v3708
    %v3739 = vmul.f32 %v3673, %v3708
    %v3740 = vmul.f32 %v3674, %v3708
    %v3741 = vmul.f32 %v3675, %v3708
    %v3742 = vmul.f32 %v3676, %v3708
    %v3743 = vmul.f32 %v3677, %v3708
    %v3744 = vmul.f32 %v3678, %v3708
    %v3745 = vmul.f32 %v3679, %v3708
    %v3746 = vmul.f32 %v3680, %v3708
    %v3747 = vmul.f32 %v3681, %v3708
    %v3748 = vmul.f32 %v3682, %v3708
    %v3749 = vmul.f32 %v3683, %v3708
    %v3750 = vmul.f32 %v3684, %v3708
    %v3751 = vmul.f32 %v3685, %v3708
    %v3752 = vmul.f32 %v3686, %v3708
    %v3753 = vmul.f32 %v3687, %v3708
    %v3754 = vmul.f32 %v3688, %v3708
    %v3755 = vmul.f32 %v3689, %v3708
    %v3756 = vmul.f32 %v3690, %v3708
    %v3757 = vmul.f32 %v3691, %v3708
    %v3758 = vmul.f32 %v3692, %v3708
    %v3759 = vmul.f32 %v3693, %v3708
    %v3760 = vmul.f32 %v3694, %v3708
    %v3761 = vmul.f32 %v3695, %v3708
    %v3762 = vmul.f32 %v3696, %v3708
    %v3763 = vmul.f32 %v3697, %v3708
    %v3764 = vmul.f32 %v3698, %v3708
    %v3765 = vmul.f32 %v3699, %v3708
    %v3766 = vmul.f32 %v3700, %v3708
    %v3767 = vmul.f32 %v3701, %v3708
    %v3768 = vmul.f32 %v3702, %v3708
    %v3769 = vmul.f32 %v3703, %v3708
    %v3770 = vmul.f32 %v3704, %v3708
    %v3771 = vmul.f32 %v3705, %v3708
    %v3772 = vmul.f32 %v3706, %v3708
    %v3773 = vadd.f32 %v3709, 0.0
    %v3774 = vadd.f32 %v3710, 0.0
    %v3775 = vadd.f32 %v3711, 0.0
    %v3776 = vadd.f32 %v3712, 0.0
    %v3777 = vadd.f32 %v3713, 0.0
    %v3778 = vadd.f32 %v3714, 0.0
    %v3779 = vadd.f32 %v3715, 0.0
    %v3780 = vadd.f32 %v3716, 0.0
    %v3781 = vadd.f32 %v3717, 0.0
    %v3782 = vadd.f32 %v3718, 0.0
    %v3783 = vadd.f32 %v3719, 0.0
    %v3784 = vadd.f32 %v3720, 0.0
    %v3785 = vadd.f32 %v3721, 0.0
    %v3786 = vadd.f32 %v3722, 0.0
    %v3787 = vadd.f32 %v3723, 0.0
    %v3788 = vadd.f32 %v3724, 0.0
    %v3789 = vadd.f32 %v3725, 0.0
    %v3790 = vadd.f32 %v3726, 0.0
    %v3791 = vadd.f32 %v3727, 0.0
    %v3792 = vadd.f32 %v3728, 0.0
    %v3793 = vadd.f32 %v3729, 0.0
    %v3794 = vadd.f32 %v3730, 0.0
    %v3795 = vadd.f32 %v3731, 0.0
    %v3796 = vadd.f32 %v3732, 0.0
    %v3797 = vadd.f32 %v3733, 0.0
    %v3798 = vadd.f32 %v3734, 0.0
    %v3799 = vadd.f32 %v3735, 0.0
    %v3800 = vadd.f32 %v3736, 0.0
    %v3801 = vadd.f32 %v3737, 0.0
    %v3802 = vadd.f32 %v3738, 0.0
    %v3803 = vadd.f32 %v3739, 0.0
    %v3804 = vadd.f32 %v3740, 0.0
    %v3805 = vadd.f32 %v3741, 0.0
    %v3806 = vadd.f32 %v3742, 0.0
    %v3807 = vadd.f32 %v3743, 0.0
    %v3808 = vadd.f32 %v3744, 0.0
    %v3809 = vadd.f32 %v3745, 0.0
    %v3810 = vadd.f32 %v3746, 0.0
    %v3811 = vadd.f32 %v3747, 0.0
    %v3812 = vadd.f32 %v3748, 0.0
    %v3813 = vadd.f32 %v3749, 0.0
    %v3814 = vadd.f32 %v3750, 0.0
    %v3815 = vadd.f32 %v3751, 0.0
    %v3816 = vadd.f32 %v3752, 0.0
    %v3817 = vadd.f32 %v3753, 0.0
    %v3818 = vadd.f32 %v3754, 0.0
    %v3819 = vadd.f32 %v3755, 0.0
    %v3820 = vadd.f32 %v3756, 0.0
    %v3821 = vadd.f32 %v3757, 0.0
    %v3822 = vadd.f32 %v3758, 0.0
    %v3823 = vadd.f32 %v3759, 0.0
    %v3824 = vadd.f32 %v3760, 0.0
    %v3825 = vadd.f32 %v3761, 0.0
    %v3826 = vadd.f32 %v3762, 0.0
    %v3827 = vadd.f32 %v3763, 0.0
    %v3828 = vadd.f32 %v3764, 0.0
    %v3829 = vadd.f32 %v3765, 0.0
    %v3830 = vadd.f32 %v3766, 0.0
    %v3831 = vadd.f32 %v3767, 0.0
    %v3832 = vadd.f32 %v3768, 0.0
    %v3833 = vadd.f32 %v3769, 0.0
    %v3834 = vadd.f32 %v3770, 0.0
    %v3835 = vadd.f32 %v3771, 0.0
    %v3836 = vadd.f32 %v3772, 0.0
    %v3837 = vld [vmem:[#allocation2 + $0x1] sm:$0xff]
    %v3838 = vld [vmem:[#allocation2 + $0x9] sm:$0xff]
    %v3839 = vld [vmem:[#allocation2 + $0x19] sm:$0xff]
    %v3840 = vld [vmem:[#allocation2 + $0x21] sm:$0xff]
    %v3841 = vld [vmem:[#allocation2 + $0x31] sm:$0xff]
    %v3842 = vld [vmem:[#allocation2 + $0x39] sm:$0xff]
    %v3843 = vld [vmem:[#allocation2 + $0x49] sm:$0xff]
    %v3844 = vld [vmem:[#allocation2 + $0x51] sm:$0xff]
    %v3845 = vld [vmem:[#allocation2 + $0x61] sm:$0xff]
    %v3846 = vld [vmem:[#allocation2 + $0x69] sm:$0xff]
    %v3847 = vld [vmem:[#allocation2 + $0x79] sm:$0xff]
    %v3848 = vld [vmem:[#allocation2 + $0x81] sm:$0xff]
    %v3849 = vld [vmem:[#allocation2 + $0x91] sm:$0xff]
    %v3850 = vld [vmem:[#allocation2 + $0x99] sm:$0xff]
    %v3851 = vld [vmem:[#allocation2 + $0xa9] sm:$0xff]
    %v3852 = vld [vmem:[#allocation2 + $0xb1] sm:$0xff]
    %v3853 = vld [vmem:[#allocation2 + $0xc1] sm:$0xff]
    %v3854 = vld [vmem:[#allocation2 + $0xc9] sm:$0xff]
    %v3855 = vld [vmem:[#allocation2 + $0xd9] sm:$0xff]
    %v3856 = vld [vmem:[#allocation2 + $0xe1] sm:$0xff]
    %v3857 = vld [vmem:[#allocation2 + $0xf1] sm:$0xff]
    %v3858 = vld [vmem:[#allocation2 + $0xf9] sm:$0xff]
    %v3859 = vld [vmem:[#allocation2 + $0x109] sm:$0xff]
    %v3860 = vld [vmem:[#allocation2 + $0x111] sm:$0xff]
    %v3861 = vld [vmem:[#allocation2 + $0x121] sm:$0xff]
    %v3862 = vld [vmem:[#allocation2 + $0x129] sm:$0xff]
    %v3863 = vld [vmem:[#allocation2 + $0x139] sm:$0xff]
    %v3864 = vld [vmem:[#allocation2 + $0x141] sm:$0xff]
    %v3865 = vld [vmem:[#allocation2 + $0x151] sm:$0xff]
    %v3866 = vld [vmem:[#allocation2 + $0x159] sm:$0xff]
    %v3867 = vld [vmem:[#allocation2 + $0x169] sm:$0xff]
    %v3868 = vld [vmem:[#allocation2 + $0x171] sm:$0xff]
    %v3869 = vld [vmem:[#allocation2 + $0x1b1] sm:$0xff]
    %v3870 = vld [vmem:[#allocation2 + $0x1b9] sm:$0xff]
    %v3871 = vld [vmem:[#allocation2 + $0x1c9] sm:$0xff]
    %v3872 = vld [vmem:[#allocation2 + $0x1d1] sm:$0xff]
    %v3873 = vld [vmem:[#allocation2 + $0x1e1] sm:$0xff]
    %v3874 = vld [vmem:[#allocation2 + $0x1e9] sm:$0xff]
    %v3875 = vld [vmem:[#allocation2 + $0x1f9] sm:$0xff]
    %v3876 = vld [vmem:[#allocation2 + $0x201] sm:$0xff]
    %v3877 = vld [vmem:[#allocation2 + $0x211] sm:$0xff]
    %v3878 = vld [vmem:[#allocation2 + $0x219] sm:$0xff]
    %v3879 = vld [vmem:[#allocation2 + $0x229] sm:$0xff]
    %v3880 = vld [vmem:[#allocation2 + $0x231] sm:$0xff]
    %v3881 = vld [vmem:[#allocation2 + $0x241] sm:$0xff]
    %v3882 = vld [vmem:[#allocation2 + $0x249] sm:$0xff]
    %v3883 = vld [vmem:[#allocation2 + $0x259] sm:$0xff]
    %v3884 = vld [vmem:[#allocation2 + $0x261] sm:$0xff]
    %v3885 = vld [vmem:[#allocation2 + $0x271] sm:$0xff]
    %v3886 = vld [vmem:[#allocation2 + $0x279] sm:$0xff]
    %v3887 = vld [vmem:[#allocation2 + $0x289] sm:$0xff]
    %v3888 = vld [vmem:[#allocation2 + $0x291] sm:$0xff]
    %v3889 = vld [vmem:[#allocation2 + $0x2a1] sm:$0xff]
    %v3890 = vld [vmem:[#allocation2 + $0x2a9] sm:$0xff]
    %v3891 = vld [vmem:[#allocation2 + $0x2b9] sm:$0xff]
    %v3892 = vld [vmem:[#allocation2 + $0x2c1] sm:$0xff]
    %v3893 = vld [vmem:[#allocation2 + $0x2d1] sm:$0xff]
    %v3894 = vld [vmem:[#allocation2 + $0x2d9] sm:$0xff]
    %v3895 = vld [vmem:[#allocation2 + $0x2e9] sm:$0xff]
    %v3896 = vld [vmem:[#allocation2 + $0x2f1] sm:$0xff]
    %v3897 = vld [vmem:[#allocation2 + $0x301] sm:$0xff]
    %v3898 = vld [vmem:[#allocation2 + $0x309] sm:$0xff]
    %v3899 = vld [vmem:[#allocation2 + $0x319] sm:$0xff]
    %v3900 = vld [vmem:[#allocation2 + $0x321] sm:$0xff]
    %v3901 = vld [vmem:[%s5 + $0x1] sm:$0x1]
    %v3902 = vperm.slane %v3901, 0
    %v3903 = vmul.f32 %v3837, %v3902
    %v3904 = vmul.f32 %v3838, %v3902
    %v3905 = vmul.f32 %v3839, %v3902
    %v3906 = vmul.f32 %v3840, %v3902
    %v3907 = vmul.f32 %v3841, %v3902
    %v3908 = vmul.f32 %v3842, %v3902
    %v3909 = vmul.f32 %v3843, %v3902
    %v3910 = vmul.f32 %v3844, %v3902
    %v3911 = vmul.f32 %v3845, %v3902
    %v3912 = vmul.f32 %v3846, %v3902
    %v3913 = vmul.f32 %v3847, %v3902
    %v3914 = vmul.f32 %v3848, %v3902
    %v3915 = vmul.f32 %v3849, %v3902
    %v3916 = vmul.f32 %v3850, %v3902
    %v3917 = vmul.f32 %v3851, %v3902
    %v3918 = vmul.f32 %v3852, %v3902
    %v3919 = vmul.f32 %v3853, %v3902
    %v3920 = vmul.f32 %v3854, %v3902
    %v3921 = vmul.f32 %v3855, %v3902
    %v3922 = vmul.f32 %v3856, %v3902
    %v3923 = vmul.f32 %v3857, %v3902
    %v3924 = vmul.f32 %v3858, %v3902
    %v3925 = vmul.f32 %v3859, %v3902
    %v3926 = vmul.f32 %v3860, %v3902
    %v3927 = vmul.f32 %v3861, %v3902
    %v3928 = vmul.f32 %v3862, %v3902
    %v3929 = vmul.f32 %v3863, %v3902
    %v3930 = vmul.f32 %v3864, %v3902
    %v3931 = vmul.f32 %v3865, %v3902
    %v3932 = vmul.f32 %v3866, %v3902
    %v3933 = vmul.f32 %v3867, %v3902
    %v3934 = vmul.f32 %v3868, %v3902
    %v3935 = vmul.f32 %v3869, %v3902
    %v3936 = vmul.f32 %v3870, %v3902
    %v3937 = vmul.f32 %v3871, %v3902
    %v3938 = vmul.f32 %v3872, %v3902
    %v3939 = vmul.f32 %v3873, %v3902
    %v3940 = vmul.f32 %v3874, %v3902
    %v3941 = vmul.f32 %v3875, %v3902
    %v3942 = vmul.f32 %v3876, %v3902
    %v3943 = vmul.f32 %v3877, %v3902
    %v3944 = vmul.f32 %v3878, %v3902
    %v3945 = vmul.f32 %v3879, %v3902
    %v3946 = vmul.f32 %v3880, %v3902
    %v3947 = vmul.f32 %v3881, %v3902
    %v3948 = vmul.f32 %v3882, %v3902
    %v3949 = vmul.f32 %v3883, %v3902
    %v3950 = vmul.f32 %v3884, %v3902
    %v3951 = vmul.f32 %v3885, %v3902
    %v3952 = vmul.f32 %v3886, %v3902
    %v3953 = vmul.f32 %v3887, %v3902
    %v3954 = vmul.f32 %v3888, %v3902
    %v3955 = vmul.f32 %v3889, %v3902
    %v3956 = vmul.f32 %v3890, %v3902
    %v3957 = vmul.f32 %v3891, %v3902
    %v3958 = vmul.f32 %v3892, %v3902
    %v3959 = vmul.f32 %v3893, %v3902
    %v3960 = vmul.f32 %v3894, %v3902
    %v3961 = vmul.f32 %v3895, %v3902
    %v3962 = vmul.f32 %v3896, %v3902
    %v3963 = vmul.f32 %v3897, %v3902
    %v3964 = vmul.f32 %v3898, %v3902
    %v3965 = vmul.f32 %v3899, %v3902
    %v3966 = vmul.f32 %v3900, %v3902
    %v3967 = vadd.f32 %v3773, %v3903
    %v3968 = vadd.f32 %v3774, %v3904
    %v3969 = vadd.f32 %v3775, %v3905
    %v3970 = vadd.f32 %v3776, %v3906
    %v3971 = vadd.f32 %v3777, %v3907
    %v3972 = vadd.f32 %v3778, %v3908
    %v3973 = vadd.f32 %v3779, %v3909
    %v3974 = vadd.f32 %v3780, %v3910
    %v3975 = vadd.f32 %v3781, %v3911
    %v3976 = vadd.f32 %v3782, %v3912
    %v3977 = vadd.f32 %v3783, %v3913
    %v3978 = vadd.f32 %v3784, %v3914
    %v3979 = vadd.f32 %v3785, %v3915
    %v3980 = vadd.f32 %v3786, %v3916
    %v3981 = vadd.f32 %v3787, %v3917
    %v3982 = vadd.f32 %v3788, %v3918
    %v3983 = vadd.f32 %v3789, %v3919
    %v3984 = vadd.f32 %v3790, %v3920
    %v3985 = vadd.f32 %v3791, %v3921
    %v3986 = vadd.f32 %v3792, %v3922
    %v3987 = vadd.f32 %v3793, %v3923
    %v3988 = vadd.f32 %v3794, %v3924
    %v3989 = vadd.f32 %v3795, %v3925
    %v3990 = vadd.f32 %v3796, %v3926
    %v3991 = vadd.f32 %v3797, %v3927
    %v3992 = vadd.f32 %v3798, %v3928
    %v3993 = vadd.f32 %v3799, %v3929
    %v3994 = vadd.f32 %v3800, %v3930
    %v3995 = vadd.f32 %v3801, %v3931
    %v3996 = vadd.f32 %v3802, %v3932
    %v3997 = vadd.f32 %v3803, %v3933
    %v3998 = vadd.f32 %v3804, %v3934
    %v3999 = vadd.f32 %v3805, %v3935
    %v4000 = vadd.f32 %v3806, %v3936
    %v4001 = vadd.f32 %v3807, %v3937
    %v4002 = vadd.f32 %v3808, %v3938
    %v4003 = vadd.f32 %v3809, %v3939
    %v4004 = vadd.f32 %v3810, %v3940
    %v4005 = vadd.f32 %v3811, %v3941
    %v4006 = vadd.f32 %v3812, %v3942
    %v4007 = vadd.f32 %v3813, %v3943
    %v4008 = vadd.f32 %v3814, %v3944
    %v4009 = vadd.f32 %v3815, %v3945
    %v4010 = vadd.f32 %v3816, %v3946
    %v4011 = vadd.f32 %v3817, %v3947
    %v4012 = vadd.f32 %v3818, %v3948
    %v4013 = vadd.f32 %v3819, %v3949
    %v4014 = vadd.f32 %v3820, %v3950
    %v4015 = vadd.f32 %v3821, %v3951
    %v4016 = vadd.f32 %v3822, %v3952
    %v4017 = vadd.f32 %v3823, %v3953
    %v4018 = vadd.f32 %v3824, %v3954
    %v4019 = vadd.f32 %v3825, %v3955
    %v4020 = vadd.f32 %v3826, %v3956
    %v4021 = vadd.f32 %v3827, %v3957
    %v4022 = vadd.f32 %v3828, %v3958
    %v4023 = vadd.f32 %v3829, %v3959
    %v4024 = vadd.f32 %v3830, %v3960
    %v4025 = vadd.f32 %v3831, %v3961
    %v4026 = vadd.f32 %v3832, %v3962
    %v4027 = vadd.f32 %v3833, %v3963
    %v4028 = vadd.f32 %v3834, %v3964
    %v4029 = vadd.f32 %v3835, %v3965
    %v4030 = vadd.f32 %v3836, %v3966
    %v4031 = vld [vmem:[#allocation2 + $0x2] sm:$0xff]
    %v4032 = vld [vmem:[#allocation2 + $0xa] sm:$0xff]
    %v4033 = vld [vmem:[#allocation2 + $0x1a] sm:$0xff]
    %v4034 = vld [vmem:[#allocation2 + $0x22] sm:$0xff]
    %v4035 = vld [vmem:[#allocation2 + $0x32] sm:$0xff]
    %v4036 = vld [vmem:[#allocation2 + $0x3a] sm:$0xff]
    %v4037 = vld [vmem:[#allocation2 + $0x4a] sm:$0xff]
    %v4038 = vld [vmem:[#allocation2 + $0x52] sm:$0xff]
    %v4039 = vld [vmem:[#allocation2 + $0x62] sm:$0xff]
    %v4040 = vld [vmem:[#allocation2 + $0x6a] sm:$0xff]
    %v4041 = vld [vmem:[#allocation2 + $0x7a] sm:$0xff]
    %v4042 = vld [vmem:[#allocation2 + $0x82] sm:$0xff]
    %v4043 = vld [vmem:[#allocation2 + $0x92] sm:$0xff]
    %v4044 = vld [vmem:[#allocation2 + $0x9a] sm:$0xff]
    %v4045 = vld [vmem:[#allocation2 + $0xaa] sm:$0xff]
    %v4046 = vld [vmem:[#allocation2 + $0xb2] sm:$0xff]
    %v4047 = vld [vmem:[#allocation2 + $0xc2] sm:$0xff]
    %v4048 = vld [vmem:[#allocation2 + $0xca] sm:$0xff]
    %v4049 = vld [vmem:[#allocation2 + $0xda] sm:$0xff]
    %v4050 = vld [vmem:[#allocation2 + $0xe2] sm:$0xff]
    %v4051 = vld [vmem:[#allocation2 + $0xf2] sm:$0xff]
    %v4052 = vld [vmem:[#allocation2 + $0xfa] sm:$0xff]
    %v4053 = vld [vmem:[#allocation2 + $0x10a] sm:$0xff]
    %v4054 = vld [vmem:[#allocation2 + $0x112] sm:$0xff]
    %v4055 = vld [vmem:[#allocation2 + $0x122] sm:$0xff]
    %v4056 = vld [vmem:[#allocation2 + $0x12a] sm:$0xff]
    %v4057 = vld [vmem:[#allocation2 + $0x13a] sm:$0xff]
    %v4058 = vld [vmem:[#allocation2 + $0x142] sm:$0xff]
    %v4059 = vld [vmem:[#allocation2 + $0x152] sm:$0xff]
    %v4060 = vld [vmem:[#allocation2 + $0x15a] sm:$0xff]
    %v4061 = vld [vmem:[#allocation2 + $0x16a] sm:$0xff]
    %v4062 = vld [vmem:[#allocation2 + $0x172] sm:$0xff]
    %v4063 = vld [vmem:[#allocation2 + $0x1b2] sm:$0xff]
    %v4064 = vld [vmem:[#allocation2 + $0x1ba] sm:$0xff]
    %v4065 = vld [vmem:[#allocation2 + $0x1ca] sm:$0xff]
    %v4066 = vld [vmem:[#allocation2 + $0x1d2] sm:$0xff]
    %v4067 = vld [vmem:[#allocation2 + $0x1e2] sm:$0xff]
    %v4068 = vld [vmem:[#allocation2 + $0x1ea] sm:$0xff]
    %v4069 = vld [vmem:[#allocation2 + $0x1fa] sm:$0xff]
    %v4070 = vld [vmem:[#allocation2 + $0x202] sm:$0xff]
    %v4071 = vld [vmem:[#allocation2 + $0x212] sm:$0xff]
    %v4072 = vld [vmem:[#allocation2 + $0x21a] sm:$0xff]
    %v4073 = vld [vmem:[#allocation2 + $0x22a] sm:$0xff]
    %v4074 = vld [vmem:[#allocation2 + $0x232] sm:$0xff]
    %v4075 = vld [vmem:[#allocation2 + $0x242] sm:$0xff]
    %v4076 = vld [vmem:[#allocation2 + $0x24a] sm:$0xff]
    %v4077 = vld [vmem:[#allocation2 + $0x25a] sm:$0xff]
    %v4078 = vld [vmem:[#allocation2 + $0x262] sm:$0xff]
    %v4079 = vld [vmem:[#allocation2 + $0x272] sm:$0xff]
    %v4080 = vld [vmem:[#allocation2 + $0x27a] sm:$0xff]
    %v4081 = vld [vmem:[#allocation2 + $0x28a] sm:$0xff]
    %v4082 = vld [vmem:[#allocation2 + $0x292] sm:$0xff]
    %v4083 = vld [vmem:[#allocation2 + $0x2a2] sm:$0xff]
    %v4084 = vld [vmem:[#allocation2 + $0x2aa] sm:$0xff]
    %v4085 = vld [vmem:[#allocation2 + $0x2ba] sm:$0xff]
    %v4086 = vld [vmem:[#allocation2 + $0x2c2] sm:$0xff]
    %v4087 = vld [vmem:[#allocation2 + $0x2d2] sm:$0xff]
    %v4088 = vld [vmem:[#allocation2 + $0x2da] sm:$0xff]
    %v4089 = vld [vmem:[#allocation2 + $0x2ea] sm:$0xff]
    %v4090 = vld [vmem:[#allocation2 + $0x2f2] sm:$0xff]
    %v4091 = vld [vmem:[#allocation2 + $0x302] sm:$0xff]
    %v4092 = vld [vmem:[#allocation2 + $0x30a] sm:$0xff]
    %v4093 = vld [vmem:[#allocation2 + $0x31a] sm:$0xff]
    %v4094 = vld [vmem:[#allocation2 + $0x322] sm:$0xff]
    %v4095 = vld [vmem:[%s5 + $0x2] sm:$0x1]
    %v4096 = vperm.slane %v4095, 0
    %v4097 = vmul.f32 %v4031, %v4096
    %v4098 = vmul.f32 %v4032, %v4096
    %v4099 = vmul.f32 %v4033, %v4096
    %v4100 = vmul.f32 %v4034, %v4096
    %v4101 = vmul.f32 %v4035, %v4096
    %v4102 = vmul.f32 %v4036, %v4096
    %v4103 = vmul.f32 %v4037, %v4096
    %v4104 = vmul.f32 %v4038, %v4096
    %v4105 = vmul.f32 %v4039, %v4096
    %v4106 = vmul.f32 %v4040, %v4096
    %v4107 = vmul.f32 %v4041, %v4096
    %v4108 = vmul.f32 %v4042, %v4096
    %v4109 = vmul.f32 %v4043, %v4096
    %v4110 = vmul.f32 %v4044, %v4096
    %v4111 = vmul.f32 %v4045, %v4096
    %v4112 = vmul.f32 %v4046, %v4096
    %v4113 = vmul.f32 %v4047, %v4096
    %v4114 = vmul.f32 %v4048, %v4096
    %v4115 = vmul.f32 %v4049, %v4096
    %v4116 = vmul.f32 %v4050, %v4096
    %v4117 = vmul.f32 %v4051, %v4096
    %v4118 = vmul.f32 %v4052, %v4096
    %v4119 = vmul.f32 %v4053, %v4096
    %v4120 = vmul.f32 %v4054, %v4096
    %v4121 = vmul.f32 %v4055, %v4096
    %v4122 = vmul.f32 %v4056, %v4096
    %v4123 = vmul.f32 %v4057, %v4096
    %v4124 = vmul.f32 %v4058, %v4096
    %v4125 = vmul.f32 %v4059, %v4096
    %v4126 = vmul.f32 %v4060, %v4096
    %v4127 = vmul.f32 %v4061, %v4096
    %v4128 = vmul.f32 %v4062, %v4096
    %v4129 = vmul.f32 %v4063, %v4096
    %v4130 = vmul.f32 %v4064, %v4096
    %v4131 = vmul.f32 %v4065, %v4096
    %v4132 = vmul.f32 %v4066, %v4096
    %v4133 = vmul.f32 %v4067, %v4096
    %v4134 = vmul.f32 %v4068, %v4096
    %v4135 = vmul.f32 %v4069, %v4096
    %v4136 = vmul.f32 %v4070, %v4096
    %v4137 = vmul.f32 %v4071, %v4096
    %v4138 = vmul.f32 %v4072, %v4096
    %v4139 = vmul.f32 %v4073, %v4096
    %v4140 = vmul.f32 %v4074, %v4096
    %v4141 = vmul.f32 %v4075, %v4096
    %v4142 = vmul.f32 %v4076, %v4096
    %v4143 = vmul.f32 %v4077, %v4096
    %v4144 = vmul.f32 %v4078, %v4096
    %v4145 = vmul.f32 %v4079, %v4096
    %v4146 = vmul.f32 %v4080, %v4096
    %v4147 = vmul.f32 %v4081, %v4096
    %v4148 = vmul.f32 %v4082, %v4096
    %v4149 = vmul.f32 %v4083, %v4096
    %v4150 = vmul.f32 %v4084, %v4096
    %v4151 = vmul.f32 %v4085, %v4096
    %v4152 = vmul.f32 %v4086, %v4096
    %v4153 = vmul.f32 %v4087, %v4096
    %v4154 = vmul.f32 %v4088, %v4096
    %v4155 = vmul.f32 %v4089, %v4096
    %v4156 = vmul.f32 %v4090, %v4096
    %v4157 = vmul.f32 %v4091, %v4096
    %v4158 = vmul.f32 %v4092, %v4096
    %v4159 = vmul.f32 %v4093, %v4096
    %v4160 = vmul.f32 %v4094, %v4096
    %v4161 = vadd.f32 %v3967, %v4097
    %v4162 = vadd.f32 %v3968, %v4098
    %v4163 = vadd.f32 %v3969, %v4099
    %v4164 = vadd.f32 %v3970, %v4100
    %v4165 = vadd.f32 %v3971, %v4101
    %v4166 = vadd.f32 %v3972, %v4102
    %v4167 = vadd.f32 %v3973, %v4103
    %v4168 = vadd.f32 %v3974, %v4104
    %v4169 = vadd.f32 %v3975, %v4105
    %v4170 = vadd.f32 %v3976, %v4106
    %v4171 = vadd.f32 %v3977, %v4107
    %v4172 = vadd.f32 %v3978, %v4108
    %v4173 = vadd.f32 %v3979, %v4109
    %v4174 = vadd.f32 %v3980, %v4110
    %v4175 = vadd.f32 %v3981, %v4111
    %v4176 = vadd.f32 %v3982, %v4112
    %v4177 = vadd.f32 %v3983, %v4113
    %v4178 = vadd.f32 %v3984, %v4114
    %v4179 = vadd.f32 %v3985, %v4115
    %v4180 = vadd.f32 %v3986, %v4116
    %v4181 = vadd.f32 %v3987, %v4117
    %v4182 = vadd.f32 %v3988, %v4118
    %v4183 = vadd.f32 %v3989, %v4119
    %v4184 = vadd.f32 %v3990, %v4120
    %v4185 = vadd.f32 %v3991, %v4121
    %v4186 = vadd.f32 %v3992, %v4122
    %v4187 = vadd.f32 %v3993, %v4123
    %v4188 = vadd.f32 %v3994, %v4124
    %v4189 = vadd.f32 %v3995, %v4125
    %v4190 = vadd.f32 %v3996, %v4126
    %v4191 = vadd.f32 %v3997, %v4127
    %v4192 = vadd.f32 %v3998, %v4128
    %v4193 = vadd.f32 %v3999, %v4129
    %v4194 = vadd.f32 %v4000, %v4130
    %v4195 = vadd.f32 %v4001, %v4131
    %v4196 = vadd.f32 %v4002, %v4132
    %v4197 = vadd.f32 %v4003, %v4133
    %v4198 = vadd.f32 %v4004, %v4134
    %v4199 = vadd.f32 %v4005, %v4135
    %v4200 = vadd.f32 %v4006, %v4136
    %v4201 = vadd.f32 %v4007, %v4137
    %v4202 = vadd.f32 %v4008, %v4138
    %v4203 = vadd.f32 %v4009, %v4139
    %v4204 = vadd.f32 %v4010, %v4140
    %v4205 = vadd.f32 %v4011, %v4141
    %v4206 = vadd.f32 %v4012, %v4142
    %v4207 = vadd.f32 %v4013, %v4143
    %v4208 = vadd.f32 %v4014, %v4144
    %v4209 = vadd.f32 %v4015, %v4145
    %v4210 = vadd.f32 %v4016, %v4146
    %v4211 = vadd.f32 %v4017, %v4147
    %v4212 = vadd.f32 %v4018, %v4148
    %v4213 = vadd.f32 %v4019, %v4149
    %v4214 = vadd.f32 %v4020, %v4150
    %v4215 = vadd.f32 %v4021, %v4151
    %v4216 = vadd.f32 %v4022, %v4152
    %v4217 = vadd.f32 %v4023, %v4153
    %v4218 = vadd.f32 %v4024, %v4154
    %v4219 = vadd.f32 %v4025, %v4155
    %v4220 = vadd.f32 %v4026, %v4156
    %v4221 = vadd.f32 %v4027, %v4157
    %v4222 = vadd.f32 %v4028, %v4158
    %v4223 = vadd.f32 %v4029, %v4159
    %v4224 = vadd.f32 %v4030, %v4160
    %v4225 = vld [vmem:[%s3547] sm:$0xff]
    %v4226 = vld [vmem:[%s3547 + $0x8] sm:$0xff]
    %v4227 = vld [vmem:[%s3547 + $0x18] sm:$0xff]
    %v4228 = vld [vmem:[%s3547 + $0x20] sm:$0xff]
    %v4229 = vld [vmem:[%s3547 + $0x30] sm:$0xff]
    %v4230 = vld [vmem:[%s3547 + $0x38] sm:$0xff]
    %v4231 = vld [vmem:[%s3547 + $0x48] sm:$0xff]
    %v4232 = vld [vmem:[%s3547 + $0x50] sm:$0xff]
    %v4233 = vld [vmem:[%s3547 + $0x60] sm:$0xff]
    %v4234 = vld [vmem:[%s3547 + $0x68] sm:$0xff]
    %v4235 = vld [vmem:[%s3547 + $0x78] sm:$0xff]
    %v4236 = vld [vmem:[%s3547 + $0x80] sm:$0xff]
    %v4237 = vld [vmem:[%s3547 + $0x90] sm:$0xff]
    %v4238 = vld [vmem:[%s3547 + $0x98] sm:$0xff]
    %v4239 = vld [vmem:[%s3547 + $0xa8] sm:$0xff]
    %v4240 = vld [vmem:[%s3547 + $0xb0] sm:$0xff]
    %v4241 = vld [vmem:[%s3547 + $0xc0] sm:$0xff]
    %v4242 = vld [vmem:[%s3547 + $0xc8] sm:$0xff]
    %v4243 = vld [vmem:[%s3547 + $0xd8] sm:$0xff]
    %v4244 = vld [vmem:[%s3547 + $0xe0] sm:$0xff]
    %v4245 = vld [vmem:[%s3547 + $0xf0] sm:$0xff]
    %v4246 = vld [vmem:[%s3547 + $0xf8] sm:$0xff]
    %v4247 = vld [vmem:[%s3547 + $0x108] sm:$0xff]
    %v4248 = vld [vmem:[%s3547 + $0x110] sm:$0xff]
    %v4249 = vld [vmem:[%s3547 + $0x120] sm:$0xff]
    %v4250 = vld [vmem:[%s3547 + $0x128] sm:$0xff]
    %v4251 = vld [vmem:[%s3547 + $0x138] sm:$0xff]
    %v4252 = vld [vmem:[%s3547 + $0x140] sm:$0xff]
    %v4253 = vld [vmem:[%s3547 + $0x150] sm:$0xff]
    %v4254 = vld [vmem:[%s3547 + $0x158] sm:$0xff]
    %v4255 = vld [vmem:[%s3547 + $0x168] sm:$0xff]
    %v4256 = vld [vmem:[%s3547 + $0x170] sm:$0xff]
    %v4257 = vld [vmem:[%s3547 + $0x1b0] sm:$0xff]
    %v4258 = vld [vmem:[%s3547 + $0x1b8] sm:$0xff]
    %v4259 = vld [vmem:[%s3547 + $0x1c8] sm:$0xff]
    %v4260 = vld [vmem:[%s3547 + $0x1d0] sm:$0xff]
    %v4261 = vld [vmem:[%s3547 + $0x1e0] sm:$0xff]
    %v4262 = vld [vmem:[%s3547 + $0x1e8] sm:$0xff]
    %v4263 = vld [vmem:[%s3547 + $0x1f8] sm:$0xff]
    %v4264 = vld [vmem:[%s3547 + $0x200] sm:$0xff]
    %v4265 = vld [vmem:[%s3547 + $0x210] sm:$0xff]
    %v4266 = vld [vmem:[%s3547 + $0x218] sm:$0xff]
    %v4267 = vld [vmem:[%s3547 + $0x228] sm:$0xff]
    %v4268 = vld [vmem:[%s3547 + $0x230] sm:$0xff]
    %v4269 = vld [vmem:[%s3547 + $0x240] sm:$0xff]
    %v4270 = vld [vmem:[%s3547 + $0x248] sm:$0xff]
    %v4271 = vld [vmem:[%s3547 + $0x258] sm:$0xff]
    %v4272 = vld [vmem:[%s3547 + $0x260] sm:$0xff]
    %v4273 = vld [vmem:[%s3547 + $0x270] sm:$0xff]
    %v4274 = vld [vmem:[%s3547 + $0x278] sm:$0xff]
    %v4275 = vld [vmem:[%s3547 + $0x288] sm:$0xff]
    %v4276 = vld [vmem:[%s3547 + $0x290] sm:$0xff]
    %v4277 = vld [vmem:[%s3547 + $0x2a0] sm:$0xff]
    %v4278 = vld [vmem:[%s3547 + $0x2a8] sm:$0xff]
    %v4279 = vld [vmem:[%s3547 + $0x2b8] sm:$0xff]
    %v4280 = vld [vmem:[%s3547 + $0x2c0] sm:$0xff]
    %v4281 = vld [vmem:[%s3547 + $0x2d0] sm:$0xff]
    %v4282 = vld [vmem:[%s3547 + $0x2d8] sm:$0xff]
    %v4283 = vld [vmem:[%s3547 + $0x2e8] sm:$0xff]
    %v4284 = vld [vmem:[%s3547 + $0x2f0] sm:$0xff]
    %v4285 = vld [vmem:[%s3547 + $0x300] sm:$0xff]
    %v4286 = vld [vmem:[%s3547 + $0x308] sm:$0xff]
    %v4287 = vld [vmem:[%s3547 + $0x318] sm:$0xff]
    %v4288 = vld [vmem:[%s3547 + $0x320] sm:$0xff]
    %v4289 = vld [vmem:[%s5 + $0x3] sm:$0x1]
    %v4290 = vperm.slane %v4289, 0
    %v4291 = vmul.f32 %v4225, %v4290
    %v4292 = vmul.f32 %v4226, %v4290
    %v4293 = vmul.f32 %v4227, %v4290
    %v4294 = vmul.f32 %v4228, %v4290
    %v4295 = vmul.f32 %v4229, %v4290
    %v4296 = vmul.f32 %v4230, %v4290
    %v4297 = vmul.f32 %v4231, %v4290
    %v4298 = vmul.f32 %v4232, %v4290
    %v4299 = vmul.f32 %v4233, %v4290
    %v4300 = vmul.f32 %v4234, %v4290
    %v4301 = vmul.f32 %v4235, %v4290
    %v4302 = vmul.f32 %v4236, %v4290
    %v4303 = vmul.f32 %v4237, %v4290
    %v4304 = vmul.f32 %v4238, %v4290
    %v4305 = vmul.f32 %v4239, %v4290
    %v4306 = vmul.f32 %v4240, %v4290
    %v4307 = vmul.f32 %v4241, %v4290
    %v4308 = vmul.f32 %v4242, %v4290
    %v4309 = vmul.f32 %v4243, %v4290
    %v4310 = vmul.f32 %v4244, %v4290
    %v4311 = vmul.f32 %v4245, %v4290
    %v4312 = vmul.f32 %v4246, %v4290
    %v4313 = vmul.f32 %v4247, %v4290
    %v4314 = vmul.f32 %v4248, %v4290
    %v4315 = vmul.f32 %v4249, %v4290
    %v4316 = vmul.f32 %v4250, %v4290
    %v4317 = vmul.f32 %v4251, %v4290
    %v4318 = vmul.f32 %v4252, %v4290
    %v4319 = vmul.f32 %v4253, %v4290
    %v4320 = vmul.f32 %v4254, %v4290
    %v4321 = vmul.f32 %v4255, %v4290
    %v4322 = vmul.f32 %v4256, %v4290
    %v4323 = vmul.f32 %v4257, %v4290
    %v4324 = vmul.f32 %v4258, %v4290
    %v4325 = vmul.f32 %v4259, %v4290
    %v4326 = vmul.f32 %v4260, %v4290
    %v4327 = vmul.f32 %v4261, %v4290
    %v4328 = vmul.f32 %v4262, %v4290
    %v4329 = vmul.f32 %v4263, %v4290
    %v4330 = vmul.f32 %v4264, %v4290
    %v4331 = vmul.f32 %v4265, %v4290
    %v4332 = vmul.f32 %v4266, %v4290
    %v4333 = vmul.f32 %v4267, %v4290
    %v4334 = vmul.f32 %v4268, %v4290
    %v4335 = vmul.f32 %v4269, %v4290
    %v4336 = vmul.f32 %v4270, %v4290
    %v4337 = vmul.f32 %v4271, %v4290
    %v4338 = vmul.f32 %v4272, %v4290
    %v4339 = vmul.f32 %v4273, %v4290
    %v4340 = vmul.f32 %v4274, %v4290
    %v4341 = vmul.f32 %v4275, %v4290
    %v4342 = vmul.f32 %v4276, %v4290
    %v4343 = vmul.f32 %v4277, %v4290
    %v4344 = vmul.f32 %v4278, %v4290
    %v4345 = vmul.f32 %v4279, %v4290
    %v4346 = vmul.f32 %v4280, %v4290
    %v4347 = vmul.f32 %v4281, %v4290
    %v4348 = vmul.f32 %v4282, %v4290
    %v4349 = vmul.f32 %v4283, %v4290
    %v4350 = vmul.f32 %v4284, %v4290
    %v4351 = vmul.f32 %v4285, %v4290
    %v4352 = vmul.f32 %v4286, %v4290
    %v4353 = vmul.f32 %v4287, %v4290
    %v4354 = vmul.f32 %v4288, %v4290
    %v4355 = vadd.f32 %v4161, %v4291
    %v4356 = vadd.f32 %v4162, %v4292
    %v4357 = vadd.f32 %v4163, %v4293
    %v4358 = vadd.f32 %v4164, %v4294
    %v4359 = vadd.f32 %v4165, %v4295
    %v4360 = vadd.f32 %v4166, %v4296
    %v4361 = vadd.f32 %v4167, %v4297
    %v4362 = vadd.f32 %v4168, %v4298
    %v4363 = vadd.f32 %v4169, %v4299
    %v4364 = vadd.f32 %v4170, %v4300
    %v4365 = vadd.f32 %v4171, %v4301
    %v4366 = vadd.f32 %v4172, %v4302
    %v4367 = vadd.f32 %v4173, %v4303
    %v4368 = vadd.f32 %v4174, %v4304
    %v4369 = vadd.f32 %v4175, %v4305
    %v4370 = vadd.f32 %v4176, %v4306
    %v4371 = vadd.f32 %v4177, %v4307
    %v4372 = vadd.f32 %v4178, %v4308
    %v4373 = vadd.f32 %v4179, %v4309
    %v4374 = vadd.f32 %v4180, %v4310
    %v4375 = vadd.f32 %v4181, %v4311
    %v4376 = vadd.f32 %v4182, %v4312
    %v4377 = vadd.f32 %v4183, %v4313
    %v4378 = vadd.f32 %v4184, %v4314
    %v4379 = vadd.f32 %v4185, %v4315
    %v4380 = vadd.f32 %v4186, %v4316
    %v4381 = vadd.f32 %v4187, %v4317
    %v4382 = vadd.f32 %v4188, %v4318
    %v4383 = vadd.f32 %v4189, %v4319
    %v4384 = vadd.f32 %v4190, %v4320
    %v4385 = vadd.f32 %v4191, %v4321
    %v4386 = vadd.f32 %v4192, %v4322
    %v4387 = vadd.f32 %v4193, %v4323
    %v4388 = vadd.f32 %v4194, %v4324
    %v4389 = vadd.f32 %v4195, %v4325
    %v4390 = vadd.f32 %v4196, %v4326
    %v4391 = vadd.f32 %v4197, %v4327
    %v4392 = vadd.f32 %v4198, %v4328
    %v4393 = vadd.f32 %v4199, %v4329
    %v4394 = vadd.f32 %v4200, %v4330
    %v4395 = vadd.f32 %v4201, %v4331
    %v4396 = vadd.f32 %v4202, %v4332
    %v4397 = vadd.f32 %v4203, %v4333
    %v4398 = vadd.f32 %v4204, %v4334
    %v4399 = vadd.f32 %v4205, %v4335
    %v4400 = vadd.f32 %v4206, %v4336
    %v4401 = vadd.f32 %v4207, %v4337
    %v4402 = vadd.f32 %v4208, %v4338
    %v4403 = vadd.f32 %v4209, %v4339
    %v4404 = vadd.f32 %v4210, %v4340
    %v4405 = vadd.f32 %v4211, %v4341
    %v4406 = vadd.f32 %v4212, %v4342
    %v4407 = vadd.f32 %v4213, %v4343
    %v4408 = vadd.f32 %v4214, %v4344
    %v4409 = vadd.f32 %v4215, %v4345
    %v4410 = vadd.f32 %v4216, %v4346
    %v4411 = vadd.f32 %v4217, %v4347
    %v4412 = vadd.f32 %v4218, %v4348
    %v4413 = vadd.f32 %v4219, %v4349
    %v4414 = vadd.f32 %v4220, %v4350
    %v4415 = vadd.f32 %v4221, %v4351
    %v4416 = vadd.f32 %v4222, %v4352
    %v4417 = vadd.f32 %v4223, %v4353
    %v4418 = vadd.f32 %v4224, %v4354
    %v4419 = vld [vmem:[%s3547 + $0x1] sm:$0xff]
    %v4420 = vld [vmem:[%s3547 + $0x9] sm:$0xff]
    %v4421 = vld [vmem:[%s3547 + $0x19] sm:$0xff]
    %v4422 = vld [vmem:[%s3547 + $0x21] sm:$0xff]
    %v4423 = vld [vmem:[%s3547 + $0x31] sm:$0xff]
    %v4424 = vld [vmem:[%s3547 + $0x39] sm:$0xff]
    %v4425 = vld [vmem:[%s3547 + $0x49] sm:$0xff]
    %v4426 = vld [vmem:[%s3547 + $0x51] sm:$0xff]
    %v4427 = vld [vmem:[%s3547 + $0x61] sm:$0xff]
    %v4428 = vld [vmem:[%s3547 + $0x69] sm:$0xff]
    %v4429 = vld [vmem:[%s3547 + $0x79] sm:$0xff]
    %v4430 = vld [vmem:[%s3547 + $0x81] sm:$0xff]
    %v4431 = vld [vmem:[%s3547 + $0x91] sm:$0xff]
    %v4432 = vld [vmem:[%s3547 + $0x99] sm:$0xff]
    %v4433 = vld [vmem:[%s3547 + $0xa9] sm:$0xff]
    %v4434 = vld [vmem:[%s3547 + $0xb1] sm:$0xff]
    %v4435 = vld [vmem:[%s3547 + $0xc1] sm:$0xff]
    %v4436 = vld [vmem:[%s3547 + $0xc9] sm:$0xff]
    %v4437 = vld [vmem:[%s3547 + $0xd9] sm:$0xff]
    %v4438 = vld [vmem:[%s3547 + $0xe1] sm:$0xff]
    %v4439 = vld [vmem:[%s3547 + $0xf1] sm:$0xff]
    %v4440 = vld [vmem:[%s3547 + $0xf9] sm:$0xff]
    %v4441 = vld [vmem:[%s3547 + $0x109] sm:$0xff]
    %v4442 = vld [vmem:[%s3547 + $0x111] sm:$0xff]
    %v4443 = vld [vmem:[%s3547 + $0x121] sm:$0xff]
    %v4444 = vld [vmem:[%s3547 + $0x129] sm:$0xff]
    %v4445 = vld [vmem:[%s3547 + $0x139] sm:$0xff]
    %v4446 = vld [vmem:[%s3547 + $0x141] sm:$0xff]
    %v4447 = vld [vmem:[%s3547 + $0x151] sm:$0xff]
    %v4448 = vld [vmem:[%s3547 + $0x159] sm:$0xff]
    %v4449 = vld [vmem:[%s3547 + $0x169] sm:$0xff]
    %v4450 = vld [vmem:[%s3547 + $0x171] sm:$0xff]
    %v4451 = vld [vmem:[%s3547 + $0x1b1] sm:$0xff]
    %v4452 = vld [vmem:[%s3547 + $0x1b9] sm:$0xff]
    %v4453 = vld [vmem:[%s3547 + $0x1c9] sm:$0xff]
    %v4454 = vld [vmem:[%s3547 + $0x1d1] sm:$0xff]
    %v4455 = vld [vmem:[%s3547 + $0x1e1] sm:$0xff]
    %v4456 = vld [vmem:[%s3547 + $0x1e9] sm:$0xff]
    %v4457 = vld [vmem:[%s3547 + $0x1f9] sm:$0xff]
    %v4458 = vld [vmem:[%s3547 + $0x201] sm:$0xff]
    %v4459 = vld [vmem:[%s3547 + $0x211] sm:$0xff]
    %v4460 = vld [vmem:[%s3547 + $0x219] sm:$0xff]
    %v4461 = vld [vmem:[%s3547 + $0x229] sm:$0xff]
    %v4462 = vld [vmem:[%s3547 + $0x231] sm:$0xff]
    %v4463 = vld [vmem:[%s3547 + $0x241] sm:$0xff]
    %v4464 = vld [vmem:[%s3547 + $0x249] sm:$0xff]
    %v4465 = vld [vmem:[%s3547 + $0x259] sm:$0xff]
    %v4466 = vld [vmem:[%s3547 + $0x261] sm:$0xff]
    %v4467 = vld [vmem:[%s3547 + $0x271] sm:$0xff]
    %v4468 = vld [vmem:[%s3547 + $0x279] sm:$0xff]
    %v4469 = vld [vmem:[%s3547 + $0x289] sm:$0xff]
    %v4470 = vld [vmem:[%s3547 + $0x291] sm:$0xff]
    %v4471 = vld [vmem:[%s3547 + $0x2a1] sm:$0xff]
    %v4472 = vld [vmem:[%s3547 + $0x2a9] sm:$0xff]
    %v4473 = vld [vmem:[%s3547 + $0x2b9] sm:$0xff]
    %v4474 = vld [vmem:[%s3547 + $0x2c1] sm:$0xff]
    %v4475 = vld [vmem:[%s3547 + $0x2d1] sm:$0xff]
    %v4476 = vld [vmem:[%s3547 + $0x2d9] sm:$0xff]
    %v4477 = vld [vmem:[%s3547 + $0x2e9] sm:$0xff]
    %v4478 = vld [vmem:[%s3547 + $0x2f1] sm:$0xff]
    %v4479 = vld [vmem:[%s3547 + $0x301] sm:$0xff]
    %v4480 = vld [vmem:[%s3547 + $0x309] sm:$0xff]
    %v4481 = vld [vmem:[%s3547 + $0x319] sm:$0xff]
    %v4482 = vld [vmem:[%s3547 + $0x321] sm:$0xff]
    %v4483 = vld [vmem:[%s5 + $0x4] sm:$0x1]
    %v4484 = vperm.slane %v4483, 0
    %v4485 = vmul.f32 %v4419, %v4484
    %v4486 = vmul.f32 %v4420, %v4484
    %v4487 = vmul.f32 %v4421, %v4484
    %v4488 = vmul.f32 %v4422, %v4484
    %v4489 = vmul.f32 %v4423, %v4484
    %v4490 = vmul.f32 %v4424, %v4484
    %v4491 = vmul.f32 %v4425, %v4484
    %v4492 = vmul.f32 %v4426, %v4484
    %v4493 = vmul.f32 %v4427, %v4484
    %v4494 = vmul.f32 %v4428, %v4484
    %v4495 = vmul.f32 %v4429, %v4484
    %v4496 = vmul.f32 %v4430, %v4484
    %v4497 = vmul.f32 %v4431, %v4484
    %v4498 = vmul.f32 %v4432, %v4484
    %v4499 = vmul.f32 %v4433, %v4484
    %v4500 = vmul.f32 %v4434, %v4484
    %v4501 = vmul.f32 %v4435, %v4484
    %v4502 = vmul.f32 %v4436, %v4484
    %v4503 = vmul.f32 %v4437, %v4484
    %v4504 = vmul.f32 %v4438, %v4484
    %v4505 = vmul.f32 %v4439, %v4484
    %v4506 = vmul.f32 %v4440, %v4484
    %v4507 = vmul.f32 %v4441, %v4484
    %v4508 = vmul.f32 %v4442, %v4484
    %v4509 = vmul.f32 %v4443, %v4484
    %v4510 = vmul.f32 %v4444, %v4484
    %v4511 = vmul.f32 %v4445, %v4484
    %v4512 = vmul.f32 %v4446, %v4484
    %v4513 = vmul.f32 %v4447, %v4484
    %v4514 = vmul.f32 %v4448, %v4484
    %v4515 = vmul.f32 %v4449, %v4484
    %v4516 = vmul.f32 %v4450, %v4484
    %v4517 = vmul.f32 %v4451, %v4484
    %v4518 = vmul.f32 %v4452, %v4484
    %v4519 = vmul.f32 %v4453, %v4484
    %v4520 = vmul.f32 %v4454, %v4484
    %v4521 = vmul.f32 %v4455, %v4484
    %v4522 = vmul.f32 %v4456, %v4484
    %v4523 = vmul.f32 %v4457, %v4484
    %v4524 = vmul.f32 %v4458, %v4484
    %v4525 = vmul.f32 %v4459, %v4484
    %v4526 = vmul.f32 %v4460, %v4484
    %v4527 = vmul.f32 %v4461, %v4484
    %v4528 = vmul.f32 %v4462, %v4484
    %v4529 = vmul.f32 %v4463, %v4484
    %v4530 = vmul.f32 %v4464, %v4484
    %v4531 = vmul.f32 %v4465, %v4484
    %v4532 = vmul.f32 %v4466, %v4484
    %v4533 = vmul.f32 %v4467, %v4484
    %v4534 = vmul.f32 %v4468, %v4484
    %v4535 = vmul.f32 %v4469, %v4484
    %v4536 = vmul.f32 %v4470, %v4484
    %v4537 = vmul.f32 %v4471, %v4484
    %v4538 = vmul.f32 %v4472, %v4484
    %v4539 = vmul.f32 %v4473, %v4484
    %v4540 = vmul.f32 %v4474, %v4484
    %v4541 = vmul.f32 %v4475, %v4484
    %v4542 = vmul.f32 %v4476, %v4484
    %v4543 = vmul.f32 %v4477, %v4484
    %v4544 = vmul.f32 %v4478, %v4484
    %v4545 = vmul.f32 %v4479, %v4484
    %v4546 = vmul.f32 %v4480, %v4484
    %v4547 = vmul.f32 %v4481, %v4484
    %v4548 = vmul.f32 %v4482, %v4484
    %v4549 = vadd.f32 %v4355, %v4485
    %v4550 = vadd.f32 %v4356, %v4486
    %v4551 = vadd.f32 %v4357, %v4487
    %v4552 = vadd.f32 %v4358, %v4488
    %v4553 = vadd.f32 %v4359, %v4489
    %v4554 = vadd.f32 %v4360, %v4490
    %v4555 = vadd.f32 %v4361, %v4491
    %v4556 = vadd.f32 %v4362, %v4492
    %v4557 = vadd.f32 %v4363, %v4493
    %v4558 = vadd.f32 %v4364, %v4494
    %v4559 = vadd.f32 %v4365, %v4495
    %v4560 = vadd.f32 %v4366, %v4496
    %v4561 = vadd.f32 %v4367, %v4497
    %v4562 = vadd.f32 %v4368, %v4498
    %v4563 = vadd.f32 %v4369, %v4499
    %v4564 = vadd.f32 %v4370, %v4500
    %v4565 = vadd.f32 %v4371, %v4501
    %v4566 = vadd.f32 %v4372, %v4502
    %v4567 = vadd.f32 %v4373, %v4503
    %v4568 = vadd.f32 %v4374, %v4504
    %v4569 = vadd.f32 %v4375, %v4505
    %v4570 = vadd.f32 %v4376, %v4506
    %v4571 = vadd.f32 %v4377, %v4507
    %v4572 = vadd.f32 %v4378, %v4508
    %v4573 = vadd.f32 %v4379, %v4509
    %v4574 = vadd.f32 %v4380, %v4510
    %v4575 = vadd.f32 %v4381, %v4511
    %v4576 = vadd.f32 %v4382, %v4512
    %v4577 = vadd.f32 %v4383, %v4513
    %v4578 = vadd.f32 %v4384, %v4514
    %v4579 = vadd.f32 %v4385, %v4515
    %v4580 = vadd.f32 %v4386, %v4516
    %v4581 = vadd.f32 %v4387, %v4517
    %v4582 = vadd.f32 %v4388, %v4518
    %v4583 = vadd.f32 %v4389, %v4519
    %v4584 = vadd.f32 %v4390, %v4520
    %v4585 = vadd.f32 %v4391, %v4521
    %v4586 = vadd.f32 %v4392, %v4522
    %v4587 = vadd.f32 %v4393, %v4523
    %v4588 = vadd.f32 %v4394, %v4524
    %v4589 = vadd.f32 %v4395, %v4525
    %v4590 = vadd.f32 %v4396, %v4526
    %v4591 = vadd.f32 %v4397, %v4527
    %v4592 = vadd.f32 %v4398, %v4528
    %v4593 = vadd.f32 %v4399, %v4529
    %v4594 = vadd.f32 %v4400, %v4530
    %v4595 = vadd.f32 %v4401, %v4531
    %v4596 = vadd.f32 %v4402, %v4532
    %v4597 = vadd.f32 %v4403, %v4533
    %v4598 = vadd.f32 %v4404, %v4534
    %v4599 = vadd.f32 %v4405, %v4535
    %v4600 = vadd.f32 %v4406, %v4536
    %v4601 = vadd.f32 %v4407, %v4537
    %v4602 = vadd.f32 %v4408, %v4538
    %v4603 = vadd.f32 %v4409, %v4539
    %v4604 = vadd.f32 %v4410, %v4540
    %v4605 = vadd.f32 %v4411, %v4541
    %v4606 = vadd.f32 %v4412, %v4542
    %v4607 = vadd.f32 %v4413, %v4543
    %v4608 = vadd.f32 %v4414, %v4544
    %v4609 = vadd.f32 %v4415, %v4545
    %v4610 = vadd.f32 %v4416, %v4546
    %v4611 = vadd.f32 %v4417, %v4547
    %v4612 = vadd.f32 %v4418, %v4548
    %v4613 = vld [vmem:[%s3547 + $0x2] sm:$0xff]
    %v4614 = vld [vmem:[%s3547 + $0xa] sm:$0xff]
    %v4615 = vld [vmem:[%s3547 + $0x1a] sm:$0xff]
    %v4616 = vld [vmem:[%s3547 + $0x22] sm:$0xff]
    %v4617 = vld [vmem:[%s3547 + $0x32] sm:$0xff]
    %v4618 = vld [vmem:[%s3547 + $0x3a] sm:$0xff]
    %v4619 = vld [vmem:[%s3547 + $0x4a] sm:$0xff]
    %v4620 = vld [vmem:[%s3547 + $0x52] sm:$0xff]
    %v4621 = vld [vmem:[%s3547 + $0x62] sm:$0xff]
    %v4622 = vld [vmem:[%s3547 + $0x6a] sm:$0xff]
    %v4623 = vld [vmem:[%s3547 + $0x7a] sm:$0xff]
    %v4624 = vld [vmem:[%s3547 + $0x82] sm:$0xff]
    %v4625 = vld [vmem:[%s3547 + $0x92] sm:$0xff]
    %v4626 = vld [vmem:[%s3547 + $0x9a] sm:$0xff]
    %v4627 = vld [vmem:[%s3547 + $0xaa] sm:$0xff]
    %v4628 = vld [vmem:[%s3547 + $0xb2] sm:$0xff]
    %v4629 = vld [vmem:[%s3547 + $0xc2] sm:$0xff]
    %v4630 = vld [vmem:[%s3547 + $0xca] sm:$0xff]
    %v4631 = vld [vmem:[%s3547 + $0xda] sm:$0xff]
    %v4632 = vld [vmem:[%s3547 + $0xe2] sm:$0xff]
    %v4633 = vld [vmem:[%s3547 + $0xf2] sm:$0xff]
    %v4634 = vld [vmem:[%s3547 + $0xfa] sm:$0xff]
    %v4635 = vld [vmem:[%s3547 + $0x10a] sm:$0xff]
    %v4636 = vld [vmem:[%s3547 + $0x112] sm:$0xff]
    %v4637 = vld [vmem:[%s3547 + $0x122] sm:$0xff]
    %v4638 = vld [vmem:[%s3547 + $0x12a] sm:$0xff]
    %v4639 = vld [vmem:[%s3547 + $0x13a] sm:$0xff]
    %v4640 = vld [vmem:[%s3547 + $0x142] sm:$0xff]
    %v4641 = vld [vmem:[%s3547 + $0x152] sm:$0xff]
    %v4642 = vld [vmem:[%s3547 + $0x15a] sm:$0xff]
    %v4643 = vld [vmem:[%s3547 + $0x16a] sm:$0xff]
    %v4644 = vld [vmem:[%s3547 + $0x172] sm:$0xff]
    %v4645 = vld [vmem:[%s3547 + $0x1b2] sm:$0xff]
    %v4646 = vld [vmem:[%s3547 + $0x1ba] sm:$0xff]
    %v4647 = vld [vmem:[%s3547 + $0x1ca] sm:$0xff]
    %v4648 = vld [vmem:[%s3547 + $0x1d2] sm:$0xff]
    %v4649 = vld [vmem:[%s3547 + $0x1e2] sm:$0xff]
    %v4650 = vld [vmem:[%s3547 + $0x1ea] sm:$0xff]
    %v4651 = vld [vmem:[%s3547 + $0x1fa] sm:$0xff]
    %v4652 = vld [vmem:[%s3547 + $0x202] sm:$0xff]
    %v4653 = vld [vmem:[%s3547 + $0x212] sm:$0xff]
    %v4654 = vld [vmem:[%s3547 + $0x21a] sm:$0xff]
    %v4655 = vld [vmem:[%s3547 + $0x22a] sm:$0xff]
    %v4656 = vld [vmem:[%s3547 + $0x232] sm:$0xff]
    %v4657 = vld [vmem:[%s3547 + $0x242] sm:$0xff]
    %v4658 = vld [vmem:[%s3547 + $0x24a] sm:$0xff]
    %v4659 = vld [vmem:[%s3547 + $0x25a] sm:$0xff]
    %v4660 = vld [vmem:[%s3547 + $0x262] sm:$0xff]
    %v4661 = vld [vmem:[%s3547 + $0x272] sm:$0xff]
    %v4662 = vld [vmem:[%s3547 + $0x27a] sm:$0xff]
    %v4663 = vld [vmem:[%s3547 + $0x28a] sm:$0xff]
    %v4664 = vld [vmem:[%s3547 + $0x292] sm:$0xff]
    %v4665 = vld [vmem:[%s3547 + $0x2a2] sm:$0xff]
    %v4666 = vld [vmem:[%s3547 + $0x2aa] sm:$0xff]
    %v4667 = vld [vmem:[%s3547 + $0x2ba] sm:$0xff]
    %v4668 = vld [vmem:[%s3547 + $0x2c2] sm:$0xff]
    %v4669 = vld [vmem:[%s3547 + $0x2d2] sm:$0xff]
    %v4670 = vld [vmem:[%s3547 + $0x2da] sm:$0xff]
    %v4671 = vld [vmem:[%s3547 + $0x2ea] sm:$0xff]
    %v4672 = vld [vmem:[%s3547 + $0x2f2] sm:$0xff]
    %v4673 = vld [vmem:[%s3547 + $0x302] sm:$0xff]
    %v4674 = vld [vmem:[%s3547 + $0x30a] sm:$0xff]
    %v4675 = vld [vmem:[%s3547 + $0x31a] sm:$0xff]
    %v4676 = vld [vmem:[%s3547 + $0x322] sm:$0xff]
    %v4677 = vld [vmem:[%s5 + $0x5] sm:$0x1]
    %v4678 = vperm.slane %v4677, 0
    %v4679 = vmul.f32 %v4613, %v4678
    %v4680 = vmul.f32 %v4614, %v4678
    %v4681 = vmul.f32 %v4615, %v4678
    %v4682 = vmul.f32 %v4616, %v4678
    %v4683 = vmul.f32 %v4617, %v4678
    %v4684 = vmul.f32 %v4618, %v4678
    %v4685 = vmul.f32 %v4619, %v4678
    %v4686 = vmul.f32 %v4620, %v4678
    %v4687 = vmul.f32 %v4621, %v4678
    %v4688 = vmul.f32 %v4622, %v4678
    %v4689 = vmul.f32 %v4623, %v4678
    %v4690 = vmul.f32 %v4624, %v4678
    %v4691 = vmul.f32 %v4625, %v4678
    %v4692 = vmul.f32 %v4626, %v4678
    %v4693 = vmul.f32 %v4627, %v4678
    %v4694 = vmul.f32 %v4628, %v4678
    %v4695 = vmul.f32 %v4629, %v4678
    %v4696 = vmul.f32 %v4630, %v4678
    %v4697 = vmul.f32 %v4631, %v4678
    %v4698 = vmul.f32 %v4632, %v4678
    %v4699 = vmul.f32 %v4633, %v4678
    %v4700 = vmul.f32 %v4634, %v4678
    %v4701 = vmul.f32 %v4635, %v4678
    %v4702 = vmul.f32 %v4636, %v4678
    %v4703 = vmul.f32 %v4637, %v4678
    %v4704 = vmul.f32 %v4638, %v4678
    %v4705 = vmul.f32 %v4639, %v4678
    %v4706 = vmul.f32 %v4640, %v4678
    %v4707 = vmul.f32 %v4641, %v4678
    %v4708 = vmul.f32 %v4642, %v4678
    %v4709 = vmul.f32 %v4643, %v4678
    %v4710 = vmul.f32 %v4644, %v4678
    %v4711 = vmul.f32 %v4645, %v4678
    %v4712 = vmul.f32 %v4646, %v4678
    %v4713 = vmul.f32 %v4647, %v4678
    %v4714 = vmul.f32 %v4648, %v4678
    %v4715 = vmul.f32 %v4649, %v4678
    %v4716 = vmul.f32 %v4650, %v4678
    %v4717 = vmul.f32 %v4651, %v4678
    %v4718 = vmul.f32 %v4652, %v4678
    %v4719 = vmul.f32 %v4653, %v4678
    %v4720 = vmul.f32 %v4654, %v4678
    %v4721 = vmul.f32 %v4655, %v4678
    %v4722 = vmul.f32 %v4656, %v4678
    %v4723 = vmul.f32 %v4657, %v4678
    %v4724 = vmul.f32 %v4658, %v4678
    %v4725 = vmul.f32 %v4659, %v4678
    %v4726 = vmul.f32 %v4660, %v4678
    %v4727 = vmul.f32 %v4661, %v4678
    %v4728 = vmul.f32 %v4662, %v4678
    %v4729 = vmul.f32 %v4663, %v4678
    %v4730 = vmul.f32 %v4664, %v4678
    %v4731 = vmul.f32 %v4665, %v4678
    %v4732 = vmul.f32 %v4666, %v4678
    %v4733 = vmul.f32 %v4667, %v4678
    %v4734 = vmul.f32 %v4668, %v4678
    %v4735 = vmul.f32 %v4669, %v4678
    %v4736 = vmul.f32 %v4670, %v4678
    %v4737 = vmul.f32 %v4671, %v4678
    %v4738 = vmul.f32 %v4672, %v4678
    %v4739 = vmul.f32 %v4673, %v4678
    %v4740 = vmul.f32 %v4674, %v4678
    %v4741 = vmul.f32 %v4675, %v4678
    %v4742 = vmul.f32 %v4676, %v4678
    %v4743 = vadd.f32 %v4549, %v4679
    %v4744 = vadd.f32 %v4550, %v4680
    %v4745 = vadd.f32 %v4551, %v4681
    %v4746 = vadd.f32 %v4552, %v4682
    %v4747 = vadd.f32 %v4553, %v4683
    %v4748 = vadd.f32 %v4554, %v4684
    %v4749 = vadd.f32 %v4555, %v4685
    %v4750 = vadd.f32 %v4556, %v4686
    %v4751 = vadd.f32 %v4557, %v4687
    %v4752 = vadd.f32 %v4558, %v4688
    %v4753 = vadd.f32 %v4559, %v4689
    %v4754 = vadd.f32 %v4560, %v4690
    %v4755 = vadd.f32 %v4561, %v4691
    %v4756 = vadd.f32 %v4562, %v4692
    %v4757 = vadd.f32 %v4563, %v4693
    %v4758 = vadd.f32 %v4564, %v4694
    %v4759 = vadd.f32 %v4565, %v4695
    %v4760 = vadd.f32 %v4566, %v4696
    %v4761 = vadd.f32 %v4567, %v4697
    %v4762 = vadd.f32 %v4568, %v4698
    %v4763 = vadd.f32 %v4569, %v4699
    %v4764 = vadd.f32 %v4570, %v4700
    %v4765 = vadd.f32 %v4571, %v4701
    %v4766 = vadd.f32 %v4572, %v4702
    %v4767 = vadd.f32 %v4573, %v4703
    %v4768 = vadd.f32 %v4574, %v4704
    %v4769 = vadd.f32 %v4575, %v4705
    %v4770 = vadd.f32 %v4576, %v4706
    %v4771 = vadd.f32 %v4577, %v4707
    %v4772 = vadd.f32 %v4578, %v4708
    %v4773 = vadd.f32 %v4579, %v4709
    %v4774 = vadd.f32 %v4580, %v4710
    %v4775 = vadd.f32 %v4581, %v4711
    %v4776 = vadd.f32 %v4582, %v4712
    %v4777 = vadd.f32 %v4583, %v4713
    %v4778 = vadd.f32 %v4584, %v4714
    %v4779 = vadd.f32 %v4585, %v4715
    %v4780 = vadd.f32 %v4586, %v4716
    %v4781 = vadd.f32 %v4587, %v4717
    %v4782 = vadd.f32 %v4588, %v4718
    %v4783 = vadd.f32 %v4589, %v4719
    %v4784 = vadd.f32 %v4590, %v4720
    %v4785 = vadd.f32 %v4591, %v4721
    %v4786 = vadd.f32 %v4592, %v4722
    %v4787 = vadd.f32 %v4593, %v4723
    %v4788 = vadd.f32 %v4594, %v4724
    %v4789 = vadd.f32 %v4595, %v4725
    %v4790 = vadd.f32 %v4596, %v4726
    %v4791 = vadd.f32 %v4597, %v4727
    %v4792 = vadd.f32 %v4598, %v4728
    %v4793 = vadd.f32 %v4599, %v4729
    %v4794 = vadd.f32 %v4600, %v4730
    %v4795 = vadd.f32 %v4601, %v4731
    %v4796 = vadd.f32 %v4602, %v4732
    %v4797 = vadd.f32 %v4603, %v4733
    %v4798 = vadd.f32 %v4604, %v4734
    %v4799 = vadd.f32 %v4605, %v4735
    %v4800 = vadd.f32 %v4606, %v4736
    %v4801 = vadd.f32 %v4607, %v4737
    %v4802 = vadd.f32 %v4608, %v4738
    %v4803 = vadd.f32 %v4609, %v4739
    %v4804 = vadd.f32 %v4610, %v4740
    %v4805 = vadd.f32 %v4611, %v4741
    %v4806 = vadd.f32 %v4612, %v4742
    %v4807 = vld [vmem:[%s3550] sm:$0xff]
    %v4808 = vld [vmem:[%s3550 + $0x8] sm:$0xff]
    %v4809 = vld [vmem:[%s3550 + $0x18] sm:$0xff]
    %v4810 = vld [vmem:[%s3550 + $0x20] sm:$0xff]
    %v4811 = vld [vmem:[%s3550 + $0x30] sm:$0xff]
    %v4812 = vld [vmem:[%s3550 + $0x38] sm:$0xff]
    %v4813 = vld [vmem:[%s3550 + $0x48] sm:$0xff]
    %v4814 = vld [vmem:[%s3550 + $0x50] sm:$0xff]
    %v4815 = vld [vmem:[%s3550 + $0x60] sm:$0xff]
    %v4816 = vld [vmem:[%s3550 + $0x68] sm:$0xff]
    %v4817 = vld [vmem:[%s3550 + $0x78] sm:$0xff]
    %v4818 = vld [vmem:[%s3550 + $0x80] sm:$0xff]
    %v4819 = vld [vmem:[%s3550 + $0x90] sm:$0xff]
    %v4820 = vld [vmem:[%s3550 + $0x98] sm:$0xff]
    %v4821 = vld [vmem:[%s3550 + $0xa8] sm:$0xff]
    %v4822 = vld [vmem:[%s3550 + $0xb0] sm:$0xff]
    %v4823 = vld [vmem:[%s3550 + $0xc0] sm:$0xff]
    %v4824 = vld [vmem:[%s3550 + $0xc8] sm:$0xff]
    %v4825 = vld [vmem:[%s3550 + $0xd8] sm:$0xff]
    %v4826 = vld [vmem:[%s3550 + $0xe0] sm:$0xff]
    %v4827 = vld [vmem:[%s3550 + $0xf0] sm:$0xff]
    %v4828 = vld [vmem:[%s3550 + $0xf8] sm:$0xff]
    %v4829 = vld [vmem:[%s3550 + $0x108] sm:$0xff]
    %v4830 = vld [vmem:[%s3550 + $0x110] sm:$0xff]
    %v4831 = vld [vmem:[%s3550 + $0x120] sm:$0xff]
    %v4832 = vld [vmem:[%s3550 + $0x128] sm:$0xff]
    %v4833 = vld [vmem:[%s3550 + $0x138] sm:$0xff]
    %v4834 = vld [vmem:[%s3550 + $0x140] sm:$0xff]
    %v4835 = vld [vmem:[%s3550 + $0x150] sm:$0xff]
    %v4836 = vld [vmem:[%s3550 + $0x158] sm:$0xff]
    %v4837 = vld [vmem:[%s3550 + $0x168] sm:$0xff]
    %v4838 = vld [vmem:[%s3550 + $0x170] sm:$0xff]
    %v4839 = vld [vmem:[%s3550 + $0x1b0] sm:$0xff]
    %v4840 = vld [vmem:[%s3550 + $0x1b8] sm:$0xff]
    %v4841 = vld [vmem:[%s3550 + $0x1c8] sm:$0xff]
    %v4842 = vld [vmem:[%s3550 + $0x1d0] sm:$0xff]
    %v4843 = vld [vmem:[%s3550 + $0x1e0] sm:$0xff]
    %v4844 = vld [vmem:[%s3550 + $0x1e8] sm:$0xff]
    %v4845 = vld [vmem:[%s3550 + $0x1f8] sm:$0xff]
    %v4846 = vld [vmem:[%s3550 + $0x200] sm:$0xff]
    %v4847 = vld [vmem:[%s3550 + $0x210] sm:$0xff]
    %v4848 = vld [vmem:[%s3550 + $0x218] sm:$0xff]
    %v4849 = vld [vmem:[%s3550 + $0x228] sm:$0xff]
    %v4850 = vld [vmem:[%s3550 + $0x230] sm:$0xff]
    %v4851 = vld [vmem:[%s3550 + $0x240] sm:$0xff]
    %v4852 = vld [vmem:[%s3550 + $0x248] sm:$0xff]
    %v4853 = vld [vmem:[%s3550 + $0x258] sm:$0xff]
    %v4854 = vld [vmem:[%s3550 + $0x260] sm:$0xff]
    %v4855 = vld [vmem:[%s3550 + $0x270] sm:$0xff]
    %v4856 = vld [vmem:[%s3550 + $0x278] sm:$0xff]
    %v4857 = vld [vmem:[%s3550 + $0x288] sm:$0xff]
    %v4858 = vld [vmem:[%s3550 + $0x290] sm:$0xff]
    %v4859 = vld [vmem:[%s3550 + $0x2a0] sm:$0xff]
    %v4860 = vld [vmem:[%s3550 + $0x2a8] sm:$0xff]
    %v4861 = vld [vmem:[%s3550 + $0x2b8] sm:$0xff]
    %v4862 = vld [vmem:[%s3550 + $0x2c0] sm:$0xff]
    %v4863 = vld [vmem:[%s3550 + $0x2d0] sm:$0xff]
    %v4864 = vld [vmem:[%s3550 + $0x2d8] sm:$0xff]
    %v4865 = vld [vmem:[%s3550 + $0x2e8] sm:$0xff]
    %v4866 = vld [vmem:[%s3550 + $0x2f0] sm:$0xff]
    %v4867 = vld [vmem:[%s3550 + $0x300] sm:$0xff]
    %v4868 = vld [vmem:[%s3550 + $0x308] sm:$0xff]
    %v4869 = vld [vmem:[%s3550 + $0x318] sm:$0xff]
    %v4870 = vld [vmem:[%s3550 + $0x320] sm:$0xff]
    %v4871 = vld [vmem:[%s5 + $0x6] sm:$0x1]
    %v4872 = vperm.slane %v4871, 0
    %v4873 = vmul.f32 %v4807, %v4872
    %v4874 = vmul.f32 %v4808, %v4872
    %v4875 = vmul.f32 %v4809, %v4872
    %v4876 = vmul.f32 %v4810, %v4872
    %v4877 = vmul.f32 %v4811, %v4872
    %v4878 = vmul.f32 %v4812, %v4872
    %v4879 = vmul.f32 %v4813, %v4872
    %v4880 = vmul.f32 %v4814, %v4872
    %v4881 = vmul.f32 %v4815, %v4872
    %v4882 = vmul.f32 %v4816, %v4872
    %v4883 = vmul.f32 %v4817, %v4872
    %v4884 = vmul.f32 %v4818, %v4872
    %v4885 = vmul.f32 %v4819, %v4872
    %v4886 = vmul.f32 %v4820, %v4872
    %v4887 = vmul.f32 %v4821, %v4872
    %v4888 = vmul.f32 %v4822, %v4872
    %v4889 = vmul.f32 %v4823, %v4872
    %v4890 = vmul.f32 %v4824, %v4872
    %v4891 = vmul.f32 %v4825, %v4872
    %v4892 = vmul.f32 %v4826, %v4872
    %v4893 = vmul.f32 %v4827, %v4872
    %v4894 = vmul.f32 %v4828, %v4872
    %v4895 = vmul.f32 %v4829, %v4872
    %v4896 = vmul.f32 %v4830, %v4872
    %v4897 = vmul.f32 %v4831, %v4872
    %v4898 = vmul.f32 %v4832, %v4872
    %v4899 = vmul.f32 %v4833, %v4872
    %v4900 = vmul.f32 %v4834, %v4872
    %v4901 = vmul.f32 %v4835, %v4872
    %v4902 = vmul.f32 %v4836, %v4872
    %v4903 = vmul.f32 %v4837, %v4872
    %v4904 = vmul.f32 %v4838, %v4872
    %v4905 = vmul.f32 %v4839, %v4872
    %v4906 = vmul.f32 %v4840, %v4872
    %v4907 = vmul.f32 %v4841, %v4872
    %v4908 = vmul.f32 %v4842, %v4872
    %v4909 = vmul.f32 %v4843, %v4872
    %v4910 = vmul.f32 %v4844, %v4872
    %v4911 = vmul.f32 %v4845, %v4872
    %v4912 = vmul.f32 %v4846, %v4872
    %v4913 = vmul.f32 %v4847, %v4872
    %v4914 = vmul.f32 %v4848, %v4872
    %v4915 = vmul.f32 %v4849, %v4872
    %v4916 = vmul.f32 %v4850, %v4872
    %v4917 = vmul.f32 %v4851, %v4872
    %v4918 = vmul.f32 %v4852, %v4872
    %v4919 = vmul.f32 %v4853, %v4872
    %v4920 = vmul.f32 %v4854, %v4872
    %v4921 = vmul.f32 %v4855, %v4872
    %v4922 = vmul.f32 %v4856, %v4872
    %v4923 = vmul.f32 %v4857, %v4872
    %v4924 = vmul.f32 %v4858, %v4872
    %v4925 = vmul.f32 %v4859, %v4872
    %v4926 = vmul.f32 %v4860, %v4872
    %v4927 = vmul.f32 %v4861, %v4872
    %v4928 = vmul.f32 %v4862, %v4872
    %v4929 = vmul.f32 %v4863, %v4872
    %v4930 = vmul.f32 %v4864, %v4872
    %v4931 = vmul.f32 %v4865, %v4872
    %v4932 = vmul.f32 %v4866, %v4872
    %v4933 = vmul.f32 %v4867, %v4872
    %v4934 = vmul.f32 %v4868, %v4872
    %v4935 = vmul.f32 %v4869, %v4872
    %v4936 = vmul.f32 %v4870, %v4872
    %v4937 = vadd.f32 %v4743, %v4873
    %v4938 = vadd.f32 %v4744, %v4874
    %v4939 = vadd.f32 %v4745, %v4875
    %v4940 = vadd.f32 %v4746, %v4876
    %v4941 = vadd.f32 %v4747, %v4877
    %v4942 = vadd.f32 %v4748, %v4878
    %v4943 = vadd.f32 %v4749, %v4879
    %v4944 = vadd.f32 %v4750, %v4880
    %v4945 = vadd.f32 %v4751, %v4881
    %v4946 = vadd.f32 %v4752, %v4882
    %v4947 = vadd.f32 %v4753, %v4883
    %v4948 = vadd.f32 %v4754, %v4884
    %v4949 = vadd.f32 %v4755, %v4885
    %v4950 = vadd.f32 %v4756, %v4886
    %v4951 = vadd.f32 %v4757, %v4887
    %v4952 = vadd.f32 %v4758, %v4888
    %v4953 = vadd.f32 %v4759, %v4889
    %v4954 = vadd.f32 %v4760, %v4890
    %v4955 = vadd.f32 %v4761, %v4891
    %v4956 = vadd.f32 %v4762, %v4892
    %v4957 = vadd.f32 %v4763, %v4893
    %v4958 = vadd.f32 %v4764, %v4894
    %v4959 = vadd.f32 %v4765, %v4895
    %v4960 = vadd.f32 %v4766, %v4896
    %v4961 = vadd.f32 %v4767, %v4897
    %v4962 = vadd.f32 %v4768, %v4898
    %v4963 = vadd.f32 %v4769, %v4899
    %v4964 = vadd.f32 %v4770, %v4900
    %v4965 = vadd.f32 %v4771, %v4901
    %v4966 = vadd.f32 %v4772, %v4902
    %v4967 = vadd.f32 %v4773, %v4903
    %v4968 = vadd.f32 %v4774, %v4904
    %v4969 = vadd.f32 %v4775, %v4905
    %v4970 = vadd.f32 %v4776, %v4906
    %v4971 = vadd.f32 %v4777, %v4907
    %v4972 = vadd.f32 %v4778, %v4908
    %v4973 = vadd.f32 %v4779, %v4909
    %v4974 = vadd.f32 %v4780, %v4910
    %v4975 = vadd.f32 %v4781, %v4911
    %v4976 = vadd.f32 %v4782, %v4912
    %v4977 = vadd.f32 %v4783, %v4913
    %v4978 = vadd.f32 %v4784, %v4914
    %v4979 = vadd.f32 %v4785, %v4915
    %v4980 = vadd.f32 %v4786, %v4916
    %v4981 = vadd.f32 %v4787, %v4917
    %v4982 = vadd.f32 %v4788, %v4918
    %v4983 = vadd.f32 %v4789, %v4919
    %v4984 = vadd.f32 %v4790, %v4920
    %v4985 = vadd.f32 %v4791, %v4921
    %v4986 = vadd.f32 %v4792, %v4922
    %v4987 = vadd.f32 %v4793, %v4923
    %v4988 = vadd.f32 %v4794, %v4924
    %v4989 = vadd.f32 %v4795, %v4925
    %v4990 = vadd.f32 %v4796, %v4926
    %v4991 = vadd.f32 %v4797, %v4927
    %v4992 = vadd.f32 %v4798, %v4928
    %v4993 = vadd.f32 %v4799, %v4929
    %v4994 = vadd.f32 %v4800, %v4930
    %v4995 = vadd.f32 %v4801, %v4931
    %v4996 = vadd.f32 %v4802, %v4932
    %v4997 = vadd.f32 %v4803, %v4933
    %v4998 = vadd.f32 %v4804, %v4934
    %v4999 = vadd.f32 %v4805, %v4935
    %v5000 = vadd.f32 %v4806, %v4936
    %v5001 = vld [vmem:[%s3550 + $0x1] sm:$0xff]
    %v5002 = vld [vmem:[%s3550 + $0x9] sm:$0xff]
    %v5003 = vld [vmem:[%s3550 + $0x19] sm:$0xff]
    %v5004 = vld [vmem:[%s3550 + $0x21] sm:$0xff]
    %v5005 = vld [vmem:[%s3550 + $0x31] sm:$0xff]
    %v5006 = vld [vmem:[%s3550 + $0x39] sm:$0xff]
    %v5007 = vld [vmem:[%s3550 + $0x49] sm:$0xff]
    %v5008 = vld [vmem:[%s3550 + $0x51] sm:$0xff]
    %v5009 = vld [vmem:[%s3550 + $0x61] sm:$0xff]
    %v5010 = vld [vmem:[%s3550 + $0x69] sm:$0xff]
    %v5011 = vld [vmem:[%s3550 + $0x79] sm:$0xff]
    %v5012 = vld [vmem:[%s3550 + $0x81] sm:$0xff]
    %v5013 = vld [vmem:[%s3550 + $0x91] sm:$0xff]
    %v5014 = vld [vmem:[%s3550 + $0x99] sm:$0xff]
    %v5015 = vld [vmem:[%s3550 + $0xa9] sm:$0xff]
    %v5016 = vld [vmem:[%s3550 + $0xb1] sm:$0xff]
    %v5017 = vld [vmem:[%s3550 + $0xc1] sm:$0xff]
    %v5018 = vld [vmem:[%s3550 + $0xc9] sm:$0xff]
    %v5019 = vld [vmem:[%s3550 + $0xd9] sm:$0xff]
    %v5020 = vld [vmem:[%s3550 + $0xe1] sm:$0xff]
    %v5021 = vld [vmem:[%s3550 + $0xf1] sm:$0xff]
    %v5022 = vld [vmem:[%s3550 + $0xf9] sm:$0xff]
    %v5023 = vld [vmem:[%s3550 + $0x109] sm:$0xff]
    %v5024 = vld [vmem:[%s3550 + $0x111] sm:$0xff]
    %v5025 = vld [vmem:[%s3550 + $0x121] sm:$0xff]
    %v5026 = vld [vmem:[%s3550 + $0x129] sm:$0xff]
    %v5027 = vld [vmem:[%s3550 + $0x139] sm:$0xff]
    %v5028 = vld [vmem:[%s3550 + $0x141] sm:$0xff]
    %v5029 = vld [vmem:[%s3550 + $0x151] sm:$0xff]
    %v5030 = vld [vmem:[%s3550 + $0x159] sm:$0xff]
    %v5031 = vld [vmem:[%s3550 + $0x169] sm:$0xff]
    %v5032 = vld [vmem:[%s3550 + $0x171] sm:$0xff]
    %v5033 = vld [vmem:[%s3550 + $0x1b1] sm:$0xff]
    %v5034 = vld [vmem:[%s3550 + $0x1b9] sm:$0xff]
    %v5035 = vld [vmem:[%s3550 + $0x1c9] sm:$0xff]
    %v5036 = vld [vmem:[%s3550 + $0x1d1] sm:$0xff]
    %v5037 = vld [vmem:[%s3550 + $0x1e1] sm:$0xff]
    %v5038 = vld [vmem:[%s3550 + $0x1e9] sm:$0xff]
    %v5039 = vld [vmem:[%s3550 + $0x1f9] sm:$0xff]
    %v5040 = vld [vmem:[%s3550 + $0x201] sm:$0xff]
    %v5041 = vld [vmem:[%s3550 + $0x211] sm:$0xff]
    %v5042 = vld [vmem:[%s3550 + $0x219] sm:$0xff]
    %v5043 = vld [vmem:[%s3550 + $0x229] sm:$0xff]
    %v5044 = vld [vmem:[%s3550 + $0x231] sm:$0xff]
    %v5045 = vld [vmem:[%s3550 + $0x241] sm:$0xff]
    %v5046 = vld [vmem:[%s3550 + $0x249] sm:$0xff]
    %v5047 = vld [vmem:[%s3550 + $0x259] sm:$0xff]
    %v5048 = vld [vmem:[%s3550 + $0x261] sm:$0xff]
    %v5049 = vld [vmem:[%s3550 + $0x271] sm:$0xff]
    %v5050 = vld [vmem:[%s3550 + $0x279] sm:$0xff]
    %v5051 = vld [vmem:[%s3550 + $0x289] sm:$0xff]
    %v5052 = vld [vmem:[%s3550 + $0x291] sm:$0xff]
    %v5053 = vld [vmem:[%s3550 + $0x2a1] sm:$0xff]
    %v5054 = vld [vmem:[%s3550 + $0x2a9] sm:$0xff]
    %v5055 = vld [vmem:[%s3550 + $0x2b9] sm:$0xff]
    %v5056 = vld [vmem:[%s3550 + $0x2c1] sm:$0xff]
    %v5057 = vld [vmem:[%s3550 + $0x2d1] sm:$0xff]
    %v5058 = vld [vmem:[%s3550 + $0x2d9] sm:$0xff]
    %v5059 = vld [vmem:[%s3550 + $0x2e9] sm:$0xff]
    %v5060 = vld [vmem:[%s3550 + $0x2f1] sm:$0xff]
    %v5061 = vld [vmem:[%s3550 + $0x301] sm:$0xff]
    %v5062 = vld [vmem:[%s3550 + $0x309] sm:$0xff]
    %v5063 = vld [vmem:[%s3550 + $0x319] sm:$0xff]
    %v5064 = vld [vmem:[%s3550 + $0x321] sm:$0xff]
    %v5065 = vld [vmem:[%s5 + $0x7] sm:$0x1]
    %v5066 = vperm.slane %v5065, 0
    %v5067 = vmul.f32 %v5001, %v5066
    %v5068 = vmul.f32 %v5002, %v5066
    %v5069 = vmul.f32 %v5003, %v5066
    %v5070 = vmul.f32 %v5004, %v5066
    %v5071 = vmul.f32 %v5005, %v5066
    %v5072 = vmul.f32 %v5006, %v5066
    %v5073 = vmul.f32 %v5007, %v5066
    %v5074 = vmul.f32 %v5008, %v5066
    %v5075 = vmul.f32 %v5009, %v5066
    %v5076 = vmul.f32 %v5010, %v5066
    %v5077 = vmul.f32 %v5011, %v5066
    %v5078 = vmul.f32 %v5012, %v5066
    %v5079 = vmul.f32 %v5013, %v5066
    %v5080 = vmul.f32 %v5014, %v5066
    %v5081 = vmul.f32 %v5015, %v5066
    %v5082 = vmul.f32 %v5016, %v5066
    %v5083 = vmul.f32 %v5017, %v5066
    %v5084 = vmul.f32 %v5018, %v5066
    %v5085 = vmul.f32 %v5019, %v5066
    %v5086 = vmul.f32 %v5020, %v5066
    %v5087 = vmul.f32 %v5021, %v5066
    %v5088 = vmul.f32 %v5022, %v5066
    %v5089 = vmul.f32 %v5023, %v5066
    %v5090 = vmul.f32 %v5024, %v5066
    %v5091 = vmul.f32 %v5025, %v5066
    %v5092 = vmul.f32 %v5026, %v5066
    %v5093 = vmul.f32 %v5027, %v5066
    %v5094 = vmul.f32 %v5028, %v5066
    %v5095 = vmul.f32 %v5029, %v5066
    %v5096 = vmul.f32 %v5030, %v5066
    %v5097 = vmul.f32 %v5031, %v5066
    %v5098 = vmul.f32 %v5032, %v5066
    %v5099 = vmul.f32 %v5033, %v5066
    %v5100 = vmul.f32 %v5034, %v5066
    %v5101 = vmul.f32 %v5035, %v5066
    %v5102 = vmul.f32 %v5036, %v5066
    %v5103 = vmul.f32 %v5037, %v5066
    %v5104 = vmul.f32 %v5038, %v5066
    %v5105 = vmul.f32 %v5039, %v5066
    %v5106 = vmul.f32 %v5040, %v5066
    %v5107 = vmul.f32 %v5041, %v5066
    %v5108 = vmul.f32 %v5042, %v5066
    %v5109 = vmul.f32 %v5043, %v5066
    %v5110 = vmul.f32 %v5044, %v5066
    %v5111 = vmul.f32 %v5045, %v5066
    %v5112 = vmul.f32 %v5046, %v5066
    %v5113 = vmul.f32 %v5047, %v5066
    %v5114 = vmul.f32 %v5048, %v5066
    %v5115 = vmul.f32 %v5049, %v5066
    %v5116 = vmul.f32 %v5050, %v5066
    %v5117 = vmul.f32 %v5051, %v5066
    %v5118 = vmul.f32 %v5052, %v5066
    %v5119 = vmul.f32 %v5053, %v5066
    %v5120 = vmul.f32 %v5054, %v5066
    %v5121 = vmul.f32 %v5055, %v5066
    %v5122 = vmul.f32 %v5056, %v5066
    %v5123 = vmul.f32 %v5057, %v5066
    %v5124 = vmul.f32 %v5058, %v5066
    %v5125 = vmul.f32 %v5059, %v5066
    %v5126 = vmul.f32 %v5060, %v5066
    %v5127 = vmul.f32 %v5061, %v5066
    %v5128 = vmul.f32 %v5062, %v5066
    %v5129 = vmul.f32 %v5063, %v5066
    %v5130 = vmul.f32 %v5064, %v5066
    %v5131 = vadd.f32 %v4937, %v5067
    %v5132 = vadd.f32 %v4938, %v5068
    %v5133 = vadd.f32 %v4939, %v5069
    %v5134 = vadd.f32 %v4940, %v5070
    %v5135 = vadd.f32 %v4941, %v5071
    %v5136 = vadd.f32 %v4942, %v5072
    %v5137 = vadd.f32 %v4943, %v5073
    %v5138 = vadd.f32 %v4944, %v5074
    %v5139 = vadd.f32 %v4945, %v5075
    %v5140 = vadd.f32 %v4946, %v5076
    %v5141 = vadd.f32 %v4947, %v5077
    %v5142 = vadd.f32 %v4948, %v5078
    %v5143 = vadd.f32 %v4949, %v5079
    %v5144 = vadd.f32 %v4950, %v5080
    %v5145 = vadd.f32 %v4951, %v5081
    %v5146 = vadd.f32 %v4952, %v5082
    %v5147 = vadd.f32 %v4953, %v5083
    %v5148 = vadd.f32 %v4954, %v5084
    %v5149 = vadd.f32 %v4955, %v5085
    %v5150 = vadd.f32 %v4956, %v5086
    %v5151 = vadd.f32 %v4957, %v5087
    %v5152 = vadd.f32 %v4958, %v5088
    %v5153 = vadd.f32 %v4959, %v5089
    %v5154 = vadd.f32 %v4960, %v5090
    %v5155 = vadd.f32 %v4961, %v5091
    %v5156 = vadd.f32 %v4962, %v5092
    %v5157 = vadd.f32 %v4963, %v5093
    %v5158 = vadd.f32 %v4964, %v5094
    %v5159 = vadd.f32 %v4965, %v5095
    %v5160 = vadd.f32 %v4966, %v5096
    %v5161 = vadd.f32 %v4967, %v5097
    %v5162 = vadd.f32 %v4968, %v5098
    %v5163 = vadd.f32 %v4969, %v5099
    %v5164 = vadd.f32 %v4970, %v5100
    %v5165 = vadd.f32 %v4971, %v5101
    %v5166 = vadd.f32 %v4972, %v5102
    %v5167 = vadd.f32 %v4973, %v5103
    %v5168 = vadd.f32 %v4974, %v5104
    %v5169 = vadd.f32 %v4975, %v5105
    %v5170 = vadd.f32 %v4976, %v5106
    %v5171 = vadd.f32 %v4977, %v5107
    %v5172 = vadd.f32 %v4978, %v5108
    %v5173 = vadd.f32 %v4979, %v5109
    %v5174 = vadd.f32 %v4980, %v5110
    %v5175 = vadd.f32 %v4981, %v5111
    %v5176 = vadd.f32 %v4982, %v5112
    %v5177 = vadd.f32 %v4983, %v5113
    %v5178 = vadd.f32 %v4984, %v5114
    %v5179 = vadd.f32 %v4985, %v5115
    %v5180 = vadd.f32 %v4986, %v5116
    %v5181 = vadd.f32 %v4987, %v5117
    %v5182 = vadd.f32 %v4988, %v5118
    %v5183 = vadd.f32 %v4989, %v5119
    %v5184 = vadd.f32 %v4990, %v5120
    %v5185 = vadd.f32 %v4991, %v5121
    %v5186 = vadd.f32 %v4992, %v5122
    %v5187 = vadd.f32 %v4993, %v5123
    %v5188 = vadd.f32 %v4994, %v5124
    %v5189 = vadd.f32 %v4995, %v5125
    %v5190 = vadd.f32 %v4996, %v5126
    %v5191 = vadd.f32 %v4997, %v5127
    %v5192 = vadd.f32 %v4998, %v5128
    %v5193 = vadd.f32 %v4999, %v5129
    %v5194 = vadd.f32 %v5000, %v5130
    %v5195 = vld [vmem:[%s3550 + $0x2] sm:$0xff]
    %v5196 = vld [vmem:[%s3550 + $0xa] sm:$0xff]
    %v5197 = vld [vmem:[%s3550 + $0x1a] sm:$0xff]
    %v5198 = vld [vmem:[%s3550 + $0x22] sm:$0xff]
    %v5199 = vld [vmem:[%s3550 + $0x32] sm:$0xff]
    %v5200 = vld [vmem:[%s3550 + $0x3a] sm:$0xff]
    %v5201 = vld [vmem:[%s3550 + $0x4a] sm:$0xff]
    %v5202 = vld [vmem:[%s3550 + $0x52] sm:$0xff]
    %v5203 = vld [vmem:[%s3550 + $0x62] sm:$0xff]
    %v5204 = vld [vmem:[%s3550 + $0x6a] sm:$0xff]
    %v5205 = vld [vmem:[%s3550 + $0x7a] sm:$0xff]
    %v5206 = vld [vmem:[%s3550 + $0x82] sm:$0xff]
    %v5207 = vld [vmem:[%s3550 + $0x92] sm:$0xff]
    %v5208 = vld [vmem:[%s3550 + $0x9a] sm:$0xff]
    %v5209 = vld [vmem:[%s3550 + $0xaa] sm:$0xff]
    %v5210 = vld [vmem:[%s3550 + $0xb2] sm:$0xff]
    %v5211 = vld [vmem:[%s3550 + $0xc2] sm:$0xff]
    %v5212 = vld [vmem:[%s3550 + $0xca] sm:$0xff]
    %v5213 = vld [vmem:[%s3550 + $0xda] sm:$0xff]
    %v5214 = vld [vmem:[%s3550 + $0xe2] sm:$0xff]
    %v5215 = vld [vmem:[%s3550 + $0xf2] sm:$0xff]
    %v5216 = vld [vmem:[%s3550 + $0xfa] sm:$0xff]
    %v5217 = vld [vmem:[%s3550 + $0x10a] sm:$0xff]
    %v5218 = vld [vmem:[%s3550 + $0x112] sm:$0xff]
    %v5219 = vld [vmem:[%s3550 + $0x122] sm:$0xff]
    %v5220 = vld [vmem:[%s3550 + $0x12a] sm:$0xff]
    %v5221 = vld [vmem:[%s3550 + $0x13a] sm:$0xff]
    %v5222 = vld [vmem:[%s3550 + $0x142] sm:$0xff]
    %v5223 = vld [vmem:[%s3550 + $0x152] sm:$0xff]
    %v5224 = vld [vmem:[%s3550 + $0x15a] sm:$0xff]
    %v5225 = vld [vmem:[%s3550 + $0x16a] sm:$0xff]
    %v5226 = vld [vmem:[%s3550 + $0x172] sm:$0xff]
    %v5227 = vld [vmem:[%s3550 + $0x1b2] sm:$0xff]
    %v5228 = vld [vmem:[%s3550 + $0x1ba] sm:$0xff]
    %v5229 = vld [vmem:[%s3550 + $0x1ca] sm:$0xff]
    %v5230 = vld [vmem:[%s3550 + $0x1d2] sm:$0xff]
    %v5231 = vld [vmem:[%s3550 + $0x1e2] sm:$0xff]
    %v5232 = vld [vmem:[%s3550 + $0x1ea] sm:$0xff]
    %v5233 = vld [vmem:[%s3550 + $0x1fa] sm:$0xff]
    %v5234 = vld [vmem:[%s3550 + $0x202] sm:$0xff]
    %v5235 = vld [vmem:[%s3550 + $0x212] sm:$0xff]
    %v5236 = vld [vmem:[%s3550 + $0x21a] sm:$0xff]
    %v5237 = vld [vmem:[%s3550 + $0x22a] sm:$0xff]
    %v5238 = vld [vmem:[%s3550 + $0x232] sm:$0xff]
    %v5239 = vld [vmem:[%s3550 + $0x242] sm:$0xff]
    %v5240 = vld [vmem:[%s3550 + $0x24a] sm:$0xff]
    %v5241 = vld [vmem:[%s3550 + $0x25a] sm:$0xff]
    %v5242 = vld [vmem:[%s3550 + $0x262] sm:$0xff]
    %v5243 = vld [vmem:[%s3550 + $0x272] sm:$0xff]
    %v5244 = vld [vmem:[%s3550 + $0x27a] sm:$0xff]
    %v5245 = vld [vmem:[%s3550 + $0x28a] sm:$0xff]
    %v5246 = vld [vmem:[%s3550 + $0x292] sm:$0xff]
    %v5247 = vld [vmem:[%s3550 + $0x2a2] sm:$0xff]
    %v5248 = vld [vmem:[%s3550 + $0x2aa] sm:$0xff]
    %v5249 = vld [vmem:[%s3550 + $0x2ba] sm:$0xff]
    %v5250 = vld [vmem:[%s3550 + $0x2c2] sm:$0xff]
    %v5251 = vld [vmem:[%s3550 + $0x2d2] sm:$0xff]
    %v5252 = vld [vmem:[%s3550 + $0x2da] sm:$0xff]
    %v5253 = vld [vmem:[%s3550 + $0x2ea] sm:$0xff]
    %v5254 = vld [vmem:[%s3550 + $0x2f2] sm:$0xff]
    %v5255 = vld [vmem:[%s3550 + $0x302] sm:$0xff]
    %v5256 = vld [vmem:[%s3550 + $0x30a] sm:$0xff]
    %v5257 = vld [vmem:[%s3550 + $0x31a] sm:$0xff]
    %v5258 = vld [vmem:[%s3550 + $0x322] sm:$0xff]
    %v5259 = vld [vmem:[%s5 + $0x8] sm:$0x1]
    %v5260 = vperm.slane %v5259, 0
    %v5261 = vmul.f32 %v5195, %v5260
    %v5262 = vmul.f32 %v5196, %v5260
    %v5263 = vmul.f32 %v5197, %v5260
    %v5264 = vmul.f32 %v5198, %v5260
    %v5265 = vmul.f32 %v5199, %v5260
    %v5266 = vmul.f32 %v5200, %v5260
    %v5267 = vmul.f32 %v5201, %v5260
    %v5268 = vmul.f32 %v5202, %v5260
    %v5269 = vmul.f32 %v5203, %v5260
    %v5270 = vmul.f32 %v5204, %v5260
    %v5271 = vmul.f32 %v5205, %v5260
    %v5272 = vmul.f32 %v5206, %v5260
    %v5273 = vmul.f32 %v5207, %v5260
    %v5274 = vmul.f32 %v5208, %v5260
    %v5275 = vmul.f32 %v5209, %v5260
    %v5276 = vmul.f32 %v5210, %v5260
    %v5277 = vmul.f32 %v5211, %v5260
    %v5278 = vmul.f32 %v5212, %v5260
    %v5279 = vmul.f32 %v5213, %v5260
    %v5280 = vmul.f32 %v5214, %v5260
    %v5281 = vmul.f32 %v5215, %v5260
    %v5282 = vmul.f32 %v5216, %v5260
    %v5283 = vmul.f32 %v5217, %v5260
    %v5284 = vmul.f32 %v5218, %v5260
    %v5285 = vmul.f32 %v5219, %v5260
    %v5286 = vmul.f32 %v5220, %v5260
    %v5287 = vmul.f32 %v5221, %v5260
    %v5288 = vmul.f32 %v5222, %v5260
    %v5289 = vmul.f32 %v5223, %v5260
    %v5290 = vmul.f32 %v5224, %v5260
    %v5291 = vmul.f32 %v5225, %v5260
    %v5292 = vmul.f32 %v5226, %v5260
    %v5293 = vmul.f32 %v5227, %v5260
    %v5294 = vmul.f32 %v5228, %v5260
    %v5295 = vmul.f32 %v5229, %v5260
    %v5296 = vmul.f32 %v5230, %v5260
    %v5297 = vmul.f32 %v5231, %v5260
    %v5298 = vmul.f32 %v5232, %v5260
    %v5299 = vmul.f32 %v5233, %v5260
    %v5300 = vmul.f32 %v5234, %v5260
    %v5301 = vmul.f32 %v5235, %v5260
    %v5302 = vmul.f32 %v5236, %v5260
    %v5303 = vmul.f32 %v5237, %v5260
    %v5304 = vmul.f32 %v5238, %v5260
    %v5305 = vmul.f32 %v5239, %v5260
    %v5306 = vmul.f32 %v5240, %v5260
    %v5307 = vmul.f32 %v5241, %v5260
    %v5308 = vmul.f32 %v5242, %v5260
    %v5309 = vmul.f32 %v5243, %v5260
    %v5310 = vmul.f32 %v5244, %v5260
    %v5311 = vmul.f32 %v5245, %v5260
    %v5312 = vmul.f32 %v5246, %v5260
    %v5313 = vmul.f32 %v5247, %v5260
    %v5314 = vmul.f32 %v5248, %v5260
    %v5315 = vmul.f32 %v5249, %v5260
    %v5316 = vmul.f32 %v5250, %v5260
    %v5317 = vmul.f32 %v5251, %v5260
    %v5318 = vmul.f32 %v5252, %v5260
    %v5319 = vmul.f32 %v5253, %v5260
    %v5320 = vmul.f32 %v5254, %v5260
    %v5321 = vmul.f32 %v5255, %v5260
    %v5322 = vmul.f32 %v5256, %v5260
    %v5323 = vmul.f32 %v5257, %v5260
    %v5324 = vmul.f32 %v5258, %v5260
    %v5325 = vadd.f32 %v5131, %v5261
    %v5326 = vadd.f32 %v5132, %v5262
    %v5327 = vadd.f32 %v5133, %v5263
    %v5328 = vadd.f32 %v5134, %v5264
    %v5329 = vadd.f32 %v5135, %v5265
    %v5330 = vadd.f32 %v5136, %v5266
    %v5331 = vadd.f32 %v5137, %v5267
    %v5332 = vadd.f32 %v5138, %v5268
    %v5333 = vadd.f32 %v5139, %v5269
    %v5334 = vadd.f32 %v5140, %v5270
    %v5335 = vadd.f32 %v5141, %v5271
    %v5336 = vadd.f32 %v5142, %v5272
    %v5337 = vadd.f32 %v5143, %v5273
    %v5338 = vadd.f32 %v5144, %v5274
    %v5339 = vadd.f32 %v5145, %v5275
    %v5340 = vadd.f32 %v5146, %v5276
    %v5341 = vadd.f32 %v5147, %v5277
    %v5342 = vadd.f32 %v5148, %v5278
    %v5343 = vadd.f32 %v5149, %v5279
    %v5344 = vadd.f32 %v5150, %v5280
    %v5345 = vadd.f32 %v5151, %v5281
    %v5346 = vadd.f32 %v5152, %v5282
    %v5347 = vadd.f32 %v5153, %v5283
    %v5348 = vadd.f32 %v5154, %v5284
    %v5349 = vadd.f32 %v5155, %v5285
    %v5350 = vadd.f32 %v5156, %v5286
    %v5351 = vadd.f32 %v5157, %v5287
    %v5352 = vadd.f32 %v5158, %v5288
    %v5353 = vadd.f32 %v5159, %v5289
    %v5354 = vadd.f32 %v5160, %v5290
    %v5355 = vadd.f32 %v5161, %v5291
    %v5356 = vadd.f32 %v5162, %v5292
    %v5357 = vadd.f32 %v5163, %v5293
    %v5358 = vadd.f32 %v5164, %v5294
    %v5359 = vadd.f32 %v5165, %v5295
    %v5360 = vadd.f32 %v5166, %v5296
    %v5361 = vadd.f32 %v5167, %v5297
    %v5362 = vadd.f32 %v5168, %v5298
    %v5363 = vadd.f32 %v5169, %v5299
    %v5364 = vadd.f32 %v5170, %v5300
    %v5365 = vadd.f32 %v5171, %v5301
    %v5366 = vadd.f32 %v5172, %v5302
    %v5367 = vadd.f32 %v5173, %v5303
    %v5368 = vadd.f32 %v5174, %v5304
    %v5369 = vadd.f32 %v5175, %v5305
    %v5370 = vadd.f32 %v5176, %v5306
    %v5371 = vadd.f32 %v5177, %v5307
    %v5372 = vadd.f32 %v5178, %v5308
    %v5373 = vadd.f32 %v5179, %v5309
    %v5374 = vadd.f32 %v5180, %v5310
    %v5375 = vadd.f32 %v5181, %v5311
    %v5376 = vadd.f32 %v5182, %v5312
    %v5377 = vadd.f32 %v5183, %v5313
    %v5378 = vadd.f32 %v5184, %v5314
    %v5379 = vadd.f32 %v5185, %v5315
    %v5380 = vadd.f32 %v5186, %v5316
    %v5381 = vadd.f32 %v5187, %v5317
    %v5382 = vadd.f32 %v5188, %v5318
    %v5383 = vadd.f32 %v5189, %v5319
    %v5384 = vadd.f32 %v5190, %v5320
    %v5385 = vadd.f32 %v5191, %v5321
    %v5386 = vadd.f32 %v5192, %v5322
    %v5387 = vadd.f32 %v5193, %v5323
    %v5388 = vadd.f32 %v5194, %v5324
    %v5389 = vld [vmem:[%s6] sm:$0x1]
    %v5391 = vperm.slane %v5389, 0
    %v5393 = vadd.f32 %v5325, %v5391
    %v5394 = vadd.f32 %v5326, %v5391
    %v5395 = vadd.f32 %v5327, %v5391
    %v5396 = vadd.f32 %v5328, %v5391
    %v5397 = vadd.f32 %v5329, %v5391
    %v5398 = vadd.f32 %v5330, %v5391
    %v5399 = vadd.f32 %v5331, %v5391
    %v5400 = vadd.f32 %v5332, %v5391
    %v5401 = vadd.f32 %v5333, %v5391
    %v5402 = vadd.f32 %v5334, %v5391
    %v5403 = vadd.f32 %v5335, %v5391
    %v5404 = vadd.f32 %v5336, %v5391
    %v5405 = vadd.f32 %v5337, %v5391
    %v5406 = vadd.f32 %v5338, %v5391
    %v5407 = vadd.f32 %v5339, %v5391
    %v5408 = vadd.f32 %v5340, %v5391
    %v5409 = vadd.f32 %v5341, %v5391
    %v5410 = vadd.f32 %v5342, %v5391
    %v5411 = vadd.f32 %v5343, %v5391
    %v5412 = vadd.f32 %v5344, %v5391
    %v5413 = vadd.f32 %v5345, %v5391
    %v5414 = vadd.f32 %v5346, %v5391
    %v5415 = vadd.f32 %v5347, %v5391
    %v5416 = vadd.f32 %v5348, %v5391
    %v5417 = vadd.f32 %v5349, %v5391
    %v5418 = vadd.f32 %v5350, %v5391
    %v5419 = vadd.f32 %v5351, %v5391
    %v5420 = vadd.f32 %v5352, %v5391
    %v5421 = vadd.f32 %v5353, %v5391
    %v5422 = vadd.f32 %v5354, %v5391
    %v5423 = vadd.f32 %v5355, %v5391
    %v5424 = vadd.f32 %v5356, %v5391
    %v5425 = vadd.f32 %v5357, %v5391
    %v5426 = vadd.f32 %v5358, %v5391
    %v5427 = vadd.f32 %v5359, %v5391
    %v5428 = vadd.f32 %v5360, %v5391
    %v5429 = vadd.f32 %v5361, %v5391
    %v5430 = vadd.f32 %v5362, %v5391
    %v5431 = vadd.f32 %v5363, %v5391
    %v5432 = vadd.f32 %v5364, %v5391
    %v5433 = vadd.f32 %v5365, %v5391
    %v5434 = vadd.f32 %v5366, %v5391
    %v5435 = vadd.f32 %v5367, %v5391
    %v5436 = vadd.f32 %v5368, %v5391
    %v5437 = vadd.f32 %v5369, %v5391
    %v5438 = vadd.f32 %v5370, %v5391
    %v5439 = vadd.f32 %v5371, %v5391
    %v5440 = vadd.f32 %v5372, %v5391
    %v5441 = vadd.f32 %v5373, %v5391
    %v5442 = vadd.f32 %v5374, %v5391
    %v5443 = vadd.f32 %v5375, %v5391
    %v5444 = vadd.f32 %v5376, %v5391
    %v5445 = vadd.f32 %v5377, %v5391
    %v5446 = vadd.f32 %v5378, %v5391
    %v5447 = vadd.f32 %v5379, %v5391
    %v5448 = vadd.f32 %v5380, %v5391
    %v5449 = vadd.f32 %v5381, %v5391
    %v5450 = vadd.f32 %v5382, %v5391
    %v5451 = vadd.f32 %v5383, %v5391
    %v5452 = vadd.f32 %v5384, %v5391
    %v5453 = vadd.f32 %v5385, %v5391
    %v5454 = vadd.f32 %v5386, %v5391
    %v5455 = vadd.f32 %v5387, %v5391
    %v5456 = vadd.f32 %v5388, %v5391
    %v5457 = vxor.u32 %v5393, 2147483648
    %v5458 = vxor.u32 %v5394, 2147483648
    %v5459 = vxor.u32 %v5395, 2147483648
    %v5460 = vxor.u32 %v5396, 2147483648
    %v5461 = vxor.u32 %v5397, 2147483648
    %v5462 = vxor.u32 %v5398, 2147483648
    %v5463 = vxor.u32 %v5399, 2147483648
    %v5464 = vxor.u32 %v5400, 2147483648
    %v5465 = vxor.u32 %v5401, 2147483648
    %v5466 = vxor.u32 %v5402, 2147483648
    %v5467 = vxor.u32 %v5403, 2147483648
    %v5468 = vxor.u32 %v5404, 2147483648
    %v5469 = vxor.u32 %v5405, 2147483648
    %v5470 = vxor.u32 %v5406, 2147483648
    %v5471 = vxor.u32 %v5407, 2147483648
    %v5472 = vxor.u32 %v5408, 2147483648
    %v5473 = vxor.u32 %v5409, 2147483648
    %v5474 = vxor.u32 %v5410, 2147483648
    %v5475 = vxor.u32 %v5411, 2147483648
    %v5476 = vxor.u32 %v5412, 2147483648
    %v5477 = vxor.u32 %v5413, 2147483648
    %v5478 = vxor.u32 %v5414, 2147483648
    %v5479 = vxor.u32 %v5415, 2147483648
    %v5480 = vxor.u32 %v5416, 2147483648
    %v5481 = vxor.u32 %v5417, 2147483648
    %v5482 = vxor.u32 %v5418, 2147483648
    %v5483 = vxor.u32 %v5419, 2147483648
    %v5484 = vxor.u32 %v5420, 2147483648
    %v5485 = vxor.u32 %v5421, 2147483648
    %v5486 = vxor.u32 %v5422, 2147483648
    %v5487 = vxor.u32 %v5423, 2147483648
    %v5488 = vxor.u32 %v5424, 2147483648
    %v5489 = vxor.u32 %v5425, 2147483648
    %v5490 = vxor.u32 %v5426, 2147483648
    %v5491 = vxor.u32 %v5427, 2147483648
    %v5492 = vxor.u32 %v5428, 2147483648
    %v5493 = vxor.u32 %v5429, 2147483648
    %v5494 = vxor.u32 %v5430, 2147483648
    %v5495 = vxor.u32 %v5431, 2147483648
    %v5496 = vxor.u32 %v5432, 2147483648
    %v5497 = vxor.u32 %v5433, 2147483648
    %v5498 = vxor.u32 %v5434, 2147483648
    %v5499 = vxor.u32 %v5435, 2147483648
    %v5500 = vxor.u32 %v5436, 2147483648
    %v5501 = vxor.u32 %v5437, 2147483648
    %v5502 = vxor.u32 %v5438, 2147483648
    %v5503 = vxor.u32 %v5439, 2147483648
    %v5504 = vxor.u32 %v5440, 2147483648
    %v5505 = vxor.u32 %v5441, 2147483648
    %v5506 = vxor.u32 %v5442, 2147483648
    %v5507 = vxor.u32 %v5443, 2147483648
    %v5508 = vxor.u32 %v5444, 2147483648
    %v5509 = vxor.u32 %v5445, 2147483648
    %v5510 = vxor.u32 %v5446, 2147483648
    %v5511 = vxor.u32 %v5447, 2147483648
    %v5512 = vxor.u32 %v5448, 2147483648
    %v5513 = vxor.u32 %v5449, 2147483648
    %v5514 = vxor.u32 %v5450, 2147483648
    %v5515 = vxor.u32 %v5451, 2147483648
    %v5516 = vxor.u32 %v5452, 2147483648
    %v5517 = vxor.u32 %v5453, 2147483648
    %v5518 = vxor.u32 %v5454, 2147483648
    %v5519 = vxor.u32 %v5455, 2147483648
    %v5520 = vxor.u32 %v5456, 2147483648
    %v5521 = vmul.f32 %v5457, 1.442695
    %v5522 = vpow.pop %v5521
    %v5523 = vmul.f32 %v5458, 1.442695
    %v5524 = vpow.pop %v5523
    %v5525 = vmul.f32 %v5459, 1.442695
    %v5526 = vpow.pop %v5525
    %v5527 = vmul.f32 %v5460, 1.442695
    %v5528 = vpow.pop %v5527
    %v5529 = vmul.f32 %v5461, 1.442695
    %v5530 = vpow.pop %v5529
    %v5531 = vmul.f32 %v5462, 1.442695
    %v5532 = vpow.pop %v5531
    %v5533 = vmul.f32 %v5463, 1.442695
    %v5534 = vpow.pop %v5533
    %v5535 = vmul.f32 %v5464, 1.442695
    %v5536 = vpow.pop %v5535
    %v5537 = vmul.f32 %v5465, 1.442695
    %v5538 = vpow.pop %v5537
    %v5539 = vmul.f32 %v5466, 1.442695
    %v5540 = vpow.pop %v5539
    %v5541 = vmul.f32 %v5467, 1.442695
    %v5542 = vpow.pop %v5541
    %v5543 = vmul.f32 %v5468, 1.442695
    %v5544 = vpow.pop %v5543
    %v5545 = vmul.f32 %v5469, 1.442695
    %v5546 = vpow.pop %v5545
    %v5547 = vmul.f32 %v5470, 1.442695
    %v5548 = vpow.pop %v5547
    %v5549 = vmul.f32 %v5471, 1.442695
    %v5550 = vpow.pop %v5549
    %v5551 = vmul.f32 %v5472, 1.442695
    %v5552 = vpow.pop %v5551
    %v5553 = vmul.f32 %v5473, 1.442695
    %v5554 = vpow.pop %v5553
    %v5555 = vmul.f32 %v5474, 1.442695
    %v5556 = vpow.pop %v5555
    %v5557 = vmul.f32 %v5475, 1.442695
    %v5558 = vpow.pop %v5557
    %v5559 = vmul.f32 %v5476, 1.442695
    %v5560 = vpow.pop %v5559
    %v5561 = vmul.f32 %v5477, 1.442695
    %v5562 = vpow.pop %v5561
    %v5563 = vmul.f32 %v5478, 1.442695
    %v5564 = vpow.pop %v5563
    %v5565 = vmul.f32 %v5479, 1.442695
    %v5566 = vpow.pop %v5565
    %v5567 = vmul.f32 %v5480, 1.442695
    %v5568 = vpow.pop %v5567
    %v5569 = vmul.f32 %v5481, 1.442695
    %v5570 = vpow.pop %v5569
    %v5571 = vmul.f32 %v5482, 1.442695
    %v5572 = vpow.pop %v5571
    %v5573 = vmul.f32 %v5483, 1.442695
    %v5574 = vpow.pop %v5573
    %v5575 = vmul.f32 %v5484, 1.442695
    %v5576 = vpow.pop %v5575
    %v5577 = vmul.f32 %v5485, 1.442695
    %v5578 = vpow.pop %v5577
    %v5579 = vmul.f32 %v5486, 1.442695
    %v5580 = vpow.pop %v5579
    %v5581 = vmul.f32 %v5487, 1.442695
    %v5582 = vpow.pop %v5581
    %v5583 = vmul.f32 %v5488, 1.442695
    %v5584 = vpow.pop %v5583
    %v5585 = vmul.f32 %v5489, 1.442695
    %v5586 = vpow.pop %v5585
    %v5587 = vmul.f32 %v5490, 1.442695
    %v5588 = vpow.pop %v5587
    %v5589 = vmul.f32 %v5491, 1.442695
    %v5590 = vpow.pop %v5589
    %v5591 = vmul.f32 %v5492, 1.442695
    %v5592 = vpow.pop %v5591
    %v5593 = vmul.f32 %v5493, 1.442695
    %v5594 = vpow.pop %v5593
    %v5595 = vmul.f32 %v5494, 1.442695
    %v5596 = vpow.pop %v5595
    %v5597 = vmul.f32 %v5495, 1.442695
    %v5598 = vpow.pop %v5597
    %v5599 = vmul.f32 %v5496, 1.442695
    %v5600 = vpow.pop %v5599
    %v5601 = vmul.f32 %v5497, 1.442695
    %v5602 = vpow.pop %v5601
    %v5603 = vmul.f32 %v5498, 1.442695
    %v5604 = vpow.pop %v5603
    %v5605 = vmul.f32 %v5499, 1.442695
    %v5606 = vpow.pop %v5605
    %v5607 = vmul.f32 %v5500, 1.442695
    %v5608 = vpow.pop %v5607
    %v5609 = vmul.f32 %v5501, 1.442695
    %v5610 = vpow.pop %v5609
    %v5611 = vmul.f32 %v5502, 1.442695
    %v5612 = vpow.pop %v5611
    %v5613 = vmul.f32 %v5503, 1.442695
    %v5614 = vpow.pop %v5613
    %v5615 = vmul.f32 %v5504, 1.442695
    %v5616 = vpow.pop %v5615
    %v5617 = vmul.f32 %v5505, 1.442695
    %v5618 = vpow.pop %v5617
    %v5619 = vmul.f32 %v5506, 1.442695
    %v5620 = vpow.pop %v5619
    %v5621 = vmul.f32 %v5507, 1.442695
    %v5622 = vpow.pop %v5621
    %v5623 = vmul.f32 %v5508, 1.442695
    %v5624 = vpow.pop %v5623
    %v5625 = vmul.f32 %v5509, 1.442695
    %v5626 = vpow.pop %v5625
    %v5627 = vmul.f32 %v5510, 1.442695
    %v5628 = vpow.pop %v5627
    %v5629 = vmul.f32 %v5511, 1.442695
    %v5630 = vpow.pop %v5629
    %v5631 = vmul.f32 %v5512, 1.442695
    %v5632 = vpow.pop %v5631
    %v5633 = vmul.f32 %v5513, 1.442695
    %v5634 = vpow.pop %v5633
    %v5635 = vmul.f32 %v5514, 1.442695
    %v5636 = vpow.pop %v5635
    %v5637 = vmul.f32 %v5515, 1.442695
    %v5638 = vpow.pop %v5637
    %v5639 = vmul.f32 %v5516, 1.442695
    %v5640 = vpow.pop %v5639
    %v5641 = vmul.f32 %v5517, 1.442695
    %v5642 = vpow.pop %v5641
    %v5643 = vmul.f32 %v5518, 1.442695
    %v5644 = vpow.pop %v5643
    %v5645 = vmul.f32 %v5519, 1.442695
    %v5646 = vpow.pop %v5645
    %v5647 = vmul.f32 %v5520, 1.442695
    %v5648 = vpow.pop %v5647
    %v5649 = vadd.f32 %v5522, 1.0
    %v5650 = vadd.f32 %v5524, 1.0
    %v5651 = vadd.f32 %v5526, 1.0
    %v5652 = vadd.f32 %v5528, 1.0
    %v5653 = vadd.f32 %v5530, 1.0
    %v5654 = vadd.f32 %v5532, 1.0
    %v5655 = vadd.f32 %v5534, 1.0
    %v5656 = vadd.f32 %v5536, 1.0
    %v5657 = vadd.f32 %v5538, 1.0
    %v5658 = vadd.f32 %v5540, 1.0
    %v5659 = vadd.f32 %v5542, 1.0
    %v5660 = vadd.f32 %v5544, 1.0
    %v5661 = vadd.f32 %v5546, 1.0
    %v5662 = vadd.f32 %v5548, 1.0
    %v5663 = vadd.f32 %v5550, 1.0
    %v5664 = vadd.f32 %v5552, 1.0
    %v5665 = vadd.f32 %v5554, 1.0
    %v5666 = vadd.f32 %v5556, 1.0
    %v5667 = vadd.f32 %v5558, 1.0
    %v5668 = vadd.f32 %v5560, 1.0
    %v5669 = vadd.f32 %v5562, 1.0
    %v5670 = vadd.f32 %v5564, 1.0
    %v5671 = vadd.f32 %v5566, 1.0
    %v5672 = vadd.f32 %v5568, 1.0
    %v5673 = vadd.f32 %v5570, 1.0
    %v5674 = vadd.f32 %v5572, 1.0
    %v5675 = vadd.f32 %v5574, 1.0
    %v5676 = vadd.f32 %v5576, 1.0
    %v5677 = vadd.f32 %v5578, 1.0
    %v5678 = vadd.f32 %v5580, 1.0
    %v5679 = vadd.f32 %v5582, 1.0
    %v5680 = vadd.f32 %v5584, 1.0
    %v5681 = vadd.f32 %v5586, 1.0
    %v5682 = vadd.f32 %v5588, 1.0
    %v5683 = vadd.f32 %v5590, 1.0
    %v5684 = vadd.f32 %v5592, 1.0
    %v5685 = vadd.f32 %v5594, 1.0
    %v5686 = vadd.f32 %v5596, 1.0
    %v5687 = vadd.f32 %v5598, 1.0
    %v5688 = vadd.f32 %v5600, 1.0
    %v5689 = vadd.f32 %v5602, 1.0
    %v5690 = vadd.f32 %v5604, 1.0
    %v5691 = vadd.f32 %v5606, 1.0
    %v5692 = vadd.f32 %v5608, 1.0
    %v5693 = vadd.f32 %v5610, 1.0
    %v5694 = vadd.f32 %v5612, 1.0
    %v5695 = vadd.f32 %v5614, 1.0
    %v5696 = vadd.f32 %v5616, 1.0
    %v5697 = vadd.f32 %v5618, 1.0
    %v5698 = vadd.f32 %v5620, 1.0
    %v5699 = vadd.f32 %v5622, 1.0
    %v5700 = vadd.f32 %v5624, 1.0
    %v5701 = vadd.f32 %v5626, 1.0
    %v5702 = vadd.f32 %v5628, 1.0
    %v5703 = vadd.f32 %v5630, 1.0
    %v5704 = vadd.f32 %v5632, 1.0
    %v5705 = vadd.f32 %v5634, 1.0
    %v5706 = vadd.f32 %v5636, 1.0
    %v5707 = vadd.f32 %v5638, 1.0
    %v5708 = vadd.f32 %v5640, 1.0
    %v5709 = vadd.f32 %v5642, 1.0
    %v5710 = vadd.f32 %v5644, 1.0
    %v5711 = vadd.f32 %v5646, 1.0
    %v5712 = vadd.f32 %v5648, 1.0
    %v5713 = vrcp.pop %v5649
    %v5714 = vmul.f32 %v5649, %v5713
    %v5715 = vsub.f32 1.0, %v5714
    %v5716 = vmul.f32 %v5713, %v5715
    %v5717 = vadd.f32 %v5713, %v5716
    %vm5718 = vweird.f32 %v5649
    %vm5719 = vweird.f32 %v5713
    %vm5720 = vmor %vm5718, %vm5719
    %v5721 = vsel %vm5720, %v5713, %v5717
    %v5722 = vand.u32 2147483647, %v5649
    %vm5723 = vcmp.eq.f32.partialorder %v5722, 8.507059e+37
    %v5724 = vand.u32 %v5649, 2147483648
    %v5725 = vor.u32 1.1754944e-38, %v5724
    %v5726 = vsel %vm5723, %v5725, %v5721
    %v5727 = vmul.f32 1.0, %v5726
    %v5728 = vrcp.pop %v5650
    %v5729 = vmul.f32 %v5650, %v5728
    %v5730 = vsub.f32 1.0, %v5729
    %v5731 = vmul.f32 %v5728, %v5730
    %v5732 = vadd.f32 %v5728, %v5731
    %vm5733 = vweird.f32 %v5650
    %vm5734 = vweird.f32 %v5728
    %vm5735 = vmor %vm5733, %vm5734
    %v5736 = vsel %vm5735, %v5728, %v5732
    %v5737 = vand.u32 2147483647, %v5650
    %vm5738 = vcmp.eq.f32.partialorder %v5737, 8.507059e+37
    %v5739 = vand.u32 %v5650, 2147483648
    %v5740 = vor.u32 1.1754944e-38, %v5739
    %v5741 = vsel %vm5738, %v5740, %v5736
    %v5742 = vmul.f32 1.0, %v5741
    %v5743 = vrcp.pop %v5651
    %v5744 = vmul.f32 %v5651, %v5743
    %v5745 = vsub.f32 1.0, %v5744
    %v5746 = vmul.f32 %v5743, %v5745
    %v5747 = vadd.f32 %v5743, %v5746
    %vm5748 = vweird.f32 %v5651
    %vm5749 = vweird.f32 %v5743
    %vm5750 = vmor %vm5748, %vm5749
    %v5751 = vsel %vm5750, %v5743, %v5747
    %v5752 = vand.u32 2147483647, %v5651
    %vm5753 = vcmp.eq.f32.partialorder %v5752, 8.507059e+37
    %v5754 = vand.u32 %v5651, 2147483648
    %v5755 = vor.u32 1.1754944e-38, %v5754
    %v5756 = vsel %vm5753, %v5755, %v5751
    %v5757 = vmul.f32 1.0, %v5756
    %v5758 = vrcp.pop %v5652
    %v5759 = vmul.f32 %v5652, %v5758
    %v5760 = vsub.f32 1.0, %v5759
    %v5761 = vmul.f32 %v5758, %v5760
    %v5762 = vadd.f32 %v5758, %v5761
    %vm5763 = vweird.f32 %v5652
    %vm5764 = vweird.f32 %v5758
    %vm5765 = vmor %vm5763, %vm5764
    %v5766 = vsel %vm5765, %v5758, %v5762
    %v5767 = vand.u32 2147483647, %v5652
    %vm5768 = vcmp.eq.f32.partialorder %v5767, 8.507059e+37
    %v5769 = vand.u32 %v5652, 2147483648
    %v5770 = vor.u32 1.1754944e-38, %v5769
    %v5771 = vsel %vm5768, %v5770, %v5766
    %v5772 = vmul.f32 1.0, %v5771
    %v5773 = vrcp.pop %v5653
    %v5774 = vmul.f32 %v5653, %v5773
    %v5775 = vsub.f32 1.0, %v5774
    %v5776 = vmul.f32 %v5773, %v5775
    %v5777 = vadd.f32 %v5773, %v5776
    %vm5778 = vweird.f32 %v5653
    %vm5779 = vweird.f32 %v5773
    %vm5780 = vmor %vm5778, %vm5779
    %v5781 = vsel %vm5780, %v5773, %v5777
    %v5782 = vand.u32 2147483647, %v5653
    %vm5783 = vcmp.eq.f32.partialorder %v5782, 8.507059e+37
    %v5784 = vand.u32 %v5653, 2147483648
    %v5785 = vor.u32 1.1754944e-38, %v5784
    %v5786 = vsel %vm5783, %v5785, %v5781
    %v5787 = vmul.f32 1.0, %v5786
    %v5788 = vrcp.pop %v5654
    %v5789 = vmul.f32 %v5654, %v5788
    %v5790 = vsub.f32 1.0, %v5789
    %v5791 = vmul.f32 %v5788, %v5790
    %v5792 = vadd.f32 %v5788, %v5791
    %vm5793 = vweird.f32 %v5654
    %vm5794 = vweird.f32 %v5788
    %vm5795 = vmor %vm5793, %vm5794
    %v5796 = vsel %vm5795, %v5788, %v5792
    %v5797 = vand.u32 2147483647, %v5654
    %vm5798 = vcmp.eq.f32.partialorder %v5797, 8.507059e+37
    %v5799 = vand.u32 %v5654, 2147483648
    %v5800 = vor.u32 1.1754944e-38, %v5799
    %v5801 = vsel %vm5798, %v5800, %v5796
    %v5802 = vmul.f32 1.0, %v5801
    %v5803 = vrcp.pop %v5655
    %v5804 = vmul.f32 %v5655, %v5803
    %v5805 = vsub.f32 1.0, %v5804
    %v5806 = vmul.f32 %v5803, %v5805
    %v5807 = vadd.f32 %v5803, %v5806
    %vm5808 = vweird.f32 %v5655
    %vm5809 = vweird.f32 %v5803
    %vm5810 = vmor %vm5808, %vm5809
    %v5811 = vsel %vm5810, %v5803, %v5807
    %v5812 = vand.u32 2147483647, %v5655
    %vm5813 = vcmp.eq.f32.partialorder %v5812, 8.507059e+37
    %v5814 = vand.u32 %v5655, 2147483648
    %v5815 = vor.u32 1.1754944e-38, %v5814
    %v5816 = vsel %vm5813, %v5815, %v5811
    %v5817 = vmul.f32 1.0, %v5816
    %v5818 = vrcp.pop %v5656
    %v5819 = vmul.f32 %v5656, %v5818
    %v5820 = vsub.f32 1.0, %v5819
    %v5821 = vmul.f32 %v5818, %v5820
    %v5822 = vadd.f32 %v5818, %v5821
    %vm5823 = vweird.f32 %v5656
    %vm5824 = vweird.f32 %v5818
    %vm5825 = vmor %vm5823, %vm5824
    %v5826 = vsel %vm5825, %v5818, %v5822
    %v5827 = vand.u32 2147483647, %v5656
    %vm5828 = vcmp.eq.f32.partialorder %v5827, 8.507059e+37
    %v5829 = vand.u32 %v5656, 2147483648
    %v5830 = vor.u32 1.1754944e-38, %v5829
    %v5831 = vsel %vm5828, %v5830, %v5826
    %v5832 = vmul.f32 1.0, %v5831
    %v5833 = vrcp.pop %v5657
    %v5834 = vmul.f32 %v5657, %v5833
    %v5835 = vsub.f32 1.0, %v5834
    %v5836 = vmul.f32 %v5833, %v5835
    %v5837 = vadd.f32 %v5833, %v5836
    %vm5838 = vweird.f32 %v5657
    %vm5839 = vweird.f32 %v5833
    %vm5840 = vmor %vm5838, %vm5839
    %v5841 = vsel %vm5840, %v5833, %v5837
    %v5842 = vand.u32 2147483647, %v5657
    %vm5843 = vcmp.eq.f32.partialorder %v5842, 8.507059e+37
    %v5844 = vand.u32 %v5657, 2147483648
    %v5845 = vor.u32 1.1754944e-38, %v5844
    %v5846 = vsel %vm5843, %v5845, %v5841
    %v5847 = vmul.f32 1.0, %v5846
    %v5848 = vrcp.pop %v5658
    %v5849 = vmul.f32 %v5658, %v5848
    %v5850 = vsub.f32 1.0, %v5849
    %v5851 = vmul.f32 %v5848, %v5850
    %v5852 = vadd.f32 %v5848, %v5851
    %vm5853 = vweird.f32 %v5658
    %vm5854 = vweird.f32 %v5848
    %vm5855 = vmor %vm5853, %vm5854
    %v5856 = vsel %vm5855, %v5848, %v5852
    %v5857 = vand.u32 2147483647, %v5658
    %vm5858 = vcmp.eq.f32.partialorder %v5857, 8.507059e+37
    %v5859 = vand.u32 %v5658, 2147483648
    %v5860 = vor.u32 1.1754944e-38, %v5859
    %v5861 = vsel %vm5858, %v5860, %v5856
    %v5862 = vmul.f32 1.0, %v5861
    %v5863 = vrcp.pop %v5659
    %v5864 = vmul.f32 %v5659, %v5863
    %v5865 = vsub.f32 1.0, %v5864
    %v5866 = vmul.f32 %v5863, %v5865
    %v5867 = vadd.f32 %v5863, %v5866
    %vm5868 = vweird.f32 %v5659
    %vm5869 = vweird.f32 %v5863
    %vm5870 = vmor %vm5868, %vm5869
    %v5871 = vsel %vm5870, %v5863, %v5867
    %v5872 = vand.u32 2147483647, %v5659
    %vm5873 = vcmp.eq.f32.partialorder %v5872, 8.507059e+37
    %v5874 = vand.u32 %v5659, 2147483648
    %v5875 = vor.u32 1.1754944e-38, %v5874
    %v5876 = vsel %vm5873, %v5875, %v5871
    %v5877 = vmul.f32 1.0, %v5876
    %v5878 = vrcp.pop %v5660
    %v5879 = vmul.f32 %v5660, %v5878
    %v5880 = vsub.f32 1.0, %v5879
    %v5881 = vmul.f32 %v5878, %v5880
    %v5882 = vadd.f32 %v5878, %v5881
    %vm5883 = vweird.f32 %v5660
    %vm5884 = vweird.f32 %v5878
    %vm5885 = vmor %vm5883, %vm5884
    %v5886 = vsel %vm5885, %v5878, %v5882
    %v5887 = vand.u32 2147483647, %v5660
    %vm5888 = vcmp.eq.f32.partialorder %v5887, 8.507059e+37
    %v5889 = vand.u32 %v5660, 2147483648
    %v5890 = vor.u32 1.1754944e-38, %v5889
    %v5891 = vsel %vm5888, %v5890, %v5886
    %v5892 = vmul.f32 1.0, %v5891
    %v5893 = vrcp.pop %v5661
    %v5894 = vmul.f32 %v5661, %v5893
    %v5895 = vsub.f32 1.0, %v5894
    %v5896 = vmul.f32 %v5893, %v5895
    %v5897 = vadd.f32 %v5893, %v5896
    %vm5898 = vweird.f32 %v5661
    %vm5899 = vweird.f32 %v5893
    %vm5900 = vmor %vm5898, %vm5899
    %v5901 = vsel %vm5900, %v5893, %v5897
    %v5902 = vand.u32 2147483647, %v5661
    %vm5903 = vcmp.eq.f32.partialorder %v5902, 8.507059e+37
    %v5904 = vand.u32 %v5661, 2147483648
    %v5905 = vor.u32 1.1754944e-38, %v5904
    %v5906 = vsel %vm5903, %v5905, %v5901
    %v5907 = vmul.f32 1.0, %v5906
    %v5908 = vrcp.pop %v5662
    %v5909 = vmul.f32 %v5662, %v5908
    %v5910 = vsub.f32 1.0, %v5909
    %v5911 = vmul.f32 %v5908, %v5910
    %v5912 = vadd.f32 %v5908, %v5911
    %vm5913 = vweird.f32 %v5662
    %vm5914 = vweird.f32 %v5908
    %vm5915 = vmor %vm5913, %vm5914
    %v5916 = vsel %vm5915, %v5908, %v5912
    %v5917 = vand.u32 2147483647, %v5662
    %vm5918 = vcmp.eq.f32.partialorder %v5917, 8.507059e+37
    %v5919 = vand.u32 %v5662, 2147483648
    %v5920 = vor.u32 1.1754944e-38, %v5919
    %v5921 = vsel %vm5918, %v5920, %v5916
    %v5922 = vmul.f32 1.0, %v5921
    %v5923 = vrcp.pop %v5663
    %v5924 = vmul.f32 %v5663, %v5923
    %v5925 = vsub.f32 1.0, %v5924
    %v5926 = vmul.f32 %v5923, %v5925
    %v5927 = vadd.f32 %v5923, %v5926
    %vm5928 = vweird.f32 %v5663
    %vm5929 = vweird.f32 %v5923
    %vm5930 = vmor %vm5928, %vm5929
    %v5931 = vsel %vm5930, %v5923, %v5927
    %v5932 = vand.u32 2147483647, %v5663
    %vm5933 = vcmp.eq.f32.partialorder %v5932, 8.507059e+37
    %v5934 = vand.u32 %v5663, 2147483648
    %v5935 = vor.u32 1.1754944e-38, %v5934
    %v5936 = vsel %vm5933, %v5935, %v5931
    %v5937 = vmul.f32 1.0, %v5936
    %v5938 = vrcp.pop %v5664
    %v5939 = vmul.f32 %v5664, %v5938
    %v5940 = vsub.f32 1.0, %v5939
    %v5941 = vmul.f32 %v5938, %v5940
    %v5942 = vadd.f32 %v5938, %v5941
    %vm5943 = vweird.f32 %v5664
    %vm5944 = vweird.f32 %v5938
    %vm5945 = vmor %vm5943, %vm5944
    %v5946 = vsel %vm5945, %v5938, %v5942
    %v5947 = vand.u32 2147483647, %v5664
    %vm5948 = vcmp.eq.f32.partialorder %v5947, 8.507059e+37
    %v5949 = vand.u32 %v5664, 2147483648
    %v5950 = vor.u32 1.1754944e-38, %v5949
    %v5951 = vsel %vm5948, %v5950, %v5946
    %v5952 = vmul.f32 1.0, %v5951
    %v5953 = vrcp.pop %v5665
    %v5954 = vmul.f32 %v5665, %v5953
    %v5955 = vsub.f32 1.0, %v5954
    %v5956 = vmul.f32 %v5953, %v5955
    %v5957 = vadd.f32 %v5953, %v5956
    %vm5958 = vweird.f32 %v5665
    %vm5959 = vweird.f32 %v5953
    %vm5960 = vmor %vm5958, %vm5959
    %v5961 = vsel %vm5960, %v5953, %v5957
    %v5962 = vand.u32 2147483647, %v5665
    %vm5963 = vcmp.eq.f32.partialorder %v5962, 8.507059e+37
    %v5964 = vand.u32 %v5665, 2147483648
    %v5965 = vor.u32 1.1754944e-38, %v5964
    %v5966 = vsel %vm5963, %v5965, %v5961
    %v5967 = vmul.f32 1.0, %v5966
    %v5968 = vrcp.pop %v5666
    %v5969 = vmul.f32 %v5666, %v5968
    %v5970 = vsub.f32 1.0, %v5969
    %v5971 = vmul.f32 %v5968, %v5970
    %v5972 = vadd.f32 %v5968, %v5971
    %vm5973 = vweird.f32 %v5666
    %vm5974 = vweird.f32 %v5968
    %vm5975 = vmor %vm5973, %vm5974
    %v5976 = vsel %vm5975, %v5968, %v5972
    %v5977 = vand.u32 2147483647, %v5666
    %vm5978 = vcmp.eq.f32.partialorder %v5977, 8.507059e+37
    %v5979 = vand.u32 %v5666, 2147483648
    %v5980 = vor.u32 1.1754944e-38, %v5979
    %v5981 = vsel %vm5978, %v5980, %v5976
    %v5982 = vmul.f32 1.0, %v5981
    %v5983 = vrcp.pop %v5667
    %v5984 = vmul.f32 %v5667, %v5983
    %v5985 = vsub.f32 1.0, %v5984
    %v5986 = vmul.f32 %v5983, %v5985
    %v5987 = vadd.f32 %v5983, %v5986
    %vm5988 = vweird.f32 %v5667
    %vm5989 = vweird.f32 %v5983
    %vm5990 = vmor %vm5988, %vm5989
    %v5991 = vsel %vm5990, %v5983, %v5987
    %v5992 = vand.u32 2147483647, %v5667
    %vm5993 = vcmp.eq.f32.partialorder %v5992, 8.507059e+37
    %v5994 = vand.u32 %v5667, 2147483648
    %v5995 = vor.u32 1.1754944e-38, %v5994
    %v5996 = vsel %vm5993, %v5995, %v5991
    %v5997 = vmul.f32 1.0, %v5996
    %v5998 = vrcp.pop %v5668
    %v5999 = vmul.f32 %v5668, %v5998
    %v6000 = vsub.f32 1.0, %v5999
    %v6001 = vmul.f32 %v5998, %v6000
    %v6002 = vadd.f32 %v5998, %v6001
    %vm6003 = vweird.f32 %v5668
    %vm6004 = vweird.f32 %v5998
    %vm6005 = vmor %vm6003, %vm6004
    %v6006 = vsel %vm6005, %v5998, %v6002
    %v6007 = vand.u32 2147483647, %v5668
    %vm6008 = vcmp.eq.f32.partialorder %v6007, 8.507059e+37
    %v6009 = vand.u32 %v5668, 2147483648
    %v6010 = vor.u32 1.1754944e-38, %v6009
    %v6011 = vsel %vm6008, %v6010, %v6006
    %v6012 = vmul.f32 1.0, %v6011
    %v6013 = vrcp.pop %v5669
    %v6014 = vmul.f32 %v5669, %v6013
    %v6015 = vsub.f32 1.0, %v6014
    %v6016 = vmul.f32 %v6013, %v6015
    %v6017 = vadd.f32 %v6013, %v6016
    %vm6018 = vweird.f32 %v5669
    %vm6019 = vweird.f32 %v6013
    %vm6020 = vmor %vm6018, %vm6019
    %v6021 = vsel %vm6020, %v6013, %v6017
    %v6022 = vand.u32 2147483647, %v5669
    %vm6023 = vcmp.eq.f32.partialorder %v6022, 8.507059e+37
    %v6024 = vand.u32 %v5669, 2147483648
    %v6025 = vor.u32 1.1754944e-38, %v6024
    %v6026 = vsel %vm6023, %v6025, %v6021
    %v6027 = vmul.f32 1.0, %v6026
    %v6028 = vrcp.pop %v5670
    %v6029 = vmul.f32 %v5670, %v6028
    %v6030 = vsub.f32 1.0, %v6029
    %v6031 = vmul.f32 %v6028, %v6030
    %v6032 = vadd.f32 %v6028, %v6031
    %vm6033 = vweird.f32 %v5670
    %vm6034 = vweird.f32 %v6028
    %vm6035 = vmor %vm6033, %vm6034
    %v6036 = vsel %vm6035, %v6028, %v6032
    %v6037 = vand.u32 2147483647, %v5670
    %vm6038 = vcmp.eq.f32.partialorder %v6037, 8.507059e+37
    %v6039 = vand.u32 %v5670, 2147483648
    %v6040 = vor.u32 1.1754944e-38, %v6039
    %v6041 = vsel %vm6038, %v6040, %v6036
    %v6042 = vmul.f32 1.0, %v6041
    %v6043 = vrcp.pop %v5671
    %v6044 = vmul.f32 %v5671, %v6043
    %v6045 = vsub.f32 1.0, %v6044
    %v6046 = vmul.f32 %v6043, %v6045
    %v6047 = vadd.f32 %v6043, %v6046
    %vm6048 = vweird.f32 %v5671
    %vm6049 = vweird.f32 %v6043
    %vm6050 = vmor %vm6048, %vm6049
    %v6051 = vsel %vm6050, %v6043, %v6047
    %v6052 = vand.u32 2147483647, %v5671
    %vm6053 = vcmp.eq.f32.partialorder %v6052, 8.507059e+37
    %v6054 = vand.u32 %v5671, 2147483648
    %v6055 = vor.u32 1.1754944e-38, %v6054
    %v6056 = vsel %vm6053, %v6055, %v6051
    %v6057 = vmul.f32 1.0, %v6056
    %v6058 = vrcp.pop %v5672
    %v6059 = vmul.f32 %v5672, %v6058
    %v6060 = vsub.f32 1.0, %v6059
    %v6061 = vmul.f32 %v6058, %v6060
    %v6062 = vadd.f32 %v6058, %v6061
    %vm6063 = vweird.f32 %v5672
    %vm6064 = vweird.f32 %v6058
    %vm6065 = vmor %vm6063, %vm6064
    %v6066 = vsel %vm6065, %v6058, %v6062
    %v6067 = vand.u32 2147483647, %v5672
    %vm6068 = vcmp.eq.f32.partialorder %v6067, 8.507059e+37
    %v6069 = vand.u32 %v5672, 2147483648
    %v6070 = vor.u32 1.1754944e-38, %v6069
    %v6071 = vsel %vm6068, %v6070, %v6066
    %v6072 = vmul.f32 1.0, %v6071
    %v6073 = vrcp.pop %v5673
    %v6074 = vmul.f32 %v5673, %v6073
    %v6075 = vsub.f32 1.0, %v6074
    %v6076 = vmul.f32 %v6073, %v6075
    %v6077 = vadd.f32 %v6073, %v6076
    %vm6078 = vweird.f32 %v5673
    %vm6079 = vweird.f32 %v6073
    %vm6080 = vmor %vm6078, %vm6079
    %v6081 = vsel %vm6080, %v6073, %v6077
    %v6082 = vand.u32 2147483647, %v5673
    %vm6083 = vcmp.eq.f32.partialorder %v6082, 8.507059e+37
    %v6084 = vand.u32 %v5673, 2147483648
    %v6085 = vor.u32 1.1754944e-38, %v6084
    %v6086 = vsel %vm6083, %v6085, %v6081
    %v6087 = vmul.f32 1.0, %v6086
    %v6088 = vrcp.pop %v5674
    %v6089 = vmul.f32 %v5674, %v6088
    %v6090 = vsub.f32 1.0, %v6089
    %v6091 = vmul.f32 %v6088, %v6090
    %v6092 = vadd.f32 %v6088, %v6091
    %vm6093 = vweird.f32 %v5674
    %vm6094 = vweird.f32 %v6088
    %vm6095 = vmor %vm6093, %vm6094
    %v6096 = vsel %vm6095, %v6088, %v6092
    %v6097 = vand.u32 2147483647, %v5674
    %vm6098 = vcmp.eq.f32.partialorder %v6097, 8.507059e+37
    %v6099 = vand.u32 %v5674, 2147483648
    %v6100 = vor.u32 1.1754944e-38, %v6099
    %v6101 = vsel %vm6098, %v6100, %v6096
    %v6102 = vmul.f32 1.0, %v6101
    %v6103 = vrcp.pop %v5675
    %v6104 = vmul.f32 %v5675, %v6103
    %v6105 = vsub.f32 1.0, %v6104
    %v6106 = vmul.f32 %v6103, %v6105
    %v6107 = vadd.f32 %v6103, %v6106
    %vm6108 = vweird.f32 %v5675
    %vm6109 = vweird.f32 %v6103
    %vm6110 = vmor %vm6108, %vm6109
    %v6111 = vsel %vm6110, %v6103, %v6107
    %v6112 = vand.u32 2147483647, %v5675
    %vm6113 = vcmp.eq.f32.partialorder %v6112, 8.507059e+37
    %v6114 = vand.u32 %v5675, 2147483648
    %v6115 = vor.u32 1.1754944e-38, %v6114
    %v6116 = vsel %vm6113, %v6115, %v6111
    %v6117 = vmul.f32 1.0, %v6116
    %v6118 = vrcp.pop %v5676
    %v6119 = vmul.f32 %v5676, %v6118
    %v6120 = vsub.f32 1.0, %v6119
    %v6121 = vmul.f32 %v6118, %v6120
    %v6122 = vadd.f32 %v6118, %v6121
    %vm6123 = vweird.f32 %v5676
    %vm6124 = vweird.f32 %v6118
    %vm6125 = vmor %vm6123, %vm6124
    %v6126 = vsel %vm6125, %v6118, %v6122
    %v6127 = vand.u32 2147483647, %v5676
    %vm6128 = vcmp.eq.f32.partialorder %v6127, 8.507059e+37
    %v6129 = vand.u32 %v5676, 2147483648
    %v6130 = vor.u32 1.1754944e-38, %v6129
    %v6131 = vsel %vm6128, %v6130, %v6126
    %v6132 = vmul.f32 1.0, %v6131
    %v6133 = vrcp.pop %v5677
    %v6134 = vmul.f32 %v5677, %v6133
    %v6135 = vsub.f32 1.0, %v6134
    %v6136 = vmul.f32 %v6133, %v6135
    %v6137 = vadd.f32 %v6133, %v6136
    %vm6138 = vweird.f32 %v5677
    %vm6139 = vweird.f32 %v6133
    %vm6140 = vmor %vm6138, %vm6139
    %v6141 = vsel %vm6140, %v6133, %v6137
    %v6142 = vand.u32 2147483647, %v5677
    %vm6143 = vcmp.eq.f32.partialorder %v6142, 8.507059e+37
    %v6144 = vand.u32 %v5677, 2147483648
    %v6145 = vor.u32 1.1754944e-38, %v6144
    %v6146 = vsel %vm6143, %v6145, %v6141
    %v6147 = vmul.f32 1.0, %v6146
    %v6148 = vrcp.pop %v5678
    %v6149 = vmul.f32 %v5678, %v6148
    %v6150 = vsub.f32 1.0, %v6149
    %v6151 = vmul.f32 %v6148, %v6150
    %v6152 = vadd.f32 %v6148, %v6151
    %vm6153 = vweird.f32 %v5678
    %vm6154 = vweird.f32 %v6148
    %vm6155 = vmor %vm6153, %vm6154
    %v6156 = vsel %vm6155, %v6148, %v6152
    %v6157 = vand.u32 2147483647, %v5678
    %vm6158 = vcmp.eq.f32.partialorder %v6157, 8.507059e+37
    %v6159 = vand.u32 %v5678, 2147483648
    %v6160 = vor.u32 1.1754944e-38, %v6159
    %v6161 = vsel %vm6158, %v6160, %v6156
    %v6162 = vmul.f32 1.0, %v6161
    %v6163 = vrcp.pop %v5679
    %v6164 = vmul.f32 %v5679, %v6163
    %v6165 = vsub.f32 1.0, %v6164
    %v6166 = vmul.f32 %v6163, %v6165
    %v6167 = vadd.f32 %v6163, %v6166
    %vm6168 = vweird.f32 %v5679
    %vm6169 = vweird.f32 %v6163
    %vm6170 = vmor %vm6168, %vm6169
    %v6171 = vsel %vm6170, %v6163, %v6167
    %v6172 = vand.u32 2147483647, %v5679
    %vm6173 = vcmp.eq.f32.partialorder %v6172, 8.507059e+37
    %v6174 = vand.u32 %v5679, 2147483648
    %v6175 = vor.u32 1.1754944e-38, %v6174
    %v6176 = vsel %vm6173, %v6175, %v6171
    %v6177 = vmul.f32 1.0, %v6176
    %v6178 = vrcp.pop %v5680
    %v6179 = vmul.f32 %v5680, %v6178
    %v6180 = vsub.f32 1.0, %v6179
    %v6181 = vmul.f32 %v6178, %v6180
    %v6182 = vadd.f32 %v6178, %v6181
    %vm6183 = vweird.f32 %v5680
    %vm6184 = vweird.f32 %v6178
    %vm6185 = vmor %vm6183, %vm6184
    %v6186 = vsel %vm6185, %v6178, %v6182
    %v6187 = vand.u32 2147483647, %v5680
    %vm6188 = vcmp.eq.f32.partialorder %v6187, 8.507059e+37
    %v6189 = vand.u32 %v5680, 2147483648
    %v6190 = vor.u32 1.1754944e-38, %v6189
    %v6191 = vsel %vm6188, %v6190, %v6186
    %v6192 = vmul.f32 1.0, %v6191
    %v6193 = vrcp.pop %v5681
    %v6194 = vmul.f32 %v5681, %v6193
    %v6195 = vsub.f32 1.0, %v6194
    %v6196 = vmul.f32 %v6193, %v6195
    %v6197 = vadd.f32 %v6193, %v6196
    %vm6198 = vweird.f32 %v5681
    %vm6199 = vweird.f32 %v6193
    %vm6200 = vmor %vm6198, %vm6199
    %v6201 = vsel %vm6200, %v6193, %v6197
    %v6202 = vand.u32 2147483647, %v5681
    %vm6203 = vcmp.eq.f32.partialorder %v6202, 8.507059e+37
    %v6204 = vand.u32 %v5681, 2147483648
    %v6205 = vor.u32 1.1754944e-38, %v6204
    %v6206 = vsel %vm6203, %v6205, %v6201
    %v6207 = vmul.f32 1.0, %v6206
    %v6208 = vrcp.pop %v5682
    %v6209 = vmul.f32 %v5682, %v6208
    %v6210 = vsub.f32 1.0, %v6209
    %v6211 = vmul.f32 %v6208, %v6210
    %v6212 = vadd.f32 %v6208, %v6211
    %vm6213 = vweird.f32 %v5682
    %vm6214 = vweird.f32 %v6208
    %vm6215 = vmor %vm6213, %vm6214
    %v6216 = vsel %vm6215, %v6208, %v6212
    %v6217 = vand.u32 2147483647, %v5682
    %vm6218 = vcmp.eq.f32.partialorder %v6217, 8.507059e+37
    %v6219 = vand.u32 %v5682, 2147483648
    %v6220 = vor.u32 1.1754944e-38, %v6219
    %v6221 = vsel %vm6218, %v6220, %v6216
    %v6222 = vmul.f32 1.0, %v6221
    %v6223 = vrcp.pop %v5683
    %v6224 = vmul.f32 %v5683, %v6223
    %v6225 = vsub.f32 1.0, %v6224
    %v6226 = vmul.f32 %v6223, %v6225
    %v6227 = vadd.f32 %v6223, %v6226
    %vm6228 = vweird.f32 %v5683
    %vm6229 = vweird.f32 %v6223
    %vm6230 = vmor %vm6228, %vm6229
    %v6231 = vsel %vm6230, %v6223, %v6227
    %v6232 = vand.u32 2147483647, %v5683
    %vm6233 = vcmp.eq.f32.partialorder %v6232, 8.507059e+37
    %v6234 = vand.u32 %v5683, 2147483648
    %v6235 = vor.u32 1.1754944e-38, %v6234
    %v6236 = vsel %vm6233, %v6235, %v6231
    %v6237 = vmul.f32 1.0, %v6236
    %v6238 = vrcp.pop %v5684
    %v6239 = vmul.f32 %v5684, %v6238
    %v6240 = vsub.f32 1.0, %v6239
    %v6241 = vmul.f32 %v6238, %v6240
    %v6242 = vadd.f32 %v6238, %v6241
    %vm6243 = vweird.f32 %v5684
    %vm6244 = vweird.f32 %v6238
    %vm6245 = vmor %vm6243, %vm6244
    %v6246 = vsel %vm6245, %v6238, %v6242
    %v6247 = vand.u32 2147483647, %v5684
    %vm6248 = vcmp.eq.f32.partialorder %v6247, 8.507059e+37
    %v6249 = vand.u32 %v5684, 2147483648
    %v6250 = vor.u32 1.1754944e-38, %v6249
    %v6251 = vsel %vm6248, %v6250, %v6246
    %v6252 = vmul.f32 1.0, %v6251
    %v6253 = vrcp.pop %v5685
    %v6254 = vmul.f32 %v5685, %v6253
    %v6255 = vsub.f32 1.0, %v6254
    %v6256 = vmul.f32 %v6253, %v6255
    %v6257 = vadd.f32 %v6253, %v6256
    %vm6258 = vweird.f32 %v5685
    %vm6259 = vweird.f32 %v6253
    %vm6260 = vmor %vm6258, %vm6259
    %v6261 = vsel %vm6260, %v6253, %v6257
    %v6262 = vand.u32 2147483647, %v5685
    %vm6263 = vcmp.eq.f32.partialorder %v6262, 8.507059e+37
    %v6264 = vand.u32 %v5685, 2147483648
    %v6265 = vor.u32 1.1754944e-38, %v6264
    %v6266 = vsel %vm6263, %v6265, %v6261
    %v6267 = vmul.f32 1.0, %v6266
    %v6268 = vrcp.pop %v5686
    %v6269 = vmul.f32 %v5686, %v6268
    %v6270 = vsub.f32 1.0, %v6269
    %v6271 = vmul.f32 %v6268, %v6270
    %v6272 = vadd.f32 %v6268, %v6271
    %vm6273 = vweird.f32 %v5686
    %vm6274 = vweird.f32 %v6268
    %vm6275 = vmor %vm6273, %vm6274
    %v6276 = vsel %vm6275, %v6268, %v6272
    %v6277 = vand.u32 2147483647, %v5686
    %vm6278 = vcmp.eq.f32.partialorder %v6277, 8.507059e+37
    %v6279 = vand.u32 %v5686, 2147483648
    %v6280 = vor.u32 1.1754944e-38, %v6279
    %v6281 = vsel %vm6278, %v6280, %v6276
    %v6282 = vmul.f32 1.0, %v6281
    %v6283 = vrcp.pop %v5687
    %v6284 = vmul.f32 %v5687, %v6283
    %v6285 = vsub.f32 1.0, %v6284
    %v6286 = vmul.f32 %v6283, %v6285
    %v6287 = vadd.f32 %v6283, %v6286
    %vm6288 = vweird.f32 %v5687
    %vm6289 = vweird.f32 %v6283
    %vm6290 = vmor %vm6288, %vm6289
    %v6291 = vsel %vm6290, %v6283, %v6287
    %v6292 = vand.u32 2147483647, %v5687
    %vm6293 = vcmp.eq.f32.partialorder %v6292, 8.507059e+37
    %v6294 = vand.u32 %v5687, 2147483648
    %v6295 = vor.u32 1.1754944e-38, %v6294
    %v6296 = vsel %vm6293, %v6295, %v6291
    %v6297 = vmul.f32 1.0, %v6296
    %v6298 = vrcp.pop %v5688
    %v6299 = vmul.f32 %v5688, %v6298
    %v6300 = vsub.f32 1.0, %v6299
    %v6301 = vmul.f32 %v6298, %v6300
    %v6302 = vadd.f32 %v6298, %v6301
    %vm6303 = vweird.f32 %v5688
    %vm6304 = vweird.f32 %v6298
    %vm6305 = vmor %vm6303, %vm6304
    %v6306 = vsel %vm6305, %v6298, %v6302
    %v6307 = vand.u32 2147483647, %v5688
    %vm6308 = vcmp.eq.f32.partialorder %v6307, 8.507059e+37
    %v6309 = vand.u32 %v5688, 2147483648
    %v6310 = vor.u32 1.1754944e-38, %v6309
    %v6311 = vsel %vm6308, %v6310, %v6306
    %v6312 = vmul.f32 1.0, %v6311
    %v6313 = vrcp.pop %v5689
    %v6314 = vmul.f32 %v5689, %v6313
    %v6315 = vsub.f32 1.0, %v6314
    %v6316 = vmul.f32 %v6313, %v6315
    %v6317 = vadd.f32 %v6313, %v6316
    %vm6318 = vweird.f32 %v5689
    %vm6319 = vweird.f32 %v6313
    %vm6320 = vmor %vm6318, %vm6319
    %v6321 = vsel %vm6320, %v6313, %v6317
    %v6322 = vand.u32 2147483647, %v5689
    %vm6323 = vcmp.eq.f32.partialorder %v6322, 8.507059e+37
    %v6324 = vand.u32 %v5689, 2147483648
    %v6325 = vor.u32 1.1754944e-38, %v6324
    %v6326 = vsel %vm6323, %v6325, %v6321
    %v6327 = vmul.f32 1.0, %v6326
    %v6328 = vrcp.pop %v5690
    %v6329 = vmul.f32 %v5690, %v6328
    %v6330 = vsub.f32 1.0, %v6329
    %v6331 = vmul.f32 %v6328, %v6330
    %v6332 = vadd.f32 %v6328, %v6331
    %vm6333 = vweird.f32 %v5690
    %vm6334 = vweird.f32 %v6328
    %vm6335 = vmor %vm6333, %vm6334
    %v6336 = vsel %vm6335, %v6328, %v6332
    %v6337 = vand.u32 2147483647, %v5690
    %vm6338 = vcmp.eq.f32.partialorder %v6337, 8.507059e+37
    %v6339 = vand.u32 %v5690, 2147483648
    %v6340 = vor.u32 1.1754944e-38, %v6339
    %v6341 = vsel %vm6338, %v6340, %v6336
    %v6342 = vmul.f32 1.0, %v6341
    %v6343 = vrcp.pop %v5691
    %v6344 = vmul.f32 %v5691, %v6343
    %v6345 = vsub.f32 1.0, %v6344
    %v6346 = vmul.f32 %v6343, %v6345
    %v6347 = vadd.f32 %v6343, %v6346
    %vm6348 = vweird.f32 %v5691
    %vm6349 = vweird.f32 %v6343
    %vm6350 = vmor %vm6348, %vm6349
    %v6351 = vsel %vm6350, %v6343, %v6347
    %v6352 = vand.u32 2147483647, %v5691
    %vm6353 = vcmp.eq.f32.partialorder %v6352, 8.507059e+37
    %v6354 = vand.u32 %v5691, 2147483648
    %v6355 = vor.u32 1.1754944e-38, %v6354
    %v6356 = vsel %vm6353, %v6355, %v6351
    %v6357 = vmul.f32 1.0, %v6356
    %v6358 = vrcp.pop %v5692
    %v6359 = vmul.f32 %v5692, %v6358
    %v6360 = vsub.f32 1.0, %v6359
    %v6361 = vmul.f32 %v6358, %v6360
    %v6362 = vadd.f32 %v6358, %v6361
    %vm6363 = vweird.f32 %v5692
    %vm6364 = vweird.f32 %v6358
    %vm6365 = vmor %vm6363, %vm6364
    %v6366 = vsel %vm6365, %v6358, %v6362
    %v6367 = vand.u32 2147483647, %v5692
    %vm6368 = vcmp.eq.f32.partialorder %v6367, 8.507059e+37
    %v6369 = vand.u32 %v5692, 2147483648
    %v6370 = vor.u32 1.1754944e-38, %v6369
    %v6371 = vsel %vm6368, %v6370, %v6366
    %v6372 = vmul.f32 1.0, %v6371
    %v6373 = vrcp.pop %v5693
    %v6374 = vmul.f32 %v5693, %v6373
    %v6375 = vsub.f32 1.0, %v6374
    %v6376 = vmul.f32 %v6373, %v6375
    %v6377 = vadd.f32 %v6373, %v6376
    %vm6378 = vweird.f32 %v5693
    %vm6379 = vweird.f32 %v6373
    %vm6380 = vmor %vm6378, %vm6379
    %v6381 = vsel %vm6380, %v6373, %v6377
    %v6382 = vand.u32 2147483647, %v5693
    %vm6383 = vcmp.eq.f32.partialorder %v6382, 8.507059e+37
    %v6384 = vand.u32 %v5693, 2147483648
    %v6385 = vor.u32 1.1754944e-38, %v6384
    %v6386 = vsel %vm6383, %v6385, %v6381
    %v6387 = vmul.f32 1.0, %v6386
    %v6388 = vrcp.pop %v5694
    %v6389 = vmul.f32 %v5694, %v6388
    %v6390 = vsub.f32 1.0, %v6389
    %v6391 = vmul.f32 %v6388, %v6390
    %v6392 = vadd.f32 %v6388, %v6391
    %vm6393 = vweird.f32 %v5694
    %vm6394 = vweird.f32 %v6388
    %vm6395 = vmor %vm6393, %vm6394
    %v6396 = vsel %vm6395, %v6388, %v6392
    %v6397 = vand.u32 2147483647, %v5694
    %vm6398 = vcmp.eq.f32.partialorder %v6397, 8.507059e+37
    %v6399 = vand.u32 %v5694, 2147483648
    %v6400 = vor.u32 1.1754944e-38, %v6399
    %v6401 = vsel %vm6398, %v6400, %v6396
    %v6402 = vmul.f32 1.0, %v6401
    %v6403 = vrcp.pop %v5695
    %v6404 = vmul.f32 %v5695, %v6403
    %v6405 = vsub.f32 1.0, %v6404
    %v6406 = vmul.f32 %v6403, %v6405
    %v6407 = vadd.f32 %v6403, %v6406
    %vm6408 = vweird.f32 %v5695
    %vm6409 = vweird.f32 %v6403
    %vm6410 = vmor %vm6408, %vm6409
    %v6411 = vsel %vm6410, %v6403, %v6407
    %v6412 = vand.u32 2147483647, %v5695
    %vm6413 = vcmp.eq.f32.partialorder %v6412, 8.507059e+37
    %v6414 = vand.u32 %v5695, 2147483648
    %v6415 = vor.u32 1.1754944e-38, %v6414
    %v6416 = vsel %vm6413, %v6415, %v6411
    %v6417 = vmul.f32 1.0, %v6416
    %v6418 = vrcp.pop %v5696
    %v6419 = vmul.f32 %v5696, %v6418
    %v6420 = vsub.f32 1.0, %v6419
    %v6421 = vmul.f32 %v6418, %v6420
    %v6422 = vadd.f32 %v6418, %v6421
    %vm6423 = vweird.f32 %v5696
    %vm6424 = vweird.f32 %v6418
    %vm6425 = vmor %vm6423, %vm6424
    %v6426 = vsel %vm6425, %v6418, %v6422
    %v6427 = vand.u32 2147483647, %v5696
    %vm6428 = vcmp.eq.f32.partialorder %v6427, 8.507059e+37
    %v6429 = vand.u32 %v5696, 2147483648
    %v6430 = vor.u32 1.1754944e-38, %v6429
    %v6431 = vsel %vm6428, %v6430, %v6426
    %v6432 = vmul.f32 1.0, %v6431
    %v6433 = vrcp.pop %v5697
    %v6434 = vmul.f32 %v5697, %v6433
    %v6435 = vsub.f32 1.0, %v6434
    %v6436 = vmul.f32 %v6433, %v6435
    %v6437 = vadd.f32 %v6433, %v6436
    %vm6438 = vweird.f32 %v5697
    %vm6439 = vweird.f32 %v6433
    %vm6440 = vmor %vm6438, %vm6439
    %v6441 = vsel %vm6440, %v6433, %v6437
    %v6442 = vand.u32 2147483647, %v5697
    %vm6443 = vcmp.eq.f32.partialorder %v6442, 8.507059e+37
    %v6444 = vand.u32 %v5697, 2147483648
    %v6445 = vor.u32 1.1754944e-38, %v6444
    %v6446 = vsel %vm6443, %v6445, %v6441
    %v6447 = vmul.f32 1.0, %v6446
    %v6448 = vrcp.pop %v5698
    %v6449 = vmul.f32 %v5698, %v6448
    %v6450 = vsub.f32 1.0, %v6449
    %v6451 = vmul.f32 %v6448, %v6450
    %v6452 = vadd.f32 %v6448, %v6451
    %vm6453 = vweird.f32 %v5698
    %vm6454 = vweird.f32 %v6448
    %vm6455 = vmor %vm6453, %vm6454
    %v6456 = vsel %vm6455, %v6448, %v6452
    %v6457 = vand.u32 2147483647, %v5698
    %vm6458 = vcmp.eq.f32.partialorder %v6457, 8.507059e+37
    %v6459 = vand.u32 %v5698, 2147483648
    %v6460 = vor.u32 1.1754944e-38, %v6459
    %v6461 = vsel %vm6458, %v6460, %v6456
    %v6462 = vmul.f32 1.0, %v6461
    %v6463 = vrcp.pop %v5699
    %v6464 = vmul.f32 %v5699, %v6463
    %v6465 = vsub.f32 1.0, %v6464
    %v6466 = vmul.f32 %v6463, %v6465
    %v6467 = vadd.f32 %v6463, %v6466
    %vm6468 = vweird.f32 %v5699
    %vm6469 = vweird.f32 %v6463
    %vm6470 = vmor %vm6468, %vm6469
    %v6471 = vsel %vm6470, %v6463, %v6467
    %v6472 = vand.u32 2147483647, %v5699
    %vm6473 = vcmp.eq.f32.partialorder %v6472, 8.507059e+37
    %v6474 = vand.u32 %v5699, 2147483648
    %v6475 = vor.u32 1.1754944e-38, %v6474
    %v6476 = vsel %vm6473, %v6475, %v6471
    %v6477 = vmul.f32 1.0, %v6476
    %v6478 = vrcp.pop %v5700
    %v6479 = vmul.f32 %v5700, %v6478
    %v6480 = vsub.f32 1.0, %v6479
    %v6481 = vmul.f32 %v6478, %v6480
    %v6482 = vadd.f32 %v6478, %v6481
    %vm6483 = vweird.f32 %v5700
    %vm6484 = vweird.f32 %v6478
    %vm6485 = vmor %vm6483, %vm6484
    %v6486 = vsel %vm6485, %v6478, %v6482
    %v6487 = vand.u32 2147483647, %v5700
    %vm6488 = vcmp.eq.f32.partialorder %v6487, 8.507059e+37
    %v6489 = vand.u32 %v5700, 2147483648
    %v6490 = vor.u32 1.1754944e-38, %v6489
    %v6491 = vsel %vm6488, %v6490, %v6486
    %v6492 = vmul.f32 1.0, %v6491
    %v6493 = vrcp.pop %v5701
    %v6494 = vmul.f32 %v5701, %v6493
    %v6495 = vsub.f32 1.0, %v6494
    %v6496 = vmul.f32 %v6493, %v6495
    %v6497 = vadd.f32 %v6493, %v6496
    %vm6498 = vweird.f32 %v5701
    %vm6499 = vweird.f32 %v6493
    %vm6500 = vmor %vm6498, %vm6499
    %v6501 = vsel %vm6500, %v6493, %v6497
    %v6502 = vand.u32 2147483647, %v5701
    %vm6503 = vcmp.eq.f32.partialorder %v6502, 8.507059e+37
    %v6504 = vand.u32 %v5701, 2147483648
    %v6505 = vor.u32 1.1754944e-38, %v6504
    %v6506 = vsel %vm6503, %v6505, %v6501
    %v6507 = vmul.f32 1.0, %v6506
    %v6508 = vrcp.pop %v5702
    %v6509 = vmul.f32 %v5702, %v6508
    %v6510 = vsub.f32 1.0, %v6509
    %v6511 = vmul.f32 %v6508, %v6510
    %v6512 = vadd.f32 %v6508, %v6511
    %vm6513 = vweird.f32 %v5702
    %vm6514 = vweird.f32 %v6508
    %vm6515 = vmor %vm6513, %vm6514
    %v6516 = vsel %vm6515, %v6508, %v6512
    %v6517 = vand.u32 2147483647, %v5702
    %vm6518 = vcmp.eq.f32.partialorder %v6517, 8.507059e+37
    %v6519 = vand.u32 %v5702, 2147483648
    %v6520 = vor.u32 1.1754944e-38, %v6519
    %v6521 = vsel %vm6518, %v6520, %v6516
    %v6522 = vmul.f32 1.0, %v6521
    %v6523 = vrcp.pop %v5703
    %v6524 = vmul.f32 %v5703, %v6523
    %v6525 = vsub.f32 1.0, %v6524
    %v6526 = vmul.f32 %v6523, %v6525
    %v6527 = vadd.f32 %v6523, %v6526
    %vm6528 = vweird.f32 %v5703
    %vm6529 = vweird.f32 %v6523
    %vm6530 = vmor %vm6528, %vm6529
    %v6531 = vsel %vm6530, %v6523, %v6527
    %v6532 = vand.u32 2147483647, %v5703
    %vm6533 = vcmp.eq.f32.partialorder %v6532, 8.507059e+37
    %v6534 = vand.u32 %v5703, 2147483648
    %v6535 = vor.u32 1.1754944e-38, %v6534
    %v6536 = vsel %vm6533, %v6535, %v6531
    %v6537 = vmul.f32 1.0, %v6536
    %v6538 = vrcp.pop %v5704
    %v6539 = vmul.f32 %v5704, %v6538
    %v6540 = vsub.f32 1.0, %v6539
    %v6541 = vmul.f32 %v6538, %v6540
    %v6542 = vadd.f32 %v6538, %v6541
    %vm6543 = vweird.f32 %v5704
    %vm6544 = vweird.f32 %v6538
    %vm6545 = vmor %vm6543, %vm6544
    %v6546 = vsel %vm6545, %v6538, %v6542
    %v6547 = vand.u32 2147483647, %v5704
    %vm6548 = vcmp.eq.f32.partialorder %v6547, 8.507059e+37
    %v6549 = vand.u32 %v5704, 2147483648
    %v6550 = vor.u32 1.1754944e-38, %v6549
    %v6551 = vsel %vm6548, %v6550, %v6546
    %v6552 = vmul.f32 1.0, %v6551
    %v6553 = vrcp.pop %v5705
    %v6554 = vmul.f32 %v5705, %v6553
    %v6555 = vsub.f32 1.0, %v6554
    %v6556 = vmul.f32 %v6553, %v6555
    %v6557 = vadd.f32 %v6553, %v6556
    %vm6558 = vweird.f32 %v5705
    %vm6559 = vweird.f32 %v6553
    %vm6560 = vmor %vm6558, %vm6559
    %v6561 = vsel %vm6560, %v6553, %v6557
    %v6562 = vand.u32 2147483647, %v5705
    %vm6563 = vcmp.eq.f32.partialorder %v6562, 8.507059e+37
    %v6564 = vand.u32 %v5705, 2147483648
    %v6565 = vor.u32 1.1754944e-38, %v6564
    %v6566 = vsel %vm6563, %v6565, %v6561
    %v6567 = vmul.f32 1.0, %v6566
    %v6568 = vrcp.pop %v5706
    %v6569 = vmul.f32 %v5706, %v6568
    %v6570 = vsub.f32 1.0, %v6569
    %v6571 = vmul.f32 %v6568, %v6570
    %v6572 = vadd.f32 %v6568, %v6571
    %vm6573 = vweird.f32 %v5706
    %vm6574 = vweird.f32 %v6568
    %vm6575 = vmor %vm6573, %vm6574
    %v6576 = vsel %vm6575, %v6568, %v6572
    %v6577 = vand.u32 2147483647, %v5706
    %vm6578 = vcmp.eq.f32.partialorder %v6577, 8.507059e+37
    %v6579 = vand.u32 %v5706, 2147483648
    %v6580 = vor.u32 1.1754944e-38, %v6579
    %v6581 = vsel %vm6578, %v6580, %v6576
    %v6582 = vmul.f32 1.0, %v6581
    %v6583 = vrcp.pop %v5707
    %v6584 = vmul.f32 %v5707, %v6583
    %v6585 = vsub.f32 1.0, %v6584
    %v6586 = vmul.f32 %v6583, %v6585
    %v6587 = vadd.f32 %v6583, %v6586
    %vm6588 = vweird.f32 %v5707
    %vm6589 = vweird.f32 %v6583
    %vm6590 = vmor %vm6588, %vm6589
    %v6591 = vsel %vm6590, %v6583, %v6587
    %v6592 = vand.u32 2147483647, %v5707
    %vm6593 = vcmp.eq.f32.partialorder %v6592, 8.507059e+37
    %v6594 = vand.u32 %v5707, 2147483648
    %v6595 = vor.u32 1.1754944e-38, %v6594
    %v6596 = vsel %vm6593, %v6595, %v6591
    %v6597 = vmul.f32 1.0, %v6596
    %v6598 = vrcp.pop %v5708
    %v6599 = vmul.f32 %v5708, %v6598
    %v6600 = vsub.f32 1.0, %v6599
    %v6601 = vmul.f32 %v6598, %v6600
    %v6602 = vadd.f32 %v6598, %v6601
    %vm6603 = vweird.f32 %v5708
    %vm6604 = vweird.f32 %v6598
    %vm6605 = vmor %vm6603, %vm6604
    %v6606 = vsel %vm6605, %v6598, %v6602
    %v6607 = vand.u32 2147483647, %v5708
    %vm6608 = vcmp.eq.f32.partialorder %v6607, 8.507059e+37
    %v6609 = vand.u32 %v5708, 2147483648
    %v6610 = vor.u32 1.1754944e-38, %v6609
    %v6611 = vsel %vm6608, %v6610, %v6606
    %v6612 = vmul.f32 1.0, %v6611
    %v6613 = vrcp.pop %v5709
    %v6614 = vmul.f32 %v5709, %v6613
    %v6615 = vsub.f32 1.0, %v6614
    %v6616 = vmul.f32 %v6613, %v6615
    %v6617 = vadd.f32 %v6613, %v6616
    %vm6618 = vweird.f32 %v5709
    %vm6619 = vweird.f32 %v6613
    %vm6620 = vmor %vm6618, %vm6619
    %v6621 = vsel %vm6620, %v6613, %v6617
    %v6622 = vand.u32 2147483647, %v5709
    %vm6623 = vcmp.eq.f32.partialorder %v6622, 8.507059e+37
    %v6624 = vand.u32 %v5709, 2147483648
    %v6625 = vor.u32 1.1754944e-38, %v6624
    %v6626 = vsel %vm6623, %v6625, %v6621
    %v6627 = vmul.f32 1.0, %v6626
    %v6628 = vrcp.pop %v5710
    %v6629 = vmul.f32 %v5710, %v6628
    %v6630 = vsub.f32 1.0, %v6629
    %v6631 = vmul.f32 %v6628, %v6630
    %v6632 = vadd.f32 %v6628, %v6631
    %vm6633 = vweird.f32 %v5710
    %vm6634 = vweird.f32 %v6628
    %vm6635 = vmor %vm6633, %vm6634
    %v6636 = vsel %vm6635, %v6628, %v6632
    %v6637 = vand.u32 2147483647, %v5710
    %vm6638 = vcmp.eq.f32.partialorder %v6637, 8.507059e+37
    %v6639 = vand.u32 %v5710, 2147483648
    %v6640 = vor.u32 1.1754944e-38, %v6639
    %v6641 = vsel %vm6638, %v6640, %v6636
    %v6642 = vmul.f32 1.0, %v6641
    %v6643 = vrcp.pop %v5711
    %v6644 = vmul.f32 %v5711, %v6643
    %v6645 = vsub.f32 1.0, %v6644
    %v6646 = vmul.f32 %v6643, %v6645
    %v6647 = vadd.f32 %v6643, %v6646
    %vm6648 = vweird.f32 %v5711
    %vm6649 = vweird.f32 %v6643
    %vm6650 = vmor %vm6648, %vm6649
    %v6651 = vsel %vm6650, %v6643, %v6647
    %v6652 = vand.u32 2147483647, %v5711
    %vm6653 = vcmp.eq.f32.partialorder %v6652, 8.507059e+37
    %v6654 = vand.u32 %v5711, 2147483648
    %v6655 = vor.u32 1.1754944e-38, %v6654
    %v6656 = vsel %vm6653, %v6655, %v6651
    %v6657 = vmul.f32 1.0, %v6656
    %v6658 = vrcp.pop %v5712
    %v6659 = vmul.f32 %v5712, %v6658
    %v6660 = vsub.f32 1.0, %v6659
    %v6661 = vmul.f32 %v6658, %v6660
    %v6662 = vadd.f32 %v6658, %v6661
    %vm6663 = vweird.f32 %v5712
    %vm6664 = vweird.f32 %v6658
    %vm6665 = vmor %vm6663, %vm6664
    %v6666 = vsel %vm6665, %v6658, %v6662
    %v6667 = vand.u32 2147483647, %v5712
    %vm6668 = vcmp.eq.f32.partialorder %v6667, 8.507059e+37
    %v6669 = vand.u32 %v5712, 2147483648
    %v6670 = vor.u32 1.1754944e-38, %v6669
    %v6671 = vsel %vm6668, %v6670, %v6666
    %v6672 = vmul.f32 1.0, %v6671
    %v6673 = vmul.f32 %v5393, %v5727
    %v6674 = vmul.f32 %v5394, %v5742
    %v6675 = vmul.f32 %v5395, %v5757
    %v6676 = vmul.f32 %v5396, %v5772
    %v6677 = vmul.f32 %v5397, %v5787
    %v6678 = vmul.f32 %v5398, %v5802
    %v6679 = vmul.f32 %v5399, %v5817
    %v6680 = vmul.f32 %v5400, %v5832
    %v6681 = vmul.f32 %v5401, %v5847
    %v6682 = vmul.f32 %v5402, %v5862
    %v6683 = vmul.f32 %v5403, %v5877
    %v6684 = vmul.f32 %v5404, %v5892
    %v6685 = vmul.f32 %v5405, %v5907
    %v6686 = vmul.f32 %v5406, %v5922
    %v6687 = vmul.f32 %v5407, %v5937
    %v6688 = vmul.f32 %v5408, %v5952
    %v6689 = vmul.f32 %v5409, %v5967
    %v6690 = vmul.f32 %v5410, %v5982
    %v6691 = vmul.f32 %v5411, %v5997
    %v6692 = vmul.f32 %v5412, %v6012
    %v6693 = vmul.f32 %v5413, %v6027
    %v6694 = vmul.f32 %v5414, %v6042
    %v6695 = vmul.f32 %v5415, %v6057
    %v6696 = vmul.f32 %v5416, %v6072
    %v6697 = vmul.f32 %v5417, %v6087
    %v6698 = vmul.f32 %v5418, %v6102
    %v6699 = vmul.f32 %v5419, %v6117
    %v6700 = vmul.f32 %v5420, %v6132
    %v6701 = vmul.f32 %v5421, %v6147
    %v6702 = vmul.f32 %v5422, %v6162
    %v6703 = vmul.f32 %v5423, %v6177
    %v6704 = vmul.f32 %v5424, %v6192
    %v6705 = vmul.f32 %v5425, %v6207
    %v6706 = vmul.f32 %v5426, %v6222
    %v6707 = vmul.f32 %v5427, %v6237
    %v6708 = vmul.f32 %v5428, %v6252
    %v6709 = vmul.f32 %v5429, %v6267
    %v6710 = vmul.f32 %v5430, %v6282
    %v6711 = vmul.f32 %v5431, %v6297
    %v6712 = vmul.f32 %v5432, %v6312
    %v6713 = vmul.f32 %v5433, %v6327
    %v6714 = vmul.f32 %v5434, %v6342
    %v6715 = vmul.f32 %v5435, %v6357
    %v6716 = vmul.f32 %v5436, %v6372
    %v6717 = vmul.f32 %v5437, %v6387
    %v6718 = vmul.f32 %v5438, %v6402
    %v6719 = vmul.f32 %v5439, %v6417
    %v6720 = vmul.f32 %v5440, %v6432
    %v6721 = vmul.f32 %v5441, %v6447
    %v6722 = vmul.f32 %v5442, %v6462
    %v6723 = vmul.f32 %v5443, %v6477
    %v6724 = vmul.f32 %v5444, %v6492
    %v6725 = vmul.f32 %v5445, %v6507
    %v6726 = vmul.f32 %v5446, %v6522
    %v6727 = vmul.f32 %v5447, %v6537
    %v6728 = vmul.f32 %v5448, %v6552
    %v6729 = vmul.f32 %v5449, %v6567
    %v6730 = vmul.f32 %v5450, %v6582
    %v6731 = vmul.f32 %v5451, %v6597
    %v6732 = vmul.f32 %v5452, %v6612
    %v6733 = vmul.f32 %v5453, %v6627
    %v6734 = vmul.f32 %v5454, %v6642
    %v6735 = vmul.f32 %v5455, %v6657
    %v6736 = vmul.f32 %v5456, %v6672
    %v6737 = vsel %vm302, %v6673, 0.0
    %v6738 = vsel %vm302, %v6675, 0.0
    %v6739 = vadd.f32 %v6737, %v6738
    %v6740 = vsel %vm302, %v6677, 0.0
    %v6741 = vadd.f32 %v6739, %v6740
    %v6742 = vsel %vm302, %v6679, 0.0
    %v6743 = vadd.f32 %v6741, %v6742
    %v6744 = vsel %vm302, %v6681, 0.0
    %v6745 = vadd.f32 %v6743, %v6744
    %v6746 = vsel %vm302, %v6683, 0.0
    %v6747 = vadd.f32 %v6745, %v6746
    %v6748 = vsel %vm302, %v6685, 0.0
    %v6749 = vadd.f32 %v6747, %v6748
    %v6750 = vsel %vm302, %v6687, 0.0
    %v6751 = vadd.f32 %v6749, %v6750
    %v6752 = vsel %vm302, %v6689, 0.0
    %v6753 = vadd.f32 %v6751, %v6752
    %v6754 = vsel %vm302, %v6691, 0.0
    %v6755 = vadd.f32 %v6753, %v6754
    %v6756 = vsel %vm302, %v6693, 0.0
    %v6757 = vadd.f32 %v6755, %v6756
    %v6758 = vsel %vm302, %v6695, 0.0
    %v6759 = vadd.f32 %v6757, %v6758
    %v6760 = vsel %vm302, %v6697, 0.0
    %v6761 = vadd.f32 %v6759, %v6760
    %v6762 = vsel %vm302, %v6699, 0.0
    %v6763 = vadd.f32 %v6761, %v6762
    %v6764 = vsel %vm302, %v6701, 0.0
    %v6765 = vadd.f32 %v6763, %v6764
    %v6766 = vsel %vm302, %v6703, 0.0
    %v6767 = vadd.f32 %v6765, %v6766
    %v6768 = vsel %vm302, %v6674, 0.0
    %v6769 = vsel %vm302, %v6676, 0.0
    %v6770 = vadd.f32 %v6768, %v6769
    %v6771 = vsel %vm302, %v6678, 0.0
    %v6772 = vadd.f32 %v6770, %v6771
    %v6773 = vsel %vm302, %v6680, 0.0
    %v6774 = vadd.f32 %v6772, %v6773
    %v6775 = vsel %vm302, %v6682, 0.0
    %v6776 = vadd.f32 %v6774, %v6775
    %v6777 = vsel %vm302, %v6684, 0.0
    %v6778 = vadd.f32 %v6776, %v6777
    %v6779 = vsel %vm302, %v6686, 0.0
    %v6780 = vadd.f32 %v6778, %v6779
    %v6781 = vsel %vm302, %v6688, 0.0
    %v6782 = vadd.f32 %v6780, %v6781
    %v6783 = vsel %vm302, %v6690, 0.0
    %v6784 = vadd.f32 %v6782, %v6783
    %v6785 = vsel %vm302, %v6692, 0.0
    %v6786 = vadd.f32 %v6784, %v6785
    %v6787 = vsel %vm302, %v6694, 0.0
    %v6788 = vadd.f32 %v6786, %v6787
    %v6789 = vsel %vm302, %v6696, 0.0
    %v6790 = vadd.f32 %v6788, %v6789
    %v6791 = vsel %vm302, %v6698, 0.0
    %v6792 = vadd.f32 %v6790, %v6791
    %v6793 = vsel %vm302, %v6700, 0.0
    %v6794 = vadd.f32 %v6792, %v6793
    %v6795 = vsel %vm302, %v6702, 0.0
    %v6796 = vadd.f32 %v6794, %v6795
    %v6797 = vsel %vm302, %v6704, 0.0
    %v6798 = vadd.f32 %v6796, %v6797
    %v6799 = vsel %vm302, %v6705, 0.0
    %v6800 = vsel %vm302, %v6707, 0.0
    %v6801 = vadd.f32 %v6799, %v6800
    %v6802 = vsel %vm302, %v6709, 0.0
    %v6803 = vadd.f32 %v6801, %v6802
    %v6804 = vsel %vm302, %v6711, 0.0
    %v6805 = vadd.f32 %v6803, %v6804
    %v6806 = vsel %vm302, %v6713, 0.0
    %v6807 = vadd.f32 %v6805, %v6806
    %v6808 = vsel %vm302, %v6715, 0.0
    %v6809 = vadd.f32 %v6807, %v6808
    %v6810 = vsel %vm302, %v6717, 0.0
    %v6811 = vadd.f32 %v6809, %v6810
    %v6812 = vsel %vm302, %v6719, 0.0
    %v6813 = vadd.f32 %v6811, %v6812
    %v6814 = vsel %vm302, %v6721, 0.0
    %v6815 = vadd.f32 %v6813, %v6814
    %v6816 = vsel %vm302, %v6723, 0.0
    %v6817 = vadd.f32 %v6815, %v6816
    %v6818 = vsel %vm302, %v6725, 0.0
    %v6819 = vadd.f32 %v6817, %v6818
    %v6820 = vsel %vm302, %v6727, 0.0
    %v6821 = vadd.f32 %v6819, %v6820
    %v6822 = vsel %vm302, %v6729, 0.0
    %v6823 = vadd.f32 %v6821, %v6822
    %v6824 = vsel %vm302, %v6731, 0.0
    %v6825 = vadd.f32 %v6823, %v6824
    %v6826 = vsel %vm302, %v6733, 0.0
    %v6827 = vadd.f32 %v6825, %v6826
    %v6828 = vsel %vm302, %v6735, 0.0
    %v6829 = vadd.f32 %v6827, %v6828
    %v6830 = vsel %vm302, %v6706, 0.0
    %v6831 = vsel %vm302, %v6708, 0.0
    %v6832 = vadd.f32 %v6830, %v6831
    %v6833 = vsel %vm302, %v6710, 0.0
    %v6834 = vadd.f32 %v6832, %v6833
    %v6835 = vsel %vm302, %v6712, 0.0
    %v6836 = vadd.f32 %v6834, %v6835
    %v6837 = vsel %vm302, %v6714, 0.0
    %v6838 = vadd.f32 %v6836, %v6837
    %v6839 = vsel %vm302, %v6716, 0.0
    %v6840 = vadd.f32 %v6838, %v6839
    %v6841 = vsel %vm302, %v6718, 0.0
    %v6842 = vadd.f32 %v6840, %v6841
    %v6843 = vsel %vm302, %v6720, 0.0
    %v6844 = vadd.f32 %v6842, %v6843
    %v6845 = vsel %vm302, %v6722, 0.0
    %v6846 = vadd.f32 %v6844, %v6845
    %v6847 = vsel %vm302, %v6724, 0.0
    %v6848 = vadd.f32 %v6846, %v6847
    %v6849 = vsel %vm302, %v6726, 0.0
    %v6850 = vadd.f32 %v6848, %v6849
    %v6851 = vsel %vm302, %v6728, 0.0
    %v6852 = vadd.f32 %v6850, %v6851
    %v6853 = vsel %vm302, %v6730, 0.0
    %v6854 = vadd.f32 %v6852, %v6853
    %v6855 = vsel %vm302, %v6732, 0.0
    %v6856 = vadd.f32 %v6854, %v6855
    %v6857 = vsel %vm302, %v6734, 0.0
    %v6858 = vadd.f32 %v6856, %v6857
    %v6859 = vsel %vm302, %v6736, 0.0
    %v6860 = vadd.f32 %v6858, %v6859
    %v6861 = vsel %vm302, %v6767, 0.0
    %v6862 = vsel %vm302, %v6798, 0.0
    %v6863 = vadd.f32 %v6861, %v6862
    %v6864 = vrot.slane %v6863, 4
    %v6865 = vadd.f32 %v6863, %v6864
    %v6866 = vrot.slane %v6865, 2
    %v6867 = vadd.f32 %v6865, %v6866
    %v6868 = vrot.slane %v6867, 1
    %v6869 = vadd.f32 %v6867, %v6868
    %v6870 = vsel %vm302, %v6829, 0.0
    %v6871 = vsel %vm302, %v6860, 0.0
    %v6872 = vadd.f32 %v6870, %v6871
    %v6873 = vrot.slane %v6872, 4
    %v6874 = vadd.f32 %v6872, %v6873
    %v6875 = vrot.slane %v6874, 2
    %v6876 = vadd.f32 %v6874, %v6875
    %v6877 = vrot.slane %v6876, 1
    %v6878 = vadd.f32 %v6876, %v6877
    %v6879 = vmul.f32 %v6869, 0.00390625
    %v6880 = vmul.f32 %v6878, 0.00390625
    %v6881 = vld [vmem:[%s7] sm:$0xff]
    %v6882 = vld [vmem:[%s7 + $0x8] sm:$0xff]
    %v6883 = vld [vmem:[%s7 + $0x10] sm:$0xff]
    %v6884 = vld [vmem:[%s7 + $0x18] sm:$0xff]
    %v6885 = vld [vmem:[%s8] sm:$0x1]
    %v6887 = vperm.slane %v6885, 0
    %vm6891 = vcmask 1041409
    %v6892 = vsel %vm6891, %v6880, %v6879
    %v6893 = vsel %vm302, %v6892, 0
    %6895 = vmatpush.msra.mxu0 0.0
    %6896 = vmatpush.msra.mxu0 0.0
    %6897 = vmatpush.msra.mxu0 0.0
    %6898 = vmatpush.msra.mxu0 0.0
    %6899 = vmatpush.msra.mxu0 0.0
    %6900 = vmatpush.msra.mxu0 0.0
    %6901 = vmatpush.msra.mxu0 0.0
    %6902 = vmatpush.msra.mxu0 0.0
    %6903 = vmatpush.msra.mxu0 0.0
    %6904 = vmatpush.msra.mxu0 0.0
    %6905 = vmatpush.msra.mxu0 0.0
    %6906 = vmatpush.msra.mxu0 0.0
    %6907 = vmatpush.msra.mxu0 %v6884
    %6908 = vmatpush.msra.mxu0 %v6883
    %6909 = vmatpush.msra.mxu0 %v6882
    %6910 = vmatpush.msra.mxu0 %v6881
    %6911 = vmatmul.f32.gmra.mxu0 %v6893
    %v6912 = vpop.f32.mrf.mxu0
    %v6913 = vadd.f32 %v6887, %v6912
    %6914 = vdwg.mxu0
    %v6915 = vxor.u32 %v6913, 2147483648
    %v6916 = vmul.f32 %v6915, 1.442695
    %v6917 = vpow.pop %v6916
    %v6918 = vadd.f32 %v6917, 1.0
    %v6919 = vrcp.pop %v6918
    %v6920 = vmul.f32 %v6918, %v6919
    %v6921 = vsub.f32 1.0, %v6920
    %v6922 = vmul.f32 %v6919, %v6921
    %v6923 = vadd.f32 %v6919, %v6922
    %vm6924 = vweird.f32 %v6918
    %vm6925 = vweird.f32 %v6919
    %vm6926 = vmor %vm6924, %vm6925
    %v6927 = vsel %vm6926, %v6919, %v6923
    %v6928 = vand.u32 2147483647, %v6918
    %vm6929 = vcmp.eq.f32.partialorder %v6928, 8.507059e+37
    %v6930 = vand.u32 %v6918, 2147483648
    %v6931 = vor.u32 1.1754944e-38, %v6930
    %v6932 = vsel %vm6929, %v6931, %v6927
    %v6933 = vmul.f32 1.0, %v6932
    %v6934 = vmul.f32 %v6913, %v6933
    %v6935 = vld [vmem:[%s9] sm:$0xff]
    %v6936 = vld [vmem:[%s10] sm:$0x1]
    %v6938 = vperm.slane %v6936, 0
    %vm6940 = vcmask 64512
    %v6942 = vsel %vm6940, %v6934, 0
    %6944 = vmatpush.msra.mxu0 0.0
    %6945 = vmatpush.msra.mxu0 0.0
    %6946 = vmatpush.msra.mxu0 0.0
    %6947 = vmatpush.msra.mxu0 0.0
    %6948 = vmatpush.msra.mxu0 0.0
    %6949 = vmatpush.msra.mxu0 0.0
    %6950 = vmatpush.msra.mxu0 0.0
    %6951 = vmatpush.msra.mxu0 0.0
    %6952 = vmatpush.msra.mxu0 0.0
    %6953 = vmatpush.msra.mxu0 0.0
    %6954 = vmatpush.msra.mxu0 0.0
    %6955 = vmatpush.msra.mxu0 0.0
    %6956 = vmatpush.msra.mxu0 0.0
    %6957 = vmatpush.msra.mxu0 0.0
    %6958 = vmatpush.msra.mxu0 0.0
    %6959 = vmatpush.msra.mxu0 %v6935
    %6960 = vmatmul.f32.gmra.mxu0 %v6942
    %v6961 = vpop.f32.mrf.mxu0
    %v6962 = vadd.f32 %v6938, %v6961
    %6963 = vdwg.mxu0
    %v6964 = vxor.u32 %v6962, 2147483648
    %v6965 = vmul.f32 %v6964, 1.442695
    %v6966 = vpow.pop %v6965
    %v6967 = vadd.f32 %v6966, 1.0
    %v6968 = vrcp.pop %v6967
    %v6969 = vmul.f32 %v6967, %v6968
    %v6970 = vsub.f32 1.0, %v6969
    %v6971 = vmul.f32 %v6968, %v6970
    %v6972 = vadd.f32 %v6968, %v6971
    %vm6973 = vweird.f32 %v6967
    %vm6974 = vweird.f32 %v6968
    %vm6975 = vmor %vm6973, %vm6974
    %v6976 = vsel %vm6975, %v6968, %v6972
    %v6977 = vand.u32 2147483647, %v6967
    %vm6978 = vcmp.eq.f32.partialorder %v6977, 8.507059e+37
    %v6979 = vand.u32 %v6967, 2147483648
    %v6980 = vor.u32 1.1754944e-38, %v6979
    %v6981 = vsel %vm6978, %v6980, %v6976
    %v6982 = vmul.f32 1.0, %v6981
    %v6983 = vperm.slane %v6982, 0
    %v6984 = vmul.f32 %v6673, %v6983
    %v6985 = vmul.f32 %v6674, %v6983
    %6986 = vst.msk [vmem:[#allocation3] sm:$0xff] %vm302, %v6984
    %6987 = vst.msk [vmem:[#allocation3 + $0x8] sm:$0xff] %vm302, %v6985
    %v6988 = vmul.f32 %v6675, %v6983
    %v6989 = vmul.f32 %v6676, %v6983
    %6990 = vst.msk [vmem:[#allocation3 + $0x10] sm:$0xff] %vm302, %v6988
    %6991 = vst.msk [vmem:[#allocation3 + $0x18] sm:$0xff] %vm302, %v6989
    %v6992 = vmul.f32 %v6677, %v6983
    %v6993 = vmul.f32 %v6678, %v6983
    %6994 = vst.msk [vmem:[#allocation3 + $0x20] sm:$0xff] %vm302, %v6992
    %6995 = vst.msk [vmem:[#allocation3 + $0x28] sm:$0xff] %vm302, %v6993
    %v6996 = vmul.f32 %v6679, %v6983
    %v6997 = vmul.f32 %v6680, %v6983
    %6998 = vst.msk [vmem:[#allocation3 + $0x30] sm:$0xff] %vm302, %v6996
    %6999 = vst.msk [vmem:[#allocation3 + $0x38] sm:$0xff] %vm302, %v6997
    %v7000 = vmul.f32 %v6681, %v6983
    %v7001 = vmul.f32 %v6682, %v6983
    %7002 = vst.msk [vmem:[#allocation3 + $0x40] sm:$0xff] %vm302, %v7000
    %7003 = vst.msk [vmem:[#allocation3 + $0x48] sm:$0xff] %vm302, %v7001
    %v7004 = vmul.f32 %v6683, %v6983
    %v7005 = vmul.f32 %v6684, %v6983
    %7006 = vst.msk [vmem:[#allocation3 + $0x50] sm:$0xff] %vm302, %v7004
    %7007 = vst.msk [vmem:[#allocation3 + $0x58] sm:$0xff] %vm302, %v7005
    %v7008 = vmul.f32 %v6685, %v6983
    %v7009 = vmul.f32 %v6686, %v6983
    %7010 = vst.msk [vmem:[#allocation3 + $0x60] sm:$0xff] %vm302, %v7008
    %7011 = vst.msk [vmem:[#allocation3 + $0x68] sm:$0xff] %vm302, %v7009
    %v7012 = vmul.f32 %v6687, %v6983
    %v7013 = vmul.f32 %v6688, %v6983
    %7014 = vst.msk [vmem:[#allocation3 + $0x70] sm:$0xff] %vm302, %v7012
    %7015 = vst.msk [vmem:[#allocation3 + $0x78] sm:$0xff] %vm302, %v7013
    %v7016 = vmul.f32 %v6689, %v6983
    %v7017 = vmul.f32 %v6690, %v6983
    %7018 = vst.msk [vmem:[#allocation3 + $0x80] sm:$0xff] %vm302, %v7016
    %7019 = vst.msk [vmem:[#allocation3 + $0x88] sm:$0xff] %vm302, %v7017
    %v7020 = vmul.f32 %v6691, %v6983
    %v7021 = vmul.f32 %v6692, %v6983
    %7022 = vst.msk [vmem:[#allocation3 + $0x90] sm:$0xff] %vm302, %v7020
    %7023 = vst.msk [vmem:[#allocation3 + $0x98] sm:$0xff] %vm302, %v7021
    %v7024 = vmul.f32 %v6693, %v6983
    %v7025 = vmul.f32 %v6694, %v6983
    %7026 = vst.msk [vmem:[#allocation3 + $0xa0] sm:$0xff] %vm302, %v7024
    %7027 = vst.msk [vmem:[#allocation3 + $0xa8] sm:$0xff] %vm302, %v7025
    %v7028 = vmul.f32 %v6695, %v6983
    %v7029 = vmul.f32 %v6696, %v6983
    %7030 = vst.msk [vmem:[#allocation3 + $0xb0] sm:$0xff] %vm302, %v7028
    %7031 = vst.msk [vmem:[#allocation3 + $0xb8] sm:$0xff] %vm302, %v7029
    %v7032 = vmul.f32 %v6697, %v6983
    %v7033 = vmul.f32 %v6698, %v6983
    %7034 = vst.msk [vmem:[#allocation3 + $0xc0] sm:$0xff] %vm302, %v7032
    %7035 = vst.msk [vmem:[#allocation3 + $0xc8] sm:$0xff] %vm302, %v7033
    %v7036 = vmul.f32 %v6699, %v6983
    %v7037 = vmul.f32 %v6700, %v6983
    %7038 = vst.msk [vmem:[#allocation3 + $0xd0] sm:$0xff] %vm302, %v7036
    %7039 = vst.msk [vmem:[#allocation3 + $0xd8] sm:$0xff] %vm302, %v7037
    %v7040 = vmul.f32 %v6701, %v6983
    %v7041 = vmul.f32 %v6702, %v6983
    %7042 = vst.msk [vmem:[#allocation3 + $0xe0] sm:$0xff] %vm302, %v7040
    %7043 = vst.msk [vmem:[#allocation3 + $0xe8] sm:$0xff] %vm302, %v7041
    %v7044 = vmul.f32 %v6703, %v6983
    %v7045 = vmul.f32 %v6704, %v6983
    %7046 = vst.msk [vmem:[#allocation3 + $0xf0] sm:$0xff] %vm302, %v7044
    %7047 = vst.msk [vmem:[#allocation3 + $0xf8] sm:$0xff] %vm302, %v7045
    %v7048 = vperm.slane %v6982, 1
    %v7049 = vmul.f32 %v6705, %v7048
    %v7050 = vmul.f32 %v6706, %v7048
    %7051 = vst.msk [vmem:[#allocation3 + $0x100] sm:$0xff] %vm302, %v7049
    %7052 = vst.msk [vmem:[#allocation3 + $0x108] sm:$0xff] %vm302, %v7050
    %v7053 = vmul.f32 %v6707, %v7048
    %v7054 = vmul.f32 %v6708, %v7048
    %7055 = vst.msk [vmem:[#allocation3 + $0x110] sm:$0xff] %vm302, %v7053
    %7056 = vst.msk [vmem:[#allocation3 + $0x118] sm:$0xff] %vm302, %v7054
    %v7057 = vmul.f32 %v6709, %v7048
    %v7058 = vmul.f32 %v6710, %v7048
    %7059 = vst.msk [vmem:[#allocation3 + $0x120] sm:$0xff] %vm302, %v7057
    %7060 = vst.msk [vmem:[#allocation3 + $0x128] sm:$0xff] %vm302, %v7058
    %v7061 = vmul.f32 %v6711, %v7048
    %v7062 = vmul.f32 %v6712, %v7048
    %7063 = vst.msk [vmem:[#allocation3 + $0x130] sm:$0xff] %vm302, %v7061
    %7064 = vst.msk [vmem:[#allocation3 + $0x138] sm:$0xff] %vm302, %v7062
    %v7065 = vmul.f32 %v6713, %v7048
    %v7066 = vmul.f32 %v6714, %v7048
    %7067 = vst.msk [vmem:[#allocation3 + $0x140] sm:$0xff] %vm302, %v7065
    %7068 = vst.msk [vmem:[#allocation3 + $0x148] sm:$0xff] %vm302, %v7066
    %v7069 = vmul.f32 %v6715, %v7048
    %v7070 = vmul.f32 %v6716, %v7048
    %7071 = vst.msk [vmem:[#allocation3 + $0x150] sm:$0xff] %vm302, %v7069
    %7072 = vst.msk [vmem:[#allocation3 + $0x158] sm:$0xff] %vm302, %v7070
    %v7073 = vmul.f32 %v6717, %v7048
    %v7074 = vmul.f32 %v6718, %v7048
    %7075 = vst.msk [vmem:[#allocation3 + $0x160] sm:$0xff] %vm302, %v7073
    %7076 = vst.msk [vmem:[#allocation3 + $0x168] sm:$0xff] %vm302, %v7074
    %v7077 = vmul.f32 %v6719, %v7048
    %v7078 = vmul.f32 %v6720, %v7048
    %7079 = vst.msk [vmem:[#allocation3 + $0x170] sm:$0xff] %vm302, %v7077
    %7080 = vst.msk [vmem:[#allocation3 + $0x178] sm:$0xff] %vm302, %v7078
    %v7081 = vmul.f32 %v6721, %v7048
    %v7082 = vmul.f32 %v6722, %v7048
    %7083 = vst.msk [vmem:[#allocation3 + $0x180] sm:$0xff] %vm302, %v7081
    %7084 = vst.msk [vmem:[#allocation3 + $0x188] sm:$0xff] %vm302, %v7082
    %v7085 = vmul.f32 %v6723, %v7048
    %v7086 = vmul.f32 %v6724, %v7048
    %7087 = vst.msk [vmem:[#allocation3 + $0x190] sm:$0xff] %vm302, %v7085
    %7088 = vst.msk [vmem:[#allocation3 + $0x198] sm:$0xff] %vm302, %v7086
    %v7089 = vmul.f32 %v6725, %v7048
    %v7090 = vmul.f32 %v6726, %v7048
    %7091 = vst.msk [vmem:[#allocation3 + $0x1a0] sm:$0xff] %vm302, %v7089
    %7092 = vst.msk [vmem:[#allocation3 + $0x1a8] sm:$0xff] %vm302, %v7090
    %v7093 = vmul.f32 %v6727, %v7048
    %v7094 = vmul.f32 %v6728, %v7048
    %7095 = vst.msk [vmem:[#allocation3 + $0x1b0] sm:$0xff] %vm302, %v7093
    %7096 = vst.msk [vmem:[#allocation3 + $0x1b8] sm:$0xff] %vm302, %v7094
    %v7097 = vmul.f32 %v6729, %v7048
    %v7098 = vmul.f32 %v6730, %v7048
    %7099 = vst.msk [vmem:[#allocation3 + $0x1c0] sm:$0xff] %vm302, %v7097
    %7100 = vst.msk [vmem:[#allocation3 + $0x1c8] sm:$0xff] %vm302, %v7098
    %v7101 = vmul.f32 %v6731, %v7048
    %v7102 = vmul.f32 %v6732, %v7048
    %7103 = vst.msk [vmem:[#allocation3 + $0x1d0] sm:$0xff] %vm302, %v7101
    %7104 = vst.msk [vmem:[#allocation3 + $0x1d8] sm:$0xff] %vm302, %v7102
    %v7105 = vmul.f32 %v6733, %v7048
    %v7106 = vmul.f32 %v6734, %v7048
    %7107 = vst.msk [vmem:[#allocation3 + $0x1e0] sm:$0xff] %vm302, %v7105
    %7108 = vst.msk [vmem:[#allocation3 + $0x1e8] sm:$0xff] %vm302, %v7106
    %v7109 = vmul.f32 %v6735, %v7048
    %v7110 = vmul.f32 %v6736, %v7048
    %7111 = vst.msk [vmem:[#allocation3 + $0x1f0] sm:$0xff] %vm302, %v7109
    %7112 = vst.msk [vmem:[#allocation3 + $0x1f8] sm:$0xff] %vm302, %v7110
    %v7113 = vld [vmem:[#allocation3] sm:$0xff]
    %v7114 = vld [vmem:[#allocation3 + $0x8] sm:$0xff]
    %v7115 = vld [vmem:[#allocation3 + $0x10] sm:$0xff]
    %v7116 = vld [vmem:[#allocation3 + $0x18] sm:$0xff]
    %v7117 = vld [vmem:[#allocation3 + $0x20] sm:$0xff]
    %v7118 = vld [vmem:[#allocation3 + $0x28] sm:$0xff]
    %v7119 = vld [vmem:[#allocation3 + $0x30] sm:$0xff]
    %v7120 = vld [vmem:[#allocation3 + $0x38] sm:$0xff]
    %v7121 = vld [vmem:[#allocation3 + $0x40] sm:$0xff]
    %v7122 = vld [vmem:[#allocation3 + $0x48] sm:$0xff]
    %v7123 = vld [vmem:[#allocation3 + $0x50] sm:$0xff]
    %v7124 = vld [vmem:[#allocation3 + $0x58] sm:$0xff]
    %v7125 = vld [vmem:[#allocation3 + $0x60] sm:$0xff]
    %v7126 = vld [vmem:[#allocation3 + $0x68] sm:$0xff]
    %v7127 = vld [vmem:[#allocation3 + $0x70] sm:$0xff]
    %v7128 = vld [vmem:[#allocation3 + $0x78] sm:$0xff]
    %v7129 = vld [vmem:[#allocation3 + $0x80] sm:$0xff]
    %v7130 = vld [vmem:[#allocation3 + $0x88] sm:$0xff]
    %v7131 = vld [vmem:[#allocation3 + $0x90] sm:$0xff]
    %v7132 = vld [vmem:[#allocation3 + $0x98] sm:$0xff]
    %v7133 = vld [vmem:[#allocation3 + $0xa0] sm:$0xff]
    %v7134 = vld [vmem:[#allocation3 + $0xa8] sm:$0xff]
    %v7135 = vld [vmem:[#allocation3 + $0xb0] sm:$0xff]
    %v7136 = vld [vmem:[#allocation3 + $0xb8] sm:$0xff]
    %v7137 = vld [vmem:[#allocation3 + $0xc0] sm:$0xff]
    %v7138 = vld [vmem:[#allocation3 + $0xc8] sm:$0xff]
    %v7139 = vld [vmem:[#allocation3 + $0xd0] sm:$0xff]
    %v7140 = vld [vmem:[#allocation3 + $0xd8] sm:$0xff]
    %v7141 = vld [vmem:[#allocation3 + $0xe0] sm:$0xff]
    %v7142 = vld [vmem:[#allocation3 + $0xe8] sm:$0xff]
    %v7143 = vld [vmem:[#allocation3 + $0xf0] sm:$0xff]
    %v7144 = vld [vmem:[#allocation3 + $0xf8] sm:$0xff]
    %v7145 = vld [vmem:[#allocation3 + $0x100] sm:$0xff]
    %v7146 = vld [vmem:[#allocation3 + $0x108] sm:$0xff]
    %v7147 = vld [vmem:[#allocation3 + $0x110] sm:$0xff]
    %v7148 = vld [vmem:[#allocation3 + $0x118] sm:$0xff]
    %v7149 = vld [vmem:[#allocation3 + $0x120] sm:$0xff]
    %v7150 = vld [vmem:[#allocation3 + $0x128] sm:$0xff]
    %v7151 = vld [vmem:[#allocation3 + $0x130] sm:$0xff]
    %v7152 = vld [vmem:[#allocation3 + $0x138] sm:$0xff]
    %v7153 = vld [vmem:[#allocation3 + $0x140] sm:$0xff]
    %v7154 = vld [vmem:[#allocation3 + $0x148] sm:$0xff]
    %v7155 = vld [vmem:[#allocation3 + $0x150] sm:$0xff]
    %v7156 = vld [vmem:[#allocation3 + $0x158] sm:$0xff]
    %v7157 = vld [vmem:[#allocation3 + $0x160] sm:$0xff]
    %v7158 = vld [vmem:[#allocation3 + $0x168] sm:$0xff]
    %v7159 = vld [vmem:[#allocation3 + $0x170] sm:$0xff]
    %v7160 = vld [vmem:[#allocation3 + $0x178] sm:$0xff]
    %v7161 = vld [vmem:[#allocation3 + $0x180] sm:$0xff]
    %v7162 = vld [vmem:[#allocation3 + $0x188] sm:$0xff]
    %v7163 = vld [vmem:[#allocation3 + $0x190] sm:$0xff]
    %v7164 = vld [vmem:[#allocation3 + $0x198] sm:$0xff]
    %v7165 = vld [vmem:[#allocation3 + $0x1a0] sm:$0xff]
    %v7166 = vld [vmem:[#allocation3 + $0x1a8] sm:$0xff]
    %v7167 = vld [vmem:[#allocation3 + $0x1b0] sm:$0xff]
    %v7168 = vld [vmem:[#allocation3 + $0x1b8] sm:$0xff]
    %v7169 = vld [vmem:[#allocation3 + $0x1c0] sm:$0xff]
    %v7170 = vld [vmem:[#allocation3 + $0x1c8] sm:$0xff]
    %v7171 = vld [vmem:[#allocation3 + $0x1d0] sm:$0xff]
    %v7172 = vld [vmem:[#allocation3 + $0x1d8] sm:$0xff]
    %v7173 = vld [vmem:[#allocation3 + $0x1e0] sm:$0xff]
    %v7174 = vld [vmem:[#allocation3 + $0x1e8] sm:$0xff]
    %v7175 = vld [vmem:[#allocation3 + $0x1f0] sm:$0xff]
    %v7176 = vld [vmem:[#allocation3 + $0x1f8] sm:$0xff]
    %v7177 = vpack.c.bf16 %v7114, %v7113
    %v7178 = vpack.c.bf16 %v7116, %v7115
    %v7179 = vpack.c.bf16 %v7118, %v7117
    %v7180 = vpack.c.bf16 %v7120, %v7119
    %v7181 = vpack.c.bf16 %v7122, %v7121
    %v7182 = vpack.c.bf16 %v7124, %v7123
    %v7183 = vpack.c.bf16 %v7126, %v7125
    %v7184 = vpack.c.bf16 %v7128, %v7127
    %v7185 = vpack.c.bf16 %v7130, %v7129
    %v7186 = vpack.c.bf16 %v7132, %v7131
    %v7187 = vpack.c.bf16 %v7134, %v7133
    %v7188 = vpack.c.bf16 %v7136, %v7135
    %v7189 = vpack.c.bf16 %v7138, %v7137
    %v7190 = vpack.c.bf16 %v7140, %v7139
    %v7191 = vpack.c.bf16 %v7142, %v7141
    %v7192 = vpack.c.bf16 %v7144, %v7143
    %v7193 = vpack.c.bf16 %v7146, %v7145
    %v7194 = vpack.c.bf16 %v7148, %v7147
    %v7195 = vpack.c.bf16 %v7150, %v7149
    %v7196 = vpack.c.bf16 %v7152, %v7151
    %v7197 = vpack.c.bf16 %v7154, %v7153
    %v7198 = vpack.c.bf16 %v7156, %v7155
    %v7199 = vpack.c.bf16 %v7158, %v7157
    %v7200 = vpack.c.bf16 %v7160, %v7159
    %v7201 = vpack.c.bf16 %v7162, %v7161
    %v7202 = vpack.c.bf16 %v7164, %v7163
    %v7203 = vpack.c.bf16 %v7166, %v7165
    %v7204 = vpack.c.bf16 %v7168, %v7167
    %v7205 = vpack.c.bf16 %v7170, %v7169
    %v7206 = vpack.c.bf16 %v7172, %v7171
    %v7207 = vpack.c.bf16 %v7174, %v7173
    %v7208 = vpack.c.bf16 %v7176, %v7175
    %v7209 = vld [vmem:[%s11] sm:$0xf]
    %v7210 = vld [vmem:[%s11 + $0x4] sm:$0xf]
    %v7211 = vld [vmem:[%s11 + $0x8] sm:$0xf]
    %v7212 = vld [vmem:[%s11 + $0xc] sm:$0xf]
    %v7213 = vld [vmem:[%s12] sm:$0x1]
    %v7215 = vperm.slane %v7213, 0
    %v7221 = vunpack.c.l.b16 %v7209
    %v7222 = vunpack.c.l.b16 %v7210
    %v7223 = vunpack.c.l.b16 %v7211
    %v7224 = vunpack.c.l.b16 %v7212
    %v7225 = vpack.c.b16 %v7222, %v7221
    %v7226 = vpack.c.b16 %v7224, %v7223
    %v7230 = vsel %vm302, %v7177, 0
    %v7233 = vsel %vm302, %v7178, 0
    %v7236 = vsel %vm302, %v7179, 0
    %v7239 = vsel %vm302, %v7180, 0
    %v7242 = vsel %vm302, %v7181, 0
    %v7245 = vsel %vm302, %v7182, 0
    %v7248 = vsel %vm302, %v7183, 0
    %v7251 = vsel %vm302, %v7184, 0
    %v7254 = vsel %vm302, %v7185, 0
    %v7257 = vsel %vm302, %v7186, 0
    %v7260 = vsel %vm302, %v7187, 0
    %v7263 = vsel %vm302, %v7188, 0
    %v7266 = vsel %vm302, %v7189, 0
    %v7269 = vsel %vm302, %v7190, 0
    %v7272 = vsel %vm302, %v7191, 0
    %v7275 = vsel %vm302, %v7192, 0
    %v7278 = vsel %vm302, %v7193, 0
    %v7281 = vsel %vm302, %v7194, 0
    %v7284 = vsel %vm302, %v7195, 0
    %v7287 = vsel %vm302, %v7196, 0
    %v7290 = vsel %vm302, %v7197, 0
    %v7293 = vsel %vm302, %v7198, 0
    %v7296 = vsel %vm302, %v7199, 0
    %v7299 = vsel %vm302, %v7200, 0
    %v7302 = vsel %vm302, %v7201, 0
    %v7305 = vsel %vm302, %v7202, 0
    %v7308 = vsel %vm302, %v7203, 0
    %v7311 = vsel %vm302, %v7204, 0
    %v7314 = vsel %vm302, %v7205, 0
    %v7317 = vsel %vm302, %v7206, 0
    %v7320 = vsel %vm302, %v7207, 0
    %v7323 = vsel %vm302, %v7208, 0
    %7325 = vmatpush.bf16.msra.mxu0 0
    %7326 = vmatpush.bf16.msra.mxu0 0
    %7327 = vmatpush.bf16.msra.mxu0 0
    %7328 = vmatpush.bf16.msra.mxu0 0
    %7329 = vmatpush.bf16.msra.mxu0 0
    %7330 = vmatpush.bf16.msra.mxu0 0
    %7331 = vmatpush.bf16.msra.mxu0 %v7226
    %7332 = vmatpush.bf16.msra.mxu0 %v7225
    %7333 = vmatmul.bf16.gmra.mxu0 %v7230
    %v7334 = vpop.f32.mrf.mxu0
    %v7335 = vadd.f32 %v7215, %v7334
    %v7336 = vpop.f32.mrf.mxu0
    %v7337 = vadd.f32 %v7215, %v7336
    %7338 = vmatmul.bf16.gmra.mxu0 %v7233
    %v7339 = vpop.f32.mrf.mxu0
    %v7340 = vadd.f32 %v7215, %v7339
    %v7341 = vpop.f32.mrf.mxu0
    %v7342 = vadd.f32 %v7215, %v7341
    %7343 = vmatmul.bf16.gmra.mxu0 %v7236
    %v7344 = vpop.f32.mrf.mxu0
    %v7345 = vadd.f32 %v7215, %v7344
    %v7346 = vpop.f32.mrf.mxu0
    %v7347 = vadd.f32 %v7215, %v7346
    %7348 = vmatmul.bf16.gmra.mxu0 %v7239
    %v7349 = vpop.f32.mrf.mxu0
    %v7350 = vadd.f32 %v7215, %v7349
    %v7351 = vpop.f32.mrf.mxu0
    %v7352 = vadd.f32 %v7215, %v7351
    %7353 = vmatmul.bf16.gmra.mxu0 %v7242
    %v7354 = vpop.f32.mrf.mxu0
    %v7355 = vadd.f32 %v7215, %v7354
    %v7356 = vpop.f32.mrf.mxu0
    %v7357 = vadd.f32 %v7215, %v7356
    %7358 = vmatmul.bf16.gmra.mxu0 %v7245
    %v7359 = vpop.f32.mrf.mxu0
    %v7360 = vadd.f32 %v7215, %v7359
    %v7361 = vpop.f32.mrf.mxu0
    %v7362 = vadd.f32 %v7215, %v7361
    %7363 = vmatmul.bf16.gmra.mxu0 %v7248
    %v7364 = vpop.f32.mrf.mxu0
    %v7365 = vadd.f32 %v7215, %v7364
    %v7366 = vpop.f32.mrf.mxu0
    %v7367 = vadd.f32 %v7215, %v7366
    %7368 = vmatmul.bf16.gmra.mxu0 %v7251
    %v7369 = vpop.f32.mrf.mxu0
    %v7370 = vadd.f32 %v7215, %v7369
    %v7371 = vpop.f32.mrf.mxu0
    %v7372 = vadd.f32 %v7215, %v7371
    %7373 = vmatmul.bf16.gmra.mxu0 %v7254
    %v7374 = vpop.f32.mrf.mxu0
    %v7375 = vadd.f32 %v7215, %v7374
    %v7376 = vpop.f32.mrf.mxu0
    %v7377 = vadd.f32 %v7215, %v7376
    %7378 = vmatmul.bf16.gmra.mxu0 %v7257
    %v7379 = vpop.f32.mrf.mxu0
    %v7380 = vadd.f32 %v7215, %v7379
    %v7381 = vpop.f32.mrf.mxu0
    %v7382 = vadd.f32 %v7215, %v7381
    %7383 = vmatmul.bf16.gmra.mxu0 %v7260
    %v7384 = vpop.f32.mrf.mxu0
    %v7385 = vadd.f32 %v7215, %v7384
    %v7386 = vpop.f32.mrf.mxu0
    %v7387 = vadd.f32 %v7215, %v7386
    %7388 = vmatmul.bf16.gmra.mxu0 %v7263
    %v7389 = vpop.f32.mrf.mxu0
    %v7390 = vadd.f32 %v7215, %v7389
    %v7391 = vpop.f32.mrf.mxu0
    %v7392 = vadd.f32 %v7215, %v7391
    %7393 = vmatmul.bf16.gmra.mxu0 %v7266
    %v7394 = vpop.f32.mrf.mxu0
    %v7395 = vadd.f32 %v7215, %v7394
    %v7396 = vpop.f32.mrf.mxu0
    %v7397 = vadd.f32 %v7215, %v7396
    %7398 = vmatmul.bf16.gmra.mxu0 %v7269
    %v7399 = vpop.f32.mrf.mxu0
    %v7400 = vadd.f32 %v7215, %v7399
    %v7401 = vpop.f32.mrf.mxu0
    %v7402 = vadd.f32 %v7215, %v7401
    %7403 = vmatmul.bf16.gmra.mxu0 %v7272
    %v7404 = vpop.f32.mrf.mxu0
    %v7405 = vadd.f32 %v7215, %v7404
    %v7406 = vpop.f32.mrf.mxu0
    %v7407 = vadd.f32 %v7215, %v7406
    %7408 = vmatmul.bf16.gmra.mxu0 %v7275
    %v7409 = vpop.f32.mrf.mxu0
    %v7410 = vadd.f32 %v7215, %v7409
    %v7411 = vpop.f32.mrf.mxu0
    %v7412 = vadd.f32 %v7215, %v7411
    %7413 = vmatmul.bf16.gmra.mxu0 %v7278
    %v7414 = vpop.f32.mrf.mxu0
    %v7415 = vadd.f32 %v7215, %v7414
    %v7416 = vpop.f32.mrf.mxu0
    %v7417 = vadd.f32 %v7215, %v7416
    %7418 = vmatmul.bf16.gmra.mxu0 %v7281
    %v7419 = vpop.f32.mrf.mxu0
    %v7420 = vadd.f32 %v7215, %v7419
    %v7421 = vpop.f32.mrf.mxu0
    %v7422 = vadd.f32 %v7215, %v7421
    %7423 = vmatmul.bf16.gmra.mxu0 %v7284
    %v7424 = vpop.f32.mrf.mxu0
    %v7425 = vadd.f32 %v7215, %v7424
    %v7426 = vpop.f32.mrf.mxu0
    %v7427 = vadd.f32 %v7215, %v7426
    %7428 = vmatmul.bf16.gmra.mxu0 %v7287
    %v7429 = vpop.f32.mrf.mxu0
    %v7430 = vadd.f32 %v7215, %v7429
    %v7431 = vpop.f32.mrf.mxu0
    %v7432 = vadd.f32 %v7215, %v7431
    %7433 = vmatmul.bf16.gmra.mxu0 %v7290
    %v7434 = vpop.f32.mrf.mxu0
    %v7435 = vadd.f32 %v7215, %v7434
    %v7436 = vpop.f32.mrf.mxu0
    %v7437 = vadd.f32 %v7215, %v7436
    %7438 = vmatmul.bf16.gmra.mxu0 %v7293
    %v7439 = vpop.f32.mrf.mxu0
    %v7440 = vadd.f32 %v7215, %v7439
    %v7441 = vpop.f32.mrf.mxu0
    %v7442 = vadd.f32 %v7215, %v7441
    %7443 = vmatmul.bf16.gmra.mxu0 %v7296
    %v7444 = vpop.f32.mrf.mxu0
    %v7445 = vadd.f32 %v7215, %v7444
    %v7446 = vpop.f32.mrf.mxu0
    %v7447 = vadd.f32 %v7215, %v7446
    %7448 = vmatmul.bf16.gmra.mxu0 %v7299
    %v7449 = vpop.f32.mrf.mxu0
    %v7450 = vadd.f32 %v7215, %v7449
    %v7451 = vpop.f32.mrf.mxu0
    %v7452 = vadd.f32 %v7215, %v7451
    %7453 = vmatmul.bf16.gmra.mxu0 %v7302
    %v7454 = vpop.f32.mrf.mxu0
    %v7455 = vadd.f32 %v7215, %v7454
    %v7456 = vpop.f32.mrf.mxu0
    %v7457 = vadd.f32 %v7215, %v7456
    %7458 = vmatmul.bf16.gmra.mxu0 %v7305
    %v7459 = vpop.f32.mrf.mxu0
    %v7460 = vadd.f32 %v7215, %v7459
    %v7461 = vpop.f32.mrf.mxu0
    %v7462 = vadd.f32 %v7215, %v7461
    %7463 = vmatmul.bf16.gmra.mxu0 %v7308
    %v7464 = vpop.f32.mrf.mxu0
    %v7465 = vadd.f32 %v7215, %v7464
    %v7466 = vpop.f32.mrf.mxu0
    %v7467 = vadd.f32 %v7215, %v7466
    %7468 = vmatmul.bf16.gmra.mxu0 %v7311
    %v7469 = vpop.f32.mrf.mxu0
    %v7470 = vadd.f32 %v7215, %v7469
    %v7471 = vpop.f32.mrf.mxu0
    %v7472 = vadd.f32 %v7215, %v7471
    %7473 = vmatmul.bf16.gmra.mxu0 %v7314
    %v7474 = vpop.f32.mrf.mxu0
    %v7475 = vadd.f32 %v7215, %v7474
    %v7476 = vpop.f32.mrf.mxu0
    %v7477 = vadd.f32 %v7215, %v7476
    %7478 = vmatmul.bf16.gmra.mxu0 %v7317
    %v7479 = vpop.f32.mrf.mxu0
    %v7480 = vadd.f32 %v7215, %v7479
    %v7481 = vpop.f32.mrf.mxu0
    %v7482 = vadd.f32 %v7215, %v7481
    %7483 = vmatmul.bf16.gmra.mxu0 %v7320
    %v7484 = vpop.f32.mrf.mxu0
    %v7485 = vadd.f32 %v7215, %v7484
    %v7486 = vpop.f32.mrf.mxu0
    %v7487 = vadd.f32 %v7215, %v7486
    %7488 = vmatmul.bf16.gmra.mxu0 %v7323
    %v7489 = vpop.f32.mrf.mxu0
    %v7490 = vadd.f32 %v7215, %v7489
    %v7491 = vpop.f32.mrf.mxu0
    %v7492 = vadd.f32 %v7215, %v7491
    %7493 = vdwg.mxu0
    %v7494 = vadd.f32 %v7335, %v1784
    %v7495 = vadd.f32 %v7337, %v1785
    %v7496 = vadd.f32 %v7340, %v1786
    %v7497 = vadd.f32 %v7342, %v1787
    %v7498 = vadd.f32 %v7345, %v1788
    %v7499 = vadd.f32 %v7347, %v1789
    %v7500 = vadd.f32 %v7350, %v1790
    %v7501 = vadd.f32 %v7352, %v1791
    %v7502 = vadd.f32 %v7355, %v1792
    %v7503 = vadd.f32 %v7357, %v1793
    %v7504 = vadd.f32 %v7360, %v1794
    %v7505 = vadd.f32 %v7362, %v1795
    %v7506 = vadd.f32 %v7365, %v1796
    %v7507 = vadd.f32 %v7367, %v1797
    %v7508 = vadd.f32 %v7370, %v1798
    %v7509 = vadd.f32 %v7372, %v1799
    %v7510 = vadd.f32 %v7375, %v1800
    %v7511 = vadd.f32 %v7377, %v1801
    %v7512 = vadd.f32 %v7380, %v1802
    %v7513 = vadd.f32 %v7382, %v1803
    %v7514 = vadd.f32 %v7385, %v1804
    %v7515 = vadd.f32 %v7387, %v1805
    %v7516 = vadd.f32 %v7390, %v1806
    %v7517 = vadd.f32 %v7392, %v1807
    %v7518 = vadd.f32 %v7395, %v1808
    %v7519 = vadd.f32 %v7397, %v1809
    %v7520 = vadd.f32 %v7400, %v1810
    %v7521 = vadd.f32 %v7402, %v1811
    %v7522 = vadd.f32 %v7405, %v1812
    %v7523 = vadd.f32 %v7407, %v1813
    %v7524 = vadd.f32 %v7410, %v1814
    %v7525 = vadd.f32 %v7412, %v1815
    %v7526 = vadd.f32 %v7415, %v1816
    %v7527 = vadd.f32 %v7417, %v1817
    %v7528 = vadd.f32 %v7420, %v1818
    %v7529 = vadd.f32 %v7422, %v1819
    %v7530 = vadd.f32 %v7425, %v1820
    %v7531 = vadd.f32 %v7427, %v1821
    %v7532 = vadd.f32 %v7430, %v1822
    %v7533 = vadd.f32 %v7432, %v1823
    %v7534 = vadd.f32 %v7435, %v1824
    %v7535 = vadd.f32 %v7437, %v1825
    %v7536 = vadd.f32 %v7440, %v1826
    %v7537 = vadd.f32 %v7442, %v1827
    %v7538 = vadd.f32 %v7445, %v1828
    %v7539 = vadd.f32 %v7447, %v1829
    %v7540 = vadd.f32 %v7450, %v1830
    %v7541 = vadd.f32 %v7452, %v1831
    %v7542 = vadd.f32 %v7455, %v1832
    %v7543 = vadd.f32 %v7457, %v1833
    %v7544 = vadd.f32 %v7460, %v1834
    %v7545 = vadd.f32 %v7462, %v1835
    %v7546 = vadd.f32 %v7465, %v1836
    %v7547 = vadd.f32 %v7467, %v1837
    %v7548 = vadd.f32 %v7470, %v1838
    %v7549 = vadd.f32 %v7472, %v1839
    %v7550 = vadd.f32 %v7475, %v1840
    %v7551 = vadd.f32 %v7477, %v1841
    %v7552 = vadd.f32 %v7480, %v1842
    %v7553 = vadd.f32 %v7482, %v1843
    %v7554 = vadd.f32 %v7485, %v1844
    %v7555 = vadd.f32 %v7487, %v1845
    %v7556 = vadd.f32 %v7490, %v1846
    %v7557 = vadd.f32 %v7492, %v1847
    %v7558 = vpack.c.bf16 %v7495, %v7494
    %v7559 = vpack.c.bf16 %v7497, %v7496
    %v7560 = vpack.c.bf16 %v7499, %v7498
    %v7561 = vpack.c.bf16 %v7501, %v7500
    %v7562 = vpack.c.bf16 %v7503, %v7502
    %v7563 = vpack.c.bf16 %v7505, %v7504
    %v7564 = vpack.c.bf16 %v7507, %v7506
    %v7565 = vpack.c.bf16 %v7509, %v7508
    %v7566 = vpack.c.bf16 %v7511, %v7510
    %v7567 = vpack.c.bf16 %v7513, %v7512
    %v7568 = vpack.c.bf16 %v7515, %v7514
    %v7569 = vpack.c.bf16 %v7517, %v7516
    %v7570 = vpack.c.bf16 %v7519, %v7518
    %v7571 = vpack.c.bf16 %v7521, %v7520
    %v7572 = vpack.c.bf16 %v7523, %v7522
    %v7573 = vpack.c.bf16 %v7525, %v7524
    %v7574 = vpack.c.bf16 %v7527, %v7526
    %v7575 = vpack.c.bf16 %v7529, %v7528
    %v7576 = vpack.c.bf16 %v7531, %v7530
    %v7577 = vpack.c.bf16 %v7533, %v7532
    %v7578 = vpack.c.bf16 %v7535, %v7534
    %v7579 = vpack.c.bf16 %v7537, %v7536
    %v7580 = vpack.c.bf16 %v7539, %v7538
    %v7581 = vpack.c.bf16 %v7541, %v7540
    %v7582 = vpack.c.bf16 %v7543, %v7542
    %v7583 = vpack.c.bf16 %v7545, %v7544
    %v7584 = vpack.c.bf16 %v7547, %v7546
    %v7585 = vpack.c.bf16 %v7549, %v7548
    %v7586 = vpack.c.bf16 %v7551, %v7550
    %v7587 = vpack.c.bf16 %v7553, %v7552
    %v7588 = vpack.c.bf16 %v7555, %v7554
    %v7589 = vpack.c.bf16 %v7557, %v7556
    %v7590 = vld [vmem:[%s13] sm:$0xf]
    %v7591 = vld [vmem:[%s13 + $0x4] sm:$0xf]
    %v7592 = vld [vmem:[%s14] sm:$0x1]
    %v7594 = vperm.slane %v7592, 0
    %v7598 = vunpack.c.l.b16 %v7590
    %v7599 = vunpack.c.l.b16 %v7591
    %v7600 = vpack.c.b16 %v7599, %v7598
    %v7603 = vsel %vm1892, %v7558, 0
    %v7606 = vsel %vm1892, %v7559, 0
    %v7609 = vsel %vm1892, %v7560, 0
    %v7612 = vsel %vm1892, %v7561, 0
    %v7615 = vsel %vm1892, %v7562, 0
    %v7618 = vsel %vm1892, %v7563, 0
    %v7621 = vsel %vm1892, %v7564, 0
    %v7624 = vsel %vm1892, %v7565, 0
    %v7627 = vsel %vm1892, %v7566, 0
    %v7630 = vsel %vm1892, %v7567, 0
    %v7633 = vsel %vm1892, %v7568, 0
    %v7636 = vsel %vm1892, %v7569, 0
    %v7639 = vsel %vm1892, %v7570, 0
    %v7642 = vsel %vm1892, %v7571, 0
    %v7645 = vsel %vm1892, %v7572, 0
    %v7648 = vsel %vm1892, %v7573, 0
    %v7651 = vsel %vm1892, %v7574, 0
    %v7654 = vsel %vm1892, %v7575, 0
    %v7657 = vsel %vm1892, %v7576, 0
    %v7660 = vsel %vm1892, %v7577, 0
    %v7663 = vsel %vm1892, %v7578, 0
    %v7666 = vsel %vm1892, %v7579, 0
    %v7669 = vsel %vm1892, %v7580, 0
    %v7672 = vsel %vm1892, %v7581, 0
    %v7675 = vsel %vm1892, %v7582, 0
    %v7678 = vsel %vm1892, %v7583, 0
    %v7681 = vsel %vm1892, %v7584, 0
    %v7684 = vsel %vm1892, %v7585, 0
    %v7687 = vsel %vm1892, %v7586, 0
    %v7690 = vsel %vm1892, %v7587, 0
    %v7693 = vsel %vm1892, %v7588, 0
    %v7696 = vsel %vm1892, %v7589, 0
    %7698 = vmatpush.bf16.msra.mxu0 0
    %7699 = vmatpush.bf16.msra.mxu0 0
    %7700 = vmatpush.bf16.msra.mxu0 0
    %7701 = vmatpush.bf16.msra.mxu0 0
    %7702 = vmatpush.bf16.msra.mxu0 0
    %7703 = vmatpush.bf16.msra.mxu0 0
    %7704 = vmatpush.bf16.msra.mxu0 0
    %7705 = vmatpush.bf16.msra.mxu0 %v7600
    %7706 = vmatmul.bf16.gmra.mxu0 %v7603
    %v7707 = vpop.f32.mrf.mxu0
    %v7708 = vadd.f32 %v7594, %v7707
    %v7709 = vpop.f32.mrf.mxu0
    %v7710 = vadd.f32 %v7594, %v7709
    %7711 = vmatmul.bf16.gmra.mxu0 %v7606
    %v7712 = vpop.f32.mrf.mxu0
    %v7713 = vadd.f32 %v7594, %v7712
    %v7714 = vpop.f32.mrf.mxu0
    %v7715 = vadd.f32 %v7594, %v7714
    %7716 = vmatmul.bf16.gmra.mxu0 %v7609
    %v7717 = vpop.f32.mrf.mxu0
    %v7718 = vadd.f32 %v7594, %v7717
    %v7719 = vpop.f32.mrf.mxu0
    %v7720 = vadd.f32 %v7594, %v7719
    %7721 = vmatmul.bf16.gmra.mxu0 %v7612
    %v7722 = vpop.f32.mrf.mxu0
    %v7723 = vadd.f32 %v7594, %v7722
    %v7724 = vpop.f32.mrf.mxu0
    %v7725 = vadd.f32 %v7594, %v7724
    %7726 = vmatmul.bf16.gmra.mxu0 %v7615
    %v7727 = vpop.f32.mrf.mxu0
    %v7728 = vadd.f32 %v7594, %v7727
    %v7729 = vpop.f32.mrf.mxu0
    %v7730 = vadd.f32 %v7594, %v7729
    %7731 = vmatmul.bf16.gmra.mxu0 %v7618
    %v7732 = vpop.f32.mrf.mxu0
    %v7733 = vadd.f32 %v7594, %v7732
    %v7734 = vpop.f32.mrf.mxu0
    %v7735 = vadd.f32 %v7594, %v7734
    %7736 = vmatmul.bf16.gmra.mxu0 %v7621
    %v7737 = vpop.f32.mrf.mxu0
    %v7738 = vadd.f32 %v7594, %v7737
    %v7739 = vpop.f32.mrf.mxu0
    %v7740 = vadd.f32 %v7594, %v7739
    %7741 = vmatmul.bf16.gmra.mxu0 %v7624
    %v7742 = vpop.f32.mrf.mxu0
    %v7743 = vadd.f32 %v7594, %v7742
    %v7744 = vpop.f32.mrf.mxu0
    %v7745 = vadd.f32 %v7594, %v7744
    %7746 = vmatmul.bf16.gmra.mxu0 %v7627
    %v7747 = vpop.f32.mrf.mxu0
    %v7748 = vadd.f32 %v7594, %v7747
    %v7749 = vpop.f32.mrf.mxu0
    %v7750 = vadd.f32 %v7594, %v7749
    %7751 = vmatmul.bf16.gmra.mxu0 %v7630
    %v7752 = vpop.f32.mrf.mxu0
    %v7753 = vadd.f32 %v7594, %v7752
    %v7754 = vpop.f32.mrf.mxu0
    %v7755 = vadd.f32 %v7594, %v7754
    %7756 = vmatmul.bf16.gmra.mxu0 %v7633
    %v7757 = vpop.f32.mrf.mxu0
    %v7758 = vadd.f32 %v7594, %v7757
    %v7759 = vpop.f32.mrf.mxu0
    %v7760 = vadd.f32 %v7594, %v7759
    %7761 = vmatmul.bf16.gmra.mxu0 %v7636
    %v7762 = vpop.f32.mrf.mxu0
    %v7763 = vadd.f32 %v7594, %v7762
    %v7764 = vpop.f32.mrf.mxu0
    %v7765 = vadd.f32 %v7594, %v7764
    %7766 = vmatmul.bf16.gmra.mxu0 %v7639
    %v7767 = vpop.f32.mrf.mxu0
    %v7768 = vadd.f32 %v7594, %v7767
    %v7769 = vpop.f32.mrf.mxu0
    %v7770 = vadd.f32 %v7594, %v7769
    %7771 = vmatmul.bf16.gmra.mxu0 %v7642
    %v7772 = vpop.f32.mrf.mxu0
    %v7773 = vadd.f32 %v7594, %v7772
    %v7774 = vpop.f32.mrf.mxu0
    %v7775 = vadd.f32 %v7594, %v7774
    %7776 = vmatmul.bf16.gmra.mxu0 %v7645
    %v7777 = vpop.f32.mrf.mxu0
    %v7778 = vadd.f32 %v7594, %v7777
    %v7779 = vpop.f32.mrf.mxu0
    %v7780 = vadd.f32 %v7594, %v7779
    %7781 = vmatmul.bf16.gmra.mxu0 %v7648
    %v7782 = vpop.f32.mrf.mxu0
    %v7783 = vadd.f32 %v7594, %v7782
    %v7784 = vpop.f32.mrf.mxu0
    %v7785 = vadd.f32 %v7594, %v7784
    %7786 = vmatmul.bf16.gmra.mxu0 %v7651
    %v7787 = vpop.f32.mrf.mxu0
    %v7788 = vadd.f32 %v7594, %v7787
    %v7789 = vpop.f32.mrf.mxu0
    %v7790 = vadd.f32 %v7594, %v7789
    %7791 = vmatmul.bf16.gmra.mxu0 %v7654
    %v7792 = vpop.f32.mrf.mxu0
    %v7793 = vadd.f32 %v7594, %v7792
    %v7794 = vpop.f32.mrf.mxu0
    %v7795 = vadd.f32 %v7594, %v7794
    %7796 = vmatmul.bf16.gmra.mxu0 %v7657
    %v7797 = vpop.f32.mrf.mxu0
    %v7798 = vadd.f32 %v7594, %v7797
    %v7799 = vpop.f32.mrf.mxu0
    %v7800 = vadd.f32 %v7594, %v7799
    %7801 = vmatmul.bf16.gmra.mxu0 %v7660
    %v7802 = vpop.f32.mrf.mxu0
    %v7803 = vadd.f32 %v7594, %v7802
    %v7804 = vpop.f32.mrf.mxu0
    %v7805 = vadd.f32 %v7594, %v7804
    %7806 = vmatmul.bf16.gmra.mxu0 %v7663
    %v7807 = vpop.f32.mrf.mxu0
    %v7808 = vadd.f32 %v7594, %v7807
    %v7809 = vpop.f32.mrf.mxu0
    %v7810 = vadd.f32 %v7594, %v7809
    %7811 = vmatmul.bf16.gmra.mxu0 %v7666
    %v7812 = vpop.f32.mrf.mxu0
    %v7813 = vadd.f32 %v7594, %v7812
    %v7814 = vpop.f32.mrf.mxu0
    %v7815 = vadd.f32 %v7594, %v7814
    %7816 = vmatmul.bf16.gmra.mxu0 %v7669
    %v7817 = vpop.f32.mrf.mxu0
    %v7818 = vadd.f32 %v7594, %v7817
    %v7819 = vpop.f32.mrf.mxu0
    %v7820 = vadd.f32 %v7594, %v7819
    %7821 = vmatmul.bf16.gmra.mxu0 %v7672
    %v7822 = vpop.f32.mrf.mxu0
    %v7823 = vadd.f32 %v7594, %v7822
    %v7824 = vpop.f32.mrf.mxu0
    %v7825 = vadd.f32 %v7594, %v7824
    %7826 = vmatmul.bf16.gmra.mxu0 %v7675
    %v7827 = vpop.f32.mrf.mxu0
    %v7828 = vadd.f32 %v7594, %v7827
    %v7829 = vpop.f32.mrf.mxu0
    %v7830 = vadd.f32 %v7594, %v7829
    %7831 = vmatmul.bf16.gmra.mxu0 %v7678
    %v7832 = vpop.f32.mrf.mxu0
    %v7833 = vadd.f32 %v7594, %v7832
    %v7834 = vpop.f32.mrf.mxu0
    %v7835 = vadd.f32 %v7594, %v7834
    %7836 = vmatmul.bf16.gmra.mxu0 %v7681
    %v7837 = vpop.f32.mrf.mxu0
    %v7838 = vadd.f32 %v7594, %v7837
    %v7839 = vpop.f32.mrf.mxu0
    %v7840 = vadd.f32 %v7594, %v7839
    %7841 = vmatmul.bf16.gmra.mxu0 %v7684
    %v7842 = vpop.f32.mrf.mxu0
    %v7843 = vadd.f32 %v7594, %v7842
    %v7844 = vpop.f32.mrf.mxu0
    %v7845 = vadd.f32 %v7594, %v7844
    %7846 = vmatmul.bf16.gmra.mxu0 %v7687
    %v7847 = vpop.f32.mrf.mxu0
    %v7848 = vadd.f32 %v7594, %v7847
    %v7849 = vpop.f32.mrf.mxu0
    %v7850 = vadd.f32 %v7594, %v7849
    %7851 = vmatmul.bf16.gmra.mxu0 %v7690
    %v7852 = vpop.f32.mrf.mxu0
    %v7853 = vadd.f32 %v7594, %v7852
    %v7854 = vpop.f32.mrf.mxu0
    %v7855 = vadd.f32 %v7594, %v7854
    %7856 = vmatmul.bf16.gmra.mxu0 %v7693
    %v7857 = vpop.f32.mrf.mxu0
    %v7858 = vadd.f32 %v7594, %v7857
    %v7859 = vpop.f32.mrf.mxu0
    %v7860 = vadd.f32 %v7594, %v7859
    %7861 = vmatmul.bf16.gmra.mxu0 %v7696
    %v7862 = vpop.f32.mrf.mxu0
    %v7863 = vadd.f32 %v7594, %v7862
    %v7864 = vpop.f32.mrf.mxu0
    %v7865 = vadd.f32 %v7594, %v7864
    %7866 = vdwg.mxu0
    %v7867 = vxor.u32 %v7708, 2147483648
    %v7868 = vxor.u32 %v7710, 2147483648
    %v7869 = vxor.u32 %v7713, 2147483648
    %v7870 = vxor.u32 %v7715, 2147483648
    %v7871 = vxor.u32 %v7718, 2147483648
    %v7872 = vxor.u32 %v7720, 2147483648
    %v7873 = vxor.u32 %v7723, 2147483648
    %v7874 = vxor.u32 %v7725, 2147483648
    %v7875 = vxor.u32 %v7728, 2147483648
    %v7876 = vxor.u32 %v7730, 2147483648
    %v7877 = vxor.u32 %v7733, 2147483648
    %v7878 = vxor.u32 %v7735, 2147483648
    %v7879 = vxor.u32 %v7738, 2147483648
    %v7880 = vxor.u32 %v7740, 2147483648
    %v7881 = vxor.u32 %v7743, 2147483648
    %v7882 = vxor.u32 %v7745, 2147483648
    %v7883 = vxor.u32 %v7748, 2147483648
    %v7884 = vxor.u32 %v7750, 2147483648
    %v7885 = vxor.u32 %v7753, 2147483648
    %v7886 = vxor.u32 %v7755, 2147483648
    %v7887 = vxor.u32 %v7758, 2147483648
    %v7888 = vxor.u32 %v7760, 2147483648
    %v7889 = vxor.u32 %v7763, 2147483648
    %v7890 = vxor.u32 %v7765, 2147483648
    %v7891 = vxor.u32 %v7768, 2147483648
    %v7892 = vxor.u32 %v7770, 2147483648
    %v7893 = vxor.u32 %v7773, 2147483648
    %v7894 = vxor.u32 %v7775, 2147483648
    %v7895 = vxor.u32 %v7778, 2147483648
    %v7896 = vxor.u32 %v7780, 2147483648
    %v7897 = vxor.u32 %v7783, 2147483648
    %v7898 = vxor.u32 %v7785, 2147483648
    %v7899 = vxor.u32 %v7788, 2147483648
    %v7900 = vxor.u32 %v7790, 2147483648
    %v7901 = vxor.u32 %v7793, 2147483648
    %v7902 = vxor.u32 %v7795, 2147483648
    %v7903 = vxor.u32 %v7798, 2147483648
    %v7904 = vxor.u32 %v7800, 2147483648
    %v7905 = vxor.u32 %v7803, 2147483648
    %v7906 = vxor.u32 %v7805, 2147483648
    %v7907 = vxor.u32 %v7808, 2147483648
    %v7908 = vxor.u32 %v7810, 2147483648
    %v7909 = vxor.u32 %v7813, 2147483648
    %v7910 = vxor.u32 %v7815, 2147483648
    %v7911 = vxor.u32 %v7818, 2147483648
    %v7912 = vxor.u32 %v7820, 2147483648
    %v7913 = vxor.u32 %v7823, 2147483648
    %v7914 = vxor.u32 %v7825, 2147483648
    %v7915 = vxor.u32 %v7828, 2147483648
    %v7916 = vxor.u32 %v7830, 2147483648
    %v7917 = vxor.u32 %v7833, 2147483648
    %v7918 = vxor.u32 %v7835, 2147483648
    %v7919 = vxor.u32 %v7838, 2147483648
    %v7920 = vxor.u32 %v7840, 2147483648
    %v7921 = vxor.u32 %v7843, 2147483648
    %v7922 = vxor.u32 %v7845, 2147483648
    %v7923 = vxor.u32 %v7848, 2147483648
    %v7924 = vxor.u32 %v7850, 2147483648
    %v7925 = vxor.u32 %v7853, 2147483648
    %v7926 = vxor.u32 %v7855, 2147483648
    %v7927 = vxor.u32 %v7858, 2147483648
    %v7928 = vxor.u32 %v7860, 2147483648
    %v7929 = vxor.u32 %v7863, 2147483648
    %v7930 = vxor.u32 %v7865, 2147483648
    %v7931 = vmul.f32 %v7867, 1.442695
    %v7932 = vpow.pop %v7931
    %v7933 = vmul.f32 %v7868, 1.442695
    %v7934 = vpow.pop %v7933
    %v7935 = vmul.f32 %v7869, 1.442695
    %v7936 = vpow.pop %v7935
    %v7937 = vmul.f32 %v7870, 1.442695
    %v7938 = vpow.pop %v7937
    %v7939 = vmul.f32 %v7871, 1.442695
    %v7940 = vpow.pop %v7939
    %v7941 = vmul.f32 %v7872, 1.442695
    %v7942 = vpow.pop %v7941
    %v7943 = vmul.f32 %v7873, 1.442695
    %v7944 = vpow.pop %v7943
    %v7945 = vmul.f32 %v7874, 1.442695
    %v7946 = vpow.pop %v7945
    %v7947 = vmul.f32 %v7875, 1.442695
    %v7948 = vpow.pop %v7947
    %v7949 = vmul.f32 %v7876, 1.442695
    %v7950 = vpow.pop %v7949
    %v7951 = vmul.f32 %v7877, 1.442695
    %v7952 = vpow.pop %v7951
    %v7953 = vmul.f32 %v7878, 1.442695
    %v7954 = vpow.pop %v7953
    %v7955 = vmul.f32 %v7879, 1.442695
    %v7956 = vpow.pop %v7955
    %v7957 = vmul.f32 %v7880, 1.442695
    %v7958 = vpow.pop %v7957
    %v7959 = vmul.f32 %v7881, 1.442695
    %v7960 = vpow.pop %v7959
    %v7961 = vmul.f32 %v7882, 1.442695
    %v7962 = vpow.pop %v7961
    %v7963 = vmul.f32 %v7883, 1.442695
    %v7964 = vpow.pop %v7963
    %v7965 = vmul.f32 %v7884, 1.442695
    %v7966 = vpow.pop %v7965
    %v7967 = vmul.f32 %v7885, 1.442695
    %v7968 = vpow.pop %v7967
    %v7969 = vmul.f32 %v7886, 1.442695
    %v7970 = vpow.pop %v7969
    %v7971 = vmul.f32 %v7887, 1.442695
    %v7972 = vpow.pop %v7971
    %v7973 = vmul.f32 %v7888, 1.442695
    %v7974 = vpow.pop %v7973
    %v7975 = vmul.f32 %v7889, 1.442695
    %v7976 = vpow.pop %v7975
    %v7977 = vmul.f32 %v7890, 1.442695
    %v7978 = vpow.pop %v7977
    %v7979 = vmul.f32 %v7891, 1.442695
    %v7980 = vpow.pop %v7979
    %v7981 = vmul.f32 %v7892, 1.442695
    %v7982 = vpow.pop %v7981
    %v7983 = vmul.f32 %v7893, 1.442695
    %v7984 = vpow.pop %v7983
    %v7985 = vmul.f32 %v7894, 1.442695
    %v7986 = vpow.pop %v7985
    %v7987 = vmul.f32 %v7895, 1.442695
    %v7988 = vpow.pop %v7987
    %v7989 = vmul.f32 %v7896, 1.442695
    %v7990 = vpow.pop %v7989
    %v7991 = vmul.f32 %v7897, 1.442695
    %v7992 = vpow.pop %v7991
    %v7993 = vmul.f32 %v7898, 1.442695
    %v7994 = vpow.pop %v7993
    %v7995 = vmul.f32 %v7899, 1.442695
    %v7996 = vpow.pop %v7995
    %v7997 = vmul.f32 %v7900, 1.442695
    %v7998 = vpow.pop %v7997
    %v7999 = vmul.f32 %v7901, 1.442695
    %v8000 = vpow.pop %v7999
    %v8001 = vmul.f32 %v7902, 1.442695
    %v8002 = vpow.pop %v8001
    %v8003 = vmul.f32 %v7903, 1.442695
    %v8004 = vpow.pop %v8003
    %v8005 = vmul.f32 %v7904, 1.442695
    %v8006 = vpow.pop %v8005
    %v8007 = vmul.f32 %v7905, 1.442695
    %v8008 = vpow.pop %v8007
    %v8009 = vmul.f32 %v7906, 1.442695
    %v8010 = vpow.pop %v8009
    %v8011 = vmul.f32 %v7907, 1.442695
    %v8012 = vpow.pop %v8011
    %v8013 = vmul.f32 %v7908, 1.442695
    %v8014 = vpow.pop %v8013
    %v8015 = vmul.f32 %v7909, 1.442695
    %v8016 = vpow.pop %v8015
    %v8017 = vmul.f32 %v7910, 1.442695
    %v8018 = vpow.pop %v8017
    %v8019 = vmul.f32 %v7911, 1.442695
    %v8020 = vpow.pop %v8019
    %v8021 = vmul.f32 %v7912, 1.442695
    %v8022 = vpow.pop %v8021
    %v8023 = vmul.f32 %v7913, 1.442695
    %v8024 = vpow.pop %v8023
    %v8025 = vmul.f32 %v7914, 1.442695
    %v8026 = vpow.pop %v8025
    %v8027 = vmul.f32 %v7915, 1.442695
    %v8028 = vpow.pop %v8027
    %v8029 = vmul.f32 %v7916, 1.442695
    %v8030 = vpow.pop %v8029
    %v8031 = vmul.f32 %v7917, 1.442695
    %v8032 = vpow.pop %v8031
    %v8033 = vmul.f32 %v7918, 1.442695
    %v8034 = vpow.pop %v8033
    %v8035 = vmul.f32 %v7919, 1.442695
    %v8036 = vpow.pop %v8035
    %v8037 = vmul.f32 %v7920, 1.442695
    %v8038 = vpow.pop %v8037
    %v8039 = vmul.f32 %v7921, 1.442695
    %v8040 = vpow.pop %v8039
    %v8041 = vmul.f32 %v7922, 1.442695
    %v8042 = vpow.pop %v8041
    %v8043 = vmul.f32 %v7923, 1.442695
    %v8044 = vpow.pop %v8043
    %v8045 = vmul.f32 %v7924, 1.442695
    %v8046 = vpow.pop %v8045
    %v8047 = vmul.f32 %v7925, 1.442695
    %v8048 = vpow.pop %v8047
    %v8049 = vmul.f32 %v7926, 1.442695
    %v8050 = vpow.pop %v8049
    %v8051 = vmul.f32 %v7927, 1.442695
    %v8052 = vpow.pop %v8051
    %v8053 = vmul.f32 %v7928, 1.442695
    %v8054 = vpow.pop %v8053
    %v8055 = vmul.f32 %v7929, 1.442695
    %v8056 = vpow.pop %v8055
    %v8057 = vmul.f32 %v7930, 1.442695
    %v8058 = vpow.pop %v8057
    %v8059 = vadd.f32 %v7932, 1.0
    %v8060 = vadd.f32 %v7934, 1.0
    %v8061 = vadd.f32 %v7936, 1.0
    %v8062 = vadd.f32 %v7938, 1.0
    %v8063 = vadd.f32 %v7940, 1.0
    %v8064 = vadd.f32 %v7942, 1.0
    %v8065 = vadd.f32 %v7944, 1.0
    %v8066 = vadd.f32 %v7946, 1.0
    %v8067 = vadd.f32 %v7948, 1.0
    %v8068 = vadd.f32 %v7950, 1.0
    %v8069 = vadd.f32 %v7952, 1.0
    %v8070 = vadd.f32 %v7954, 1.0
    %v8071 = vadd.f32 %v7956, 1.0
    %v8072 = vadd.f32 %v7958, 1.0
    %v8073 = vadd.f32 %v7960, 1.0
    %v8074 = vadd.f32 %v7962, 1.0
    %v8075 = vadd.f32 %v7964, 1.0
    %v8076 = vadd.f32 %v7966, 1.0
    %v8077 = vadd.f32 %v7968, 1.0
    %v8078 = vadd.f32 %v7970, 1.0
    %v8079 = vadd.f32 %v7972, 1.0
    %v8080 = vadd.f32 %v7974, 1.0
    %v8081 = vadd.f32 %v7976, 1.0
    %v8082 = vadd.f32 %v7978, 1.0
    %v8083 = vadd.f32 %v7980, 1.0
    %v8084 = vadd.f32 %v7982, 1.0
    %v8085 = vadd.f32 %v7984, 1.0
    %v8086 = vadd.f32 %v7986, 1.0
    %v8087 = vadd.f32 %v7988, 1.0
    %v8088 = vadd.f32 %v7990, 1.0
    %v8089 = vadd.f32 %v7992, 1.0
    %v8090 = vadd.f32 %v7994, 1.0
    %v8091 = vadd.f32 %v7996, 1.0
    %v8092 = vadd.f32 %v7998, 1.0
    %v8093 = vadd.f32 %v8000, 1.0
    %v8094 = vadd.f32 %v8002, 1.0
    %v8095 = vadd.f32 %v8004, 1.0
    %v8096 = vadd.f32 %v8006, 1.0
    %v8097 = vadd.f32 %v8008, 1.0
    %v8098 = vadd.f32 %v8010, 1.0
    %v8099 = vadd.f32 %v8012, 1.0
    %v8100 = vadd.f32 %v8014, 1.0
    %v8101 = vadd.f32 %v8016, 1.0
    %v8102 = vadd.f32 %v8018, 1.0
    %v8103 = vadd.f32 %v8020, 1.0
    %v8104 = vadd.f32 %v8022, 1.0
    %v8105 = vadd.f32 %v8024, 1.0
    %v8106 = vadd.f32 %v8026, 1.0
    %v8107 = vadd.f32 %v8028, 1.0
    %v8108 = vadd.f32 %v8030, 1.0
    %v8109 = vadd.f32 %v8032, 1.0
    %v8110 = vadd.f32 %v8034, 1.0
    %v8111 = vadd.f32 %v8036, 1.0
    %v8112 = vadd.f32 %v8038, 1.0
    %v8113 = vadd.f32 %v8040, 1.0
    %v8114 = vadd.f32 %v8042, 1.0
    %v8115 = vadd.f32 %v8044, 1.0
    %v8116 = vadd.f32 %v8046, 1.0
    %v8117 = vadd.f32 %v8048, 1.0
    %v8118 = vadd.f32 %v8050, 1.0
    %v8119 = vadd.f32 %v8052, 1.0
    %v8120 = vadd.f32 %v8054, 1.0
    %v8121 = vadd.f32 %v8056, 1.0
    %v8122 = vadd.f32 %v8058, 1.0
    %v8123 = vrcp.pop %v8059
    %v8124 = vmul.f32 %v8059, %v8123
    %v8125 = vsub.f32 1.0, %v8124
    %v8126 = vmul.f32 %v8123, %v8125
    %v8127 = vadd.f32 %v8123, %v8126
    %vm8128 = vweird.f32 %v8059
    %vm8129 = vweird.f32 %v8123
    %vm8130 = vmor %vm8128, %vm8129
    %v8131 = vsel %vm8130, %v8123, %v8127
    %v8132 = vand.u32 2147483647, %v8059
    %vm8133 = vcmp.eq.f32.partialorder %v8132, 8.507059e+37
    %v8134 = vand.u32 %v8059, 2147483648
    %v8135 = vor.u32 1.1754944e-38, %v8134
    %v8136 = vsel %vm8133, %v8135, %v8131
    %v8137 = vmul.f32 1.0, %v8136
    %v8138 = vrcp.pop %v8060
    %v8139 = vmul.f32 %v8060, %v8138
    %v8140 = vsub.f32 1.0, %v8139
    %v8141 = vmul.f32 %v8138, %v8140
    %v8142 = vadd.f32 %v8138, %v8141
    %vm8143 = vweird.f32 %v8060
    %vm8144 = vweird.f32 %v8138
    %vm8145 = vmor %vm8143, %vm8144
    %v8146 = vsel %vm8145, %v8138, %v8142
    %v8147 = vand.u32 2147483647, %v8060
    %vm8148 = vcmp.eq.f32.partialorder %v8147, 8.507059e+37
    %v8149 = vand.u32 %v8060, 2147483648
    %v8150 = vor.u32 1.1754944e-38, %v8149
    %v8151 = vsel %vm8148, %v8150, %v8146
    %v8152 = vmul.f32 1.0, %v8151
    %v8153 = vrcp.pop %v8061
    %v8154 = vmul.f32 %v8061, %v8153
    %v8155 = vsub.f32 1.0, %v8154
    %v8156 = vmul.f32 %v8153, %v8155
    %v8157 = vadd.f32 %v8153, %v8156
    %vm8158 = vweird.f32 %v8061
    %vm8159 = vweird.f32 %v8153
    %vm8160 = vmor %vm8158, %vm8159
    %v8161 = vsel %vm8160, %v8153, %v8157
    %v8162 = vand.u32 2147483647, %v8061
    %vm8163 = vcmp.eq.f32.partialorder %v8162, 8.507059e+37
    %v8164 = vand.u32 %v8061, 2147483648
    %v8165 = vor.u32 1.1754944e-38, %v8164
    %v8166 = vsel %vm8163, %v8165, %v8161
    %v8167 = vmul.f32 1.0, %v8166
    %v8168 = vrcp.pop %v8062
    %v8169 = vmul.f32 %v8062, %v8168
    %v8170 = vsub.f32 1.0, %v8169
    %v8171 = vmul.f32 %v8168, %v8170
    %v8172 = vadd.f32 %v8168, %v8171
    %vm8173 = vweird.f32 %v8062
    %vm8174 = vweird.f32 %v8168
    %vm8175 = vmor %vm8173, %vm8174
    %v8176 = vsel %vm8175, %v8168, %v8172
    %v8177 = vand.u32 2147483647, %v8062
    %vm8178 = vcmp.eq.f32.partialorder %v8177, 8.507059e+37
    %v8179 = vand.u32 %v8062, 2147483648
    %v8180 = vor.u32 1.1754944e-38, %v8179
    %v8181 = vsel %vm8178, %v8180, %v8176
    %v8182 = vmul.f32 1.0, %v8181
    %v8183 = vrcp.pop %v8063
    %v8184 = vmul.f32 %v8063, %v8183
    %v8185 = vsub.f32 1.0, %v8184
    %v8186 = vmul.f32 %v8183, %v8185
    %v8187 = vadd.f32 %v8183, %v8186
    %vm8188 = vweird.f32 %v8063
    %vm8189 = vweird.f32 %v8183
    %vm8190 = vmor %vm8188, %vm8189
    %v8191 = vsel %vm8190, %v8183, %v8187
    %v8192 = vand.u32 2147483647, %v8063
    %vm8193 = vcmp.eq.f32.partialorder %v8192, 8.507059e+37
    %v8194 = vand.u32 %v8063, 2147483648
    %v8195 = vor.u32 1.1754944e-38, %v8194
    %v8196 = vsel %vm8193, %v8195, %v8191
    %v8197 = vmul.f32 1.0, %v8196
    %v8198 = vrcp.pop %v8064
    %v8199 = vmul.f32 %v8064, %v8198
    %v8200 = vsub.f32 1.0, %v8199
    %v8201 = vmul.f32 %v8198, %v8200
    %v8202 = vadd.f32 %v8198, %v8201
    %vm8203 = vweird.f32 %v8064
    %vm8204 = vweird.f32 %v8198
    %vm8205 = vmor %vm8203, %vm8204
    %v8206 = vsel %vm8205, %v8198, %v8202
    %v8207 = vand.u32 2147483647, %v8064
    %vm8208 = vcmp.eq.f32.partialorder %v8207, 8.507059e+37
    %v8209 = vand.u32 %v8064, 2147483648
    %v8210 = vor.u32 1.1754944e-38, %v8209
    %v8211 = vsel %vm8208, %v8210, %v8206
    %v8212 = vmul.f32 1.0, %v8211
    %v8213 = vrcp.pop %v8065
    %v8214 = vmul.f32 %v8065, %v8213
    %v8215 = vsub.f32 1.0, %v8214
    %v8216 = vmul.f32 %v8213, %v8215
    %v8217 = vadd.f32 %v8213, %v8216
    %vm8218 = vweird.f32 %v8065
    %vm8219 = vweird.f32 %v8213
    %vm8220 = vmor %vm8218, %vm8219
    %v8221 = vsel %vm8220, %v8213, %v8217
    %v8222 = vand.u32 2147483647, %v8065
    %vm8223 = vcmp.eq.f32.partialorder %v8222, 8.507059e+37
    %v8224 = vand.u32 %v8065, 2147483648
    %v8225 = vor.u32 1.1754944e-38, %v8224
    %v8226 = vsel %vm8223, %v8225, %v8221
    %v8227 = vmul.f32 1.0, %v8226
    %v8228 = vrcp.pop %v8066
    %v8229 = vmul.f32 %v8066, %v8228
    %v8230 = vsub.f32 1.0, %v8229
    %v8231 = vmul.f32 %v8228, %v8230
    %v8232 = vadd.f32 %v8228, %v8231
    %vm8233 = vweird.f32 %v8066
    %vm8234 = vweird.f32 %v8228
    %vm8235 = vmor %vm8233, %vm8234
    %v8236 = vsel %vm8235, %v8228, %v8232
    %v8237 = vand.u32 2147483647, %v8066
    %vm8238 = vcmp.eq.f32.partialorder %v8237, 8.507059e+37
    %v8239 = vand.u32 %v8066, 2147483648
    %v8240 = vor.u32 1.1754944e-38, %v8239
    %v8241 = vsel %vm8238, %v8240, %v8236
    %v8242 = vmul.f32 1.0, %v8241
    %v8243 = vrcp.pop %v8067
    %v8244 = vmul.f32 %v8067, %v8243
    %v8245 = vsub.f32 1.0, %v8244
    %v8246 = vmul.f32 %v8243, %v8245
    %v8247 = vadd.f32 %v8243, %v8246
    %vm8248 = vweird.f32 %v8067
    %vm8249 = vweird.f32 %v8243
    %vm8250 = vmor %vm8248, %vm8249
    %v8251 = vsel %vm8250, %v8243, %v8247
    %v8252 = vand.u32 2147483647, %v8067
    %vm8253 = vcmp.eq.f32.partialorder %v8252, 8.507059e+37
    %v8254 = vand.u32 %v8067, 2147483648
    %v8255 = vor.u32 1.1754944e-38, %v8254
    %v8256 = vsel %vm8253, %v8255, %v8251
    %v8257 = vmul.f32 1.0, %v8256
    %v8258 = vrcp.pop %v8068
    %v8259 = vmul.f32 %v8068, %v8258
    %v8260 = vsub.f32 1.0, %v8259
    %v8261 = vmul.f32 %v8258, %v8260
    %v8262 = vadd.f32 %v8258, %v8261
    %vm8263 = vweird.f32 %v8068
    %vm8264 = vweird.f32 %v8258
    %vm8265 = vmor %vm8263, %vm8264
    %v8266 = vsel %vm8265, %v8258, %v8262
    %v8267 = vand.u32 2147483647, %v8068
    %vm8268 = vcmp.eq.f32.partialorder %v8267, 8.507059e+37
    %v8269 = vand.u32 %v8068, 2147483648
    %v8270 = vor.u32 1.1754944e-38, %v8269
    %v8271 = vsel %vm8268, %v8270, %v8266
    %v8272 = vmul.f32 1.0, %v8271
    %v8273 = vrcp.pop %v8069
    %v8274 = vmul.f32 %v8069, %v8273
    %v8275 = vsub.f32 1.0, %v8274
    %v8276 = vmul.f32 %v8273, %v8275
    %v8277 = vadd.f32 %v8273, %v8276
    %vm8278 = vweird.f32 %v8069
    %vm8279 = vweird.f32 %v8273
    %vm8280 = vmor %vm8278, %vm8279
    %v8281 = vsel %vm8280, %v8273, %v8277
    %v8282 = vand.u32 2147483647, %v8069
    %vm8283 = vcmp.eq.f32.partialorder %v8282, 8.507059e+37
    %v8284 = vand.u32 %v8069, 2147483648
    %v8285 = vor.u32 1.1754944e-38, %v8284
    %v8286 = vsel %vm8283, %v8285, %v8281
    %v8287 = vmul.f32 1.0, %v8286
    %v8288 = vrcp.pop %v8070
    %v8289 = vmul.f32 %v8070, %v8288
    %v8290 = vsub.f32 1.0, %v8289
    %v8291 = vmul.f32 %v8288, %v8290
    %v8292 = vadd.f32 %v8288, %v8291
    %vm8293 = vweird.f32 %v8070
    %vm8294 = vweird.f32 %v8288
    %vm8295 = vmor %vm8293, %vm8294
    %v8296 = vsel %vm8295, %v8288, %v8292
    %v8297 = vand.u32 2147483647, %v8070
    %vm8298 = vcmp.eq.f32.partialorder %v8297, 8.507059e+37
    %v8299 = vand.u32 %v8070, 2147483648
    %v8300 = vor.u32 1.1754944e-38, %v8299
    %v8301 = vsel %vm8298, %v8300, %v8296
    %v8302 = vmul.f32 1.0, %v8301
    %v8303 = vrcp.pop %v8071
    %v8304 = vmul.f32 %v8071, %v8303
    %v8305 = vsub.f32 1.0, %v8304
    %v8306 = vmul.f32 %v8303, %v8305
    %v8307 = vadd.f32 %v8303, %v8306
    %vm8308 = vweird.f32 %v8071
    %vm8309 = vweird.f32 %v8303
    %vm8310 = vmor %vm8308, %vm8309
    %v8311 = vsel %vm8310, %v8303, %v8307
    %v8312 = vand.u32 2147483647, %v8071
    %vm8313 = vcmp.eq.f32.partialorder %v8312, 8.507059e+37
    %v8314 = vand.u32 %v8071, 2147483648
    %v8315 = vor.u32 1.1754944e-38, %v8314
    %v8316 = vsel %vm8313, %v8315, %v8311
    %v8317 = vmul.f32 1.0, %v8316
    %v8318 = vrcp.pop %v8072
    %v8319 = vmul.f32 %v8072, %v8318
    %v8320 = vsub.f32 1.0, %v8319
    %v8321 = vmul.f32 %v8318, %v8320
    %v8322 = vadd.f32 %v8318, %v8321
    %vm8323 = vweird.f32 %v8072
    %vm8324 = vweird.f32 %v8318
    %vm8325 = vmor %vm8323, %vm8324
    %v8326 = vsel %vm8325, %v8318, %v8322
    %v8327 = vand.u32 2147483647, %v8072
    %vm8328 = vcmp.eq.f32.partialorder %v8327, 8.507059e+37
    %v8329 = vand.u32 %v8072, 2147483648
    %v8330 = vor.u32 1.1754944e-38, %v8329
    %v8331 = vsel %vm8328, %v8330, %v8326
    %v8332 = vmul.f32 1.0, %v8331
    %v8333 = vrcp.pop %v8073
    %v8334 = vmul.f32 %v8073, %v8333
    %v8335 = vsub.f32 1.0, %v8334
    %v8336 = vmul.f32 %v8333, %v8335
    %v8337 = vadd.f32 %v8333, %v8336
    %vm8338 = vweird.f32 %v8073
    %vm8339 = vweird.f32 %v8333
    %vm8340 = vmor %vm8338, %vm8339
    %v8341 = vsel %vm8340, %v8333, %v8337
    %v8342 = vand.u32 2147483647, %v8073
    %vm8343 = vcmp.eq.f32.partialorder %v8342, 8.507059e+37
    %v8344 = vand.u32 %v8073, 2147483648
    %v8345 = vor.u32 1.1754944e-38, %v8344
    %v8346 = vsel %vm8343, %v8345, %v8341
    %v8347 = vmul.f32 1.0, %v8346
    %v8348 = vrcp.pop %v8074
    %v8349 = vmul.f32 %v8074, %v8348
    %v8350 = vsub.f32 1.0, %v8349
    %v8351 = vmul.f32 %v8348, %v8350
    %v8352 = vadd.f32 %v8348, %v8351
    %vm8353 = vweird.f32 %v8074
    %vm8354 = vweird.f32 %v8348
    %vm8355 = vmor %vm8353, %vm8354
    %v8356 = vsel %vm8355, %v8348, %v8352
    %v8357 = vand.u32 2147483647, %v8074
    %vm8358 = vcmp.eq.f32.partialorder %v8357, 8.507059e+37
    %v8359 = vand.u32 %v8074, 2147483648
    %v8360 = vor.u32 1.1754944e-38, %v8359
    %v8361 = vsel %vm8358, %v8360, %v8356
    %v8362 = vmul.f32 1.0, %v8361
    %v8363 = vrcp.pop %v8075
    %v8364 = vmul.f32 %v8075, %v8363
    %v8365 = vsub.f32 1.0, %v8364
    %v8366 = vmul.f32 %v8363, %v8365
    %v8367 = vadd.f32 %v8363, %v8366
    %vm8368 = vweird.f32 %v8075
    %vm8369 = vweird.f32 %v8363
    %vm8370 = vmor %vm8368, %vm8369
    %v8371 = vsel %vm8370, %v8363, %v8367
    %v8372 = vand.u32 2147483647, %v8075
    %vm8373 = vcmp.eq.f32.partialorder %v8372, 8.507059e+37
    %v8374 = vand.u32 %v8075, 2147483648
    %v8375 = vor.u32 1.1754944e-38, %v8374
    %v8376 = vsel %vm8373, %v8375, %v8371
    %v8377 = vmul.f32 1.0, %v8376
    %v8378 = vrcp.pop %v8076
    %v8379 = vmul.f32 %v8076, %v8378
    %v8380 = vsub.f32 1.0, %v8379
    %v8381 = vmul.f32 %v8378, %v8380
    %v8382 = vadd.f32 %v8378, %v8381
    %vm8383 = vweird.f32 %v8076
    %vm8384 = vweird.f32 %v8378
    %vm8385 = vmor %vm8383, %vm8384
    %v8386 = vsel %vm8385, %v8378, %v8382
    %v8387 = vand.u32 2147483647, %v8076
    %vm8388 = vcmp.eq.f32.partialorder %v8387, 8.507059e+37
    %v8389 = vand.u32 %v8076, 2147483648
    %v8390 = vor.u32 1.1754944e-38, %v8389
    %v8391 = vsel %vm8388, %v8390, %v8386
    %v8392 = vmul.f32 1.0, %v8391
    %v8393 = vrcp.pop %v8077
    %v8394 = vmul.f32 %v8077, %v8393
    %v8395 = vsub.f32 1.0, %v8394
    %v8396 = vmul.f32 %v8393, %v8395
    %v8397 = vadd.f32 %v8393, %v8396
    %vm8398 = vweird.f32 %v8077
    %vm8399 = vweird.f32 %v8393
    %vm8400 = vmor %vm8398, %vm8399
    %v8401 = vsel %vm8400, %v8393, %v8397
    %v8402 = vand.u32 2147483647, %v8077
    %vm8403 = vcmp.eq.f32.partialorder %v8402, 8.507059e+37
    %v8404 = vand.u32 %v8077, 2147483648
    %v8405 = vor.u32 1.1754944e-38, %v8404
    %v8406 = vsel %vm8403, %v8405, %v8401
    %v8407 = vmul.f32 1.0, %v8406
    %v8408 = vrcp.pop %v8078
    %v8409 = vmul.f32 %v8078, %v8408
    %v8410 = vsub.f32 1.0, %v8409
    %v8411 = vmul.f32 %v8408, %v8410
    %v8412 = vadd.f32 %v8408, %v8411
    %vm8413 = vweird.f32 %v8078
    %vm8414 = vweird.f32 %v8408
    %vm8415 = vmor %vm8413, %vm8414
    %v8416 = vsel %vm8415, %v8408, %v8412
    %v8417 = vand.u32 2147483647, %v8078
    %vm8418 = vcmp.eq.f32.partialorder %v8417, 8.507059e+37
    %v8419 = vand.u32 %v8078, 2147483648
    %v8420 = vor.u32 1.1754944e-38, %v8419
    %v8421 = vsel %vm8418, %v8420, %v8416
    %v8422 = vmul.f32 1.0, %v8421
    %v8423 = vrcp.pop %v8079
    %v8424 = vmul.f32 %v8079, %v8423
    %v8425 = vsub.f32 1.0, %v8424
    %v8426 = vmul.f32 %v8423, %v8425
    %v8427 = vadd.f32 %v8423, %v8426
    %vm8428 = vweird.f32 %v8079
    %vm8429 = vweird.f32 %v8423
    %vm8430 = vmor %vm8428, %vm8429
    %v8431 = vsel %vm8430, %v8423, %v8427
    %v8432 = vand.u32 2147483647, %v8079
    %vm8433 = vcmp.eq.f32.partialorder %v8432, 8.507059e+37
    %v8434 = vand.u32 %v8079, 2147483648
    %v8435 = vor.u32 1.1754944e-38, %v8434
    %v8436 = vsel %vm8433, %v8435, %v8431
    %v8437 = vmul.f32 1.0, %v8436
    %v8438 = vrcp.pop %v8080
    %v8439 = vmul.f32 %v8080, %v8438
    %v8440 = vsub.f32 1.0, %v8439
    %v8441 = vmul.f32 %v8438, %v8440
    %v8442 = vadd.f32 %v8438, %v8441
    %vm8443 = vweird.f32 %v8080
    %vm8444 = vweird.f32 %v8438
    %vm8445 = vmor %vm8443, %vm8444
    %v8446 = vsel %vm8445, %v8438, %v8442
    %v8447 = vand.u32 2147483647, %v8080
    %vm8448 = vcmp.eq.f32.partialorder %v8447, 8.507059e+37
    %v8449 = vand.u32 %v8080, 2147483648
    %v8450 = vor.u32 1.1754944e-38, %v8449
    %v8451 = vsel %vm8448, %v8450, %v8446
    %v8452 = vmul.f32 1.0, %v8451
    %v8453 = vrcp.pop %v8081
    %v8454 = vmul.f32 %v8081, %v8453
    %v8455 = vsub.f32 1.0, %v8454
    %v8456 = vmul.f32 %v8453, %v8455
    %v8457 = vadd.f32 %v8453, %v8456
    %vm8458 = vweird.f32 %v8081
    %vm8459 = vweird.f32 %v8453
    %vm8460 = vmor %vm8458, %vm8459
    %v8461 = vsel %vm8460, %v8453, %v8457
    %v8462 = vand.u32 2147483647, %v8081
    %vm8463 = vcmp.eq.f32.partialorder %v8462, 8.507059e+37
    %v8464 = vand.u32 %v8081, 2147483648
    %v8465 = vor.u32 1.1754944e-38, %v8464
    %v8466 = vsel %vm8463, %v8465, %v8461
    %v8467 = vmul.f32 1.0, %v8466
    %v8468 = vrcp.pop %v8082
    %v8469 = vmul.f32 %v8082, %v8468
    %v8470 = vsub.f32 1.0, %v8469
    %v8471 = vmul.f32 %v8468, %v8470
    %v8472 = vadd.f32 %v8468, %v8471
    %vm8473 = vweird.f32 %v8082
    %vm8474 = vweird.f32 %v8468
    %vm8475 = vmor %vm8473, %vm8474
    %v8476 = vsel %vm8475, %v8468, %v8472
    %v8477 = vand.u32 2147483647, %v8082
    %vm8478 = vcmp.eq.f32.partialorder %v8477, 8.507059e+37
    %v8479 = vand.u32 %v8082, 2147483648
    %v8480 = vor.u32 1.1754944e-38, %v8479
    %v8481 = vsel %vm8478, %v8480, %v8476
    %v8482 = vmul.f32 1.0, %v8481
    %v8483 = vrcp.pop %v8083
    %v8484 = vmul.f32 %v8083, %v8483
    %v8485 = vsub.f32 1.0, %v8484
    %v8486 = vmul.f32 %v8483, %v8485
    %v8487 = vadd.f32 %v8483, %v8486
    %vm8488 = vweird.f32 %v8083
    %vm8489 = vweird.f32 %v8483
    %vm8490 = vmor %vm8488, %vm8489
    %v8491 = vsel %vm8490, %v8483, %v8487
    %v8492 = vand.u32 2147483647, %v8083
    %vm8493 = vcmp.eq.f32.partialorder %v8492, 8.507059e+37
    %v8494 = vand.u32 %v8083, 2147483648
    %v8495 = vor.u32 1.1754944e-38, %v8494
    %v8496 = vsel %vm8493, %v8495, %v8491
    %v8497 = vmul.f32 1.0, %v8496
    %v8498 = vrcp.pop %v8084
    %v8499 = vmul.f32 %v8084, %v8498
    %v8500 = vsub.f32 1.0, %v8499
    %v8501 = vmul.f32 %v8498, %v8500
    %v8502 = vadd.f32 %v8498, %v8501
    %vm8503 = vweird.f32 %v8084
    %vm8504 = vweird.f32 %v8498
    %vm8505 = vmor %vm8503, %vm8504
    %v8506 = vsel %vm8505, %v8498, %v8502
    %v8507 = vand.u32 2147483647, %v8084
    %vm8508 = vcmp.eq.f32.partialorder %v8507, 8.507059e+37
    %v8509 = vand.u32 %v8084, 2147483648
    %v8510 = vor.u32 1.1754944e-38, %v8509
    %v8511 = vsel %vm8508, %v8510, %v8506
    %v8512 = vmul.f32 1.0, %v8511
    %v8513 = vrcp.pop %v8085
    %v8514 = vmul.f32 %v8085, %v8513
    %v8515 = vsub.f32 1.0, %v8514
    %v8516 = vmul.f32 %v8513, %v8515
    %v8517 = vadd.f32 %v8513, %v8516
    %vm8518 = vweird.f32 %v8085
    %vm8519 = vweird.f32 %v8513
    %vm8520 = vmor %vm8518, %vm8519
    %v8521 = vsel %vm8520, %v8513, %v8517
    %v8522 = vand.u32 2147483647, %v8085
    %vm8523 = vcmp.eq.f32.partialorder %v8522, 8.507059e+37
    %v8524 = vand.u32 %v8085, 2147483648
    %v8525 = vor.u32 1.1754944e-38, %v8524
    %v8526 = vsel %vm8523, %v8525, %v8521
    %v8527 = vmul.f32 1.0, %v8526
    %v8528 = vrcp.pop %v8086
    %v8529 = vmul.f32 %v8086, %v8528
    %v8530 = vsub.f32 1.0, %v8529
    %v8531 = vmul.f32 %v8528, %v8530
    %v8532 = vadd.f32 %v8528, %v8531
    %vm8533 = vweird.f32 %v8086
    %vm8534 = vweird.f32 %v8528
    %vm8535 = vmor %vm8533, %vm8534
    %v8536 = vsel %vm8535, %v8528, %v8532
    %v8537 = vand.u32 2147483647, %v8086
    %vm8538 = vcmp.eq.f32.partialorder %v8537, 8.507059e+37
    %v8539 = vand.u32 %v8086, 2147483648
    %v8540 = vor.u32 1.1754944e-38, %v8539
    %v8541 = vsel %vm8538, %v8540, %v8536
    %v8542 = vmul.f32 1.0, %v8541
    %v8543 = vrcp.pop %v8087
    %v8544 = vmul.f32 %v8087, %v8543
    %v8545 = vsub.f32 1.0, %v8544
    %v8546 = vmul.f32 %v8543, %v8545
    %v8547 = vadd.f32 %v8543, %v8546
    %vm8548 = vweird.f32 %v8087
    %vm8549 = vweird.f32 %v8543
    %vm8550 = vmor %vm8548, %vm8549
    %v8551 = vsel %vm8550, %v8543, %v8547
    %v8552 = vand.u32 2147483647, %v8087
    %vm8553 = vcmp.eq.f32.partialorder %v8552, 8.507059e+37
    %v8554 = vand.u32 %v8087, 2147483648
    %v8555 = vor.u32 1.1754944e-38, %v8554
    %v8556 = vsel %vm8553, %v8555, %v8551
    %v8557 = vmul.f32 1.0, %v8556
    %v8558 = vrcp.pop %v8088
    %v8559 = vmul.f32 %v8088, %v8558
    %v8560 = vsub.f32 1.0, %v8559
    %v8561 = vmul.f32 %v8558, %v8560
    %v8562 = vadd.f32 %v8558, %v8561
    %vm8563 = vweird.f32 %v8088
    %vm8564 = vweird.f32 %v8558
    %vm8565 = vmor %vm8563, %vm8564
    %v8566 = vsel %vm8565, %v8558, %v8562
    %v8567 = vand.u32 2147483647, %v8088
    %vm8568 = vcmp.eq.f32.partialorder %v8567, 8.507059e+37
    %v8569 = vand.u32 %v8088, 2147483648
    %v8570 = vor.u32 1.1754944e-38, %v8569
    %v8571 = vsel %vm8568, %v8570, %v8566
    %v8572 = vmul.f32 1.0, %v8571
    %v8573 = vrcp.pop %v8089
    %v8574 = vmul.f32 %v8089, %v8573
    %v8575 = vsub.f32 1.0, %v8574
    %v8576 = vmul.f32 %v8573, %v8575
    %v8577 = vadd.f32 %v8573, %v8576
    %vm8578 = vweird.f32 %v8089
    %vm8579 = vweird.f32 %v8573
    %vm8580 = vmor %vm8578, %vm8579
    %v8581 = vsel %vm8580, %v8573, %v8577
    %v8582 = vand.u32 2147483647, %v8089
    %vm8583 = vcmp.eq.f32.partialorder %v8582, 8.507059e+37
    %v8584 = vand.u32 %v8089, 2147483648
    %v8585 = vor.u32 1.1754944e-38, %v8584
    %v8586 = vsel %vm8583, %v8585, %v8581
    %v8587 = vmul.f32 1.0, %v8586
    %v8588 = vrcp.pop %v8090
    %v8589 = vmul.f32 %v8090, %v8588
    %v8590 = vsub.f32 1.0, %v8589
    %v8591 = vmul.f32 %v8588, %v8590
    %v8592 = vadd.f32 %v8588, %v8591
    %vm8593 = vweird.f32 %v8090
    %vm8594 = vweird.f32 %v8588
    %vm8595 = vmor %vm8593, %vm8594
    %v8596 = vsel %vm8595, %v8588, %v8592
    %v8597 = vand.u32 2147483647, %v8090
    %vm8598 = vcmp.eq.f32.partialorder %v8597, 8.507059e+37
    %v8599 = vand.u32 %v8090, 2147483648
    %v8600 = vor.u32 1.1754944e-38, %v8599
    %v8601 = vsel %vm8598, %v8600, %v8596
    %v8602 = vmul.f32 1.0, %v8601
    %v8603 = vrcp.pop %v8091
    %v8604 = vmul.f32 %v8091, %v8603
    %v8605 = vsub.f32 1.0, %v8604
    %v8606 = vmul.f32 %v8603, %v8605
    %v8607 = vadd.f32 %v8603, %v8606
    %vm8608 = vweird.f32 %v8091
    %vm8609 = vweird.f32 %v8603
    %vm8610 = vmor %vm8608, %vm8609
    %v8611 = vsel %vm8610, %v8603, %v8607
    %v8612 = vand.u32 2147483647, %v8091
    %vm8613 = vcmp.eq.f32.partialorder %v8612, 8.507059e+37
    %v8614 = vand.u32 %v8091, 2147483648
    %v8615 = vor.u32 1.1754944e-38, %v8614
    %v8616 = vsel %vm8613, %v8615, %v8611
    %v8617 = vmul.f32 1.0, %v8616
    %v8618 = vrcp.pop %v8092
    %v8619 = vmul.f32 %v8092, %v8618
    %v8620 = vsub.f32 1.0, %v8619
    %v8621 = vmul.f32 %v8618, %v8620
    %v8622 = vadd.f32 %v8618, %v8621
    %vm8623 = vweird.f32 %v8092
    %vm8624 = vweird.f32 %v8618
    %vm8625 = vmor %vm8623, %vm8624
    %v8626 = vsel %vm8625, %v8618, %v8622
    %v8627 = vand.u32 2147483647, %v8092
    %vm8628 = vcmp.eq.f32.partialorder %v8627, 8.507059e+37
    %v8629 = vand.u32 %v8092, 2147483648
    %v8630 = vor.u32 1.1754944e-38, %v8629
    %v8631 = vsel %vm8628, %v8630, %v8626
    %v8632 = vmul.f32 1.0, %v8631
    %v8633 = vrcp.pop %v8093
    %v8634 = vmul.f32 %v8093, %v8633
    %v8635 = vsub.f32 1.0, %v8634
    %v8636 = vmul.f32 %v8633, %v8635
    %v8637 = vadd.f32 %v8633, %v8636
    %vm8638 = vweird.f32 %v8093
    %vm8639 = vweird.f32 %v8633
    %vm8640 = vmor %vm8638, %vm8639
    %v8641 = vsel %vm8640, %v8633, %v8637
    %v8642 = vand.u32 2147483647, %v8093
    %vm8643 = vcmp.eq.f32.partialorder %v8642, 8.507059e+37
    %v8644 = vand.u32 %v8093, 2147483648
    %v8645 = vor.u32 1.1754944e-38, %v8644
    %v8646 = vsel %vm8643, %v8645, %v8641
    %v8647 = vmul.f32 1.0, %v8646
    %v8648 = vrcp.pop %v8094
    %v8649 = vmul.f32 %v8094, %v8648
    %v8650 = vsub.f32 1.0, %v8649
    %v8651 = vmul.f32 %v8648, %v8650
    %v8652 = vadd.f32 %v8648, %v8651
    %vm8653 = vweird.f32 %v8094
    %vm8654 = vweird.f32 %v8648
    %vm8655 = vmor %vm8653, %vm8654
    %v8656 = vsel %vm8655, %v8648, %v8652
    %v8657 = vand.u32 2147483647, %v8094
    %vm8658 = vcmp.eq.f32.partialorder %v8657, 8.507059e+37
    %v8659 = vand.u32 %v8094, 2147483648
    %v8660 = vor.u32 1.1754944e-38, %v8659
    %v8661 = vsel %vm8658, %v8660, %v8656
    %v8662 = vmul.f32 1.0, %v8661
    %v8663 = vrcp.pop %v8095
    %v8664 = vmul.f32 %v8095, %v8663
    %v8665 = vsub.f32 1.0, %v8664
    %v8666 = vmul.f32 %v8663, %v8665
    %v8667 = vadd.f32 %v8663, %v8666
    %vm8668 = vweird.f32 %v8095
    %vm8669 = vweird.f32 %v8663
    %vm8670 = vmor %vm8668, %vm8669
    %v8671 = vsel %vm8670, %v8663, %v8667
    %v8672 = vand.u32 2147483647, %v8095
    %vm8673 = vcmp.eq.f32.partialorder %v8672, 8.507059e+37
    %v8674 = vand.u32 %v8095, 2147483648
    %v8675 = vor.u32 1.1754944e-38, %v8674
    %v8676 = vsel %vm8673, %v8675, %v8671
    %v8677 = vmul.f32 1.0, %v8676
    %v8678 = vrcp.pop %v8096
    %v8679 = vmul.f32 %v8096, %v8678
    %v8680 = vsub.f32 1.0, %v8679
    %v8681 = vmul.f32 %v8678, %v8680
    %v8682 = vadd.f32 %v8678, %v8681
    %vm8683 = vweird.f32 %v8096
    %vm8684 = vweird.f32 %v8678
    %vm8685 = vmor %vm8683, %vm8684
    %v8686 = vsel %vm8685, %v8678, %v8682
    %v8687 = vand.u32 2147483647, %v8096
    %vm8688 = vcmp.eq.f32.partialorder %v8687, 8.507059e+37
    %v8689 = vand.u32 %v8096, 2147483648
    %v8690 = vor.u32 1.1754944e-38, %v8689
    %v8691 = vsel %vm8688, %v8690, %v8686
    %v8692 = vmul.f32 1.0, %v8691
    %v8693 = vrcp.pop %v8097
    %v8694 = vmul.f32 %v8097, %v8693
    %v8695 = vsub.f32 1.0, %v8694
    %v8696 = vmul.f32 %v8693, %v8695
    %v8697 = vadd.f32 %v8693, %v8696
    %vm8698 = vweird.f32 %v8097
    %vm8699 = vweird.f32 %v8693
    %vm8700 = vmor %vm8698, %vm8699
    %v8701 = vsel %vm8700, %v8693, %v8697
    %v8702 = vand.u32 2147483647, %v8097
    %vm8703 = vcmp.eq.f32.partialorder %v8702, 8.507059e+37
    %v8704 = vand.u32 %v8097, 2147483648
    %v8705 = vor.u32 1.1754944e-38, %v8704
    %v8706 = vsel %vm8703, %v8705, %v8701
    %v8707 = vmul.f32 1.0, %v8706
    %v8708 = vrcp.pop %v8098
    %v8709 = vmul.f32 %v8098, %v8708
    %v8710 = vsub.f32 1.0, %v8709
    %v8711 = vmul.f32 %v8708, %v8710
    %v8712 = vadd.f32 %v8708, %v8711
    %vm8713 = vweird.f32 %v8098
    %vm8714 = vweird.f32 %v8708
    %vm8715 = vmor %vm8713, %vm8714
    %v8716 = vsel %vm8715, %v8708, %v8712
    %v8717 = vand.u32 2147483647, %v8098
    %vm8718 = vcmp.eq.f32.partialorder %v8717, 8.507059e+37
    %v8719 = vand.u32 %v8098, 2147483648
    %v8720 = vor.u32 1.1754944e-38, %v8719
    %v8721 = vsel %vm8718, %v8720, %v8716
    %v8722 = vmul.f32 1.0, %v8721
    %v8723 = vrcp.pop %v8099
    %v8724 = vmul.f32 %v8099, %v8723
    %v8725 = vsub.f32 1.0, %v8724
    %v8726 = vmul.f32 %v8723, %v8725
    %v8727 = vadd.f32 %v8723, %v8726
    %vm8728 = vweird.f32 %v8099
    %vm8729 = vweird.f32 %v8723
    %vm8730 = vmor %vm8728, %vm8729
    %v8731 = vsel %vm8730, %v8723, %v8727
    %v8732 = vand.u32 2147483647, %v8099
    %vm8733 = vcmp.eq.f32.partialorder %v8732, 8.507059e+37
    %v8734 = vand.u32 %v8099, 2147483648
    %v8735 = vor.u32 1.1754944e-38, %v8734
    %v8736 = vsel %vm8733, %v8735, %v8731
    %v8737 = vmul.f32 1.0, %v8736
    %v8738 = vrcp.pop %v8100
    %v8739 = vmul.f32 %v8100, %v8738
    %v8740 = vsub.f32 1.0, %v8739
    %v8741 = vmul.f32 %v8738, %v8740
    %v8742 = vadd.f32 %v8738, %v8741
    %vm8743 = vweird.f32 %v8100
    %vm8744 = vweird.f32 %v8738
    %vm8745 = vmor %vm8743, %vm8744
    %v8746 = vsel %vm8745, %v8738, %v8742
    %v8747 = vand.u32 2147483647, %v8100
    %vm8748 = vcmp.eq.f32.partialorder %v8747, 8.507059e+37
    %v8749 = vand.u32 %v8100, 2147483648
    %v8750 = vor.u32 1.1754944e-38, %v8749
    %v8751 = vsel %vm8748, %v8750, %v8746
    %v8752 = vmul.f32 1.0, %v8751
    %v8753 = vrcp.pop %v8101
    %v8754 = vmul.f32 %v8101, %v8753
    %v8755 = vsub.f32 1.0, %v8754
    %v8756 = vmul.f32 %v8753, %v8755
    %v8757 = vadd.f32 %v8753, %v8756
    %vm8758 = vweird.f32 %v8101
    %vm8759 = vweird.f32 %v8753
    %vm8760 = vmor %vm8758, %vm8759
    %v8761 = vsel %vm8760, %v8753, %v8757
    %v8762 = vand.u32 2147483647, %v8101
    %vm8763 = vcmp.eq.f32.partialorder %v8762, 8.507059e+37
    %v8764 = vand.u32 %v8101, 2147483648
    %v8765 = vor.u32 1.1754944e-38, %v8764
    %v8766 = vsel %vm8763, %v8765, %v8761
    %v8767 = vmul.f32 1.0, %v8766
    %v8768 = vrcp.pop %v8102
    %v8769 = vmul.f32 %v8102, %v8768
    %v8770 = vsub.f32 1.0, %v8769
    %v8771 = vmul.f32 %v8768, %v8770
    %v8772 = vadd.f32 %v8768, %v8771
    %vm8773 = vweird.f32 %v8102
    %vm8774 = vweird.f32 %v8768
    %vm8775 = vmor %vm8773, %vm8774
    %v8776 = vsel %vm8775, %v8768, %v8772
    %v8777 = vand.u32 2147483647, %v8102
    %vm8778 = vcmp.eq.f32.partialorder %v8777, 8.507059e+37
    %v8779 = vand.u32 %v8102, 2147483648
    %v8780 = vor.u32 1.1754944e-38, %v8779
    %v8781 = vsel %vm8778, %v8780, %v8776
    %v8782 = vmul.f32 1.0, %v8781
    %v8783 = vrcp.pop %v8103
    %v8784 = vmul.f32 %v8103, %v8783
    %v8785 = vsub.f32 1.0, %v8784
    %v8786 = vmul.f32 %v8783, %v8785
    %v8787 = vadd.f32 %v8783, %v8786
    %vm8788 = vweird.f32 %v8103
    %vm8789 = vweird.f32 %v8783
    %vm8790 = vmor %vm8788, %vm8789
    %v8791 = vsel %vm8790, %v8783, %v8787
    %v8792 = vand.u32 2147483647, %v8103
    %vm8793 = vcmp.eq.f32.partialorder %v8792, 8.507059e+37
    %v8794 = vand.u32 %v8103, 2147483648
    %v8795 = vor.u32 1.1754944e-38, %v8794
    %v8796 = vsel %vm8793, %v8795, %v8791
    %v8797 = vmul.f32 1.0, %v8796
    %v8798 = vrcp.pop %v8104
    %v8799 = vmul.f32 %v8104, %v8798
    %v8800 = vsub.f32 1.0, %v8799
    %v8801 = vmul.f32 %v8798, %v8800
    %v8802 = vadd.f32 %v8798, %v8801
    %vm8803 = vweird.f32 %v8104
    %vm8804 = vweird.f32 %v8798
    %vm8805 = vmor %vm8803, %vm8804
    %v8806 = vsel %vm8805, %v8798, %v8802
    %v8807 = vand.u32 2147483647, %v8104
    %vm8808 = vcmp.eq.f32.partialorder %v8807, 8.507059e+37
    %v8809 = vand.u32 %v8104, 2147483648
    %v8810 = vor.u32 1.1754944e-38, %v8809
    %v8811 = vsel %vm8808, %v8810, %v8806
    %v8812 = vmul.f32 1.0, %v8811
    %v8813 = vrcp.pop %v8105
    %v8814 = vmul.f32 %v8105, %v8813
    %v8815 = vsub.f32 1.0, %v8814
    %v8816 = vmul.f32 %v8813, %v8815
    %v8817 = vadd.f32 %v8813, %v8816
    %vm8818 = vweird.f32 %v8105
    %vm8819 = vweird.f32 %v8813
    %vm8820 = vmor %vm8818, %vm8819
    %v8821 = vsel %vm8820, %v8813, %v8817
    %v8822 = vand.u32 2147483647, %v8105
    %vm8823 = vcmp.eq.f32.partialorder %v8822, 8.507059e+37
    %v8824 = vand.u32 %v8105, 2147483648
    %v8825 = vor.u32 1.1754944e-38, %v8824
    %v8826 = vsel %vm8823, %v8825, %v8821
    %v8827 = vmul.f32 1.0, %v8826
    %v8828 = vrcp.pop %v8106
    %v8829 = vmul.f32 %v8106, %v8828
    %v8830 = vsub.f32 1.0, %v8829
    %v8831 = vmul.f32 %v8828, %v8830
    %v8832 = vadd.f32 %v8828, %v8831
    %vm8833 = vweird.f32 %v8106
    %vm8834 = vweird.f32 %v8828
    %vm8835 = vmor %vm8833, %vm8834
    %v8836 = vsel %vm8835, %v8828, %v8832
    %v8837 = vand.u32 2147483647, %v8106
    %vm8838 = vcmp.eq.f32.partialorder %v8837, 8.507059e+37
    %v8839 = vand.u32 %v8106, 2147483648
    %v8840 = vor.u32 1.1754944e-38, %v8839
    %v8841 = vsel %vm8838, %v8840, %v8836
    %v8842 = vmul.f32 1.0, %v8841
    %v8843 = vrcp.pop %v8107
    %v8844 = vmul.f32 %v8107, %v8843
    %v8845 = vsub.f32 1.0, %v8844
    %v8846 = vmul.f32 %v8843, %v8845
    %v8847 = vadd.f32 %v8843, %v8846
    %vm8848 = vweird.f32 %v8107
    %vm8849 = vweird.f32 %v8843
    %vm8850 = vmor %vm8848, %vm8849
    %v8851 = vsel %vm8850, %v8843, %v8847
    %v8852 = vand.u32 2147483647, %v8107
    %vm8853 = vcmp.eq.f32.partialorder %v8852, 8.507059e+37
    %v8854 = vand.u32 %v8107, 2147483648
    %v8855 = vor.u32 1.1754944e-38, %v8854
    %v8856 = vsel %vm8853, %v8855, %v8851
    %v8857 = vmul.f32 1.0, %v8856
    %v8858 = vrcp.pop %v8108
    %v8859 = vmul.f32 %v8108, %v8858
    %v8860 = vsub.f32 1.0, %v8859
    %v8861 = vmul.f32 %v8858, %v8860
    %v8862 = vadd.f32 %v8858, %v8861
    %vm8863 = vweird.f32 %v8108
    %vm8864 = vweird.f32 %v8858
    %vm8865 = vmor %vm8863, %vm8864
    %v8866 = vsel %vm8865, %v8858, %v8862
    %v8867 = vand.u32 2147483647, %v8108
    %vm8868 = vcmp.eq.f32.partialorder %v8867, 8.507059e+37
    %v8869 = vand.u32 %v8108, 2147483648
    %v8870 = vor.u32 1.1754944e-38, %v8869
    %v8871 = vsel %vm8868, %v8870, %v8866
    %v8872 = vmul.f32 1.0, %v8871
    %v8873 = vrcp.pop %v8109
    %v8874 = vmul.f32 %v8109, %v8873
    %v8875 = vsub.f32 1.0, %v8874
    %v8876 = vmul.f32 %v8873, %v8875
    %v8877 = vadd.f32 %v8873, %v8876
    %vm8878 = vweird.f32 %v8109
    %vm8879 = vweird.f32 %v8873
    %vm8880 = vmor %vm8878, %vm8879
    %v8881 = vsel %vm8880, %v8873, %v8877
    %v8882 = vand.u32 2147483647, %v8109
    %vm8883 = vcmp.eq.f32.partialorder %v8882, 8.507059e+37
    %v8884 = vand.u32 %v8109, 2147483648
    %v8885 = vor.u32 1.1754944e-38, %v8884
    %v8886 = vsel %vm8883, %v8885, %v8881
    %v8887 = vmul.f32 1.0, %v8886
    %v8888 = vrcp.pop %v8110
    %v8889 = vmul.f32 %v8110, %v8888
    %v8890 = vsub.f32 1.0, %v8889
    %v8891 = vmul.f32 %v8888, %v8890
    %v8892 = vadd.f32 %v8888, %v8891
    %vm8893 = vweird.f32 %v8110
    %vm8894 = vweird.f32 %v8888
    %vm8895 = vmor %vm8893, %vm8894
    %v8896 = vsel %vm8895, %v8888, %v8892
    %v8897 = vand.u32 2147483647, %v8110
    %vm8898 = vcmp.eq.f32.partialorder %v8897, 8.507059e+37
    %v8899 = vand.u32 %v8110, 2147483648
    %v8900 = vor.u32 1.1754944e-38, %v8899
    %v8901 = vsel %vm8898, %v8900, %v8896
    %v8902 = vmul.f32 1.0, %v8901
    %v8903 = vrcp.pop %v8111
    %v8904 = vmul.f32 %v8111, %v8903
    %v8905 = vsub.f32 1.0, %v8904
    %v8906 = vmul.f32 %v8903, %v8905
    %v8907 = vadd.f32 %v8903, %v8906
    %vm8908 = vweird.f32 %v8111
    %vm8909 = vweird.f32 %v8903
    %vm8910 = vmor %vm8908, %vm8909
    %v8911 = vsel %vm8910, %v8903, %v8907
    %v8912 = vand.u32 2147483647, %v8111
    %vm8913 = vcmp.eq.f32.partialorder %v8912, 8.507059e+37
    %v8914 = vand.u32 %v8111, 2147483648
    %v8915 = vor.u32 1.1754944e-38, %v8914
    %v8916 = vsel %vm8913, %v8915, %v8911
    %v8917 = vmul.f32 1.0, %v8916
    %v8918 = vrcp.pop %v8112
    %v8919 = vmul.f32 %v8112, %v8918
    %v8920 = vsub.f32 1.0, %v8919
    %v8921 = vmul.f32 %v8918, %v8920
    %v8922 = vadd.f32 %v8918, %v8921
    %vm8923 = vweird.f32 %v8112
    %vm8924 = vweird.f32 %v8918
    %vm8925 = vmor %vm8923, %vm8924
    %v8926 = vsel %vm8925, %v8918, %v8922
    %v8927 = vand.u32 2147483647, %v8112
    %vm8928 = vcmp.eq.f32.partialorder %v8927, 8.507059e+37
    %v8929 = vand.u32 %v8112, 2147483648
    %v8930 = vor.u32 1.1754944e-38, %v8929
    %v8931 = vsel %vm8928, %v8930, %v8926
    %v8932 = vmul.f32 1.0, %v8931
    %v8933 = vrcp.pop %v8113
    %v8934 = vmul.f32 %v8113, %v8933
    %v8935 = vsub.f32 1.0, %v8934
    %v8936 = vmul.f32 %v8933, %v8935
    %v8937 = vadd.f32 %v8933, %v8936
    %vm8938 = vweird.f32 %v8113
    %vm8939 = vweird.f32 %v8933
    %vm8940 = vmor %vm8938, %vm8939
    %v8941 = vsel %vm8940, %v8933, %v8937
    %v8942 = vand.u32 2147483647, %v8113
    %vm8943 = vcmp.eq.f32.partialorder %v8942, 8.507059e+37
    %v8944 = vand.u32 %v8113, 2147483648
    %v8945 = vor.u32 1.1754944e-38, %v8944
    %v8946 = vsel %vm8943, %v8945, %v8941
    %v8947 = vmul.f32 1.0, %v8946
    %v8948 = vrcp.pop %v8114
    %v8949 = vmul.f32 %v8114, %v8948
    %v8950 = vsub.f32 1.0, %v8949
    %v8951 = vmul.f32 %v8948, %v8950
    %v8952 = vadd.f32 %v8948, %v8951
    %vm8953 = vweird.f32 %v8114
    %vm8954 = vweird.f32 %v8948
    %vm8955 = vmor %vm8953, %vm8954
    %v8956 = vsel %vm8955, %v8948, %v8952
    %v8957 = vand.u32 2147483647, %v8114
    %vm8958 = vcmp.eq.f32.partialorder %v8957, 8.507059e+37
    %v8959 = vand.u32 %v8114, 2147483648
    %v8960 = vor.u32 1.1754944e-38, %v8959
    %v8961 = vsel %vm8958, %v8960, %v8956
    %v8962 = vmul.f32 1.0, %v8961
    %v8963 = vrcp.pop %v8115
    %v8964 = vmul.f32 %v8115, %v8963
    %v8965 = vsub.f32 1.0, %v8964
    %v8966 = vmul.f32 %v8963, %v8965
    %v8967 = vadd.f32 %v8963, %v8966
    %vm8968 = vweird.f32 %v8115
    %vm8969 = vweird.f32 %v8963
    %vm8970 = vmor %vm8968, %vm8969
    %v8971 = vsel %vm8970, %v8963, %v8967
    %v8972 = vand.u32 2147483647, %v8115
    %vm8973 = vcmp.eq.f32.partialorder %v8972, 8.507059e+37
    %v8974 = vand.u32 %v8115, 2147483648
    %v8975 = vor.u32 1.1754944e-38, %v8974
    %v8976 = vsel %vm8973, %v8975, %v8971
    %v8977 = vmul.f32 1.0, %v8976
    %v8978 = vrcp.pop %v8116
    %v8979 = vmul.f32 %v8116, %v8978
    %v8980 = vsub.f32 1.0, %v8979
    %v8981 = vmul.f32 %v8978, %v8980
    %v8982 = vadd.f32 %v8978, %v8981
    %vm8983 = vweird.f32 %v8116
    %vm8984 = vweird.f32 %v8978
    %vm8985 = vmor %vm8983, %vm8984
    %v8986 = vsel %vm8985, %v8978, %v8982
    %v8987 = vand.u32 2147483647, %v8116
    %vm8988 = vcmp.eq.f32.partialorder %v8987, 8.507059e+37
    %v8989 = vand.u32 %v8116, 2147483648
    %v8990 = vor.u32 1.1754944e-38, %v8989
    %v8991 = vsel %vm8988, %v8990, %v8986
    %v8992 = vmul.f32 1.0, %v8991
    %v8993 = vrcp.pop %v8117
    %v8994 = vmul.f32 %v8117, %v8993
    %v8995 = vsub.f32 1.0, %v8994
    %v8996 = vmul.f32 %v8993, %v8995
    %v8997 = vadd.f32 %v8993, %v8996
    %vm8998 = vweird.f32 %v8117
    %vm8999 = vweird.f32 %v8993
    %vm9000 = vmor %vm8998, %vm8999
    %v9001 = vsel %vm9000, %v8993, %v8997
    %v9002 = vand.u32 2147483647, %v8117
    %vm9003 = vcmp.eq.f32.partialorder %v9002, 8.507059e+37
    %v9004 = vand.u32 %v8117, 2147483648
    %v9005 = vor.u32 1.1754944e-38, %v9004
    %v9006 = vsel %vm9003, %v9005, %v9001
    %v9007 = vmul.f32 1.0, %v9006
    %v9008 = vrcp.pop %v8118
    %v9009 = vmul.f32 %v8118, %v9008
    %v9010 = vsub.f32 1.0, %v9009
    %v9011 = vmul.f32 %v9008, %v9010
    %v9012 = vadd.f32 %v9008, %v9011
    %vm9013 = vweird.f32 %v8118
    %vm9014 = vweird.f32 %v9008
    %vm9015 = vmor %vm9013, %vm9014
    %v9016 = vsel %vm9015, %v9008, %v9012
    %v9017 = vand.u32 2147483647, %v8118
    %vm9018 = vcmp.eq.f32.partialorder %v9017, 8.507059e+37
    %v9019 = vand.u32 %v8118, 2147483648
    %v9020 = vor.u32 1.1754944e-38, %v9019
    %v9021 = vsel %vm9018, %v9020, %v9016
    %v9022 = vmul.f32 1.0, %v9021
    %v9023 = vrcp.pop %v8119
    %v9024 = vmul.f32 %v8119, %v9023
    %v9025 = vsub.f32 1.0, %v9024
    %v9026 = vmul.f32 %v9023, %v9025
    %v9027 = vadd.f32 %v9023, %v9026
    %vm9028 = vweird.f32 %v8119
    %vm9029 = vweird.f32 %v9023
    %vm9030 = vmor %vm9028, %vm9029
    %v9031 = vsel %vm9030, %v9023, %v9027
    %v9032 = vand.u32 2147483647, %v8119
    %vm9033 = vcmp.eq.f32.partialorder %v9032, 8.507059e+37
    %v9034 = vand.u32 %v8119, 2147483648
    %v9035 = vor.u32 1.1754944e-38, %v9034
    %v9036 = vsel %vm9033, %v9035, %v9031
    %v9037 = vmul.f32 1.0, %v9036
    %v9038 = vrcp.pop %v8120
    %v9039 = vmul.f32 %v8120, %v9038
    %v9040 = vsub.f32 1.0, %v9039
    %v9041 = vmul.f32 %v9038, %v9040
    %v9042 = vadd.f32 %v9038, %v9041
    %vm9043 = vweird.f32 %v8120
    %vm9044 = vweird.f32 %v9038
    %vm9045 = vmor %vm9043, %vm9044
    %v9046 = vsel %vm9045, %v9038, %v9042
    %v9047 = vand.u32 2147483647, %v8120
    %vm9048 = vcmp.eq.f32.partialorder %v9047, 8.507059e+37
    %v9049 = vand.u32 %v8120, 2147483648
    %v9050 = vor.u32 1.1754944e-38, %v9049
    %v9051 = vsel %vm9048, %v9050, %v9046
    %v9052 = vmul.f32 1.0, %v9051
    %v9053 = vrcp.pop %v8121
    %v9054 = vmul.f32 %v8121, %v9053
    %v9055 = vsub.f32 1.0, %v9054
    %v9056 = vmul.f32 %v9053, %v9055
    %v9057 = vadd.f32 %v9053, %v9056
    %vm9058 = vweird.f32 %v8121
    %vm9059 = vweird.f32 %v9053
    %vm9060 = vmor %vm9058, %vm9059
    %v9061 = vsel %vm9060, %v9053, %v9057
    %v9062 = vand.u32 2147483647, %v8121
    %vm9063 = vcmp.eq.f32.partialorder %v9062, 8.507059e+37
    %v9064 = vand.u32 %v8121, 2147483648
    %v9065 = vor.u32 1.1754944e-38, %v9064
    %v9066 = vsel %vm9063, %v9065, %v9061
    %v9067 = vmul.f32 1.0, %v9066
    %v9068 = vrcp.pop %v8122
    %v9069 = vmul.f32 %v8122, %v9068
    %v9070 = vsub.f32 1.0, %v9069
    %v9071 = vmul.f32 %v9068, %v9070
    %v9072 = vadd.f32 %v9068, %v9071
    %vm9073 = vweird.f32 %v8122
    %vm9074 = vweird.f32 %v9068
    %vm9075 = vmor %vm9073, %vm9074
    %v9076 = vsel %vm9075, %v9068, %v9072
    %v9077 = vand.u32 2147483647, %v8122
    %vm9078 = vcmp.eq.f32.partialorder %v9077, 8.507059e+37
    %v9079 = vand.u32 %v8122, 2147483648
    %v9080 = vor.u32 1.1754944e-38, %v9079
    %v9081 = vsel %vm9078, %v9080, %v9076
    %v9082 = vmul.f32 1.0, %v9081
    %v9083 = vmul.f32 %v7708, %v8137
    %v9084 = vmul.f32 %v7710, %v8152
    %v9085 = vmul.f32 %v7713, %v8167
    %v9086 = vmul.f32 %v7715, %v8182
    %v9087 = vmul.f32 %v7718, %v8197
    %v9088 = vmul.f32 %v7720, %v8212
    %v9089 = vmul.f32 %v7723, %v8227
    %v9090 = vmul.f32 %v7725, %v8242
    %v9091 = vmul.f32 %v7728, %v8257
    %v9092 = vmul.f32 %v7730, %v8272
    %v9093 = vmul.f32 %v7733, %v8287
    %v9094 = vmul.f32 %v7735, %v8302
    %v9095 = vmul.f32 %v7738, %v8317
    %v9096 = vmul.f32 %v7740, %v8332
    %v9097 = vmul.f32 %v7743, %v8347
    %v9098 = vmul.f32 %v7745, %v8362
    %v9099 = vmul.f32 %v7748, %v8377
    %v9100 = vmul.f32 %v7750, %v8392
    %v9101 = vmul.f32 %v7753, %v8407
    %v9102 = vmul.f32 %v7755, %v8422
    %v9103 = vmul.f32 %v7758, %v8437
    %v9104 = vmul.f32 %v7760, %v8452
    %v9105 = vmul.f32 %v7763, %v8467
    %v9106 = vmul.f32 %v7765, %v8482
    %v9107 = vmul.f32 %v7768, %v8497
    %v9108 = vmul.f32 %v7770, %v8512
    %v9109 = vmul.f32 %v7773, %v8527
    %v9110 = vmul.f32 %v7775, %v8542
    %v9111 = vmul.f32 %v7778, %v8557
    %v9112 = vmul.f32 %v7780, %v8572
    %v9113 = vmul.f32 %v7783, %v8587
    %v9114 = vmul.f32 %v7785, %v8602
    %v9115 = vmul.f32 %v7788, %v8617
    %v9116 = vmul.f32 %v7790, %v8632
    %v9117 = vmul.f32 %v7793, %v8647
    %v9118 = vmul.f32 %v7795, %v8662
    %v9119 = vmul.f32 %v7798, %v8677
    %v9120 = vmul.f32 %v7800, %v8692
    %v9121 = vmul.f32 %v7803, %v8707
    %v9122 = vmul.f32 %v7805, %v8722
    %v9123 = vmul.f32 %v7808, %v8737
    %v9124 = vmul.f32 %v7810, %v8752
    %v9125 = vmul.f32 %v7813, %v8767
    %v9126 = vmul.f32 %v7815, %v8782
    %v9127 = vmul.f32 %v7818, %v8797
    %v9128 = vmul.f32 %v7820, %v8812
    %v9129 = vmul.f32 %v7823, %v8827
    %v9130 = vmul.f32 %v7825, %v8842
    %v9131 = vmul.f32 %v7828, %v8857
    %v9132 = vmul.f32 %v7830, %v8872
    %v9133 = vmul.f32 %v7833, %v8887
    %v9134 = vmul.f32 %v7835, %v8902
    %v9135 = vmul.f32 %v7838, %v8917
    %v9136 = vmul.f32 %v7840, %v8932
    %v9137 = vmul.f32 %v7843, %v8947
    %v9138 = vmul.f32 %v7845, %v8962
    %v9139 = vmul.f32 %v7848, %v8977
    %v9140 = vmul.f32 %v7850, %v8992
    %v9141 = vmul.f32 %v7853, %v9007
    %v9142 = vmul.f32 %v7855, %v9022
    %v9143 = vmul.f32 %v7858, %v9037
    %v9144 = vmul.f32 %v7860, %v9052
    %v9145 = vmul.f32 %v7863, %v9067
    %v9146 = vmul.f32 %v7865, %v9082
    %vm9147 = vcmask 523264
    %v9148 = vsel %vm9147, %v9083, 0.0
    %v9149 = vsel %vm9147, %v9084, 0.0
    %v9150 = vadd.f32 %v9148, %v9149
    %v9151 = vsel %vm9147, %v9085, 0.0
    %v9152 = vadd.f32 %v9150, %v9151
    %v9153 = vsel %vm9147, %v9086, 0.0
    %v9154 = vadd.f32 %v9152, %v9153
    %v9155 = vsel %vm9147, %v9087, 0.0
    %v9156 = vadd.f32 %v9154, %v9155
    %v9157 = vsel %vm9147, %v9088, 0.0
    %v9158 = vadd.f32 %v9156, %v9157
    %v9159 = vsel %vm9147, %v9089, 0.0
    %v9160 = vadd.f32 %v9158, %v9159
    %v9161 = vsel %vm9147, %v9090, 0.0
    %v9162 = vadd.f32 %v9160, %v9161
    %v9163 = vsel %vm9147, %v9091, 0.0
    %v9164 = vadd.f32 %v9162, %v9163
    %v9165 = vsel %vm9147, %v9092, 0.0
    %v9166 = vadd.f32 %v9164, %v9165
    %v9167 = vsel %vm9147, %v9093, 0.0
    %v9168 = vadd.f32 %v9166, %v9167
    %v9169 = vsel %vm9147, %v9094, 0.0
    %v9170 = vadd.f32 %v9168, %v9169
    %v9171 = vsel %vm9147, %v9095, 0.0
    %v9172 = vadd.f32 %v9170, %v9171
    %v9173 = vsel %vm9147, %v9096, 0.0
    %v9174 = vadd.f32 %v9172, %v9173
    %v9175 = vsel %vm9147, %v9097, 0.0
    %v9176 = vadd.f32 %v9174, %v9175
    %v9177 = vsel %vm9147, %v9098, 0.0
    %v9178 = vadd.f32 %v9176, %v9177
    %v9179 = vsel %vm9147, %v9099, 0.0
    %v9180 = vadd.f32 %v9178, %v9179
    %v9181 = vsel %vm9147, %v9100, 0.0
    %v9182 = vadd.f32 %v9180, %v9181
    %v9183 = vsel %vm9147, %v9101, 0.0
    %v9184 = vadd.f32 %v9182, %v9183
    %v9185 = vsel %vm9147, %v9102, 0.0
    %v9186 = vadd.f32 %v9184, %v9185
    %v9187 = vsel %vm9147, %v9103, 0.0
    %v9188 = vadd.f32 %v9186, %v9187
    %v9189 = vsel %vm9147, %v9104, 0.0
    %v9190 = vadd.f32 %v9188, %v9189
    %v9191 = vsel %vm9147, %v9105, 0.0
    %v9192 = vadd.f32 %v9190, %v9191
    %v9193 = vsel %vm9147, %v9106, 0.0
    %v9194 = vadd.f32 %v9192, %v9193
    %v9195 = vsel %vm9147, %v9107, 0.0
    %v9196 = vadd.f32 %v9194, %v9195
    %v9197 = vsel %vm9147, %v9108, 0.0
    %v9198 = vadd.f32 %v9196, %v9197
    %v9199 = vsel %vm9147, %v9109, 0.0
    %v9200 = vadd.f32 %v9198, %v9199
    %v9201 = vsel %vm9147, %v9110, 0.0
    %v9202 = vadd.f32 %v9200, %v9201
    %v9203 = vsel %vm9147, %v9111, 0.0
    %v9204 = vadd.f32 %v9202, %v9203
    %v9205 = vsel %vm9147, %v9112, 0.0
    %v9206 = vadd.f32 %v9204, %v9205
    %v9207 = vsel %vm9147, %v9113, 0.0
    %v9208 = vadd.f32 %v9206, %v9207
    %v9209 = vsel %vm9147, %v9114, 0.0
    %v9210 = vadd.f32 %v9208, %v9209
    %v9211 = vrot.slane %v9210, 4
    %v9212 = vadd.f32 %v9210, %v9211
    %v9213 = vrot.slane %v9212, 2
    %v9214 = vadd.f32 %v9212, %v9213
    %v9215 = vrot.slane %v9214, 1
    %v9216 = vadd.f32 %v9214, %v9215
    %v9217 = vrcp.pop 256.0
    %v9218 = vmul.f32 256.0, %v9217
    %v9219 = vsub.f32 1.0, %v9218
    %v9220 = vmul.f32 %v9217, %v9219
    %v9221 = vadd.f32 %v9217, %v9220
    %vm9222 = vweird.f32 %v9217
    %v9223 = vsel %vm9222, %v9217, %v9221
    %v9224 = vmul.f32 %v9216, %v9223
    %v9225 = vld [vmem:[%s15] sm:$0xff]
    %v9226 = vld [vmem:[%s15 + $0x8] sm:$0xff]
    %v9227 = vld [vmem:[%s15 + $0x10] sm:$0xff]
    %v9228 = vld [vmem:[%s15 + $0x18] sm:$0xff]
    %v9229 = vld [vmem:[%s15 + $0x20] sm:$0xff]
    %v9230 = vld [vmem:[%s15 + $0x28] sm:$0xff]
    %v9231 = vld [vmem:[%s15 + $0x30] sm:$0xff]
    %v9232 = vld [vmem:[%s15 + $0x38] sm:$0xff]
    %v9233 = vld [vmem:[%s16] sm:$0x1]
    %v9235 = vsel %vm9147, %v9224, 0
    %9237 = vmatpush.msra.mxu0 0.0
    %9238 = vmatpush.msra.mxu0 0.0
    %9239 = vmatpush.msra.mxu0 0.0
    %9240 = vmatpush.msra.mxu0 0.0
    %9241 = vmatpush.msra.mxu0 0.0
    %9242 = vmatpush.msra.mxu0 0.0
    %9243 = vmatpush.msra.mxu0 0.0
    %9244 = vmatpush.msra.mxu0 0.0
    %9245 = vmatpush.msra.mxu0 %v9232
    %9246 = vmatpush.msra.mxu0 %v9231
    %9247 = vmatpush.msra.mxu0 %v9230
    %9248 = vmatpush.msra.mxu0 %v9229
    %9249 = vmatpush.msra.mxu0 %v9228
    %9250 = vmatpush.msra.mxu0 %v9227
    %9251 = vmatpush.msra.mxu0 %v9226
    %9252 = vmatpush.msra.mxu0 %v9225
    %9253 = vmatmul.f32.gmra.mxu0 %v9235
    %v9254 = vpop.f32.mrf.mxu0
    %v9255 = vadd.f32 %v9233, %v9254
    %9256 = vdwg.mxu0
    %vm9257 = vcmask 73728
    %9258 = vst.msk [vmem:[#allocation4] sm:$0x1] %vm9257, %v9255
    %v9259 = vsel %vm9147, %v9115, 0.0
    %v9260 = vsel %vm9147, %v9116, 0.0
    %v9261 = vadd.f32 %v9259, %v9260
    %v9262 = vsel %vm9147, %v9117, 0.0
    %v9263 = vadd.f32 %v9261, %v9262
    %v9264 = vsel %vm9147, %v9118, 0.0
    %v9265 = vadd.f32 %v9263, %v9264
    %v9266 = vsel %vm9147, %v9119, 0.0
    %v9267 = vadd.f32 %v9265, %v9266
    %v9268 = vsel %vm9147, %v9120, 0.0
    %v9269 = vadd.f32 %v9267, %v9268
    %v9270 = vsel %vm9147, %v9121, 0.0
    %v9271 = vadd.f32 %v9269, %v9270
    %v9272 = vsel %vm9147, %v9122, 0.0
    %v9273 = vadd.f32 %v9271, %v9272
    %v9274 = vsel %vm9147, %v9123, 0.0
    %v9275 = vadd.f32 %v9273, %v9274
    %v9276 = vsel %vm9147, %v9124, 0.0
    %v9277 = vadd.f32 %v9275, %v9276
    %v9278 = vsel %vm9147, %v9125, 0.0
    %v9279 = vadd.f32 %v9277, %v9278
    %v9280 = vsel %vm9147, %v9126, 0.0
    %v9281 = vadd.f32 %v9279, %v9280
    %v9282 = vsel %vm9147, %v9127, 0.0
    %v9283 = vadd.f32 %v9281, %v9282
    %v9284 = vsel %vm9147, %v9128, 0.0
    %v9285 = vadd.f32 %v9283, %v9284
    %v9286 = vsel %vm9147, %v9129, 0.0
    %v9287 = vadd.f32 %v9285, %v9286
    %v9288 = vsel %vm9147, %v9130, 0.0
    %v9289 = vadd.f32 %v9287, %v9288
    %v9290 = vsel %vm9147, %v9131, 0.0
    %v9291 = vadd.f32 %v9289, %v9290
    %v9292 = vsel %vm9147, %v9132, 0.0
    %v9293 = vadd.f32 %v9291, %v9292
    %v9294 = vsel %vm9147, %v9133, 0.0
    %v9295 = vadd.f32 %v9293, %v9294
    %v9296 = vsel %vm9147, %v9134, 0.0
    %v9297 = vadd.f32 %v9295, %v9296
    %v9298 = vsel %vm9147, %v9135, 0.0
    %v9299 = vadd.f32 %v9297, %v9298
    %v9300 = vsel %vm9147, %v9136, 0.0
    %v9301 = vadd.f32 %v9299, %v9300
    %v9302 = vsel %vm9147, %v9137, 0.0
    %v9303 = vadd.f32 %v9301, %v9302
    %v9304 = vsel %vm9147, %v9138, 0.0
    %v9305 = vadd.f32 %v9303, %v9304
    %v9306 = vsel %vm9147, %v9139, 0.0
    %v9307 = vadd.f32 %v9305, %v9306
    %v9308 = vsel %vm9147, %v9140, 0.0
    %v9309 = vadd.f32 %v9307, %v9308
    %v9310 = vsel %vm9147, %v9141, 0.0
    %v9311 = vadd.f32 %v9309, %v9310
    %v9312 = vsel %vm9147, %v9142, 0.0
    %v9313 = vadd.f32 %v9311, %v9312
    %v9314 = vsel %vm9147, %v9143, 0.0
    %v9315 = vadd.f32 %v9313, %v9314
    %v9316 = vsel %vm9147, %v9144, 0.0
    %v9317 = vadd.f32 %v9315, %v9316
    %v9318 = vsel %vm9147, %v9145, 0.0
    %v9319 = vadd.f32 %v9317, %v9318
    %v9320 = vsel %vm9147, %v9146, 0.0
    %v9321 = vadd.f32 %v9319, %v9320
    %v9322 = vrot.slane %v9321, 4
    %v9323 = vadd.f32 %v9321, %v9322
    %v9324 = vrot.slane %v9323, 2
    %v9325 = vadd.f32 %v9323, %v9324
    %v9326 = vrot.slane %v9325, 1
    %v9327 = vadd.f32 %v9325, %v9326
    %v9328 = vmul.f32 %v9327, %v9223
    %v9329 = vld [vmem:[%s15] sm:$0xff]
    %v9330 = vld [vmem:[%s15 + $0x8] sm:$0xff]
    %v9331 = vld [vmem:[%s15 + $0x10] sm:$0xff]
    %v9332 = vld [vmem:[%s15 + $0x18] sm:$0xff]
    %v9333 = vld [vmem:[%s15 + $0x20] sm:$0xff]
    %v9334 = vld [vmem:[%s15 + $0x28] sm:$0xff]
    %v9335 = vld [vmem:[%s15 + $0x30] sm:$0xff]
    %v9336 = vld [vmem:[%s15 + $0x38] sm:$0xff]
    %v9337 = vld [vmem:[%s16] sm:$0x1]
    %v9339 = vsel %vm9147, %v9328, 0
    %9341 = vmatpush.msra.mxu0 0.0
    %9342 = vmatpush.msra.mxu0 0.0
    %9343 = vmatpush.msra.mxu0 0.0
    %9344 = vmatpush.msra.mxu0 0.0
    %9345 = vmatpush.msra.mxu0 0.0
    %9346 = vmatpush.msra.mxu0 0.0
    %9347 = vmatpush.msra.mxu0 0.0
    %9348 = vmatpush.msra.mxu0 0.0
    %9349 = vmatpush.msra.mxu0 %v9336
    %9350 = vmatpush.msra.mxu0 %v9335
    %9351 = vmatpush.msra.mxu0 %v9334
    %9352 = vmatpush.msra.mxu0 %v9333
    %9353 = vmatpush.msra.mxu0 %v9332
    %9354 = vmatpush.msra.mxu0 %v9331
    %9355 = vmatpush.msra.mxu0 %v9330
    %9356 = vmatpush.msra.mxu0 %v9329
    %9357 = vmatmul.f32.gmra.mxu0 %v9339
    %v9358 = vpop.f32.mrf.mxu0
    %v9359 = vadd.f32 %v9337, %v9358
    %9360 = vdwg.mxu0
    %9361 = vst.msk [vmem:[#allocation4 + $0x1] sm:$0x1] %vm9257, %v9359
    // Predicated region
    $region70: #{forward.1} parent=1 // pred_check
      _
    $region71: #{forward.1} parent=1 // pred_check_branch
      %9363 = sbr.rel (0) target = $region73
    $region72: #{forward.1} parent=1 // pred_region
      %9365 = vsyncadd [#allocation5], 0
      %s9367 = sshll.u32 [#allocation4], 4
      %s9368 = int_to_ptr.vmem [resolvable:$true] %s9367
      %s9369 = sshll.u32 %s17, 4
      %s9370 = int_to_ptr.hbm [resolvable:$true] %s9369
      %9372 = dma.vmem_to_hbm [thread:$0]  %s9368, 32, %s9370, [#allocation5]
    $region73: #{forward.1} parent=1 // pred_fallthru
      _
    // Predicated region
    $region74: #{forward.1} parent=1 // pred_check
      _
    $region75: #{forward.1} parent=1 // pred_check_branch
      %9374 = sbr.rel (0) target = $region77
    $region76: #{forward.1} parent=1 // pred_region
      %9376 = dma.done [#allocation5], 32
    $region77: #{forward.1} parent=1 // pred_fallthru
      _
    %9377 = vsyncpa [#allocation5], 1

</llo_original>
